<compile_context>
chip_gen: v6e
topology: v6e:2x2x1
jax: 0.10.0
libtpu: 0.0.40
codegen_flags: <defaults>
</compile_context>

<pallas_src>
import functools

import jax
import jax.numpy as jnp
from jax.experimental import pallas as pl
from jax.experimental.pallas import tpu as pltpu

C = 512          # fixed by the module (in_channels = out_channels = 512)
REPEAT_N = 4
BN_EPS = 1e-5


def _middleflow_kernel(x_ref, wp_ref, wd_ref, bias_ref, o_ref, *, H, W, NB):
    """One residual block for one batch block; grid = (batch_blocks, repeat_n).

    x_ref:    (NB, H, W, C)   input batch block (NHWC), consumed at r == 0
    wp_ref:   (1, 3, C, C)    bf16 pointwise 1x1 weights for this residual block
    wd_ref:   (1, 3, 9, C)    f32 depthwise 3x3 taps (BN scale folded in)
    bias_ref: (1, 3, C)       f32 folded BatchNorm bias
    o_ref:    (NB, H, W, C)   output block; also the residual carry across r
    """
    r = pl.program_id(1)

    @pl.when(r == 0)
    def _():
        # New batch block: seed the residual carry with the input activation.
        o_ref[...] = x_ref[...]

    x = o_ref[...]                                    # residual-block input (carry)

    zrow = jnp.zeros((NB, 1, W, C), jnp.float32)      # H-boundary zeros (vreg rows)
    zcol = jnp.zeros((NB, H, 1, C), jnp.float32)      # W-boundary zeros (one sublane)

    def shift_h(t, kh):                               # out[h] = t[h + kh - 1], zero padded
        if kh == 1:
            return t
        if kh == 0:
            return jnp.concatenate([zrow, t[:, :H - 1]], axis=1)
        return jnp.concatenate([t[:, 1:], zrow], axis=1)

    cur = x
    for s in range(3):                                # 3 sepconv stages, unrolled
        act = jnp.maximum(cur, 0.0)                   # ReLU (VPU)
        # pointwise 1x1 conv == channel matmul on the MXU, bf16 in / f32 acc
        y = jnp.dot(
            act.reshape(NB * H * W, C).astype(jnp.bfloat16),
            wp_ref[0, s],
            preferred_element_type=jnp.float32,
        ).reshape(NB, H, W, C)

        # depthwise 3x3 conv, padding=1 (BN scale already folded into the taps).
        # W-neighbours via in-register sublane shifts -- no padded scratch.
        yw0 = jnp.concatenate([zcol, y[:, :, :W - 1, :]], axis=2)   # y[.., w-1, .]
        yw2 = jnp.concatenate([y[:, :, 1:, :], zcol], axis=2)       # y[.., w+1, .]
        wd_s = wd_ref[0, s]                           # (9, C): one load per stage
        z = None
        for kh in range(3):
            a = (yw0 * wd_s[3 * kh + 0].reshape(1, 1, 1, C)
                 + y * wd_s[3 * kh + 1].reshape(1, 1, 1, C)
                 + yw2 * wd_s[3 * kh + 2].reshape(1, 1, 1, C))
            a = shift_h(a, kh)
            z = a if z is None else z + a
        cur = z + bias_ref[0, s].reshape(1, 1, 1, C)  # BatchNorm (eval) bias

    o_ref[...] = cur + x                              # identity skip (skip_layer == [])


def _pick_batch_block(N, H, W, max_rows=1024, min_rows=128):
    """Pick NB (divisor of N): prefer >=2 batch blocks for megacore as long as
    the pointwise-matmul M-dim (NB*H*W) stays >= min_rows; else the largest
    VMEM-friendly block."""
    divs = [d for d in range(1, N + 1) if N % d == 0]
    cand = [d for d in divs
            if d * H * W <= max_rows and (N // d) >= 2 and d * H * W >= min_rows]
    if cand:
        return max(cand)
    cand = [d for d in divs if d * H * W <= max_rows]
    return max(cand) if cand else 1


def _prep_params(params):
    """Stack per-block params and fold BN (eval) scale into the depthwise taps."""
    R = len(params)
    wp = jnp.stack([p["wp"] for p in params]).astype(jnp.bfloat16)       # (R, 3, C, C)
    scale = jnp.stack([p["scale"] for p in params])                       # (R, 3, C)
    wd = jnp.stack([p["wd"] for p in params])                             # (R, 3, 3, 3, C)
    wd_eff = (wd * scale[:, :, None, None, :]).reshape(R, 3, 9, C)
    bias = jnp.stack([p["bias"] for p in params])                         # (R, 3, C)
    return wp, wd_eff, bias


def middle_flow(x_nchw, params):
    """Full MiddleFlow forward: NCHW in, NCHW out (single fused pallas_call)."""
    x = jnp.transpose(x_nchw, (0, 2, 3, 1)).astype(jnp.float32)          # -> NHWC
    N, H, W, _ = x.shape
    R = len(params)
    wp, wd_eff, bias = _prep_params(params)
    NB = _pick_batch_block(N, H, W)
    kernel = functools.partial(_middleflow_kernel, H=H, W=W, NB=NB)
    out = pl.pallas_call(
        kernel,
        out_shape=jax.ShapeDtypeStruct((N, H, W, C), jnp.float32),
        grid_spec=pltpu.PrefetchScalarGridSpec(
            num_scalar_prefetch=0,
            grid=(N // NB, R),
            in_specs=[
                pl.BlockSpec((NB, H, W, C), lambda n, r: (n, 0, 0, 0)),
                pl.BlockSpec((1, 3, C, C), lambda n, r: (r, 0, 0, 0)),
                pl.BlockSpec((1, 3, 9, C), lambda n, r: (r, 0, 0, 0)),
                pl.BlockSpec((1, 3, C), lambda n, r: (r, 0, 0)),
            ],
            out_specs=pl.BlockSpec((NB, H, W, C), lambda n, r: (n, 0, 0, 0)),
        ),
        compiler_params=pltpu.CompilerParams(
            dimension_semantics=("parallel", "arbitrary"),
            vmem_limit_bytes=32 * 1024 * 1024,
        ),
    )(x, wp, wd_eff, bias)
    return jnp.transpose(out, (0, 3, 1, 2))                               # -> NCHW


def init_params(key, repeat_n=REPEAT_N):
    """Deterministic synthetic weights (shapes match the PyTorch module)."""
    params = []
    for _ in range(repeat_n):
        key, k1, k2, k3, k4, k5, k6 = jax.random.split(key, 7)
        wp = 0.03 * jax.random.normal(k1, (3, C, C), jnp.float32)       # 1x1 conv (Cin, Cout)
        wd = 0.20 * jax.random.normal(k2, (3, 3, 3, C), jnp.float32)    # depthwise (kh, kw, C)
        gamma = 1.0 + 0.1 * jax.random.normal(k3, (3, C), jnp.float32)
        beta = 0.05 * jax.random.normal(k4, (3, C), jnp.float32)
        rmean = 0.1 * jax.random.normal(k5, (3, C), jnp.float32)
        rvar = jnp.abs(1.0 + 0.1 * jax.random.normal(k6, (3, C), jnp.float32))
        scale = gamma / jnp.sqrt(rvar + BN_EPS)
        bias = beta - rmean * scale
        params.append(dict(wp=wp, wd=wd, scale=scale, bias=bias))
    return params


def ref_middle_flow(x_nchw, params):
    """Pure-JAX reference (same math & matmul precision as the kernel, no Pallas)."""
    x = jnp.transpose(x_nchw, (0, 2, 3, 1)).astype(jnp.float32)
    N, H, W, _ = x.shape
    for p in params:
        res = x
        cur = x
        for s in range(3):
            r = jnp.maximum(cur, 0.0)
            y = jnp.einsum("nhwc,cd->nhwd",
                           r.astype(jnp.bfloat16),
                           p["wp"][s].astype(jnp.bfloat16),
                           preferred_element_type=jnp.float32)
            yp = jnp.pad(y, ((0, 0), (1, 1), (1, 1), (0, 0)))
            z = jnp.zeros_like(y)
            for dh in range(3):
                for dw in range(3):
                    z = z + yp[:, dh:dh + H, dw:dw + W, :] * p["wd"][s, dh, dw]
            cur = z * p["scale"][s] + p["bias"][s]
        x = cur + res
    return jnp.transpose(x, (0, 3, 1, 2))


if __name__ == "__main__":
    key = jax.random.PRNGKey(0)
    kx, kp = jax.random.split(key)

    N, H, W = 2, 8, 8                      # channels fixed at 512 by the module
    x = jax.random.normal(kx, (N, C, H, W), jnp.float32)   # NCHW, like the PyTorch module
    params = init_params(kp)

    out = jax.block_until_ready(middle_flow(x, params))
    assert out.shape == (N, C, H, W), out.shape

    ref = jax.block_until_ready(ref_middle_flow(x, params))
    err = float(jnp.max(jnp.abs(out - ref)))
    assert jnp.allclose(out, ref, rtol=2e-3, atol=2e-3), f"max abs err {err}"

    print("KERNEL_OK")
</pallas_src>

<mosaic_0001>
module attributes {stable_mosaic.version = 11 : i64} {
  func.func @_middleflow_kernel(%arg0: i32, %arg1: i32, %arg2: memref<2x8x8x512xf32, #tpu.memory_space<vmem>>, %arg3: memref<1x3x512x512xbf16, #tpu.memory_space<vmem>>, %arg4: memref<1x3x9x512xf32, #tpu.memory_space<vmem>>, %arg5: memref<1x3x512xf32, #tpu.memory_space<vmem>>, %arg6: memref<2x8x8x512xf32, #tpu.memory_space<vmem>>) attributes {dimension_semantics = [#tpu.dimension_semantics<parallel>, #tpu.dimension_semantics<arbitrary>], iteration_bounds = array<i64: 1, 4>, scalar_prefetch = 0 : i64, scratch_operands = 0 : i64, tpu.core_type = #tpu.core_type<tc>, window_params = [{transform_indices = @transform_0, window_bounds = array<i64: 2, 8, 8, 512>}, {transform_indices = @transform_1, window_bounds = array<i64: 1, 3, 512, 512>}, {transform_indices = @transform_2, window_bounds = array<i64: 1, 3, 9, 512>}, {transform_indices = @transform_3, window_bounds = array<i64: 1, 3, 512>}, {transform_indices = @transform_4, window_bounds = array<i64: 2, 8, 8, 512>}]} {
    %c0_i32 = arith.constant 0 : i32
    %0 = arith.cmpi eq, %arg1, %c0_i32 : i32
    %1 = arith.extui %0 : i1 to i32
    %c0_i32_0 = arith.constant 0 : i32
    %2 = arith.cmpi ne, %1, %c0_i32_0 : i32
    scf.if %2 {
      %c0_46 = arith.constant 0 : index
      %c0_47 = arith.constant 0 : index
      %c0_48 = arith.constant 0 : index
      %c0_49 = arith.constant 0 : index
      %236 = vector.load %arg2[%c0_46, %c0_47, %c0_48, %c0_49] : memref<2x8x8x512xf32, #tpu.memory_space<vmem>>, vector<2x8x8x512xf32>
      %c0_50 = arith.constant 0 : index
      %c0_51 = arith.constant 0 : index
      %c0_52 = arith.constant 0 : index
      %c0_53 = arith.constant 0 : index
      %237 = vector.load %arg6[%c0_50, %c0_51, %c0_52, %c0_53] : memref<2x8x8x512xf32, #tpu.memory_space<vmem>>, vector<2x8x8x512xf32>
      tpu.vector_store %arg6[%c0_50, %c0_51, %c0_52, %c0_53], %236 {strides = array<i32>} : memref<2x8x8x512xf32, #tpu.memory_space<vmem>>, vector<2x8x8x512xf32>,
    } else {
    }
    %c0 = arith.constant 0 : index
    %c0_1 = arith.constant 0 : index
    %c0_2 = arith.constant 0 : index
    %c0_3 = arith.constant 0 : index
    %3 = vector.load %arg6[%c0, %c0_1, %c0_2, %c0_3] : memref<2x8x8x512xf32, #tpu.memory_space<vmem>>, vector<2x8x8x512xf32>
    %cst = arith.constant 0.000000e+00 : f32
    %4 = vector.broadcast %cst : f32 to vector<2x1x8x512xf32>
    %cst_4 = arith.constant 0.000000e+00 : f32
    %5 = vector.broadcast %cst_4 : f32 to vector<2x8x1x512xf32>
    %cst_5 = arith.constant 0.000000e+00 : f32
    %6 = vector.broadcast %cst_5 : f32 to vector<2x8x8x512xf32>
    %7 = arith.maximumf %3, %6 : vector<2x8x8x512xf32>
    %8 = vector.shape_cast %7 : vector<2x8x8x512xf32> to vector<128x512xf32>
    %9 = arith.truncf %8 : vector<128x512xf32> to vector<128x512xbf16>
    %c0_6 = arith.constant 0 : index
    %c0_7 = arith.constant 0 : index
    %c0_8 = arith.constant 0 : index
    %c0_9 = arith.constant 0 : index
    %10 = vector.load %arg3[%c0_6, %c0_7, %c0_8, %c0_9] : memref<1x3x512x512xbf16, #tpu.memory_space<vmem>>, vector<1x1x512x512xbf16>
    %11 = vector.shape_cast %10 : vector<1x1x512x512xbf16> to vector<512x512xbf16>
    %cst_10 = arith.constant dense<0.000000e+00> : vector<128x512xf32>
    %12 = tpu.matmul %9, %11, %cst_10 {dimension_numbers = #tpu.dot_dimension_numbers<[1], [0], [0], [1], [0, 0, 1, 1], [], []>} : vector<128x512xbf16>, vector<512x512xbf16>, vector<128x512xf32> -> vector<128x512xf32>
    %13 = vector.shape_cast %12 : vector<128x512xf32> to vector<2x8x8x512xf32>
    %14 = vector.extract_strided_slice %13 {offsets = [0, 0, 0, 0], sizes = [2, 8, 7, 512], strides = [1, 1, 1, 1]} : vector<2x8x8x512xf32> to vector<2x8x7x512xf32>
    %15 = tpu.concatenate %5, %14 in 2 : vector<2x8x1x512xf32>, vector<2x8x7x512xf32> -> vector<2x8x8x512xf32>
    %16 = vector.extract_strided_slice %13 {offsets = [0, 0, 1, 0], sizes = [2, 8, 7, 512], strides = [1, 1, 1, 1]} : vector<2x8x8x512xf32> to vector<2x8x7x512xf32>
    %17 = tpu.concatenate %16, %5 in 2 : vector<2x8x7x512xf32>, vector<2x8x1x512xf32> -> vector<2x8x8x512xf32>
    %c0_11 = arith.constant 0 : index
    %c0_12 = arith.constant 0 : index
    %c0_13 = arith.constant 0 : index
    %c0_14 = arith.constant 0 : index
    %18 = vector.load %arg4[%c0_11, %c0_12, %c0_13, %c0_14] : memref<1x3x9x512xf32, #tpu.memory_space<vmem>>, vector<1x1x9x512xf32>
    %19 = vector.shape_cast %18 : vector<1x1x9x512xf32> to vector<9x512xf32>
    %20 = vector.extract_strided_slice %19 {offsets = [0, 0], sizes = [1, 512], strides = [1, 1]} : vector<9x512xf32> to vector<1x512xf32>
    %21 = vector.shape_cast %20 : vector<1x512xf32> to vector<512xf32>
    %22 = vector.shape_cast %21 : vector<512xf32> to vector<1x1x1x512xf32>
    %23 = vector.broadcast %22 : vector<1x1x1x512xf32> to vector<2x8x8x512xf32>
    %24 = arith.mulf %15, %23 : vector<2x8x8x512xf32>
    %25 = vector.extract_strided_slice %19 {offsets = [1, 0], sizes = [1, 512], strides = [1, 1]} : vector<9x512xf32> to vector<1x512xf32>
    %26 = vector.shape_cast %25 : vector<1x512xf32> to vector<512xf32>
    %27 = vector.shape_cast %26 : vector<512xf32> to vector<1x1x1x512xf32>
    %28 = vector.broadcast %27 : vector<1x1x1x512xf32> to vector<2x8x8x512xf32>
    %29 = arith.mulf %13, %28 : vector<2x8x8x512xf32>
    %30 = arith.addf %24, %29 : vector<2x8x8x512xf32>
    %31 = vector.extract_strided_slice %19 {offsets = [2, 0], sizes = [1, 512], strides = [1, 1]} : vector<9x512xf32> to vector<1x512xf32>
    %32 = vector.shape_cast %31 : vector<1x512xf32> to vector<512xf32>
    %33 = vector.shape_cast %32 : vector<512xf32> to vector<1x1x1x512xf32>
    %34 = vector.broadcast %33 : vector<1x1x1x512xf32> to vector<2x8x8x512xf32>
    %35 = arith.mulf %17, %34 : vector<2x8x8x512xf32>
    %36 = arith.addf %30, %35 : vector<2x8x8x512xf32>
    %37 = vector.extract_strided_slice %36 {offsets = [0, 0, 0, 0], sizes = [2, 7, 8, 512], strides = [1, 1, 1, 1]} : vector<2x8x8x512xf32> to vector<2x7x8x512xf32>
    %38 = tpu.concatenate %4, %37 in 1 : vector<2x1x8x512xf32>, vector<2x7x8x512xf32> -> vector<2x8x8x512xf32>
    %39 = vector.extract_strided_slice %19 {offsets = [3, 0], sizes = [1, 512], strides = [1, 1]} : vector<9x512xf32> to vector<1x512xf32>
    %40 = vector.shape_cast %39 : vector<1x512xf32> to vector<512xf32>
    %41 = vector.shape_cast %40 : vector<512xf32> to vector<1x1x1x512xf32>
    %42 = vector.broadcast %41 : vector<1x1x1x512xf32> to vector<2x8x8x512xf32>
    %43 = arith.mulf %15, %42 : vector<2x8x8x512xf32>
    %44 = vector.extract_strided_slice %19 {offsets = [4, 0], sizes = [1, 512], strides = [1, 1]} : vector<9x512xf32> to vector<1x512xf32>
    %45 = vector.shape_cast %44 : vector<1x512xf32> to vector<512xf32>
    %46 = vector.shape_cast %45 : vector<512xf32> to vector<1x1x1x512xf32>
    %47 = vector.broadcast %46 : vector<1x1x1x512xf32> to vector<2x8x8x512xf32>
    %48 = arith.mulf %13, %47 : vector<2x8x8x512xf32>
    %49 = arith.addf %43, %48 : vector<2x8x8x512xf32>
    %50 = vector.extract_strided_slice %19 {offsets = [5, 0], sizes = [1, 512], strides = [1, 1]} : vector<9x512xf32> to vector<1x512xf32>
    %51 = vector.shape_cast %50 : vector<1x512xf32> to vector<512xf32>
    %52 = vector.shape_cast %51 : vector<512xf32> to vector<1x1x1x512xf32>
    %53 = vector.broadcast %52 : vector<1x1x1x512xf32> to vector<2x8x8x512xf32>
    %54 = arith.mulf %17, %53 : vector<2x8x8x512xf32>
    %55 = arith.addf %49, %54 : vector<2x8x8x512xf32>
    %56 = arith.addf %38, %55 : vector<2x8x8x512xf32>
    %57 = vector.extract_strided_slice %19 {offsets = [6, 0], sizes = [1, 512], strides = [1, 1]} : vector<9x512xf32> to vector<1x512xf32>
    %58 = vector.shape_cast %57 : vector<1x512xf32> to vector<512xf32>
    %59 = vector.shape_cast %58 : vector<512xf32> to vector<1x1x1x512xf32>
    %60 = vector.broadcast %59 : vector<1x1x1x512xf32> to vector<2x8x8x512xf32>
    %61 = arith.mulf %15, %60 : vector<2x8x8x512xf32>
    %62 = vector.extract_strided_slice %19 {offsets = [7, 0], sizes = [1, 512], strides = [1, 1]} : vector<9x512xf32> to vector<1x512xf32>
    %63 = vector.shape_cast %62 : vector<1x512xf32> to vector<512xf32>
    %64 = vector.shape_cast %63 : vector<512xf32> to vector<1x1x1x512xf32>
    %65 = vector.broadcast %64 : vector<1x1x1x512xf32> to vector<2x8x8x512xf32>
    %66 = arith.mulf %13, %65 : vector<2x8x8x512xf32>
    %67 = arith.addf %61, %66 : vector<2x8x8x512xf32>
    %68 = vector.extract_strided_slice %19 {offsets = [8, 0], sizes = [1, 512], strides = [1, 1]} : vector<9x512xf32> to vector<1x512xf32>
    %69 = vector.shape_cast %68 : vector<1x512xf32> to vector<512xf32>
    %70 = vector.shape_cast %69 : vector<512xf32> to vector<1x1x1x512xf32>
    %71 = vector.broadcast %70 : vector<1x1x1x512xf32> to vector<2x8x8x512xf32>
    %72 = arith.mulf %17, %71 : vector<2x8x8x512xf32>
    %73 = arith.addf %67, %72 : vector<2x8x8x512xf32>
    %74 = vector.extract_strided_slice %73 {offsets = [0, 1, 0, 0], sizes = [2, 7, 8, 512], strides = [1, 1, 1, 1]} : vector<2x8x8x512xf32> to vector<2x7x8x512xf32>
    %75 = tpu.concatenate %74, %4 in 1 : vector<2x7x8x512xf32>, vector<2x1x8x512xf32> -> vector<2x8x8x512xf32>
    %76 = arith.addf %56, %75 : vector<2x8x8x512xf32>
    %c0_15 = arith.constant 0 : index
    %c0_16 = arith.constant 0 : index
    %c0_17 = arith.constant 0 : index
    %77 = vector.load %arg5[%c0_15, %c0_16, %c0_17] : memref<1x3x512xf32, #tpu.memory_space<vmem>>, vector<1x1x512xf32>
    %78 = vector.shape_cast %77 : vector<1x1x512xf32> to vector<512xf32>
    %79 = vector.shape_cast %78 : vector<512xf32> to vector<1x1x1x512xf32>
    %80 = vector.broadcast %79 : vector<1x1x1x512xf32> to vector<2x8x8x512xf32>
    %81 = arith.addf %76, %80 : vector<2x8x8x512xf32>
    %cst_18 = arith.constant 0.000000e+00 : f32
    %82 = vector.broadcast %cst_18 : f32 to vector<2x8x8x512xf32>
    %83 = arith.maximumf %81, %82 : vector<2x8x8x512xf32>
    %84 = vector.shape_cast %83 : vector<2x8x8x512xf32> to vector<128x512xf32>
    %85 = arith.truncf %84 : vector<128x512xf32> to vector<128x512xbf16>
    %c0_19 = arith.constant 0 : index
    %c1 = arith.constant 1 : index
    %c0_20 = arith.constant 0 : index
    %c0_21 = arith.constant 0 : index
    %86 = vector.load %arg3[%c0_19, %c1, %c0_20, %c0_21] : memref<1x3x512x512xbf16, #tpu.memory_space<vmem>>, vector<1x1x512x512xbf16>
    %87 = vector.shape_cast %86 : vector<1x1x512x512xbf16> to vector<512x512xbf16>
    %cst_22 = arith.constant dense<0.000000e+00> : vector<128x512xf32>
    %88 = tpu.matmul %85, %87, %cst_22 {dimension_numbers = #tpu.dot_dimension_numbers<[1], [0], [0], [1], [0, 0, 1, 1], [], []>} : vector<128x512xbf16>, vector<512x512xbf16>, vector<128x512xf32> -> vector<128x512xf32>
    %89 = vector.shape_cast %88 : vector<128x512xf32> to vector<2x8x8x512xf32>
    %90 = vector.extract_strided_slice %89 {offsets = [0, 0, 0, 0], sizes = [2, 8, 7, 512], strides = [1, 1, 1, 1]} : vector<2x8x8x512xf32> to vector<2x8x7x512xf32>
    %91 = tpu.concatenate %5, %90 in 2 : vector<2x8x1x512xf32>, vector<2x8x7x512xf32> -> vector<2x8x8x512xf32>
    %92 = vector.extract_strided_slice %89 {offsets = [0, 0, 1, 0], sizes = [2, 8, 7, 512], strides = [1, 1, 1, 1]} : vector<2x8x8x512xf32> to vector<2x8x7x512xf32>
    %93 = tpu.concatenate %92, %5 in 2 : vector<2x8x7x512xf32>, vector<2x8x1x512xf32> -> vector<2x8x8x512xf32>
    %c0_23 = arith.constant 0 : index
    %c1_24 = arith.constant 1 : index
    %c0_25 = arith.constant 0 : index
    %c0_26 = arith.constant 0 : index
    %94 = vector.load %arg4[%c0_23, %c1_24, %c0_25, %c0_26] : memref<1x3x9x512xf32, #tpu.memory_space<vmem>>, vector<1x1x9x512xf32>
    %95 = vector.shape_cast %94 : vector<1x1x9x512xf32> to vector<9x512xf32>
    %96 = vector.extract_strided_slice %95 {offsets = [0, 0], sizes = [1, 512], strides = [1, 1]} : vector<9x512xf32> to vector<1x512xf32>
    %97 = vector.shape_cast %96 : vector<1x512xf32> to vector<512xf32>
    %98 = vector.shape_cast %97 : vector<512xf32> to vector<1x1x1x512xf32>
    %99 = vector.broadcast %98 : vector<1x1x1x512xf32> to vector<2x8x8x512xf32>
    %100 = arith.mulf %91, %99 : vector<2x8x8x512xf32>
    %101 = vector.extract_strided_slice %95 {offsets = [1, 0], sizes = [1, 512], strides = [1, 1]} : vector<9x512xf32> to vector<1x512xf32>
    %102 = vector.shape_cast %101 : vector<1x512xf32> to vector<512xf32>
    %103 = vector.shape_cast %102 : vector<512xf32> to vector<1x1x1x512xf32>
    %104 = vector.broadcast %103 : vector<1x1x1x512xf32> to vector<2x8x8x512xf32>
    %105 = arith.mulf %89, %104 : vector<2x8x8x512xf32>
    %106 = arith.addf %100, %105 : vector<2x8x8x512xf32>
    %107 = vector.extract_strided_slice %95 {offsets = [2, 0], sizes = [1, 512], strides = [1, 1]} : vector<9x512xf32> to vector<1x512xf32>
    %108 = vector.shape_cast %107 : vector<1x512xf32> to vector<512xf32>
    %109 = vector.shape_cast %108 : vector<512xf32> to vector<1x1x1x512xf32>
    %110 = vector.broadcast %109 : vector<1x1x1x512xf32> to vector<2x8x8x512xf32>
    %111 = arith.mulf %93, %110 : vector<2x8x8x512xf32>
    %112 = arith.addf %106, %111 : vector<2x8x8x512xf32>
    %113 = vector.extract_strided_slice %112 {offsets = [0, 0, 0, 0], sizes = [2, 7, 8, 512], strides = [1, 1, 1, 1]} : vector<2x8x8x512xf32> to vector<2x7x8x512xf32>
    %114 = tpu.concatenate %4, %113 in 1 : vector<2x1x8x512xf32>, vector<2x7x8x512xf32> -> vector<2x8x8x512xf32>
    %115 = vector.extract_strided_slice %95 {offsets = [3, 0], sizes = [1, 512], strides = [1, 1]} : vector<9x512xf32> to vector<1x512xf32>
    %116 = vector.shape_cast %115 : vector<1x512xf32> to vector<512xf32>
    %117 = vector.shape_cast %116 : vector<512xf32> to vector<1x1x1x512xf32>
    %118 = vector.broadcast %117 : vector<1x1x1x512xf32> to vector<2x8x8x512xf32>
    %119 = arith.mulf %91, %118 : vector<2x8x8x512xf32>
    %120 = vector.extract_strided_slice %95 {offsets = [4, 0], sizes = [1, 512], strides = [1, 1]} : vector<9x512xf32> to vector<1x512xf32>
    %121 = vector.shape_cast %120 : vector<1x512xf32> to vector<512xf32>
    %122 = vector.shape_cast %121 : vector<512xf32> to vector<1x1x1x512xf32>
    %123 = vector.broadcast %122 : vector<1x1x1x512xf32> to vector<2x8x8x512xf32>
    %124 = arith.mulf %89, %123 : vector<2x8x8x512xf32>
    %125 = arith.addf %119, %124 : vector<2x8x8x512xf32>
    %126 = vector.extract_strided_slice %95 {offsets = [5, 0], sizes = [1, 512], strides = [1, 1]} : vector<9x512xf32> to vector<1x512xf32>
    %127 = vector.shape_cast %126 : vector<1x512xf32> to vector<512xf32>
    %128 = vector.shape_cast %127 : vector<512xf32> to vector<1x1x1x512xf32>
    %129 = vector.broadcast %128 : vector<1x1x1x512xf32> to vector<2x8x8x512xf32>
    %130 = arith.mulf %93, %129 : vector<2x8x8x512xf32>
    %131 = arith.addf %125, %130 : vector<2x8x8x512xf32>
    %132 = arith.addf %114, %131 : vector<2x8x8x512xf32>
    %133 = vector.extract_strided_slice %95 {offsets = [6, 0], sizes = [1, 512], strides = [1, 1]} : vector<9x512xf32> to vector<1x512xf32>
    %134 = vector.shape_cast %133 : vector<1x512xf32> to vector<512xf32>
    %135 = vector.shape_cast %134 : vector<512xf32> to vector<1x1x1x512xf32>
    %136 = vector.broadcast %135 : vector<1x1x1x512xf32> to vector<2x8x8x512xf32>
    %137 = arith.mulf %91, %136 : vector<2x8x8x512xf32>
    %138 = vector.extract_strided_slice %95 {offsets = [7, 0], sizes = [1, 512], strides = [1, 1]} : vector<9x512xf32> to vector<1x512xf32>
    %139 = vector.shape_cast %138 : vector<1x512xf32> to vector<512xf32>
    %140 = vector.shape_cast %139 : vector<512xf32> to vector<1x1x1x512xf32>
    %141 = vector.broadcast %140 : vector<1x1x1x512xf32> to vector<2x8x8x512xf32>
    %142 = arith.mulf %89, %141 : vector<2x8x8x512xf32>
    %143 = arith.addf %137, %142 : vector<2x8x8x512xf32>
    %144 = vector.extract_strided_slice %95 {offsets = [8, 0], sizes = [1, 512], strides = [1, 1]} : vector<9x512xf32> to vector<1x512xf32>
    %145 = vector.shape_cast %144 : vector<1x512xf32> to vector<512xf32>
    %146 = vector.shape_cast %145 : vector<512xf32> to vector<1x1x1x512xf32>
    %147 = vector.broadcast %146 : vector<1x1x1x512xf32> to vector<2x8x8x512xf32>
    %148 = arith.mulf %93, %147 : vector<2x8x8x512xf32>
    %149 = arith.addf %143, %148 : vector<2x8x8x512xf32>
    %150 = vector.extract_strided_slice %149 {offsets = [0, 1, 0, 0], sizes = [2, 7, 8, 512], strides = [1, 1, 1, 1]} : vector<2x8x8x512xf32> to vector<2x7x8x512xf32>
    %151 = tpu.concatenate %150, %4 in 1 : vector<2x7x8x512xf32>, vector<2x1x8x512xf32> -> vector<2x8x8x512xf32>
    %152 = arith.addf %132, %151 : vector<2x8x8x512xf32>
    %c0_27 = arith.constant 0 : index
    %c1_28 = arith.constant 1 : index
    %c0_29 = arith.constant 0 : index
    %153 = vector.load %arg5[%c0_27, %c1_28, %c0_29] : memref<1x3x512xf32, #tpu.memory_space<vmem>>, vector<1x1x512xf32>
    %154 = vector.shape_cast %153 : vector<1x1x512xf32> to vector<512xf32>
    %155 = vector.shape_cast %154 : vector<512xf32> to vector<1x1x1x512xf32>
    %156 = vector.broadcast %155 : vector<1x1x1x512xf32> to vector<2x8x8x512xf32>
    %157 = arith.addf %152, %156 : vector<2x8x8x512xf32>
    %cst_30 = arith.constant 0.000000e+00 : f32
    %158 = vector.broadcast %cst_30 : f32 to vector<2x8x8x512xf32>
    %159 = arith.maximumf %157, %158 : vector<2x8x8x512xf32>
    %160 = vector.shape_cast %159 : vector<2x8x8x512xf32> to vector<128x512xf32>
    %161 = arith.truncf %160 : vector<128x512xf32> to vector<128x512xbf16>
    %c0_31 = arith.constant 0 : index
    %c2 = arith.constant 2 : index
    %c0_32 = arith.constant 0 : index
    %c0_33 = arith.constant 0 : index
    %162 = vector.load %arg3[%c0_31, %c2, %c0_32, %c0_33] : memref<1x3x512x512xbf16, #tpu.memory_space<vmem>>, vector<1x1x512x512xbf16>
    %163 = vector.shape_cast %162 : vector<1x1x512x512xbf16> to vector<512x512xbf16>
    %cst_34 = arith.constant dense<0.000000e+00> : vector<128x512xf32>
    %164 = tpu.matmul %161, %163, %cst_34 {dimension_numbers = #tpu.dot_dimension_numbers<[1], [0], [0], [1], [0, 0, 1, 1], [], []>} : vector<128x512xbf16>, vector<512x512xbf16>, vector<128x512xf32> -> vector<128x512xf32>
    %165 = vector.shape_cast %164 : vector<128x512xf32> to vector<2x8x8x512xf32>
    %166 = vector.extract_strided_slice %165 {offsets = [0, 0, 0, 0], sizes = [2, 8, 7, 512], strides = [1, 1, 1, 1]} : vector<2x8x8x512xf32> to vector<2x8x7x512xf32>
    %167 = tpu.concatenate %5, %166 in 2 : vector<2x8x1x512xf32>, vector<2x8x7x512xf32> -> vector<2x8x8x512xf32>
    %168 = vector.extract_strided_slice %165 {offsets = [0, 0, 1, 0], sizes = [2, 8, 7, 512], strides = [1, 1, 1, 1]} : vector<2x8x8x512xf32> to vector<2x8x7x512xf32>
    %169 = tpu.concatenate %168, %5 in 2 : vector<2x8x7x512xf32>, vector<2x8x1x512xf32> -> vector<2x8x8x512xf32>
    %c0_35 = arith.constant 0 : index
    %c2_36 = arith.constant 2 : index
    %c0_37 = arith.constant 0 : index
    %c0_38 = arith.constant 0 : index
    %170 = vector.load %arg4[%c0_35, %c2_36, %c0_37, %c0_38] : memref<1x3x9x512xf32, #tpu.memory_space<vmem>>, vector<1x1x9x512xf32>
    %171 = vector.shape_cast %170 : vector<1x1x9x512xf32> to vector<9x512xf32>
    %172 = vector.extract_strided_slice %171 {offsets = [0, 0], sizes = [1, 512], strides = [1, 1]} : vector<9x512xf32> to vector<1x512xf32>
    %173 = vector.shape_cast %172 : vector<1x512xf32> to vector<512xf32>
    %174 = vector.shape_cast %173 : vector<512xf32> to vector<1x1x1x512xf32>
    %175 = vector.broadcast %174 : vector<1x1x1x512xf32> to vector<2x8x8x512xf32>
    %176 = arith.mulf %167, %175 : vector<2x8x8x512xf32>
    %177 = vector.extract_strided_slice %171 {offsets = [1, 0], sizes = [1, 512], strides = [1, 1]} : vector<9x512xf32> to vector<1x512xf32>
    %178 = vector.shape_cast %177 : vector<1x512xf32> to vector<512xf32>
    %179 = vector.shape_cast %178 : vector<512xf32> to vector<1x1x1x512xf32>
    %180 = vector.broadcast %179 : vector<1x1x1x512xf32> to vector<2x8x8x512xf32>
    %181 = arith.mulf %165, %180 : vector<2x8x8x512xf32>
    %182 = arith.addf %176, %181 : vector<2x8x8x512xf32>
    %183 = vector.extract_strided_slice %171 {offsets = [2, 0], sizes = [1, 512], strides = [1, 1]} : vector<9x512xf32> to vector<1x512xf32>
    %184 = vector.shape_cast %183 : vector<1x512xf32> to vector<512xf32>
    %185 = vector.shape_cast %184 : vector<512xf32> to vector<1x1x1x512xf32>
    %186 = vector.broadcast %185 : vector<1x1x1x512xf32> to vector<2x8x8x512xf32>
    %187 = arith.mulf %169, %186 : vector<2x8x8x512xf32>
    %188 = arith.addf %182, %187 : vector<2x8x8x512xf32>
    %189 = vector.extract_strided_slice %188 {offsets = [0, 0, 0, 0], sizes = [2, 7, 8, 512], strides = [1, 1, 1, 1]} : vector<2x8x8x512xf32> to vector<2x7x8x512xf32>
    %190 = tpu.concatenate %4, %189 in 1 : vector<2x1x8x512xf32>, vector<2x7x8x512xf32> -> vector<2x8x8x512xf32>
    %191 = vector.extract_strided_slice %171 {offsets = [3, 0], sizes = [1, 512], strides = [1, 1]} : vector<9x512xf32> to vector<1x512xf32>
    %192 = vector.shape_cast %191 : vector<1x512xf32> to vector<512xf32>
    %193 = vector.shape_cast %192 : vector<512xf32> to vector<1x1x1x512xf32>
    %194 = vector.broadcast %193 : vector<1x1x1x512xf32> to vector<2x8x8x512xf32>
    %195 = arith.mulf %167, %194 : vector<2x8x8x512xf32>
    %196 = vector.extract_strided_slice %171 {offsets = [4, 0], sizes = [1, 512], strides = [1, 1]} : vector<9x512xf32> to vector<1x512xf32>
    %197 = vector.shape_cast %196 : vector<1x512xf32> to vector<512xf32>
    %198 = vector.shape_cast %197 : vector<512xf32> to vector<1x1x1x512xf32>
    %199 = vector.broadcast %198 : vector<1x1x1x512xf32> to vector<2x8x8x512xf32>
    %200 = arith.mulf %165, %199 : vector<2x8x8x512xf32>
    %201 = arith.addf %195, %200 : vector<2x8x8x512xf32>
    %202 = vector.extract_strided_slice %171 {offsets = [5, 0], sizes = [1, 512], strides = [1, 1]} : vector<9x512xf32> to vector<1x512xf32>
    %203 = vector.shape_cast %202 : vector<1x512xf32> to vector<512xf32>
    %204 = vector.shape_cast %203 : vector<512xf32> to vector<1x1x1x512xf32>
    %205 = vector.broadcast %204 : vector<1x1x1x512xf32> to vector<2x8x8x512xf32>
    %206 = arith.mulf %169, %205 : vector<2x8x8x512xf32>
    %207 = arith.addf %201, %206 : vector<2x8x8x512xf32>
    %208 = arith.addf %190, %207 : vector<2x8x8x512xf32>
    %209 = vector.extract_strided_slice %171 {offsets = [6, 0], sizes = [1, 512], strides = [1, 1]} : vector<9x512xf32> to vector<1x512xf32>
    %210 = vector.shape_cast %209 : vector<1x512xf32> to vector<512xf32>
    %211 = vector.shape_cast %210 : vector<512xf32> to vector<1x1x1x512xf32>
    %212 = vector.broadcast %211 : vector<1x1x1x512xf32> to vector<2x8x8x512xf32>
    %213 = arith.mulf %167, %212 : vector<2x8x8x512xf32>
    %214 = vector.extract_strided_slice %171 {offsets = [7, 0], sizes = [1, 512], strides = [1, 1]} : vector<9x512xf32> to vector<1x512xf32>
    %215 = vector.shape_cast %214 : vector<1x512xf32> to vector<512xf32>
    %216 = vector.shape_cast %215 : vector<512xf32> to vector<1x1x1x512xf32>
    %217 = vector.broadcast %216 : vector<1x1x1x512xf32> to vector<2x8x8x512xf32>
    %218 = arith.mulf %165, %217 : vector<2x8x8x512xf32>
    %219 = arith.addf %213, %218 : vector<2x8x8x512xf32>
    %220 = vector.extract_strided_slice %171 {offsets = [8, 0], sizes = [1, 512], strides = [1, 1]} : vector<9x512xf32> to vector<1x512xf32>
    %221 = vector.shape_cast %220 : vector<1x512xf32> to vector<512xf32>
    %222 = vector.shape_cast %221 : vector<512xf32> to vector<1x1x1x512xf32>
    %223 = vector.broadcast %222 : vector<1x1x1x512xf32> to vector<2x8x8x512xf32>
    %224 = arith.mulf %169, %223 : vector<2x8x8x512xf32>
    %225 = arith.addf %219, %224 : vector<2x8x8x512xf32>
    %226 = vector.extract_strided_slice %225 {offsets = [0, 1, 0, 0], sizes = [2, 7, 8, 512], strides = [1, 1, 1, 1]} : vector<2x8x8x512xf32> to vector<2x7x8x512xf32>
    %227 = tpu.concatenate %226, %4 in 1 : vector<2x7x8x512xf32>, vector<2x1x8x512xf32> -> vector<2x8x8x512xf32>
    %228 = arith.addf %208, %227 : vector<2x8x8x512xf32>
    %c0_39 = arith.constant 0 : index
    %c2_40 = arith.constant 2 : index
    %c0_41 = arith.constant 0 : index
    %229 = vector.load %arg5[%c0_39, %c2_40, %c0_41] : memref<1x3x512xf32, #tpu.memory_space<vmem>>, vector<1x1x512xf32>
    %230 = vector.shape_cast %229 : vector<1x1x512xf32> to vector<512xf32>
    %231 = vector.shape_cast %230 : vector<512xf32> to vector<1x1x1x512xf32>
    %232 = vector.broadcast %231 : vector<1x1x1x512xf32> to vector<2x8x8x512xf32>
    %233 = arith.addf %228, %232 : vector<2x8x8x512xf32>
    %234 = arith.addf %233, %3 : vector<2x8x8x512xf32>
    %c0_42 = arith.constant 0 : index
    %c0_43 = arith.constant 0 : index
    %c0_44 = arith.constant 0 : index
    %c0_45 = arith.constant 0 : index
    %235 = vector.load %arg6[%c0_42, %c0_43, %c0_44, %c0_45] : memref<2x8x8x512xf32, #tpu.memory_space<vmem>>, vector<2x8x8x512xf32>
    tpu.vector_store %arg6[%c0_42, %c0_43, %c0_44, %c0_45], %234 {strides = array<i32>} : memref<2x8x8x512xf32, #tpu.memory_space<vmem>>, vector<2x8x8x512xf32>,
    return
  }
  func.func @transform_0(%arg0: i32, %arg1: i32) -> (i32, i32, i32, i32) {
    %c0_i32 = arith.constant 0 : i32
    %c0_i32_0 = arith.constant 0 : i32
    %c0_i32_1 = arith.constant 0 : i32
    %c0_i32_2 = arith.constant 0 : i32
    return %arg0, %c0_i32, %c0_i32_0, %c0_i32_1 : i32, i32, i32, i32
  }
  func.func @transform_1(%arg0: i32, %arg1: i32) -> (i32, i32, i32, i32) {
    %c0_i32 = arith.constant 0 : i32
    %c0_i32_0 = arith.constant 0 : i32
    %c0_i32_1 = arith.constant 0 : i32
    %c0_i32_2 = arith.constant 0 : i32
    return %arg1, %c0_i32, %c0_i32_0, %c0_i32_1 : i32, i32, i32, i32
  }
  func.func @transform_2(%arg0: i32, %arg1: i32) -> (i32, i32, i32, i32) {
    %c0_i32 = arith.constant 0 : i32
    %c0_i32_0 = arith.constant 0 : i32
    %c0_i32_1 = arith.constant 0 : i32
    %c0_i32_2 = arith.constant 0 : i32
    return %arg1, %c0_i32, %c0_i32_0, %c0_i32_1 : i32, i32, i32, i32
  }
  func.func @transform_3(%arg0: i32, %arg1: i32) -> (i32, i32, i32) {
    %c0_i32 = arith.constant 0 : i32
    %c0_i32_0 = arith.constant 0 : i32
    %c0_i32_1 = arith.constant 0 : i32
    return %arg1, %c0_i32, %c0_i32_0 : i32, i32, i32
  }
  func.func @transform_4(%arg0: i32, %arg1: i32) -> (i32, i32, i32, i32) {
    %c0_i32 = arith.constant 0 : i32
    %c0_i32_0 = arith.constant 0 : i32
    %c0_i32_1 = arith.constant 0 : i32
    %c0_i32_2 = arith.constant 0 : i32
    return %arg0, %c0_i32, %c0_i32_0, %c0_i32_1 : i32, i32, i32, i32
  }
}

</mosaic_0001>

<llo_original>
// kernel: tpu_custom_call.1
$region0: #{tpu_custom_call.1}
  #allocation0 [shape = 'u32[]', space=smem, size = 0x4, offset = 0x4, fixed_abs, tag = 'smem constant byte address 0x4 - core index']
  #allocation1 [shape = 'u32[144,128]{1,0:T(1,128)}', space=vmem, size = 0x12000, scoped, tag = 'internal scratch']
  %s0 = inlined_call_operand.hbm [shape: f32[2,8,8,512], index: 0, kind: input, shape index: {}]
  %s1 = inlined_call_operand.hbm [shape: bf16[4,3,512,512], index: 1, kind: input, shape index: {}]
  %s2 = inlined_call_operand.vmem [shape: f32[4,3,9,512], index: 2, kind: input, shape index: {}]
  %s3 = inlined_call_operand.vmem [shape: f32[4,3,512], index: 3, kind: input, shape index: {}]
  %s4 = inlined_call_operand.hbm [shape: f32[2,8,8,512], index: 4, kind: output, shape index: {}]
  %s5 = sld [smem:[#allocation0]]
  $region61: #{tpu_custom_call.1} parent=0
    _
  %s7 = ssub.s32 1, %s5
  %s8 = scalar_select 0, %s7, %s5
  $region1: #{tpu_custom_call.1} parent=0
    #allocation2 [shape = 'u8[262144]{0}', space=vmem, size = 0x40000, scoped, tag = 'input window, operand 0, single buffered']
    #allocation3 [shape = 's32[2]{0}', space=sflag, size = 0x8, scoped, tag = 'scoped memory for tpu_custom_call.1']
    #allocation4 [shape = 's32[2]{0}', space=sflag, size = 0x8, scoped, tag = 'scoped memory for tpu_custom_call.1']
    #allocation5 [shape = 'u8[3145728]{0}', space=vmem, size = 0x300000, scoped, tag = 'input window, operand 1']
    #allocation6 [shape = 's32[2]{0}', space=sflag, size = 0x8, scoped, tag = 'scoped memory for tpu_custom_call.1']
    #allocation7 [shape = 'u8[262144]{0}', space=vmem, size = 0x40000, scoped, tag = 'output window, operand 0, single buffered']
    %9 = vsyncpa [#allocation3], 0
    %10 = vsyncpa [#allocation6], 0
    %s11 = scalar_lea.sflag [#allocation6], 1
    %12 = vsyncpa %s11, 0
    %13 = vsyncpa [#allocation4], 0
    loop: start=0, step=1, limit=6
    $region2: #{tpu_custom_call.1} parent=1 // loop_pre_header
      _
    $region3: #{tpu_custom_call.1} parent=1 // loop_header
      %s15 = sphi 0, %s19
      %p16 = scmp.ge.s32.totalorder %s15, 6
      %s22 = sphi 0, %s34
      %s23 = sphi 0, %s30
      %s24 = sphi 0, %s22
      %s25 = sphi 0, %s23
      %s26 = sphi 0, %s24
      %s27 = sphi 0, %s25
      %s37 = sphi 0, %s39
      %s40 = sphi 0, %s37
      %s41 = sphi 0, %s40
      %s57 = sphi 0, %s41
      %s63 = sphi 0, %s65
      %s66 = sphi 0, %s63
      %s67 = sphi 0, %s66
      %s83 = sphi 0, %s67
      %s89 = sphi 0, %s91
      %s92 = sphi 0, %s89
      %s93 = sphi 0, %s92
      %s109 = sphi 0, %s93
      %s115 = sphi 0, %s117
      %s118 = sphi 0, %s115
      %s119 = sphi 0, %s118
      %s135 = sphi 0, %s119
      %s141 = sphi 0, %s143
      %s144 = sphi 0, %s141
      %s145 = sphi 0, %s144
      %s161 = sphi 0, %s145
    $region4: #{tpu_custom_call.1} parent=1 // loop_header_branch
      %18 = sbr.rel (%p16) target = $region8
    $region5: #{tpu_custom_call.1} parent=1 // loop_body
      %s20 = ssub.s32 %s15, 1
      %s21 = ssub.s32 %s15, 2
      %s28 = sadd.s32 1, %s23
      %p29 = scmp.ge.s32.totalorder %s28, 4
      %s30 = scalar_select %p29, 0, %s28
      %s31 = sadd.s32 1, %s22
      %s32 = scalar_select %p29, %s31, %s22
      %p33 = scmp.ge.s32.totalorder %s32, 1
      %s34 = scalar_select %p33, 0, %s32
      %s35 = ssub.s32 %s22, %s34
      %p36 = scmp.eq.s32.totalorder %s35, 0
      %s38 = sadd.s32 %s37, 1
      %s39 = scalar_select %p36, %s37, %s38
      %p42 = pneg %p36
      %p43 = scmp.eq.s32.totalorder %s15, 3
      %p44 = por %p42, %p43
      %p45 = scmp.ne.s32.totalorder %s37, %s40
      %p46 = scmp.eq.s32.totalorder %s15, 0
      %p47 = por %p45, %p46
      %p48 = scmp.ne.s32.totalorder %s37, %s40
      %p49 = scmp.eq.s32.totalorder %s20, 3
      %p50 = por %p48, %p49
      %p51 = scmp.ne.s32.totalorder %s40, %s41
      %p52 = scmp.eq.s32.totalorder %s20, 0
      %p53 = por %p51, %p52
      %p54 = scmp.ne.s32.totalorder %s40, %s41
      %p55 = scmp.eq.s32.totalorder %s21, 3
      %p56 = por %p54, %p55
      %p58 = scmp.ne.s32.totalorder %s41, %s57
      %p59 = scmp.eq.s32.totalorder %s21, 0
      %p60 = por %p58, %p59
      %s61 = ssub.s32 %s23, %s30
      %p62 = scmp.eq.s32.totalorder %s61, 0
      %s64 = sadd.s32 %s63, 1
      %s65 = scalar_select %p62, %s63, %s64
      %p68 = pneg %p62
      %p69 = scmp.eq.s32.totalorder %s15, 3
      %p70 = por %p68, %p69
      %p71 = scmp.ne.s32.totalorder %s63, %s66
      %p72 = scmp.eq.s32.totalorder %s15, 0
      %p73 = por %p71, %p72
      %p74 = scmp.ne.s32.totalorder %s63, %s66
      %p75 = scmp.eq.s32.totalorder %s20, 3
      %p76 = por %p74, %p75
      %p77 = scmp.ne.s32.totalorder %s66, %s67
      %p78 = scmp.eq.s32.totalorder %s20, 0
      %p79 = por %p77, %p78
      %p80 = scmp.ne.s32.totalorder %s66, %s67
      %p81 = scmp.eq.s32.totalorder %s21, 3
      %p82 = por %p80, %p81
      %p84 = scmp.ne.s32.totalorder %s67, %s83
      %p85 = scmp.eq.s32.totalorder %s21, 0
      %p86 = por %p84, %p85
      %s87 = ssub.s32 %s23, %s30
      %p88 = scmp.eq.s32.totalorder %s87, 0
      %s90 = sadd.s32 %s89, 1
      %s91 = scalar_select %p88, %s89, %s90
      %p94 = pneg %p88
      %p95 = scmp.eq.s32.totalorder %s15, 3
      %p96 = por %p94, %p95
      %p97 = scmp.ne.s32.totalorder %s89, %s92
      %p98 = scmp.eq.s32.totalorder %s15, 0
      %p99 = por %p97, %p98
      %p100 = scmp.ne.s32.totalorder %s89, %s92
      %p101 = scmp.eq.s32.totalorder %s20, 3
      %p102 = por %p100, %p101
      %p103 = scmp.ne.s32.totalorder %s92, %s93
      %p104 = scmp.eq.s32.totalorder %s20, 0
      %p105 = por %p103, %p104
      %p106 = scmp.ne.s32.totalorder %s92, %s93
      %p107 = scmp.eq.s32.totalorder %s21, 3
      %p108 = por %p106, %p107
      %p110 = scmp.ne.s32.totalorder %s93, %s109
      %p111 = scmp.eq.s32.totalorder %s21, 0
      %p112 = por %p110, %p111
      %s113 = ssub.s32 %s23, %s30
      %p114 = scmp.eq.s32.totalorder %s113, 0
      %s116 = sadd.s32 %s115, 1
      %s117 = scalar_select %p114, %s115, %s116
      %p120 = pneg %p114
      %p121 = scmp.eq.s32.totalorder %s15, 3
      %p122 = por %p120, %p121
      %p123 = scmp.ne.s32.totalorder %s115, %s118
      %p124 = scmp.eq.s32.totalorder %s15, 0
      %p125 = por %p123, %p124
      %p126 = scmp.ne.s32.totalorder %s115, %s118
      %p127 = scmp.eq.s32.totalorder %s20, 3
      %p128 = por %p126, %p127
      %p129 = scmp.ne.s32.totalorder %s118, %s119
      %p130 = scmp.eq.s32.totalorder %s20, 0
      %p131 = por %p129, %p130
      %p132 = scmp.ne.s32.totalorder %s118, %s119
      %p133 = scmp.eq.s32.totalorder %s21, 3
      %p134 = por %p132, %p133
      %p136 = scmp.ne.s32.totalorder %s119, %s135
      %p137 = scmp.eq.s32.totalorder %s21, 0
      %p138 = por %p136, %p137
      %s139 = ssub.s32 %s22, %s34
      %p140 = scmp.eq.s32.totalorder %s139, 0
      %s142 = sadd.s32 %s141, 1
      %s143 = scalar_select %p140, %s141, %s142
      %p146 = pneg %p140
      %p147 = scmp.eq.s32.totalorder %s15, 3
      %p148 = por %p146, %p147
      %p149 = scmp.ne.s32.totalorder %s141, %s144
      %p150 = scmp.eq.s32.totalorder %s15, 0
      %p151 = por %p149, %p150
      %p152 = scmp.ne.s32.totalorder %s141, %s144
      %p153 = scmp.eq.s32.totalorder %s20, 3
      %p154 = por %p152, %p153
      %p155 = scmp.ne.s32.totalorder %s144, %s145
      %p156 = scmp.eq.s32.totalorder %s20, 0
      %p157 = por %p155, %p156
      %p158 = scmp.ne.s32.totalorder %s144, %s145
      %p159 = scmp.eq.s32.totalorder %s21, 3
      %p160 = por %p158, %p159
      %p162 = scmp.ne.s32.totalorder %s145, %s161
      %p163 = scmp.eq.s32.totalorder %s21, 0
      %p164 = por %p162, %p163
      %p165 = scmp.le.s32.totalorder 1, %s15
      %p166 = scmp.lt.s32.totalorder %s15, 5
      %p167 = pnand %p165, %p166
      %p168 = pneg %p167
      // Predicated region
      $region9: #{tpu_custom_call.1} parent=5 // pred_check
        _
      $region10: #{tpu_custom_call.1} parent=5 // pred_check_branch
        %170 = sbr.rel (%p167) target = $region12
      $region11: #{tpu_custom_call.1} parent=5 // pred_region
        %s171 = ssub.s32 %s15, 1
        // Predicated region
        $region13: #{tpu_custom_call.1} parent=11 // pred_check
          %p172 = pneg %p53
        $region14: #{tpu_custom_call.1} parent=11 // pred_check_branch
          %174 = sbr.rel (%p172) target = $region16
        $region15: #{tpu_custom_call.1} parent=11 // pred_region
          %s175 = smul.u32 2, %s24
          %s177 = ssub.s32 8192, 8192
          %178 = vsyncadd [#allocation3], %s177
          %s179 = smul.addr %s175, 32
          %s180 = smul.addr %s179, 128
          %s181 = scalar_lea.hbm %s0, %s180
          %s182 = sshll.u32 [#allocation2], 4
          %s183 = int_to_ptr.vmem [resolvable:$true] %s182
          %188 = dma.hbm_to_vmem [thread:$0]  %s181, 8192, %s183, [#allocation3], 512, 512, 32
        $region16: #{tpu_custom_call.1} parent=11 // pred_fallthru
          _
      $region12: #{tpu_custom_call.1} parent=5 // pred_fallthru
        _
      %p189 = scmp.lt.s32.totalorder %s15, 4
      // Predicated region
      $region17: #{tpu_custom_call.1} parent=5 // pred_check
        %p190 = pneg %p189
      $region18: #{tpu_custom_call.1} parent=5 // pred_check_branch
        %192 = sbr.rel (%p190) target = $region20
      $region19: #{tpu_custom_call.1} parent=5 // pred_region
        // Predicated region
        $region21: #{tpu_custom_call.1} parent=19 // pred_check
          %p193 = pneg %p73
        $region22: #{tpu_custom_call.1} parent=19 // pred_check_branch
          %195 = sbr.rel (%p193) target = $region24
        $region23: #{tpu_custom_call.1} parent=19 // pred_region
          %s196 = sand.u32 %s63, 1
          %s197 = scalar_lea.sflag [#allocation6], %s196
          %s198 = sand.u32 %s63, 1
          %s199 = smul.addr %s198, 3072
          %s200 = scalar_lea.vmem [#allocation5], %s199
          %s202 = ssub.s32 49152, 49152
          %203 = vsyncadd %s197, %s202
          %s204 = smul.addr %s23, 768
          %s205 = smul.addr %s204, 64
          %s206 = scalar_lea.hbm %s1, %s205
          %s207 = sshll.u32 %s200, 4
          %s208 = int_to_ptr.vmem [resolvable:$true] %s207
          %213 = dma.hbm_to_vmem [thread:$0]  %s206, 49152, %s208, %s197, 256, 256, 16
        $region24: #{tpu_custom_call.1} parent=19 // pred_fallthru
          _
        // Predicated region
        $region25: #{tpu_custom_call.1} parent=19 // pred_check
          %p214 = pneg %p99
        $region26: #{tpu_custom_call.1} parent=19 // pred_check_branch
          %216 = sbr.rel (%p214) target = $region28
        $region27: #{tpu_custom_call.1} parent=19 // pred_region
          %p217 = scmp.lt.s32.totalorder %s23, 3
          %s218 = scalar_select %p217, %s23, 3
          %s219 = smul.addr %s218, 24
          %s220 = smul.addr %s219, 8
          %s221 = scalar_lea.vmem %s2, %s220
        $region28: #{tpu_custom_call.1} parent=19 // pred_fallthru
          _
        // Predicated region
        $region29: #{tpu_custom_call.1} parent=19 // pred_check
          %p222 = pneg %p125
        $region30: #{tpu_custom_call.1} parent=19 // pred_check_branch
          %224 = sbr.rel (%p222) target = $region32
        $region31: #{tpu_custom_call.1} parent=19 // pred_region
          %p225 = scmp.lt.s32.totalorder %s23, 3
          %s226 = scalar_select %p225, %s23, 3
          %s227 = smul.addr %s226, 4
          %s228 = smul.addr %s227, 4
          %s229 = scalar_lea.vmem %s3, %s228
        $region32: #{tpu_custom_call.1} parent=19 // pred_fallthru
          _
      $region20: #{tpu_custom_call.1} parent=5 // pred_fallthru
        _
      %p230 = scmp.le.s32.totalorder 1, %s15
      %p231 = scmp.lt.s32.totalorder %s15, 5
      %p232 = pnand %p230, %p231
      %p233 = pneg %p232
      // Predicated region
      $region33: #{tpu_custom_call.1} parent=5 // pred_check
        _
      $region34: #{tpu_custom_call.1} parent=5 // pred_check_branch
        %235 = sbr.rel (%p232) target = $region36
      $region35: #{tpu_custom_call.1} parent=5 // pred_region
        %s236 = ssub.s32 %s15, 1
        // Predicated region
        $region37: #{tpu_custom_call.1} parent=35 // pred_check
          %p237 = pneg %p53
        $region38: #{tpu_custom_call.1} parent=35 // pred_check_branch
          %239 = sbr.rel (%p237) target = $region40
        $region39: #{tpu_custom_call.1} parent=35 // pred_region
          %240 = dma.done [#allocation3], 8192
        $region40: #{tpu_custom_call.1} parent=35 // pred_fallthru
          _
        %s241 = sand.u32 %s66, 1
        %s242 = scalar_lea.sflag [#allocation6], %s241
        %s243 = sand.u32 %s66, 1
        %s244 = smul.addr %s243, 3072
        %s245 = scalar_lea.vmem [#allocation5], %s244
        // Predicated region
        $region41: #{tpu_custom_call.1} parent=35 // pred_check
          %p246 = pneg %p79
        $region42: #{tpu_custom_call.1} parent=35 // pred_check_branch
          %248 = sbr.rel (%p246) target = $region44
        $region43: #{tpu_custom_call.1} parent=35 // pred_region
          %249 = dma.done %s242, 49152
        $region44: #{tpu_custom_call.1} parent=35 // pred_fallthru
          _
        %p250 = pneg %p53
        %p251 = pneg %p50
        %s252 = sand.u32 %s66, 1
        %s253 = scalar_lea.sflag [#allocation6], %s252
        %s254 = sand.u32 %s66, 1
        %s255 = smul.addr %s254, 3072
        %s256 = scalar_lea.vmem [#allocation5], %s255
        %p257 = pneg %p79
        %p258 = pneg %p76
        %p259 = scmp.lt.s32.totalorder %s25, 3
        %s260 = scalar_select %p259, %s25, 3
        %s261 = smul.addr %s260, 24
        %s262 = smul.addr %s261, 8
        %s263 = scalar_lea.vmem %s2, %s262
        %p264 = pneg %p105
        %p265 = pneg %p102
        %p266 = scmp.lt.s32.totalorder %s25, 3
        %s267 = scalar_select %p266, %s25, 3
        %s268 = smul.addr %s267, 4
        %s269 = smul.addr %s268, 4
        %s270 = scalar_lea.vmem %s3, %s269
        %p271 = pneg %p131
        %p272 = pneg %p128
        %p273 = pneg %p157
        %p274 = pneg %p154
        %s275 = smul.u32 2, %s24
        %p276 = scmp.lt.s32.totalorder %s25, 3
        %s277 = scalar_select %p276, %s25, 3
        %s278 = smul.addr %s277, 24
        %s279 = smul.addr %s278, 8
        %s280 = scalar_lea.vmem %s2, %s279
        %p281 = scmp.lt.s32.totalorder %s25, 3
        %s282 = scalar_select %p281, %s25, 3
        %s283 = smul.addr %s282, 4
        %s284 = smul.addr %s283, 4
        %s285 = scalar_lea.vmem %s3, %s284
        %s286 = smul.u32 2, %s24
        %p287 = scmp.eq.s32.totalorder %s25, 0
        // Predicated region
        $region45: #{tpu_custom_call.1} parent=35 // pred_check
          %p288 = pneg %p287
        $region46: #{tpu_custom_call.1} parent=35 // pred_check_branch
          %290 = sbr.rel (%p288) target = $region48
        $region47: #{tpu_custom_call.1} parent=35 // pred_region
          %v291 = vld [vmem:[#allocation2] sm:$0xff]
          %v292 = vld [vmem:[#allocation2 + $0x8] sm:$0xff]
          %v293 = vld [vmem:[#allocation2 + $0x10] sm:$0xff]
          %v294 = vld [vmem:[#allocation2 + $0x18] sm:$0xff]
          %v295 = vld [vmem:[#allocation2 + $0x20] sm:$0xff]
          %v296 = vld [vmem:[#allocation2 + $0x28] sm:$0xff]
          %v297 = vld [vmem:[#allocation2 + $0x30] sm:$0xff]
          %v298 = vld [vmem:[#allocation2 + $0x38] sm:$0xff]
          %v299 = vld [vmem:[#allocation2 + $0x40] sm:$0xff]
          %v300 = vld [vmem:[#allocation2 + $0x48] sm:$0xff]
          %v301 = vld [vmem:[#allocation2 + $0x50] sm:$0xff]
          %v302 = vld [vmem:[#allocation2 + $0x58] sm:$0xff]
          %v303 = vld [vmem:[#allocation2 + $0x60] sm:$0xff]
          %v304 = vld [vmem:[#allocation2 + $0x68] sm:$0xff]
          %v305 = vld [vmem:[#allocation2 + $0x70] sm:$0xff]
          %v306 = vld [vmem:[#allocation2 + $0x78] sm:$0xff]
          %v307 = vld [vmem:[#allocation2 + $0x80] sm:$0xff]
          %v308 = vld [vmem:[#allocation2 + $0x88] sm:$0xff]
          %v309 = vld [vmem:[#allocation2 + $0x90] sm:$0xff]
          %v310 = vld [vmem:[#allocation2 + $0x98] sm:$0xff]
          %v311 = vld [vmem:[#allocation2 + $0xa0] sm:$0xff]
          %v312 = vld [vmem:[#allocation2 + $0xa8] sm:$0xff]
          %v313 = vld [vmem:[#allocation2 + $0xb0] sm:$0xff]
          %v314 = vld [vmem:[#allocation2 + $0xb8] sm:$0xff]
          %v315 = vld [vmem:[#allocation2 + $0xc0] sm:$0xff]
          %v316 = vld [vmem:[#allocation2 + $0xc8] sm:$0xff]
          %v317 = vld [vmem:[#allocation2 + $0xd0] sm:$0xff]
          %v318 = vld [vmem:[#allocation2 + $0xd8] sm:$0xff]
          %v319 = vld [vmem:[#allocation2 + $0xe0] sm:$0xff]
          %v320 = vld [vmem:[#allocation2 + $0xe8] sm:$0xff]
          %v321 = vld [vmem:[#allocation2 + $0xf0] sm:$0xff]
          %v322 = vld [vmem:[#allocation2 + $0xf8] sm:$0xff]
          %v323 = vld [vmem:[#allocation2 + $0x100] sm:$0xff]
          %v324 = vld [vmem:[#allocation2 + $0x108] sm:$0xff]
          %v325 = vld [vmem:[#allocation2 + $0x110] sm:$0xff]
          %v326 = vld [vmem:[#allocation2 + $0x118] sm:$0xff]
          %v327 = vld [vmem:[#allocation2 + $0x120] sm:$0xff]
          %v328 = vld [vmem:[#allocation2 + $0x128] sm:$0xff]
          %v329 = vld [vmem:[#allocation2 + $0x130] sm:$0xff]
          %v330 = vld [vmem:[#allocation2 + $0x138] sm:$0xff]
          %v331 = vld [vmem:[#allocation2 + $0x140] sm:$0xff]
          %v332 = vld [vmem:[#allocation2 + $0x148] sm:$0xff]
          %v333 = vld [vmem:[#allocation2 + $0x150] sm:$0xff]
          %v334 = vld [vmem:[#allocation2 + $0x158] sm:$0xff]
          %v335 = vld [vmem:[#allocation2 + $0x160] sm:$0xff]
          %v336 = vld [vmem:[#allocation2 + $0x168] sm:$0xff]
          %v337 = vld [vmem:[#allocation2 + $0x170] sm:$0xff]
          %v338 = vld [vmem:[#allocation2 + $0x178] sm:$0xff]
          %v339 = vld [vmem:[#allocation2 + $0x180] sm:$0xff]
          %v340 = vld [vmem:[#allocation2 + $0x188] sm:$0xff]
          %v341 = vld [vmem:[#allocation2 + $0x190] sm:$0xff]
          %v342 = vld [vmem:[#allocation2 + $0x198] sm:$0xff]
          %v343 = vld [vmem:[#allocation2 + $0x1a0] sm:$0xff]
          %v344 = vld [vmem:[#allocation2 + $0x1a8] sm:$0xff]
          %v345 = vld [vmem:[#allocation2 + $0x1b0] sm:$0xff]
          %v346 = vld [vmem:[#allocation2 + $0x1b8] sm:$0xff]
          %v347 = vld [vmem:[#allocation2 + $0x1c0] sm:$0xff]
          %v348 = vld [vmem:[#allocation2 + $0x1c8] sm:$0xff]
          %v349 = vld [vmem:[#allocation2 + $0x1d0] sm:$0xff]
          %v350 = vld [vmem:[#allocation2 + $0x1d8] sm:$0xff]
          %v351 = vld [vmem:[#allocation2 + $0x1e0] sm:$0xff]
          %v352 = vld [vmem:[#allocation2 + $0x1e8] sm:$0xff]
          %v353 = vld [vmem:[#allocation2 + $0x1f0] sm:$0xff]
          %v354 = vld [vmem:[#allocation2 + $0x1f8] sm:$0xff]
          %355 = vst [vmem:[#allocation7] sm:$0xff] %v291
          %356 = vst [vmem:[#allocation7 + $0x8] sm:$0xff] %v292
          %357 = vst [vmem:[#allocation7 + $0x10] sm:$0xff] %v293
          %358 = vst [vmem:[#allocation7 + $0x18] sm:$0xff] %v294
          %359 = vst [vmem:[#allocation7 + $0x20] sm:$0xff] %v295
          %360 = vst [vmem:[#allocation7 + $0x28] sm:$0xff] %v296
          %361 = vst [vmem:[#allocation7 + $0x30] sm:$0xff] %v297
          %362 = vst [vmem:[#allocation7 + $0x38] sm:$0xff] %v298
          %363 = vst [vmem:[#allocation7 + $0x40] sm:$0xff] %v299
          %364 = vst [vmem:[#allocation7 + $0x48] sm:$0xff] %v300
          %365 = vst [vmem:[#allocation7 + $0x50] sm:$0xff] %v301
          %366 = vst [vmem:[#allocation7 + $0x58] sm:$0xff] %v302
          %367 = vst [vmem:[#allocation7 + $0x60] sm:$0xff] %v303
          %368 = vst [vmem:[#allocation7 + $0x68] sm:$0xff] %v304
          %369 = vst [vmem:[#allocation7 + $0x70] sm:$0xff] %v305
          %370 = vst [vmem:[#allocation7 + $0x78] sm:$0xff] %v306
          %371 = vst [vmem:[#allocation7 + $0x80] sm:$0xff] %v307
          %372 = vst [vmem:[#allocation7 + $0x88] sm:$0xff] %v308
          %373 = vst [vmem:[#allocation7 + $0x90] sm:$0xff] %v309
          %374 = vst [vmem:[#allocation7 + $0x98] sm:$0xff] %v310
          %375 = vst [vmem:[#allocation7 + $0xa0] sm:$0xff] %v311
          %376 = vst [vmem:[#allocation7 + $0xa8] sm:$0xff] %v312
          %377 = vst [vmem:[#allocation7 + $0xb0] sm:$0xff] %v313
          %378 = vst [vmem:[#allocation7 + $0xb8] sm:$0xff] %v314
          %379 = vst [vmem:[#allocation7 + $0xc0] sm:$0xff] %v315
          %380 = vst [vmem:[#allocation7 + $0xc8] sm:$0xff] %v316
          %381 = vst [vmem:[#allocation7 + $0xd0] sm:$0xff] %v317
          %382 = vst [vmem:[#allocation7 + $0xd8] sm:$0xff] %v318
          %383 = vst [vmem:[#allocation7 + $0xe0] sm:$0xff] %v319
          %384 = vst [vmem:[#allocation7 + $0xe8] sm:$0xff] %v320
          %385 = vst [vmem:[#allocation7 + $0xf0] sm:$0xff] %v321
          %386 = vst [vmem:[#allocation7 + $0xf8] sm:$0xff] %v322
          %387 = vst [vmem:[#allocation7 + $0x100] sm:$0xff] %v323
          %388 = vst [vmem:[#allocation7 + $0x108] sm:$0xff] %v324
          %389 = vst [vmem:[#allocation7 + $0x110] sm:$0xff] %v325
          %390 = vst [vmem:[#allocation7 + $0x118] sm:$0xff] %v326
          %391 = vst [vmem:[#allocation7 + $0x120] sm:$0xff] %v327
          %392 = vst [vmem:[#allocation7 + $0x128] sm:$0xff] %v328
          %393 = vst [vmem:[#allocation7 + $0x130] sm:$0xff] %v329
          %394 = vst [vmem:[#allocation7 + $0x138] sm:$0xff] %v330
          %395 = vst [vmem:[#allocation7 + $0x140] sm:$0xff] %v331
          %396 = vst [vmem:[#allocation7 + $0x148] sm:$0xff] %v332
          %397 = vst [vmem:[#allocation7 + $0x150] sm:$0xff] %v333
          %398 = vst [vmem:[#allocation7 + $0x158] sm:$0xff] %v334
          %399 = vst [vmem:[#allocation7 + $0x160] sm:$0xff] %v335
          %400 = vst [vmem:[#allocation7 + $0x168] sm:$0xff] %v336
          %401 = vst [vmem:[#allocation7 + $0x170] sm:$0xff] %v337
          %402 = vst [vmem:[#allocation7 + $0x178] sm:$0xff] %v338
          %403 = vst [vmem:[#allocation7 + $0x180] sm:$0xff] %v339
          %404 = vst [vmem:[#allocation7 + $0x188] sm:$0xff] %v340
          %405 = vst [vmem:[#allocation7 + $0x190] sm:$0xff] %v341
          %406 = vst [vmem:[#allocation7 + $0x198] sm:$0xff] %v342
          %407 = vst [vmem:[#allocation7 + $0x1a0] sm:$0xff] %v343
          %408 = vst [vmem:[#allocation7 + $0x1a8] sm:$0xff] %v344
          %409 = vst [vmem:[#allocation7 + $0x1b0] sm:$0xff] %v345
          %410 = vst [vmem:[#allocation7 + $0x1b8] sm:$0xff] %v346
          %411 = vst [vmem:[#allocation7 + $0x1c0] sm:$0xff] %v347
          %412 = vst [vmem:[#allocation7 + $0x1c8] sm:$0xff] %v348
          %413 = vst [vmem:[#allocation7 + $0x1d0] sm:$0xff] %v349
          %414 = vst [vmem:[#allocation7 + $0x1d8] sm:$0xff] %v350
          %415 = vst [vmem:[#allocation7 + $0x1e0] sm:$0xff] %v351
          %416 = vst [vmem:[#allocation7 + $0x1e8] sm:$0xff] %v352
          %417 = vst [vmem:[#allocation7 + $0x1f0] sm:$0xff] %v353
          %418 = vst [vmem:[#allocation7 + $0x1f8] sm:$0xff] %v354
        $region48: #{tpu_custom_call.1} parent=35 // pred_fallthru
          _
        %v419 = vld [vmem:[#allocation7] sm:$0xff]
        %v420 = vld [vmem:[#allocation7 + $0x8] sm:$0xff]
        %v421 = vld [vmem:[#allocation7 + $0x10] sm:$0xff]
        %v422 = vld [vmem:[#allocation7 + $0x18] sm:$0xff]
        %v423 = vld [vmem:[#allocation7 + $0x20] sm:$0xff]
        %v424 = vld [vmem:[#allocation7 + $0x28] sm:$0xff]
        %v425 = vld [vmem:[#allocation7 + $0x30] sm:$0xff]
        %v426 = vld [vmem:[#allocation7 + $0x38] sm:$0xff]
        %v427 = vld [vmem:[#allocation7 + $0x40] sm:$0xff]
        %v428 = vld [vmem:[#allocation7 + $0x48] sm:$0xff]
        %v429 = vld [vmem:[#allocation7 + $0x50] sm:$0xff]
        %v430 = vld [vmem:[#allocation7 + $0x58] sm:$0xff]
        %v431 = vld [vmem:[#allocation7 + $0x60] sm:$0xff]
        %v432 = vld [vmem:[#allocation7 + $0x68] sm:$0xff]
        %v433 = vld [vmem:[#allocation7 + $0x70] sm:$0xff]
        %v434 = vld [vmem:[#allocation7 + $0x78] sm:$0xff]
        %v435 = vld [vmem:[#allocation7 + $0x80] sm:$0xff]
        %v436 = vld [vmem:[#allocation7 + $0x88] sm:$0xff]
        %v437 = vld [vmem:[#allocation7 + $0x90] sm:$0xff]
        %v438 = vld [vmem:[#allocation7 + $0x98] sm:$0xff]
        %v439 = vld [vmem:[#allocation7 + $0xa0] sm:$0xff]
        %v440 = vld [vmem:[#allocation7 + $0xa8] sm:$0xff]
        %v441 = vld [vmem:[#allocation7 + $0xb0] sm:$0xff]
        %v442 = vld [vmem:[#allocation7 + $0xb8] sm:$0xff]
        %v443 = vld [vmem:[#allocation7 + $0xc0] sm:$0xff]
        %v444 = vld [vmem:[#allocation7 + $0xc8] sm:$0xff]
        %v445 = vld [vmem:[#allocation7 + $0xd0] sm:$0xff]
        %v446 = vld [vmem:[#allocation7 + $0xd8] sm:$0xff]
        %v447 = vld [vmem:[#allocation7 + $0xe0] sm:$0xff]
        %v448 = vld [vmem:[#allocation7 + $0xe8] sm:$0xff]
        %v449 = vld [vmem:[#allocation7 + $0xf0] sm:$0xff]
        %v450 = vld [vmem:[#allocation7 + $0xf8] sm:$0xff]
        %v451 = vld [vmem:[#allocation7 + $0x100] sm:$0xff]
        %v452 = vld [vmem:[#allocation7 + $0x108] sm:$0xff]
        %v453 = vld [vmem:[#allocation7 + $0x110] sm:$0xff]
        %v454 = vld [vmem:[#allocation7 + $0x118] sm:$0xff]
        %v455 = vld [vmem:[#allocation7 + $0x120] sm:$0xff]
        %v456 = vld [vmem:[#allocation7 + $0x128] sm:$0xff]
        %v457 = vld [vmem:[#allocation7 + $0x130] sm:$0xff]
        %v458 = vld [vmem:[#allocation7 + $0x138] sm:$0xff]
        %v459 = vld [vmem:[#allocation7 + $0x140] sm:$0xff]
        %v460 = vld [vmem:[#allocation7 + $0x148] sm:$0xff]
        %v461 = vld [vmem:[#allocation7 + $0x150] sm:$0xff]
        %v462 = vld [vmem:[#allocation7 + $0x158] sm:$0xff]
        %v463 = vld [vmem:[#allocation7 + $0x160] sm:$0xff]
        %v464 = vld [vmem:[#allocation7 + $0x168] sm:$0xff]
        %v465 = vld [vmem:[#allocation7 + $0x170] sm:$0xff]
        %v466 = vld [vmem:[#allocation7 + $0x178] sm:$0xff]
        %v467 = vld [vmem:[#allocation7 + $0x180] sm:$0xff]
        %v468 = vld [vmem:[#allocation7 + $0x188] sm:$0xff]
        %v469 = vld [vmem:[#allocation7 + $0x190] sm:$0xff]
        %v470 = vld [vmem:[#allocation7 + $0x198] sm:$0xff]
        %v471 = vld [vmem:[#allocation7 + $0x1a0] sm:$0xff]
        %v472 = vld [vmem:[#allocation7 + $0x1a8] sm:$0xff]
        %v473 = vld [vmem:[#allocation7 + $0x1b0] sm:$0xff]
        %v474 = vld [vmem:[#allocation7 + $0x1b8] sm:$0xff]
        %v475 = vld [vmem:[#allocation7 + $0x1c0] sm:$0xff]
        %v476 = vld [vmem:[#allocation7 + $0x1c8] sm:$0xff]
        %v477 = vld [vmem:[#allocation7 + $0x1d0] sm:$0xff]
        %v478 = vld [vmem:[#allocation7 + $0x1d8] sm:$0xff]
        %v479 = vld [vmem:[#allocation7 + $0x1e0] sm:$0xff]
        %v480 = vld [vmem:[#allocation7 + $0x1e8] sm:$0xff]
        %v481 = vld [vmem:[#allocation7 + $0x1f0] sm:$0xff]
        %v482 = vld [vmem:[#allocation7 + $0x1f8] sm:$0xff]
        %v483 = vmax.f32 %v419, 0.0
        %v484 = vmax.f32 %v420, 0.0
        %v485 = vmax.f32 %v421, 0.0
        %v486 = vmax.f32 %v422, 0.0
        %v487 = vmax.f32 %v423, 0.0
        %v488 = vmax.f32 %v424, 0.0
        %v489 = vmax.f32 %v425, 0.0
        %v490 = vmax.f32 %v426, 0.0
        %v491 = vmax.f32 %v427, 0.0
        %v492 = vmax.f32 %v428, 0.0
        %v493 = vmax.f32 %v429, 0.0
        %v494 = vmax.f32 %v430, 0.0
        %v495 = vmax.f32 %v431, 0.0
        %v496 = vmax.f32 %v432, 0.0
        %v497 = vmax.f32 %v433, 0.0
        %v498 = vmax.f32 %v434, 0.0
        %v499 = vmax.f32 %v435, 0.0
        %v500 = vmax.f32 %v436, 0.0
        %v501 = vmax.f32 %v437, 0.0
        %v502 = vmax.f32 %v438, 0.0
        %v503 = vmax.f32 %v439, 0.0
        %v504 = vmax.f32 %v440, 0.0
        %v505 = vmax.f32 %v441, 0.0
        %v506 = vmax.f32 %v442, 0.0
        %v507 = vmax.f32 %v443, 0.0
        %v508 = vmax.f32 %v444, 0.0
        %v509 = vmax.f32 %v445, 0.0
        %v510 = vmax.f32 %v446, 0.0
        %v511 = vmax.f32 %v447, 0.0
        %v512 = vmax.f32 %v448, 0.0
        %v513 = vmax.f32 %v449, 0.0
        %v514 = vmax.f32 %v450, 0.0
        %v515 = vmax.f32 %v451, 0.0
        %v516 = vmax.f32 %v452, 0.0
        %v517 = vmax.f32 %v453, 0.0
        %v518 = vmax.f32 %v454, 0.0
        %v519 = vmax.f32 %v455, 0.0
        %v520 = vmax.f32 %v456, 0.0
        %v521 = vmax.f32 %v457, 0.0
        %v522 = vmax.f32 %v458, 0.0
        %v523 = vmax.f32 %v459, 0.0
        %v524 = vmax.f32 %v460, 0.0
        %v525 = vmax.f32 %v461, 0.0
        %v526 = vmax.f32 %v462, 0.0
        %v527 = vmax.f32 %v463, 0.0
        %v528 = vmax.f32 %v464, 0.0
        %v529 = vmax.f32 %v465, 0.0
        %v530 = vmax.f32 %v466, 0.0
        %v531 = vmax.f32 %v467, 0.0
        %v532 = vmax.f32 %v468, 0.0
        %v533 = vmax.f32 %v469, 0.0
        %v534 = vmax.f32 %v470, 0.0
        %v535 = vmax.f32 %v471, 0.0
        %v536 = vmax.f32 %v472, 0.0
        %v537 = vmax.f32 %v473, 0.0
        %v538 = vmax.f32 %v474, 0.0
        %v539 = vmax.f32 %v475, 0.0
        %v540 = vmax.f32 %v476, 0.0
        %v541 = vmax.f32 %v477, 0.0
        %v542 = vmax.f32 %v478, 0.0
        %v543 = vmax.f32 %v479, 0.0
        %v544 = vmax.f32 %v480, 0.0
        %v545 = vmax.f32 %v481, 0.0
        %v546 = vmax.f32 %v482, 0.0
        %v547 = vpack.c.bf16 %v487, %v483
        %v548 = vpack.c.bf16 %v488, %v484
        %v549 = vpack.c.bf16 %v489, %v485
        %v550 = vpack.c.bf16 %v490, %v486
        %v551 = vpack.c.bf16 %v495, %v491
        %v552 = vpack.c.bf16 %v496, %v492
        %v553 = vpack.c.bf16 %v497, %v493
        %v554 = vpack.c.bf16 %v498, %v494
        %v555 = vpack.c.bf16 %v503, %v499
        %v556 = vpack.c.bf16 %v504, %v500
        %v557 = vpack.c.bf16 %v505, %v501
        %v558 = vpack.c.bf16 %v506, %v502
        %v559 = vpack.c.bf16 %v511, %v507
        %v560 = vpack.c.bf16 %v512, %v508
        %v561 = vpack.c.bf16 %v513, %v509
        %v562 = vpack.c.bf16 %v514, %v510
        %v563 = vpack.c.bf16 %v519, %v515
        %v564 = vpack.c.bf16 %v520, %v516
        %v565 = vpack.c.bf16 %v521, %v517
        %v566 = vpack.c.bf16 %v522, %v518
        %v567 = vpack.c.bf16 %v527, %v523
        %v568 = vpack.c.bf16 %v528, %v524
        %v569 = vpack.c.bf16 %v529, %v525
        %v570 = vpack.c.bf16 %v530, %v526
        %v571 = vpack.c.bf16 %v535, %v531
        %v572 = vpack.c.bf16 %v536, %v532
        %v573 = vpack.c.bf16 %v537, %v533
        %v574 = vpack.c.bf16 %v538, %v534
        %v575 = vpack.c.bf16 %v543, %v539
        %v576 = vpack.c.bf16 %v544, %v540
        %v577 = vpack.c.bf16 %v545, %v541
        %v578 = vpack.c.bf16 %v546, %v542
        %v579 = vld [vmem:[%s245] sm:$0xff]
        %v580 = vld [vmem:[%s245 + $0x8] sm:$0xff]
        %v581 = vld [vmem:[%s245 + $0x10] sm:$0xff]
        %v582 = vld [vmem:[%s245 + $0x18] sm:$0xff]
        %v583 = vld [vmem:[%s245 + $0x20] sm:$0xff]
        %v584 = vld [vmem:[%s245 + $0x28] sm:$0xff]
        %v585 = vld [vmem:[%s245 + $0x30] sm:$0xff]
        %v586 = vld [vmem:[%s245 + $0x38] sm:$0xff]
        %v587 = vld [vmem:[%s245 + $0x40] sm:$0xff]
        %v588 = vld [vmem:[%s245 + $0x48] sm:$0xff]
        %v589 = vld [vmem:[%s245 + $0x50] sm:$0xff]
        %v590 = vld [vmem:[%s245 + $0x58] sm:$0xff]
        %v591 = vld [vmem:[%s245 + $0x60] sm:$0xff]
        %v592 = vld [vmem:[%s245 + $0x68] sm:$0xff]
        %v593 = vld [vmem:[%s245 + $0x70] sm:$0xff]
        %v594 = vld [vmem:[%s245 + $0x78] sm:$0xff]
        %v595 = vld [vmem:[%s245 + $0x80] sm:$0xff]
        %v596 = vld [vmem:[%s245 + $0x88] sm:$0xff]
        %v597 = vld [vmem:[%s245 + $0x90] sm:$0xff]
        %v598 = vld [vmem:[%s245 + $0x98] sm:$0xff]
        %v599 = vld [vmem:[%s245 + $0xa0] sm:$0xff]
        %v600 = vld [vmem:[%s245 + $0xa8] sm:$0xff]
        %v601 = vld [vmem:[%s245 + $0xb0] sm:$0xff]
        %v602 = vld [vmem:[%s245 + $0xb8] sm:$0xff]
        %v603 = vld [vmem:[%s245 + $0xc0] sm:$0xff]
        %v604 = vld [vmem:[%s245 + $0xc8] sm:$0xff]
        %v605 = vld [vmem:[%s245 + $0xd0] sm:$0xff]
        %v606 = vld [vmem:[%s245 + $0xd8] sm:$0xff]
        %v607 = vld [vmem:[%s245 + $0xe0] sm:$0xff]
        %v608 = vld [vmem:[%s245 + $0xe8] sm:$0xff]
        %v609 = vld [vmem:[%s245 + $0xf0] sm:$0xff]
        %v610 = vld [vmem:[%s245 + $0xf8] sm:$0xff]
        %v611 = vld [vmem:[%s245 + $0x100] sm:$0xff]
        %v612 = vld [vmem:[%s245 + $0x108] sm:$0xff]
        %v613 = vld [vmem:[%s245 + $0x110] sm:$0xff]
        %v614 = vld [vmem:[%s245 + $0x118] sm:$0xff]
        %v615 = vld [vmem:[%s245 + $0x120] sm:$0xff]
        %v616 = vld [vmem:[%s245 + $0x128] sm:$0xff]
        %v617 = vld [vmem:[%s245 + $0x130] sm:$0xff]
        %v618 = vld [vmem:[%s245 + $0x138] sm:$0xff]
        %v619 = vld [vmem:[%s245 + $0x140] sm:$0xff]
        %v620 = vld [vmem:[%s245 + $0x148] sm:$0xff]
        %v621 = vld [vmem:[%s245 + $0x150] sm:$0xff]
        %v622 = vld [vmem:[%s245 + $0x158] sm:$0xff]
        %v623 = vld [vmem:[%s245 + $0x160] sm:$0xff]
        %v624 = vld [vmem:[%s245 + $0x168] sm:$0xff]
        %v625 = vld [vmem:[%s245 + $0x170] sm:$0xff]
        %v626 = vld [vmem:[%s245 + $0x178] sm:$0xff]
        %v627 = vld [vmem:[%s245 + $0x180] sm:$0xff]
        %v628 = vld [vmem:[%s245 + $0x188] sm:$0xff]
        %v629 = vld [vmem:[%s245 + $0x190] sm:$0xff]
        %v630 = vld [vmem:[%s245 + $0x198] sm:$0xff]
        %v631 = vld [vmem:[%s245 + $0x1a0] sm:$0xff]
        %v632 = vld [vmem:[%s245 + $0x1a8] sm:$0xff]
        %v633 = vld [vmem:[%s245 + $0x1b0] sm:$0xff]
        %v634 = vld [vmem:[%s245 + $0x1b8] sm:$0xff]
        %v635 = vld [vmem:[%s245 + $0x1c0] sm:$0xff]
        %v636 = vld [vmem:[%s245 + $0x1c8] sm:$0xff]
        %v637 = vld [vmem:[%s245 + $0x1d0] sm:$0xff]
        %v638 = vld [vmem:[%s245 + $0x1d8] sm:$0xff]
        %v639 = vld [vmem:[%s245 + $0x1e0] sm:$0xff]
        %v640 = vld [vmem:[%s245 + $0x1e8] sm:$0xff]
        %v641 = vld [vmem:[%s245 + $0x1f0] sm:$0xff]
        %v642 = vld [vmem:[%s245 + $0x1f8] sm:$0xff]
        %v643 = vld [vmem:[%s245 + $0x200] sm:$0xff]
        %v644 = vld [vmem:[%s245 + $0x208] sm:$0xff]
        %v645 = vld [vmem:[%s245 + $0x210] sm:$0xff]
        %v646 = vld [vmem:[%s245 + $0x218] sm:$0xff]
        %v647 = vld [vmem:[%s245 + $0x220] sm:$0xff]
        %v648 = vld [vmem:[%s245 + $0x228] sm:$0xff]
        %v649 = vld [vmem:[%s245 + $0x230] sm:$0xff]
        %v650 = vld [vmem:[%s245 + $0x238] sm:$0xff]
        %v651 = vld [vmem:[%s245 + $0x240] sm:$0xff]
        %v652 = vld [vmem:[%s245 + $0x248] sm:$0xff]
        %v653 = vld [vmem:[%s245 + $0x250] sm:$0xff]
        %v654 = vld [vmem:[%s245 + $0x258] sm:$0xff]
        %v655 = vld [vmem:[%s245 + $0x260] sm:$0xff]
        %v656 = vld [vmem:[%s245 + $0x268] sm:$0xff]
        %v657 = vld [vmem:[%s245 + $0x270] sm:$0xff]
        %v658 = vld [vmem:[%s245 + $0x278] sm:$0xff]
        %v659 = vld [vmem:[%s245 + $0x280] sm:$0xff]
        %v660 = vld [vmem:[%s245 + $0x288] sm:$0xff]
        %v661 = vld [vmem:[%s245 + $0x290] sm:$0xff]
        %v662 = vld [vmem:[%s245 + $0x298] sm:$0xff]
        %v663 = vld [vmem:[%s245 + $0x2a0] sm:$0xff]
        %v664 = vld [vmem:[%s245 + $0x2a8] sm:$0xff]
        %v665 = vld [vmem:[%s245 + $0x2b0] sm:$0xff]
        %v666 = vld [vmem:[%s245 + $0x2b8] sm:$0xff]
        %v667 = vld [vmem:[%s245 + $0x2c0] sm:$0xff]
        %v668 = vld [vmem:[%s245 + $0x2c8] sm:$0xff]
        %v669 = vld [vmem:[%s245 + $0x2d0] sm:$0xff]
        %v670 = vld [vmem:[%s245 + $0x2d8] sm:$0xff]
        %v671 = vld [vmem:[%s245 + $0x2e0] sm:$0xff]
        %v672 = vld [vmem:[%s245 + $0x2e8] sm:$0xff]
        %v673 = vld [vmem:[%s245 + $0x2f0] sm:$0xff]
        %v674 = vld [vmem:[%s245 + $0x2f8] sm:$0xff]
        %v675 = vld [vmem:[%s245 + $0x300] sm:$0xff]
        %v676 = vld [vmem:[%s245 + $0x308] sm:$0xff]
        %v677 = vld [vmem:[%s245 + $0x310] sm:$0xff]
        %v678 = vld [vmem:[%s245 + $0x318] sm:$0xff]
        %v679 = vld [vmem:[%s245 + $0x320] sm:$0xff]
        %v680 = vld [vmem:[%s245 + $0x328] sm:$0xff]
        %v681 = vld [vmem:[%s245 + $0x330] sm:$0xff]
        %v682 = vld [vmem:[%s245 + $0x338] sm:$0xff]
        %v683 = vld [vmem:[%s245 + $0x340] sm:$0xff]
        %v684 = vld [vmem:[%s245 + $0x348] sm:$0xff]
        %v685 = vld [vmem:[%s245 + $0x350] sm:$0xff]
        %v686 = vld [vmem:[%s245 + $0x358] sm:$0xff]
        %v687 = vld [vmem:[%s245 + $0x360] sm:$0xff]
        %v688 = vld [vmem:[%s245 + $0x368] sm:$0xff]
        %v689 = vld [vmem:[%s245 + $0x370] sm:$0xff]
        %v690 = vld [vmem:[%s245 + $0x378] sm:$0xff]
        %v691 = vld [vmem:[%s245 + $0x380] sm:$0xff]
        %v692 = vld [vmem:[%s245 + $0x388] sm:$0xff]
        %v693 = vld [vmem:[%s245 + $0x390] sm:$0xff]
        %v694 = vld [vmem:[%s245 + $0x398] sm:$0xff]
        %v695 = vld [vmem:[%s245 + $0x3a0] sm:$0xff]
        %v696 = vld [vmem:[%s245 + $0x3a8] sm:$0xff]
        %v697 = vld [vmem:[%s245 + $0x3b0] sm:$0xff]
        %v698 = vld [vmem:[%s245 + $0x3b8] sm:$0xff]
        %v699 = vld [vmem:[%s245 + $0x3c0] sm:$0xff]
        %v700 = vld [vmem:[%s245 + $0x3c8] sm:$0xff]
        %v701 = vld [vmem:[%s245 + $0x3d0] sm:$0xff]
        %v702 = vld [vmem:[%s245 + $0x3d8] sm:$0xff]
        %v703 = vld [vmem:[%s245 + $0x3e0] sm:$0xff]
        %v704 = vld [vmem:[%s245 + $0x3e8] sm:$0xff]
        %v705 = vld [vmem:[%s245 + $0x3f0] sm:$0xff]
        %v706 = vld [vmem:[%s245 + $0x3f8] sm:$0xff]
        %v835 = vunpack.c.l.b16 %v579
        %v836 = vunpack.c.h.b16 %v579
        %v837 = vunpack.c.l.b16 %v580
        %v838 = vunpack.c.h.b16 %v580
        %v839 = vunpack.c.l.b16 %v581
        %v840 = vunpack.c.h.b16 %v581
        %v841 = vunpack.c.l.b16 %v582
        %v842 = vunpack.c.h.b16 %v582
        %v843 = vunpack.c.l.b16 %v583
        %v844 = vunpack.c.h.b16 %v583
        %v845 = vunpack.c.l.b16 %v584
        %v846 = vunpack.c.h.b16 %v584
        %v847 = vunpack.c.l.b16 %v585
        %v848 = vunpack.c.h.b16 %v585
        %v849 = vunpack.c.l.b16 %v586
        %v850 = vunpack.c.h.b16 %v586
        %v851 = vunpack.c.l.b16 %v587
        %v852 = vunpack.c.h.b16 %v587
        %v853 = vunpack.c.l.b16 %v588
        %v854 = vunpack.c.h.b16 %v588
        %v855 = vunpack.c.l.b16 %v589
        %v856 = vunpack.c.h.b16 %v589
        %v857 = vunpack.c.l.b16 %v590
        %v858 = vunpack.c.h.b16 %v590
        %v859 = vunpack.c.l.b16 %v591
        %v860 = vunpack.c.h.b16 %v591
        %v861 = vunpack.c.l.b16 %v592
        %v862 = vunpack.c.h.b16 %v592
        %v863 = vunpack.c.l.b16 %v593
        %v864 = vunpack.c.h.b16 %v593
        %v865 = vunpack.c.l.b16 %v594
        %v866 = vunpack.c.h.b16 %v594
        %v867 = vunpack.c.l.b16 %v595
        %v868 = vunpack.c.h.b16 %v595
        %v869 = vunpack.c.l.b16 %v596
        %v870 = vunpack.c.h.b16 %v596
        %v871 = vunpack.c.l.b16 %v597
        %v872 = vunpack.c.h.b16 %v597
        %v873 = vunpack.c.l.b16 %v598
        %v874 = vunpack.c.h.b16 %v598
        %v875 = vunpack.c.l.b16 %v599
        %v876 = vunpack.c.h.b16 %v599
        %v877 = vunpack.c.l.b16 %v600
        %v878 = vunpack.c.h.b16 %v600
        %v879 = vunpack.c.l.b16 %v601
        %v880 = vunpack.c.h.b16 %v601
        %v881 = vunpack.c.l.b16 %v602
        %v882 = vunpack.c.h.b16 %v602
        %v883 = vunpack.c.l.b16 %v603
        %v884 = vunpack.c.h.b16 %v603
        %v885 = vunpack.c.l.b16 %v604
        %v886 = vunpack.c.h.b16 %v604
        %v887 = vunpack.c.l.b16 %v605
        %v888 = vunpack.c.h.b16 %v605
        %v889 = vunpack.c.l.b16 %v606
        %v890 = vunpack.c.h.b16 %v606
        %v891 = vunpack.c.l.b16 %v607
        %v892 = vunpack.c.h.b16 %v607
        %v893 = vunpack.c.l.b16 %v608
        %v894 = vunpack.c.h.b16 %v608
        %v895 = vunpack.c.l.b16 %v609
        %v896 = vunpack.c.h.b16 %v609
        %v897 = vunpack.c.l.b16 %v610
        %v898 = vunpack.c.h.b16 %v610
        %v899 = vunpack.c.l.b16 %v611
        %v900 = vunpack.c.h.b16 %v611
        %v901 = vunpack.c.l.b16 %v612
        %v902 = vunpack.c.h.b16 %v612
        %v903 = vunpack.c.l.b16 %v613
        %v904 = vunpack.c.h.b16 %v613
        %v905 = vunpack.c.l.b16 %v614
        %v906 = vunpack.c.h.b16 %v614
        %v907 = vunpack.c.l.b16 %v615
        %v908 = vunpack.c.h.b16 %v615
        %v909 = vunpack.c.l.b16 %v616
        %v910 = vunpack.c.h.b16 %v616
        %v911 = vunpack.c.l.b16 %v617
        %v912 = vunpack.c.h.b16 %v617
        %v913 = vunpack.c.l.b16 %v618
        %v914 = vunpack.c.h.b16 %v618
        %v915 = vunpack.c.l.b16 %v619
        %v916 = vunpack.c.h.b16 %v619
        %v917 = vunpack.c.l.b16 %v620
        %v918 = vunpack.c.h.b16 %v620
        %v919 = vunpack.c.l.b16 %v621
        %v920 = vunpack.c.h.b16 %v621
        %v921 = vunpack.c.l.b16 %v622
        %v922 = vunpack.c.h.b16 %v622
        %v923 = vunpack.c.l.b16 %v623
        %v924 = vunpack.c.h.b16 %v623
        %v925 = vunpack.c.l.b16 %v624
        %v926 = vunpack.c.h.b16 %v624
        %v927 = vunpack.c.l.b16 %v625
        %v928 = vunpack.c.h.b16 %v625
        %v929 = vunpack.c.l.b16 %v626
        %v930 = vunpack.c.h.b16 %v626
        %v931 = vunpack.c.l.b16 %v627
        %v932 = vunpack.c.h.b16 %v627
        %v933 = vunpack.c.l.b16 %v628
        %v934 = vunpack.c.h.b16 %v628
        %v935 = vunpack.c.l.b16 %v629
        %v936 = vunpack.c.h.b16 %v629
        %v937 = vunpack.c.l.b16 %v630
        %v938 = vunpack.c.h.b16 %v630
        %v939 = vunpack.c.l.b16 %v631
        %v940 = vunpack.c.h.b16 %v631
        %v941 = vunpack.c.l.b16 %v632
        %v942 = vunpack.c.h.b16 %v632
        %v943 = vunpack.c.l.b16 %v633
        %v944 = vunpack.c.h.b16 %v633
        %v945 = vunpack.c.l.b16 %v634
        %v946 = vunpack.c.h.b16 %v634
        %v947 = vunpack.c.l.b16 %v635
        %v948 = vunpack.c.h.b16 %v635
        %v949 = vunpack.c.l.b16 %v636
        %v950 = vunpack.c.h.b16 %v636
        %v951 = vunpack.c.l.b16 %v637
        %v952 = vunpack.c.h.b16 %v637
        %v953 = vunpack.c.l.b16 %v638
        %v954 = vunpack.c.h.b16 %v638
        %v955 = vunpack.c.l.b16 %v639
        %v956 = vunpack.c.h.b16 %v639
        %v957 = vunpack.c.l.b16 %v640
        %v958 = vunpack.c.h.b16 %v640
        %v959 = vunpack.c.l.b16 %v641
        %v960 = vunpack.c.h.b16 %v641
        %v961 = vunpack.c.l.b16 %v642
        %v962 = vunpack.c.h.b16 %v642
        %v963 = vunpack.c.l.b16 %v643
        %v964 = vunpack.c.h.b16 %v643
        %v965 = vunpack.c.l.b16 %v644
        %v966 = vunpack.c.h.b16 %v644
        %v967 = vunpack.c.l.b16 %v645
        %v968 = vunpack.c.h.b16 %v645
        %v969 = vunpack.c.l.b16 %v646
        %v970 = vunpack.c.h.b16 %v646
        %v971 = vunpack.c.l.b16 %v647
        %v972 = vunpack.c.h.b16 %v647
        %v973 = vunpack.c.l.b16 %v648
        %v974 = vunpack.c.h.b16 %v648
        %v975 = vunpack.c.l.b16 %v649
        %v976 = vunpack.c.h.b16 %v649
        %v977 = vunpack.c.l.b16 %v650
        %v978 = vunpack.c.h.b16 %v650
        %v979 = vunpack.c.l.b16 %v651
        %v980 = vunpack.c.h.b16 %v651
        %v981 = vunpack.c.l.b16 %v652
        %v982 = vunpack.c.h.b16 %v652
        %v983 = vunpack.c.l.b16 %v653
        %v984 = vunpack.c.h.b16 %v653
        %v985 = vunpack.c.l.b16 %v654
        %v986 = vunpack.c.h.b16 %v654
        %v987 = vunpack.c.l.b16 %v655
        %v988 = vunpack.c.h.b16 %v655
        %v989 = vunpack.c.l.b16 %v656
        %v990 = vunpack.c.h.b16 %v656
        %v991 = vunpack.c.l.b16 %v657
        %v992 = vunpack.c.h.b16 %v657
        %v993 = vunpack.c.l.b16 %v658
        %v994 = vunpack.c.h.b16 %v658
        %v995 = vunpack.c.l.b16 %v659
        %v996 = vunpack.c.h.b16 %v659
        %v997 = vunpack.c.l.b16 %v660
        %v998 = vunpack.c.h.b16 %v660
        %v999 = vunpack.c.l.b16 %v661
        %v1000 = vunpack.c.h.b16 %v661
        %v1001 = vunpack.c.l.b16 %v662
        %v1002 = vunpack.c.h.b16 %v662
        %v1003 = vunpack.c.l.b16 %v663
        %v1004 = vunpack.c.h.b16 %v663
        %v1005 = vunpack.c.l.b16 %v664
        %v1006 = vunpack.c.h.b16 %v664
        %v1007 = vunpack.c.l.b16 %v665
        %v1008 = vunpack.c.h.b16 %v665
        %v1009 = vunpack.c.l.b16 %v666
        %v1010 = vunpack.c.h.b16 %v666
        %v1011 = vunpack.c.l.b16 %v667
        %v1012 = vunpack.c.h.b16 %v667
        %v1013 = vunpack.c.l.b16 %v668
        %v1014 = vunpack.c.h.b16 %v668
        %v1015 = vunpack.c.l.b16 %v669
        %v1016 = vunpack.c.h.b16 %v669
        %v1017 = vunpack.c.l.b16 %v670
        %v1018 = vunpack.c.h.b16 %v670
        %v1019 = vunpack.c.l.b16 %v671
        %v1020 = vunpack.c.h.b16 %v671
        %v1021 = vunpack.c.l.b16 %v672
        %v1022 = vunpack.c.h.b16 %v672
        %v1023 = vunpack.c.l.b16 %v673
        %v1024 = vunpack.c.h.b16 %v673
        %v1025 = vunpack.c.l.b16 %v674
        %v1026 = vunpack.c.h.b16 %v674
        %v1027 = vunpack.c.l.b16 %v675
        %v1028 = vunpack.c.h.b16 %v675
        %v1029 = vunpack.c.l.b16 %v676
        %v1030 = vunpack.c.h.b16 %v676
        %v1031 = vunpack.c.l.b16 %v677
        %v1032 = vunpack.c.h.b16 %v677
        %v1033 = vunpack.c.l.b16 %v678
        %v1034 = vunpack.c.h.b16 %v678
        %v1035 = vunpack.c.l.b16 %v679
        %v1036 = vunpack.c.h.b16 %v679
        %v1037 = vunpack.c.l.b16 %v680
        %v1038 = vunpack.c.h.b16 %v680
        %v1039 = vunpack.c.l.b16 %v681
        %v1040 = vunpack.c.h.b16 %v681
        %v1041 = vunpack.c.l.b16 %v682
        %v1042 = vunpack.c.h.b16 %v682
        %v1043 = vunpack.c.l.b16 %v683
        %v1044 = vunpack.c.h.b16 %v683
        %v1045 = vunpack.c.l.b16 %v684
        %v1046 = vunpack.c.h.b16 %v684
        %v1047 = vunpack.c.l.b16 %v685
        %v1048 = vunpack.c.h.b16 %v685
        %v1049 = vunpack.c.l.b16 %v686
        %v1050 = vunpack.c.h.b16 %v686
        %v1051 = vunpack.c.l.b16 %v687
        %v1052 = vunpack.c.h.b16 %v687
        %v1053 = vunpack.c.l.b16 %v688
        %v1054 = vunpack.c.h.b16 %v688
        %v1055 = vunpack.c.l.b16 %v689
        %v1056 = vunpack.c.h.b16 %v689
        %v1057 = vunpack.c.l.b16 %v690
        %v1058 = vunpack.c.h.b16 %v690
        %v1059 = vunpack.c.l.b16 %v691
        %v1060 = vunpack.c.h.b16 %v691
        %v1061 = vunpack.c.l.b16 %v692
        %v1062 = vunpack.c.h.b16 %v692
        %v1063 = vunpack.c.l.b16 %v693
        %v1064 = vunpack.c.h.b16 %v693
        %v1065 = vunpack.c.l.b16 %v694
        %v1066 = vunpack.c.h.b16 %v694
        %v1067 = vunpack.c.l.b16 %v695
        %v1068 = vunpack.c.h.b16 %v695
        %v1069 = vunpack.c.l.b16 %v696
        %v1070 = vunpack.c.h.b16 %v696
        %v1071 = vunpack.c.l.b16 %v697
        %v1072 = vunpack.c.h.b16 %v697
        %v1073 = vunpack.c.l.b16 %v698
        %v1074 = vunpack.c.h.b16 %v698
        %v1075 = vunpack.c.l.b16 %v699
        %v1076 = vunpack.c.h.b16 %v699
        %v1077 = vunpack.c.l.b16 %v700
        %v1078 = vunpack.c.h.b16 %v700
        %v1079 = vunpack.c.l.b16 %v701
        %v1080 = vunpack.c.h.b16 %v701
        %v1081 = vunpack.c.l.b16 %v702
        %v1082 = vunpack.c.h.b16 %v702
        %v1083 = vunpack.c.l.b16 %v703
        %v1084 = vunpack.c.h.b16 %v703
        %v1085 = vunpack.c.l.b16 %v704
        %v1086 = vunpack.c.h.b16 %v704
        %v1087 = vunpack.c.l.b16 %v705
        %v1088 = vunpack.c.h.b16 %v705
        %v1089 = vunpack.c.l.b16 %v706
        %v1090 = vunpack.c.h.b16 %v706
        %v1091 = vpack.c.b16 %v839, %v835
        %v1092 = vpack.c.b16 %v840, %v836
        %v1093 = vpack.c.b16 %v841, %v837
        %v1094 = vpack.c.b16 %v842, %v838
        %v1095 = vpack.c.b16 %v847, %v843
        %v1096 = vpack.c.b16 %v848, %v844
        %v1097 = vpack.c.b16 %v849, %v845
        %v1098 = vpack.c.b16 %v850, %v846
        %v1099 = vpack.c.b16 %v855, %v851
        %v1100 = vpack.c.b16 %v856, %v852
        %v1101 = vpack.c.b16 %v857, %v853
        %v1102 = vpack.c.b16 %v858, %v854
        %v1103 = vpack.c.b16 %v863, %v859
        %v1104 = vpack.c.b16 %v864, %v860
        %v1105 = vpack.c.b16 %v865, %v861
        %v1106 = vpack.c.b16 %v866, %v862
        %v1107 = vpack.c.b16 %v871, %v867
        %v1108 = vpack.c.b16 %v872, %v868
        %v1109 = vpack.c.b16 %v873, %v869
        %v1110 = vpack.c.b16 %v874, %v870
        %v1111 = vpack.c.b16 %v879, %v875
        %v1112 = vpack.c.b16 %v880, %v876
        %v1113 = vpack.c.b16 %v881, %v877
        %v1114 = vpack.c.b16 %v882, %v878
        %v1115 = vpack.c.b16 %v887, %v883
        %v1116 = vpack.c.b16 %v888, %v884
        %v1117 = vpack.c.b16 %v889, %v885
        %v1118 = vpack.c.b16 %v890, %v886
        %v1119 = vpack.c.b16 %v895, %v891
        %v1120 = vpack.c.b16 %v896, %v892
        %v1121 = vpack.c.b16 %v897, %v893
        %v1122 = vpack.c.b16 %v898, %v894
        %v1123 = vpack.c.b16 %v903, %v899
        %v1124 = vpack.c.b16 %v904, %v900
        %v1125 = vpack.c.b16 %v905, %v901
        %v1126 = vpack.c.b16 %v906, %v902
        %v1127 = vpack.c.b16 %v911, %v907
        %v1128 = vpack.c.b16 %v912, %v908
        %v1129 = vpack.c.b16 %v913, %v909
        %v1130 = vpack.c.b16 %v914, %v910
        %v1131 = vpack.c.b16 %v919, %v915
        %v1132 = vpack.c.b16 %v920, %v916
        %v1133 = vpack.c.b16 %v921, %v917
        %v1134 = vpack.c.b16 %v922, %v918
        %v1135 = vpack.c.b16 %v927, %v923
        %v1136 = vpack.c.b16 %v928, %v924
        %v1137 = vpack.c.b16 %v929, %v925
        %v1138 = vpack.c.b16 %v930, %v926
        %v1139 = vpack.c.b16 %v935, %v931
        %v1140 = vpack.c.b16 %v936, %v932
        %v1141 = vpack.c.b16 %v937, %v933
        %v1142 = vpack.c.b16 %v938, %v934
        %v1143 = vpack.c.b16 %v943, %v939
        %v1144 = vpack.c.b16 %v944, %v940
        %v1145 = vpack.c.b16 %v945, %v941
        %v1146 = vpack.c.b16 %v946, %v942
        %v1147 = vpack.c.b16 %v951, %v947
        %v1148 = vpack.c.b16 %v952, %v948
        %v1149 = vpack.c.b16 %v953, %v949
        %v1150 = vpack.c.b16 %v954, %v950
        %v1151 = vpack.c.b16 %v959, %v955
        %v1152 = vpack.c.b16 %v960, %v956
        %v1153 = vpack.c.b16 %v961, %v957
        %v1154 = vpack.c.b16 %v962, %v958
        %v1155 = vpack.c.b16 %v967, %v963
        %v1156 = vpack.c.b16 %v968, %v964
        %v1157 = vpack.c.b16 %v969, %v965
        %v1158 = vpack.c.b16 %v970, %v966
        %v1159 = vpack.c.b16 %v975, %v971
        %v1160 = vpack.c.b16 %v976, %v972
        %v1161 = vpack.c.b16 %v977, %v973
        %v1162 = vpack.c.b16 %v978, %v974
        %v1163 = vpack.c.b16 %v983, %v979
        %v1164 = vpack.c.b16 %v984, %v980
        %v1165 = vpack.c.b16 %v985, %v981
        %v1166 = vpack.c.b16 %v986, %v982
        %v1167 = vpack.c.b16 %v991, %v987
        %v1168 = vpack.c.b16 %v992, %v988
        %v1169 = vpack.c.b16 %v993, %v989
        %v1170 = vpack.c.b16 %v994, %v990
        %v1171 = vpack.c.b16 %v999, %v995
        %v1172 = vpack.c.b16 %v1000, %v996
        %v1173 = vpack.c.b16 %v1001, %v997
        %v1174 = vpack.c.b16 %v1002, %v998
        %v1175 = vpack.c.b16 %v1007, %v1003
        %v1176 = vpack.c.b16 %v1008, %v1004
        %v1177 = vpack.c.b16 %v1009, %v1005
        %v1178 = vpack.c.b16 %v1010, %v1006
        %v1179 = vpack.c.b16 %v1015, %v1011
        %v1180 = vpack.c.b16 %v1016, %v1012
        %v1181 = vpack.c.b16 %v1017, %v1013
        %v1182 = vpack.c.b16 %v1018, %v1014
        %v1183 = vpack.c.b16 %v1023, %v1019
        %v1184 = vpack.c.b16 %v1024, %v1020
        %v1185 = vpack.c.b16 %v1025, %v1021
        %v1186 = vpack.c.b16 %v1026, %v1022
        %v1187 = vpack.c.b16 %v1031, %v1027
        %v1188 = vpack.c.b16 %v1032, %v1028
        %v1189 = vpack.c.b16 %v1033, %v1029
        %v1190 = vpack.c.b16 %v1034, %v1030
        %v1191 = vpack.c.b16 %v1039, %v1035
        %v1192 = vpack.c.b16 %v1040, %v1036
        %v1193 = vpack.c.b16 %v1041, %v1037
        %v1194 = vpack.c.b16 %v1042, %v1038
        %v1195 = vpack.c.b16 %v1047, %v1043
        %v1196 = vpack.c.b16 %v1048, %v1044
        %v1197 = vpack.c.b16 %v1049, %v1045
        %v1198 = vpack.c.b16 %v1050, %v1046
        %v1199 = vpack.c.b16 %v1055, %v1051
        %v1200 = vpack.c.b16 %v1056, %v1052
        %v1201 = vpack.c.b16 %v1057, %v1053
        %v1202 = vpack.c.b16 %v1058, %v1054
        %v1203 = vpack.c.b16 %v1063, %v1059
        %v1204 = vpack.c.b16 %v1064, %v1060
        %v1205 = vpack.c.b16 %v1065, %v1061
        %v1206 = vpack.c.b16 %v1066, %v1062
        %v1207 = vpack.c.b16 %v1071, %v1067
        %v1208 = vpack.c.b16 %v1072, %v1068
        %v1209 = vpack.c.b16 %v1073, %v1069
        %v1210 = vpack.c.b16 %v1074, %v1070
        %v1211 = vpack.c.b16 %v1079, %v1075
        %v1212 = vpack.c.b16 %v1080, %v1076
        %v1213 = vpack.c.b16 %v1081, %v1077
        %v1214 = vpack.c.b16 %v1082, %v1078
        %v1215 = vpack.c.b16 %v1087, %v1083
        %v1216 = vpack.c.b16 %v1088, %v1084
        %v1217 = vpack.c.b16 %v1089, %v1085
        %v1218 = vpack.c.b16 %v1090, %v1086
        %1347 = vmatprep.subr.bf16.mxu0 %v1120
        %1348 = vmatpush1.bf16.msra.mxu0 %v1119
        %1349 = vmatprep.subr.bf16.mxu0 %v1116
        %1350 = vmatpush1.bf16.msra.mxu0 %v1115
        %1351 = vmatprep.subr.bf16.mxu0 %v1112
        %1352 = vmatpush1.bf16.msra.mxu0 %v1111
        %1353 = vmatprep.subr.bf16.mxu0 %v1108
        %1354 = vmatpush1.bf16.msra.mxu0 %v1107
        %1355 = vmatprep.subr.bf16.mxu0 %v1104
        %1356 = vmatpush1.bf16.msra.mxu0 %v1103
        %1357 = vmatprep.subr.bf16.mxu0 %v1100
        %1358 = vmatpush1.bf16.msra.mxu0 %v1099
        %1359 = vmatprep.subr.bf16.mxu0 %v1096
        %1360 = vmatpush1.bf16.msra.mxu0 %v1095
        %1361 = vmatprep.subr.bf16.mxu0 %v1092
        %1362 = vmatpush1.bf16.msra.mxu0 %v1091
        %1363 = vmatprep.subr.bf16.mxu0 %v1152
        %1364 = vmatpush2.bf16.msra.mxu0 %v1151
        %1365 = vmatprep.subr.bf16.mxu0 %v1148
        %1366 = vmatpush2.bf16.msra.mxu0 %v1147
        %1367 = vmatprep.subr.bf16.mxu0 %v1144
        %1368 = vmatpush2.bf16.msra.mxu0 %v1143
        %1369 = vmatprep.subr.bf16.mxu0 %v1140
        %1370 = vmatpush2.bf16.msra.mxu0 %v1139
        %1371 = vmatprep.subr.bf16.mxu0 %v1136
        %1372 = vmatpush2.bf16.msra.mxu0 %v1135
        %1373 = vmatprep.subr.bf16.mxu0 %v1132
        %1374 = vmatpush2.bf16.msra.mxu0 %v1131
        %1375 = vmatprep.subr.bf16.mxu0 %v1128
        %1376 = vmatpush2.bf16.msra.mxu0 %v1127
        %1377 = vmatprep.subr.bf16.mxu0 %v1124
        %1378 = vmatpush2.bf16.msra.mxu0 %v1123
        %1379 = vmatprep.mubr.bf16.mxu0 %v548
        %1380 = vmatmul.mubr.bf16.gmra.mxu0 %v547
        %v1381 = vpop.f32.mrf.mxu0
        %v1382 = vadd.f32 0.0, %v1381
        %v1383 = vpop.f32.mrf.mxu0
        %v1384 = vadd.f32 0.0, %v1383
        %v1385 = vpop.f32.mrf.mxu0
        %v1386 = vadd.f32 0.0, %v1385
        %v1387 = vpop.f32.mrf.mxu0
        %v1388 = vadd.f32 0.0, %v1387
        %1389 = vmatprep.mubr.bf16.mxu0 %v552
        %1390 = vmatmul.mubr.bf16.gmra.mxu0 %v551
        %v1391 = vpop.f32.mrf.mxu0
        %v1392 = vadd.f32 0.0, %v1391
        %v1393 = vpop.f32.mrf.mxu0
        %v1394 = vadd.f32 0.0, %v1393
        %v1395 = vpop.f32.mrf.mxu0
        %v1396 = vadd.f32 0.0, %v1395
        %v1397 = vpop.f32.mrf.mxu0
        %v1398 = vadd.f32 0.0, %v1397
        %1399 = vmatprep.mubr.bf16.mxu0 %v556
        %1400 = vmatmul.mubr.bf16.gmra.mxu0 %v555
        %v1401 = vpop.f32.mrf.mxu0
        %v1402 = vadd.f32 0.0, %v1401
        %v1403 = vpop.f32.mrf.mxu0
        %v1404 = vadd.f32 0.0, %v1403
        %v1405 = vpop.f32.mrf.mxu0
        %v1406 = vadd.f32 0.0, %v1405
        %v1407 = vpop.f32.mrf.mxu0
        %v1408 = vadd.f32 0.0, %v1407
        %1409 = vmatprep.mubr.bf16.mxu0 %v560
        %1410 = vmatmul.mubr.bf16.gmra.mxu0 %v559
        %v1411 = vpop.f32.mrf.mxu0
        %v1412 = vadd.f32 0.0, %v1411
        %v1413 = vpop.f32.mrf.mxu0
        %v1414 = vadd.f32 0.0, %v1413
        %v1415 = vpop.f32.mrf.mxu0
        %v1416 = vadd.f32 0.0, %v1415
        %v1417 = vpop.f32.mrf.mxu0
        %v1418 = vadd.f32 0.0, %v1417
        %1419 = vmatprep.mubr.bf16.mxu0 %v564
        %1420 = vmatmul.mubr.bf16.gmra.mxu0 %v563
        %v1421 = vpop.f32.mrf.mxu0
        %v1422 = vadd.f32 0.0, %v1421
        %v1423 = vpop.f32.mrf.mxu0
        %v1424 = vadd.f32 0.0, %v1423
        %v1425 = vpop.f32.mrf.mxu0
        %v1426 = vadd.f32 0.0, %v1425
        %v1427 = vpop.f32.mrf.mxu0
        %v1428 = vadd.f32 0.0, %v1427
        %1429 = vmatprep.mubr.bf16.mxu0 %v568
        %1430 = vmatmul.mubr.bf16.gmra.mxu0 %v567
        %v1431 = vpop.f32.mrf.mxu0
        %v1432 = vadd.f32 0.0, %v1431
        %v1433 = vpop.f32.mrf.mxu0
        %v1434 = vadd.f32 0.0, %v1433
        %v1435 = vpop.f32.mrf.mxu0
        %v1436 = vadd.f32 0.0, %v1435
        %v1437 = vpop.f32.mrf.mxu0
        %v1438 = vadd.f32 0.0, %v1437
        %1439 = vmatprep.mubr.bf16.mxu0 %v572
        %1440 = vmatmul.mubr.bf16.gmra.mxu0 %v571
        %v1441 = vpop.f32.mrf.mxu0
        %v1442 = vadd.f32 0.0, %v1441
        %v1443 = vpop.f32.mrf.mxu0
        %v1444 = vadd.f32 0.0, %v1443
        %v1445 = vpop.f32.mrf.mxu0
        %v1446 = vadd.f32 0.0, %v1445
        %v1447 = vpop.f32.mrf.mxu0
        %v1448 = vadd.f32 0.0, %v1447
        %1449 = vmatprep.mubr.bf16.mxu0 %v576
        %1450 = vmatmul.mubr.bf16.gmra.mxu0 %v575
        %v1451 = vpop.f32.mrf.mxu0
        %v1452 = vadd.f32 0.0, %v1451
        %v1453 = vpop.f32.mrf.mxu0
        %v1454 = vadd.f32 0.0, %v1453
        %v1455 = vpop.f32.mrf.mxu0
        %v1456 = vadd.f32 0.0, %v1455
        %v1457 = vpop.f32.mrf.mxu0
        %v1458 = vadd.f32 0.0, %v1457
        %1459 = vdwg.mxu0
        %1460 = vmatprep.subr.bf16.mxu0 %v1184
        %1461 = vmatpush1.bf16.msra.mxu0 %v1183
        %1462 = vmatprep.subr.bf16.mxu0 %v1180
        %1463 = vmatpush1.bf16.msra.mxu0 %v1179
        %1464 = vmatprep.subr.bf16.mxu0 %v1176
        %1465 = vmatpush1.bf16.msra.mxu0 %v1175
        %1466 = vmatprep.subr.bf16.mxu0 %v1172
        %1467 = vmatpush1.bf16.msra.mxu0 %v1171
        %1468 = vmatprep.subr.bf16.mxu0 %v1168
        %1469 = vmatpush1.bf16.msra.mxu0 %v1167
        %1470 = vmatprep.subr.bf16.mxu0 %v1164
        %1471 = vmatpush1.bf16.msra.mxu0 %v1163
        %1472 = vmatprep.subr.bf16.mxu0 %v1160
        %1473 = vmatpush1.bf16.msra.mxu0 %v1159
        %1474 = vmatprep.subr.bf16.mxu0 %v1156
        %1475 = vmatpush1.bf16.msra.mxu0 %v1155
        %1476 = vmatprep.subr.bf16.mxu0 %v1216
        %1477 = vmatpush2.bf16.msra.mxu0 %v1215
        %1478 = vmatprep.subr.bf16.mxu0 %v1212
        %1479 = vmatpush2.bf16.msra.mxu0 %v1211
        %1480 = vmatprep.subr.bf16.mxu0 %v1208
        %1481 = vmatpush2.bf16.msra.mxu0 %v1207
        %1482 = vmatprep.subr.bf16.mxu0 %v1204
        %1483 = vmatpush2.bf16.msra.mxu0 %v1203
        %1484 = vmatprep.subr.bf16.mxu0 %v1200
        %1485 = vmatpush2.bf16.msra.mxu0 %v1199
        %1486 = vmatprep.subr.bf16.mxu0 %v1196
        %1487 = vmatpush2.bf16.msra.mxu0 %v1195
        %1488 = vmatprep.subr.bf16.mxu0 %v1192
        %1489 = vmatpush2.bf16.msra.mxu0 %v1191
        %1490 = vmatprep.subr.bf16.mxu0 %v1188
        %1491 = vmatpush2.bf16.msra.mxu0 %v1187
        %1492 = vmatprep.mubr.bf16.mxu0 %v550
        %1493 = vmatmul.mubr.bf16.gmra.mxu0 %v549
        %v1494 = vpop.f32.mrf.mxu0
        %v1495 = vadd.f32 %v1382, %v1494
        %v1496 = vpop.f32.mrf.mxu0
        %v1497 = vadd.f32 %v1384, %v1496
        %v1498 = vpop.f32.mrf.mxu0
        %v1499 = vadd.f32 %v1386, %v1498
        %v1500 = vpop.f32.mrf.mxu0
        %v1501 = vadd.f32 %v1388, %v1500
        %1502 = vmatprep.mubr.bf16.mxu0 %v554
        %1503 = vmatmul.mubr.bf16.gmra.mxu0 %v553
        %v1504 = vpop.f32.mrf.mxu0
        %v1505 = vadd.f32 %v1392, %v1504
        %v1506 = vpop.f32.mrf.mxu0
        %v1507 = vadd.f32 %v1394, %v1506
        %v1508 = vpop.f32.mrf.mxu0
        %v1509 = vadd.f32 %v1396, %v1508
        %v1510 = vpop.f32.mrf.mxu0
        %v1511 = vadd.f32 %v1398, %v1510
        %1512 = vmatprep.mubr.bf16.mxu0 %v558
        %1513 = vmatmul.mubr.bf16.gmra.mxu0 %v557
        %v1514 = vpop.f32.mrf.mxu0
        %v1515 = vadd.f32 %v1402, %v1514
        %v1516 = vpop.f32.mrf.mxu0
        %v1517 = vadd.f32 %v1404, %v1516
        %v1518 = vpop.f32.mrf.mxu0
        %v1519 = vadd.f32 %v1406, %v1518
        %v1520 = vpop.f32.mrf.mxu0
        %v1521 = vadd.f32 %v1408, %v1520
        %1522 = vmatprep.mubr.bf16.mxu0 %v562
        %1523 = vmatmul.mubr.bf16.gmra.mxu0 %v561
        %v1524 = vpop.f32.mrf.mxu0
        %v1525 = vadd.f32 %v1412, %v1524
        %v1526 = vpop.f32.mrf.mxu0
        %v1527 = vadd.f32 %v1414, %v1526
        %v1528 = vpop.f32.mrf.mxu0
        %v1529 = vadd.f32 %v1416, %v1528
        %v1530 = vpop.f32.mrf.mxu0
        %v1531 = vadd.f32 %v1418, %v1530
        %1532 = vmatprep.mubr.bf16.mxu0 %v566
        %1533 = vmatmul.mubr.bf16.gmra.mxu0 %v565
        %v1534 = vpop.f32.mrf.mxu0
        %v1535 = vadd.f32 %v1422, %v1534
        %v1536 = vpop.f32.mrf.mxu0
        %v1537 = vadd.f32 %v1424, %v1536
        %v1538 = vpop.f32.mrf.mxu0
        %v1539 = vadd.f32 %v1426, %v1538
        %v1540 = vpop.f32.mrf.mxu0
        %v1541 = vadd.f32 %v1428, %v1540
        %1542 = vmatprep.mubr.bf16.mxu0 %v570
        %1543 = vmatmul.mubr.bf16.gmra.mxu0 %v569
        %v1544 = vpop.f32.mrf.mxu0
        %v1545 = vadd.f32 %v1432, %v1544
        %v1546 = vpop.f32.mrf.mxu0
        %v1547 = vadd.f32 %v1434, %v1546
        %v1548 = vpop.f32.mrf.mxu0
        %v1549 = vadd.f32 %v1436, %v1548
        %v1550 = vpop.f32.mrf.mxu0
        %v1551 = vadd.f32 %v1438, %v1550
        %1552 = vmatprep.mubr.bf16.mxu0 %v574
        %1553 = vmatmul.mubr.bf16.gmra.mxu0 %v573
        %v1554 = vpop.f32.mrf.mxu0
        %v1555 = vadd.f32 %v1442, %v1554
        %v1556 = vpop.f32.mrf.mxu0
        %v1557 = vadd.f32 %v1444, %v1556
        %v1558 = vpop.f32.mrf.mxu0
        %v1559 = vadd.f32 %v1446, %v1558
        %v1560 = vpop.f32.mrf.mxu0
        %v1561 = vadd.f32 %v1448, %v1560
        %1562 = vmatprep.mubr.bf16.mxu0 %v578
        %1563 = vmatmul.mubr.bf16.gmra.mxu0 %v577
        %v1564 = vpop.f32.mrf.mxu0
        %v1565 = vadd.f32 %v1452, %v1564
        %v1566 = vpop.f32.mrf.mxu0
        %v1567 = vadd.f32 %v1454, %v1566
        %v1568 = vpop.f32.mrf.mxu0
        %v1569 = vadd.f32 %v1456, %v1568
        %v1570 = vpop.f32.mrf.mxu0
        %v1571 = vadd.f32 %v1458, %v1570
        %1572 = vdwg.mxu0
        %1573 = vmatprep.subr.bf16.mxu0 %v1122
        %1574 = vmatpush1.bf16.msra.mxu0 %v1121
        %1575 = vmatprep.subr.bf16.mxu0 %v1118
        %1576 = vmatpush1.bf16.msra.mxu0 %v1117
        %1577 = vmatprep.subr.bf16.mxu0 %v1114
        %1578 = vmatpush1.bf16.msra.mxu0 %v1113
        %1579 = vmatprep.subr.bf16.mxu0 %v1110
        %1580 = vmatpush1.bf16.msra.mxu0 %v1109
        %1581 = vmatprep.subr.bf16.mxu0 %v1106
        %1582 = vmatpush1.bf16.msra.mxu0 %v1105
        %1583 = vmatprep.subr.bf16.mxu0 %v1102
        %1584 = vmatpush1.bf16.msra.mxu0 %v1101
        %1585 = vmatprep.subr.bf16.mxu0 %v1098
        %1586 = vmatpush1.bf16.msra.mxu0 %v1097
        %1587 = vmatprep.subr.bf16.mxu0 %v1094
        %1588 = vmatpush1.bf16.msra.mxu0 %v1093
        %1589 = vmatprep.subr.bf16.mxu0 %v1154
        %1590 = vmatpush2.bf16.msra.mxu0 %v1153
        %1591 = vmatprep.subr.bf16.mxu0 %v1150
        %1592 = vmatpush2.bf16.msra.mxu0 %v1149
        %1593 = vmatprep.subr.bf16.mxu0 %v1146
        %1594 = vmatpush2.bf16.msra.mxu0 %v1145
        %1595 = vmatprep.subr.bf16.mxu0 %v1142
        %1596 = vmatpush2.bf16.msra.mxu0 %v1141
        %1597 = vmatprep.subr.bf16.mxu0 %v1138
        %1598 = vmatpush2.bf16.msra.mxu0 %v1137
        %1599 = vmatprep.subr.bf16.mxu0 %v1134
        %1600 = vmatpush2.bf16.msra.mxu0 %v1133
        %1601 = vmatprep.subr.bf16.mxu0 %v1130
        %1602 = vmatpush2.bf16.msra.mxu0 %v1129
        %1603 = vmatprep.subr.bf16.mxu0 %v1126
        %1604 = vmatpush2.bf16.msra.mxu0 %v1125
        %1605 = vmatprep.mubr.bf16.mxu0 %v548
        %1606 = vmatmul.mubr.bf16.gmra.mxu0 %v547
        %v1607 = vpop.f32.mrf.mxu0
        %v1608 = vadd.f32 0.0, %v1607
        %v1609 = vpop.f32.mrf.mxu0
        %v1610 = vadd.f32 0.0, %v1609
        %v1611 = vpop.f32.mrf.mxu0
        %v1612 = vadd.f32 0.0, %v1611
        %v1613 = vpop.f32.mrf.mxu0
        %v1614 = vadd.f32 0.0, %v1613
        %1615 = vmatprep.mubr.bf16.mxu0 %v552
        %1616 = vmatmul.mubr.bf16.gmra.mxu0 %v551
        %v1617 = vpop.f32.mrf.mxu0
        %v1618 = vadd.f32 0.0, %v1617
        %v1619 = vpop.f32.mrf.mxu0
        %v1620 = vadd.f32 0.0, %v1619
        %v1621 = vpop.f32.mrf.mxu0
        %v1622 = vadd.f32 0.0, %v1621
        %v1623 = vpop.f32.mrf.mxu0
        %v1624 = vadd.f32 0.0, %v1623
        %1625 = vmatprep.mubr.bf16.mxu0 %v556
        %1626 = vmatmul.mubr.bf16.gmra.mxu0 %v555
        %v1627 = vpop.f32.mrf.mxu0
        %v1628 = vadd.f32 0.0, %v1627
        %v1629 = vpop.f32.mrf.mxu0
        %v1630 = vadd.f32 0.0, %v1629
        %v1631 = vpop.f32.mrf.mxu0
        %v1632 = vadd.f32 0.0, %v1631
        %v1633 = vpop.f32.mrf.mxu0
        %v1634 = vadd.f32 0.0, %v1633
        %1635 = vmatprep.mubr.bf16.mxu0 %v560
        %1636 = vmatmul.mubr.bf16.gmra.mxu0 %v559
        %v1637 = vpop.f32.mrf.mxu0
        %v1638 = vadd.f32 0.0, %v1637
        %v1639 = vpop.f32.mrf.mxu0
        %v1640 = vadd.f32 0.0, %v1639
        %v1641 = vpop.f32.mrf.mxu0
        %v1642 = vadd.f32 0.0, %v1641
        %v1643 = vpop.f32.mrf.mxu0
        %v1644 = vadd.f32 0.0, %v1643
        %1645 = vmatprep.mubr.bf16.mxu0 %v564
        %1646 = vmatmul.mubr.bf16.gmra.mxu0 %v563
        %v1647 = vpop.f32.mrf.mxu0
        %v1648 = vadd.f32 0.0, %v1647
        %v1649 = vpop.f32.mrf.mxu0
        %v1650 = vadd.f32 0.0, %v1649
        %v1651 = vpop.f32.mrf.mxu0
        %v1652 = vadd.f32 0.0, %v1651
        %v1653 = vpop.f32.mrf.mxu0
        %v1654 = vadd.f32 0.0, %v1653
        %1655 = vmatprep.mubr.bf16.mxu0 %v568
        %1656 = vmatmul.mubr.bf16.gmra.mxu0 %v567
        %v1657 = vpop.f32.mrf.mxu0
        %v1658 = vadd.f32 0.0, %v1657
        %v1659 = vpop.f32.mrf.mxu0
        %v1660 = vadd.f32 0.0, %v1659
        %v1661 = vpop.f32.mrf.mxu0
        %v1662 = vadd.f32 0.0, %v1661
        %v1663 = vpop.f32.mrf.mxu0
        %v1664 = vadd.f32 0.0, %v1663
        %1665 = vmatprep.mubr.bf16.mxu0 %v572
        %1666 = vmatmul.mubr.bf16.gmra.mxu0 %v571
        %v1667 = vpop.f32.mrf.mxu0
        %v1668 = vadd.f32 0.0, %v1667
        %v1669 = vpop.f32.mrf.mxu0
        %v1670 = vadd.f32 0.0, %v1669
        %v1671 = vpop.f32.mrf.mxu0
        %v1672 = vadd.f32 0.0, %v1671
        %v1673 = vpop.f32.mrf.mxu0
        %v1674 = vadd.f32 0.0, %v1673
        %1675 = vmatprep.mubr.bf16.mxu0 %v576
        %1676 = vmatmul.mubr.bf16.gmra.mxu0 %v575
        %v1677 = vpop.f32.mrf.mxu0
        %v1678 = vadd.f32 0.0, %v1677
        %v1679 = vpop.f32.mrf.mxu0
        %v1680 = vadd.f32 0.0, %v1679
        %v1681 = vpop.f32.mrf.mxu0
        %v1682 = vadd.f32 0.0, %v1681
        %v1683 = vpop.f32.mrf.mxu0
        %v1684 = vadd.f32 0.0, %v1683
        %1685 = vdwg.mxu0
        %1686 = vmatprep.subr.bf16.mxu0 %v1186
        %1687 = vmatpush1.bf16.msra.mxu0 %v1185
        %1688 = vmatprep.subr.bf16.mxu0 %v1182
        %1689 = vmatpush1.bf16.msra.mxu0 %v1181
        %1690 = vmatprep.subr.bf16.mxu0 %v1178
        %1691 = vmatpush1.bf16.msra.mxu0 %v1177
        %1692 = vmatprep.subr.bf16.mxu0 %v1174
        %1693 = vmatpush1.bf16.msra.mxu0 %v1173
        %1694 = vmatprep.subr.bf16.mxu0 %v1170
        %1695 = vmatpush1.bf16.msra.mxu0 %v1169
        %1696 = vmatprep.subr.bf16.mxu0 %v1166
        %1697 = vmatpush1.bf16.msra.mxu0 %v1165
        %1698 = vmatprep.subr.bf16.mxu0 %v1162
        %1699 = vmatpush1.bf16.msra.mxu0 %v1161
        %1700 = vmatprep.subr.bf16.mxu0 %v1158
        %1701 = vmatpush1.bf16.msra.mxu0 %v1157
        %1702 = vmatprep.subr.bf16.mxu0 %v1218
        %1703 = vmatpush2.bf16.msra.mxu0 %v1217
        %1704 = vmatprep.subr.bf16.mxu0 %v1214
        %1705 = vmatpush2.bf16.msra.mxu0 %v1213
        %1706 = vmatprep.subr.bf16.mxu0 %v1210
        %1707 = vmatpush2.bf16.msra.mxu0 %v1209
        %1708 = vmatprep.subr.bf16.mxu0 %v1206
        %1709 = vmatpush2.bf16.msra.mxu0 %v1205
        %1710 = vmatprep.subr.bf16.mxu0 %v1202
        %1711 = vmatpush2.bf16.msra.mxu0 %v1201
        %1712 = vmatprep.subr.bf16.mxu0 %v1198
        %1713 = vmatpush2.bf16.msra.mxu0 %v1197
        %1714 = vmatprep.subr.bf16.mxu0 %v1194
        %1715 = vmatpush2.bf16.msra.mxu0 %v1193
        %1716 = vmatprep.subr.bf16.mxu0 %v1190
        %1717 = vmatpush2.bf16.msra.mxu0 %v1189
        %1718 = vmatprep.mubr.bf16.mxu0 %v550
        %1719 = vmatmul.mubr.bf16.gmra.mxu0 %v549
        %v1720 = vpop.f32.mrf.mxu0
        %v1721 = vadd.f32 %v1608, %v1720
        %v1722 = vpop.f32.mrf.mxu0
        %v1723 = vadd.f32 %v1610, %v1722
        %v1724 = vpop.f32.mrf.mxu0
        %v1725 = vadd.f32 %v1612, %v1724
        %v1726 = vpop.f32.mrf.mxu0
        %v1727 = vadd.f32 %v1614, %v1726
        %1728 = vmatprep.mubr.bf16.mxu0 %v554
        %1729 = vmatmul.mubr.bf16.gmra.mxu0 %v553
        %v1730 = vpop.f32.mrf.mxu0
        %v1731 = vadd.f32 %v1618, %v1730
        %v1732 = vpop.f32.mrf.mxu0
        %v1733 = vadd.f32 %v1620, %v1732
        %v1734 = vpop.f32.mrf.mxu0
        %v1735 = vadd.f32 %v1622, %v1734
        %v1736 = vpop.f32.mrf.mxu0
        %v1737 = vadd.f32 %v1624, %v1736
        %1738 = vmatprep.mubr.bf16.mxu0 %v558
        %1739 = vmatmul.mubr.bf16.gmra.mxu0 %v557
        %v1740 = vpop.f32.mrf.mxu0
        %v1741 = vadd.f32 %v1628, %v1740
        %v1742 = vpop.f32.mrf.mxu0
        %v1743 = vadd.f32 %v1630, %v1742
        %v1744 = vpop.f32.mrf.mxu0
        %v1745 = vadd.f32 %v1632, %v1744
        %v1746 = vpop.f32.mrf.mxu0
        %v1747 = vadd.f32 %v1634, %v1746
        %1748 = vmatprep.mubr.bf16.mxu0 %v562
        %1749 = vmatmul.mubr.bf16.gmra.mxu0 %v561
        %v1750 = vpop.f32.mrf.mxu0
        %v1751 = vadd.f32 %v1638, %v1750
        %v1752 = vpop.f32.mrf.mxu0
        %v1753 = vadd.f32 %v1640, %v1752
        %v1754 = vpop.f32.mrf.mxu0
        %v1755 = vadd.f32 %v1642, %v1754
        %v1756 = vpop.f32.mrf.mxu0
        %v1757 = vadd.f32 %v1644, %v1756
        %1758 = vmatprep.mubr.bf16.mxu0 %v566
        %1759 = vmatmul.mubr.bf16.gmra.mxu0 %v565
        %v1760 = vpop.f32.mrf.mxu0
        %v1761 = vadd.f32 %v1648, %v1760
        %v1762 = vpop.f32.mrf.mxu0
        %v1763 = vadd.f32 %v1650, %v1762
        %v1764 = vpop.f32.mrf.mxu0
        %v1765 = vadd.f32 %v1652, %v1764
        %v1766 = vpop.f32.mrf.mxu0
        %v1767 = vadd.f32 %v1654, %v1766
        %1768 = vmatprep.mubr.bf16.mxu0 %v570
        %1769 = vmatmul.mubr.bf16.gmra.mxu0 %v569
        %v1770 = vpop.f32.mrf.mxu0
        %v1771 = vadd.f32 %v1658, %v1770
        %v1772 = vpop.f32.mrf.mxu0
        %v1773 = vadd.f32 %v1660, %v1772
        %v1774 = vpop.f32.mrf.mxu0
        %v1775 = vadd.f32 %v1662, %v1774
        %v1776 = vpop.f32.mrf.mxu0
        %v1777 = vadd.f32 %v1664, %v1776
        %1778 = vmatprep.mubr.bf16.mxu0 %v574
        %1779 = vmatmul.mubr.bf16.gmra.mxu0 %v573
        %v1780 = vpop.f32.mrf.mxu0
        %v1781 = vadd.f32 %v1668, %v1780
        %v1782 = vpop.f32.mrf.mxu0
        %v1783 = vadd.f32 %v1670, %v1782
        %v1784 = vpop.f32.mrf.mxu0
        %v1785 = vadd.f32 %v1672, %v1784
        %v1786 = vpop.f32.mrf.mxu0
        %v1787 = vadd.f32 %v1674, %v1786
        %1788 = vmatprep.mubr.bf16.mxu0 %v578
        %1789 = vmatmul.mubr.bf16.gmra.mxu0 %v577
        %v1790 = vpop.f32.mrf.mxu0
        %v1791 = vadd.f32 %v1678, %v1790
        %v1792 = vpop.f32.mrf.mxu0
        %v1793 = vadd.f32 %v1680, %v1792
        %v1794 = vpop.f32.mrf.mxu0
        %v1795 = vadd.f32 %v1682, %v1794
        %v1796 = vpop.f32.mrf.mxu0
        %v1797 = vadd.f32 %v1684, %v1796
        %1798 = vdwg.mxu0
        %v1863 = vrot.slane %v1495, 7
        %v1864 = vrot.slane %v1497, 7
        %v1865 = vrot.slane %v1721, 7
        %v1866 = vrot.slane %v1723, 7
        %v1867 = vrot.slane %v1499, 7
        %v1868 = vrot.slane %v1501, 7
        %v1869 = vrot.slane %v1725, 7
        %v1870 = vrot.slane %v1727, 7
        %v1871 = vrot.slane %v1505, 7
        %v1872 = vrot.slane %v1507, 7
        %v1873 = vrot.slane %v1731, 7
        %v1874 = vrot.slane %v1733, 7
        %v1875 = vrot.slane %v1509, 7
        %v1876 = vrot.slane %v1511, 7
        %v1877 = vrot.slane %v1735, 7
        %v1878 = vrot.slane %v1737, 7
        %v1879 = vrot.slane %v1515, 7
        %v1880 = vrot.slane %v1517, 7
        %v1881 = vrot.slane %v1741, 7
        %v1882 = vrot.slane %v1743, 7
        %v1883 = vrot.slane %v1519, 7
        %v1884 = vrot.slane %v1521, 7
        %v1885 = vrot.slane %v1745, 7
        %v1886 = vrot.slane %v1747, 7
        %v1887 = vrot.slane %v1525, 7
        %v1888 = vrot.slane %v1527, 7
        %v1889 = vrot.slane %v1751, 7
        %v1890 = vrot.slane %v1753, 7
        %v1891 = vrot.slane %v1529, 7
        %v1892 = vrot.slane %v1531, 7
        %v1893 = vrot.slane %v1755, 7
        %v1894 = vrot.slane %v1757, 7
        %v1895 = vrot.slane %v1535, 7
        %v1896 = vrot.slane %v1537, 7
        %v1897 = vrot.slane %v1761, 7
        %v1898 = vrot.slane %v1763, 7
        %v1899 = vrot.slane %v1539, 7
        %v1900 = vrot.slane %v1541, 7
        %v1901 = vrot.slane %v1765, 7
        %v1902 = vrot.slane %v1767, 7
        %v1903 = vrot.slane %v1545, 7
        %v1904 = vrot.slane %v1547, 7
        %v1905 = vrot.slane %v1771, 7
        %v1906 = vrot.slane %v1773, 7
        %v1907 = vrot.slane %v1549, 7
        %v1908 = vrot.slane %v1551, 7
        %v1909 = vrot.slane %v1775, 7
        %v1910 = vrot.slane %v1777, 7
        %v1911 = vrot.slane %v1555, 7
        %v1912 = vrot.slane %v1557, 7
        %v1913 = vrot.slane %v1781, 7
        %v1914 = vrot.slane %v1783, 7
        %v1915 = vrot.slane %v1559, 7
        %v1916 = vrot.slane %v1561, 7
        %v1917 = vrot.slane %v1785, 7
        %v1918 = vrot.slane %v1787, 7
        %v1919 = vrot.slane %v1565, 7
        %v1920 = vrot.slane %v1567, 7
        %v1921 = vrot.slane %v1791, 7
        %v1922 = vrot.slane %v1793, 7
        %v1923 = vrot.slane %v1569, 7
        %v1924 = vrot.slane %v1571, 7
        %v1925 = vrot.slane %v1795, 7
        %v1926 = vrot.slane %v1797, 7
        %vm1991 = vcmask 1040384
        %v1992 = vsel %vm1991, 0.0, %v1863
        %v1993 = vsel %vm1991, 0.0, %v1864
        %v1994 = vsel %vm1991, 0.0, %v1865
        %v1995 = vsel %vm1991, 0.0, %v1866
        %v1996 = vsel %vm1991, 0.0, %v1867
        %v1997 = vsel %vm1991, 0.0, %v1868
        %v1998 = vsel %vm1991, 0.0, %v1869
        %v1999 = vsel %vm1991, 0.0, %v1870
        %v2000 = vsel %vm1991, 0.0, %v1871
        %v2001 = vsel %vm1991, 0.0, %v1872
        %v2002 = vsel %vm1991, 0.0, %v1873
        %v2003 = vsel %vm1991, 0.0, %v1874
        %v2004 = vsel %vm1991, 0.0, %v1875
        %v2005 = vsel %vm1991, 0.0, %v1876
        %v2006 = vsel %vm1991, 0.0, %v1877
        %v2007 = vsel %vm1991, 0.0, %v1878
        %v2008 = vsel %vm1991, 0.0, %v1879
        %v2009 = vsel %vm1991, 0.0, %v1880
        %v2010 = vsel %vm1991, 0.0, %v1881
        %v2011 = vsel %vm1991, 0.0, %v1882
        %v2012 = vsel %vm1991, 0.0, %v1883
        %v2013 = vsel %vm1991, 0.0, %v1884
        %v2014 = vsel %vm1991, 0.0, %v1885
        %v2015 = vsel %vm1991, 0.0, %v1886
        %v2016 = vsel %vm1991, 0.0, %v1887
        %v2017 = vsel %vm1991, 0.0, %v1888
        %v2018 = vsel %vm1991, 0.0, %v1889
        %v2019 = vsel %vm1991, 0.0, %v1890
        %v2020 = vsel %vm1991, 0.0, %v1891
        %v2021 = vsel %vm1991, 0.0, %v1892
        %v2022 = vsel %vm1991, 0.0, %v1893
        %v2023 = vsel %vm1991, 0.0, %v1894
        %v2024 = vsel %vm1991, 0.0, %v1895
        %v2025 = vsel %vm1991, 0.0, %v1896
        %v2026 = vsel %vm1991, 0.0, %v1897
        %v2027 = vsel %vm1991, 0.0, %v1898
        %v2028 = vsel %vm1991, 0.0, %v1899
        %v2029 = vsel %vm1991, 0.0, %v1900
        %v2030 = vsel %vm1991, 0.0, %v1901
        %v2031 = vsel %vm1991, 0.0, %v1902
        %v2032 = vsel %vm1991, 0.0, %v1903
        %v2033 = vsel %vm1991, 0.0, %v1904
        %v2034 = vsel %vm1991, 0.0, %v1905
        %v2035 = vsel %vm1991, 0.0, %v1906
        %v2036 = vsel %vm1991, 0.0, %v1907
        %v2037 = vsel %vm1991, 0.0, %v1908
        %v2038 = vsel %vm1991, 0.0, %v1909
        %v2039 = vsel %vm1991, 0.0, %v1910
        %v2040 = vsel %vm1991, 0.0, %v1911
        %v2041 = vsel %vm1991, 0.0, %v1912
        %v2042 = vsel %vm1991, 0.0, %v1913
        %v2043 = vsel %vm1991, 0.0, %v1914
        %v2044 = vsel %vm1991, 0.0, %v1915
        %v2045 = vsel %vm1991, 0.0, %v1916
        %v2046 = vsel %vm1991, 0.0, %v1917
        %v2047 = vsel %vm1991, 0.0, %v1918
        %v2048 = vsel %vm1991, 0.0, %v1919
        %v2049 = vsel %vm1991, 0.0, %v1920
        %v2050 = vsel %vm1991, 0.0, %v1921
        %v2051 = vsel %vm1991, 0.0, %v1922
        %v2052 = vsel %vm1991, 0.0, %v1923
        %v2053 = vsel %vm1991, 0.0, %v1924
        %v2054 = vsel %vm1991, 0.0, %v1925
        %v2055 = vsel %vm1991, 0.0, %v1926
        %v2056 = vrot.slane %v1495, 1
        %v2057 = vrot.slane %v1497, 1
        %v2058 = vrot.slane %v1721, 1
        %v2059 = vrot.slane %v1723, 1
        %v2060 = vrot.slane %v1499, 1
        %v2061 = vrot.slane %v1501, 1
        %v2062 = vrot.slane %v1725, 1
        %v2063 = vrot.slane %v1727, 1
        %v2064 = vrot.slane %v1505, 1
        %v2065 = vrot.slane %v1507, 1
        %v2066 = vrot.slane %v1731, 1
        %v2067 = vrot.slane %v1733, 1
        %v2068 = vrot.slane %v1509, 1
        %v2069 = vrot.slane %v1511, 1
        %v2070 = vrot.slane %v1735, 1
        %v2071 = vrot.slane %v1737, 1
        %v2072 = vrot.slane %v1515, 1
        %v2073 = vrot.slane %v1517, 1
        %v2074 = vrot.slane %v1741, 1
        %v2075 = vrot.slane %v1743, 1
        %v2076 = vrot.slane %v1519, 1
        %v2077 = vrot.slane %v1521, 1
        %v2078 = vrot.slane %v1745, 1
        %v2079 = vrot.slane %v1747, 1
        %v2080 = vrot.slane %v1525, 1
        %v2081 = vrot.slane %v1527, 1
        %v2082 = vrot.slane %v1751, 1
        %v2083 = vrot.slane %v1753, 1
        %v2084 = vrot.slane %v1529, 1
        %v2085 = vrot.slane %v1531, 1
        %v2086 = vrot.slane %v1755, 1
        %v2087 = vrot.slane %v1757, 1
        %v2088 = vrot.slane %v1535, 1
        %v2089 = vrot.slane %v1537, 1
        %v2090 = vrot.slane %v1761, 1
        %v2091 = vrot.slane %v1763, 1
        %v2092 = vrot.slane %v1539, 1
        %v2093 = vrot.slane %v1541, 1
        %v2094 = vrot.slane %v1765, 1
        %v2095 = vrot.slane %v1767, 1
        %v2096 = vrot.slane %v1545, 1
        %v2097 = vrot.slane %v1547, 1
        %v2098 = vrot.slane %v1771, 1
        %v2099 = vrot.slane %v1773, 1
        %v2100 = vrot.slane %v1549, 1
        %v2101 = vrot.slane %v1551, 1
        %v2102 = vrot.slane %v1775, 1
        %v2103 = vrot.slane %v1777, 1
        %v2104 = vrot.slane %v1555, 1
        %v2105 = vrot.slane %v1557, 1
        %v2106 = vrot.slane %v1781, 1
        %v2107 = vrot.slane %v1783, 1
        %v2108 = vrot.slane %v1559, 1
        %v2109 = vrot.slane %v1561, 1
        %v2110 = vrot.slane %v1785, 1
        %v2111 = vrot.slane %v1787, 1
        %v2112 = vrot.slane %v1565, 1
        %v2113 = vrot.slane %v1567, 1
        %v2114 = vrot.slane %v1791, 1
        %v2115 = vrot.slane %v1793, 1
        %v2116 = vrot.slane %v1569, 1
        %v2117 = vrot.slane %v1571, 1
        %v2118 = vrot.slane %v1795, 1
        %v2119 = vrot.slane %v1797, 1
        %vm2184 = vcmask 1046528
        %v2185 = vsel %vm2184, %v2056, 0.0
        %v2186 = vsel %vm2184, %v2057, 0.0
        %v2187 = vsel %vm2184, %v2058, 0.0
        %v2188 = vsel %vm2184, %v2059, 0.0
        %v2189 = vsel %vm2184, %v2060, 0.0
        %v2190 = vsel %vm2184, %v2061, 0.0
        %v2191 = vsel %vm2184, %v2062, 0.0
        %v2192 = vsel %vm2184, %v2063, 0.0
        %v2193 = vsel %vm2184, %v2064, 0.0
        %v2194 = vsel %vm2184, %v2065, 0.0
        %v2195 = vsel %vm2184, %v2066, 0.0
        %v2196 = vsel %vm2184, %v2067, 0.0
        %v2197 = vsel %vm2184, %v2068, 0.0
        %v2198 = vsel %vm2184, %v2069, 0.0
        %v2199 = vsel %vm2184, %v2070, 0.0
        %v2200 = vsel %vm2184, %v2071, 0.0
        %v2201 = vsel %vm2184, %v2072, 0.0
        %v2202 = vsel %vm2184, %v2073, 0.0
        %v2203 = vsel %vm2184, %v2074, 0.0
        %v2204 = vsel %vm2184, %v2075, 0.0
        %v2205 = vsel %vm2184, %v2076, 0.0
        %v2206 = vsel %vm2184, %v2077, 0.0
        %v2207 = vsel %vm2184, %v2078, 0.0
        %v2208 = vsel %vm2184, %v2079, 0.0
        %v2209 = vsel %vm2184, %v2080, 0.0
        %v2210 = vsel %vm2184, %v2081, 0.0
        %v2211 = vsel %vm2184, %v2082, 0.0
        %v2212 = vsel %vm2184, %v2083, 0.0
        %v2213 = vsel %vm2184, %v2084, 0.0
        %v2214 = vsel %vm2184, %v2085, 0.0
        %v2215 = vsel %vm2184, %v2086, 0.0
        %v2216 = vsel %vm2184, %v2087, 0.0
        %v2217 = vsel %vm2184, %v2088, 0.0
        %v2218 = vsel %vm2184, %v2089, 0.0
        %v2219 = vsel %vm2184, %v2090, 0.0
        %v2220 = vsel %vm2184, %v2091, 0.0
        %v2221 = vsel %vm2184, %v2092, 0.0
        %v2222 = vsel %vm2184, %v2093, 0.0
        %v2223 = vsel %vm2184, %v2094, 0.0
        %v2224 = vsel %vm2184, %v2095, 0.0
        %v2225 = vsel %vm2184, %v2096, 0.0
        %v2226 = vsel %vm2184, %v2097, 0.0
        %v2227 = vsel %vm2184, %v2098, 0.0
        %v2228 = vsel %vm2184, %v2099, 0.0
        %v2229 = vsel %vm2184, %v2100, 0.0
        %v2230 = vsel %vm2184, %v2101, 0.0
        %v2231 = vsel %vm2184, %v2102, 0.0
        %v2232 = vsel %vm2184, %v2103, 0.0
        %v2233 = vsel %vm2184, %v2104, 0.0
        %v2234 = vsel %vm2184, %v2105, 0.0
        %v2235 = vsel %vm2184, %v2106, 0.0
        %v2236 = vsel %vm2184, %v2107, 0.0
        %v2237 = vsel %vm2184, %v2108, 0.0
        %v2238 = vsel %vm2184, %v2109, 0.0
        %v2239 = vsel %vm2184, %v2110, 0.0
        %v2240 = vsel %vm2184, %v2111, 0.0
        %v2241 = vsel %vm2184, %v2112, 0.0
        %v2242 = vsel %vm2184, %v2113, 0.0
        %v2243 = vsel %vm2184, %v2114, 0.0
        %v2244 = vsel %vm2184, %v2115, 0.0
        %v2245 = vsel %vm2184, %v2116, 0.0
        %v2246 = vsel %vm2184, %v2117, 0.0
        %v2247 = vsel %vm2184, %v2118, 0.0
        %v2248 = vsel %vm2184, %v2119, 0.0
        %v2249 = vld [vmem:[%s280] sm:$0xff]
        %v2250 = vld [vmem:[%s280 + $0x8] sm:$0xff]
        %v2251 = vld [vmem:[%s280 + $0x10] sm:$0xff]
        %v2252 = vld [vmem:[%s280 + $0x18] sm:$0xff]
        %v2253 = vld [vmem:[%s280 + $0x20] sm:$0x1]
        %v2254 = vld [vmem:[%s280 + $0x28] sm:$0x1]
        %v2255 = vld [vmem:[%s280 + $0x30] sm:$0x1]
        %v2256 = vld [vmem:[%s280 + $0x38] sm:$0x1]
        %v2257 = vlaneseq
        %v2258 = vshrl.u32 %v2257, 7
        %v2259 = vsub.s32 0, %v2258
        %v2260 = vrot.slane %v2249, %v2259
        %v2261 = vlaneseq
        %v2262 = vshrl.u32 %v2261, 7
        %v2263 = vsub.s32 0, %v2262
        %v2264 = vrot.slane %v2250, %v2263
        %v2265 = vlaneseq
        %v2266 = vshrl.u32 %v2265, 7
        %v2267 = vsub.s32 0, %v2266
        %v2268 = vrot.slane %v2251, %v2267
        %v2269 = vlaneseq
        %v2270 = vshrl.u32 %v2269, 7
        %v2271 = vsub.s32 0, %v2270
        %v2272 = vrot.slane %v2252, %v2271
        %v2273 = vmul.f32 %v1992, %v2260
        %v2274 = vmul.f32 %v1993, %v2264
        %v2275 = vmul.f32 %v1994, %v2268
        %v2276 = vmul.f32 %v1995, %v2272
        %v2277 = vmul.f32 %v1996, %v2260
        %v2278 = vmul.f32 %v1997, %v2264
        %v2279 = vmul.f32 %v1998, %v2268
        %v2280 = vmul.f32 %v1999, %v2272
        %v2281 = vmul.f32 %v2000, %v2260
        %v2282 = vmul.f32 %v2001, %v2264
        %v2283 = vmul.f32 %v2002, %v2268
        %v2284 = vmul.f32 %v2003, %v2272
        %v2285 = vmul.f32 %v2004, %v2260
        %v2286 = vmul.f32 %v2005, %v2264
        %v2287 = vmul.f32 %v2006, %v2268
        %v2288 = vmul.f32 %v2007, %v2272
        %v2289 = vmul.f32 %v2008, %v2260
        %v2290 = vmul.f32 %v2009, %v2264
        %v2291 = vmul.f32 %v2010, %v2268
        %v2292 = vmul.f32 %v2011, %v2272
        %v2293 = vmul.f32 %v2012, %v2260
        %v2294 = vmul.f32 %v2013, %v2264
        %v2295 = vmul.f32 %v2014, %v2268
        %v2296 = vmul.f32 %v2015, %v2272
        %v2297 = vmul.f32 %v2016, %v2260
        %v2298 = vmul.f32 %v2017, %v2264
        %v2299 = vmul.f32 %v2018, %v2268
        %v2300 = vmul.f32 %v2019, %v2272
        %v2301 = vmul.f32 %v2024, %v2260
        %v2302 = vmul.f32 %v2025, %v2264
        %v2303 = vmul.f32 %v2026, %v2268
        %v2304 = vmul.f32 %v2027, %v2272
        %v2305 = vmul.f32 %v2028, %v2260
        %v2306 = vmul.f32 %v2029, %v2264
        %v2307 = vmul.f32 %v2030, %v2268
        %v2308 = vmul.f32 %v2031, %v2272
        %v2309 = vmul.f32 %v2032, %v2260
        %v2310 = vmul.f32 %v2033, %v2264
        %v2311 = vmul.f32 %v2034, %v2268
        %v2312 = vmul.f32 %v2035, %v2272
        %v2313 = vmul.f32 %v2036, %v2260
        %v2314 = vmul.f32 %v2037, %v2264
        %v2315 = vmul.f32 %v2038, %v2268
        %v2316 = vmul.f32 %v2039, %v2272
        %v2317 = vmul.f32 %v2040, %v2260
        %v2318 = vmul.f32 %v2041, %v2264
        %v2319 = vmul.f32 %v2042, %v2268
        %v2320 = vmul.f32 %v2043, %v2272
        %v2321 = vmul.f32 %v2044, %v2260
        %v2322 = vmul.f32 %v2045, %v2264
        %v2323 = vmul.f32 %v2046, %v2268
        %v2324 = vmul.f32 %v2047, %v2272
        %v2325 = vmul.f32 %v2048, %v2260
        %v2326 = vmul.f32 %v2049, %v2264
        %v2327 = vmul.f32 %v2050, %v2268
        %v2328 = vmul.f32 %v2051, %v2272
        %v2329 = vlaneseq
        %v2330 = vshrl.u32 %v2329, 7
        %v2331 = vsub.s32 1, %v2330
        %v2332 = vrot.slane %v2249, %v2331
        %v2333 = vlaneseq
        %v2334 = vshrl.u32 %v2333, 7
        %v2335 = vsub.s32 1, %v2334
        %v2336 = vrot.slane %v2250, %v2335
        %v2337 = vlaneseq
        %v2338 = vshrl.u32 %v2337, 7
        %v2339 = vsub.s32 1, %v2338
        %v2340 = vrot.slane %v2251, %v2339
        %v2341 = vlaneseq
        %v2342 = vshrl.u32 %v2341, 7
        %v2343 = vsub.s32 1, %v2342
        %v2344 = vrot.slane %v2252, %v2343
        %v2345 = vmul.f32 %v1495, %v2332
        %v2346 = vmul.f32 %v1497, %v2336
        %v2347 = vmul.f32 %v1721, %v2340
        %v2348 = vmul.f32 %v1723, %v2344
        %v2349 = vmul.f32 %v1499, %v2332
        %v2350 = vmul.f32 %v1501, %v2336
        %v2351 = vmul.f32 %v1725, %v2340
        %v2352 = vmul.f32 %v1727, %v2344
        %v2353 = vmul.f32 %v1505, %v2332
        %v2354 = vmul.f32 %v1507, %v2336
        %v2355 = vmul.f32 %v1731, %v2340
        %v2356 = vmul.f32 %v1733, %v2344
        %v2357 = vmul.f32 %v1509, %v2332
        %v2358 = vmul.f32 %v1511, %v2336
        %v2359 = vmul.f32 %v1735, %v2340
        %v2360 = vmul.f32 %v1737, %v2344
        %v2361 = vmul.f32 %v1515, %v2332
        %v2362 = vmul.f32 %v1517, %v2336
        %v2363 = vmul.f32 %v1741, %v2340
        %v2364 = vmul.f32 %v1743, %v2344
        %v2365 = vmul.f32 %v1519, %v2332
        %v2366 = vmul.f32 %v1521, %v2336
        %v2367 = vmul.f32 %v1745, %v2340
        %v2368 = vmul.f32 %v1747, %v2344
        %v2369 = vmul.f32 %v1525, %v2332
        %v2370 = vmul.f32 %v1527, %v2336
        %v2371 = vmul.f32 %v1751, %v2340
        %v2372 = vmul.f32 %v1753, %v2344
        %v2373 = vmul.f32 %v1535, %v2332
        %v2374 = vmul.f32 %v1537, %v2336
        %v2375 = vmul.f32 %v1761, %v2340
        %v2376 = vmul.f32 %v1763, %v2344
        %v2377 = vmul.f32 %v1539, %v2332
        %v2378 = vmul.f32 %v1541, %v2336
        %v2379 = vmul.f32 %v1765, %v2340
        %v2380 = vmul.f32 %v1767, %v2344
        %v2381 = vmul.f32 %v1545, %v2332
        %v2382 = vmul.f32 %v1547, %v2336
        %v2383 = vmul.f32 %v1771, %v2340
        %v2384 = vmul.f32 %v1773, %v2344
        %v2385 = vmul.f32 %v1549, %v2332
        %v2386 = vmul.f32 %v1551, %v2336
        %v2387 = vmul.f32 %v1775, %v2340
        %v2388 = vmul.f32 %v1777, %v2344
        %v2389 = vmul.f32 %v1555, %v2332
        %v2390 = vmul.f32 %v1557, %v2336
        %v2391 = vmul.f32 %v1781, %v2340
        %v2392 = vmul.f32 %v1783, %v2344
        %v2393 = vmul.f32 %v1559, %v2332
        %v2394 = vmul.f32 %v1561, %v2336
        %v2395 = vmul.f32 %v1785, %v2340
        %v2396 = vmul.f32 %v1787, %v2344
        %v2397 = vmul.f32 %v1565, %v2332
        %v2398 = vmul.f32 %v1567, %v2336
        %v2399 = vmul.f32 %v1791, %v2340
        %v2400 = vmul.f32 %v1793, %v2344
        %v2401 = vadd.f32 %v2273, %v2345
        %v2402 = vadd.f32 %v2274, %v2346
        %v2403 = vadd.f32 %v2275, %v2347
        %v2404 = vadd.f32 %v2276, %v2348
        %v2405 = vadd.f32 %v2277, %v2349
        %v2406 = vadd.f32 %v2278, %v2350
        %v2407 = vadd.f32 %v2279, %v2351
        %v2408 = vadd.f32 %v2280, %v2352
        %v2409 = vadd.f32 %v2281, %v2353
        %v2410 = vadd.f32 %v2282, %v2354
        %v2411 = vadd.f32 %v2283, %v2355
        %v2412 = vadd.f32 %v2284, %v2356
        %v2413 = vadd.f32 %v2285, %v2357
        %v2414 = vadd.f32 %v2286, %v2358
        %v2415 = vadd.f32 %v2287, %v2359
        %v2416 = vadd.f32 %v2288, %v2360
        %v2417 = vadd.f32 %v2289, %v2361
        %v2418 = vadd.f32 %v2290, %v2362
        %v2419 = vadd.f32 %v2291, %v2363
        %v2420 = vadd.f32 %v2292, %v2364
        %v2421 = vadd.f32 %v2293, %v2365
        %v2422 = vadd.f32 %v2294, %v2366
        %v2423 = vadd.f32 %v2295, %v2367
        %v2424 = vadd.f32 %v2296, %v2368
        %v2425 = vadd.f32 %v2297, %v2369
        %v2426 = vadd.f32 %v2298, %v2370
        %v2427 = vadd.f32 %v2299, %v2371
        %v2428 = vadd.f32 %v2300, %v2372
        %v2429 = vadd.f32 %v2301, %v2373
        %v2430 = vadd.f32 %v2302, %v2374
        %v2431 = vadd.f32 %v2303, %v2375
        %v2432 = vadd.f32 %v2304, %v2376
        %v2433 = vadd.f32 %v2305, %v2377
        %v2434 = vadd.f32 %v2306, %v2378
        %v2435 = vadd.f32 %v2307, %v2379
        %v2436 = vadd.f32 %v2308, %v2380
        %v2437 = vadd.f32 %v2309, %v2381
        %v2438 = vadd.f32 %v2310, %v2382
        %v2439 = vadd.f32 %v2311, %v2383
        %v2440 = vadd.f32 %v2312, %v2384
        %v2441 = vadd.f32 %v2313, %v2385
        %v2442 = vadd.f32 %v2314, %v2386
        %v2443 = vadd.f32 %v2315, %v2387
        %v2444 = vadd.f32 %v2316, %v2388
        %v2445 = vadd.f32 %v2317, %v2389
        %v2446 = vadd.f32 %v2318, %v2390
        %v2447 = vadd.f32 %v2319, %v2391
        %v2448 = vadd.f32 %v2320, %v2392
        %v2449 = vadd.f32 %v2321, %v2393
        %v2450 = vadd.f32 %v2322, %v2394
        %v2451 = vadd.f32 %v2323, %v2395
        %v2452 = vadd.f32 %v2324, %v2396
        %v2453 = vadd.f32 %v2325, %v2397
        %v2454 = vadd.f32 %v2326, %v2398
        %v2455 = vadd.f32 %v2327, %v2399
        %v2456 = vadd.f32 %v2328, %v2400
        %v2457 = vlaneseq
        %v2458 = vshrl.u32 %v2457, 7
        %v2459 = vsub.s32 2, %v2458
        %v2460 = vrot.slane %v2249, %v2459
        %v2461 = vlaneseq
        %v2462 = vshrl.u32 %v2461, 7
        %v2463 = vsub.s32 2, %v2462
        %v2464 = vrot.slane %v2250, %v2463
        %v2465 = vlaneseq
        %v2466 = vshrl.u32 %v2465, 7
        %v2467 = vsub.s32 2, %v2466
        %v2468 = vrot.slane %v2251, %v2467
        %v2469 = vlaneseq
        %v2470 = vshrl.u32 %v2469, 7
        %v2471 = vsub.s32 2, %v2470
        %v2472 = vrot.slane %v2252, %v2471
        %v2473 = vmul.f32 %v2185, %v2460
        %v2474 = vmul.f32 %v2186, %v2464
        %v2475 = vmul.f32 %v2187, %v2468
        %v2476 = vmul.f32 %v2188, %v2472
        %v2477 = vmul.f32 %v2189, %v2460
        %v2478 = vmul.f32 %v2190, %v2464
        %v2479 = vmul.f32 %v2191, %v2468
        %v2480 = vmul.f32 %v2192, %v2472
        %v2481 = vmul.f32 %v2193, %v2460
        %v2482 = vmul.f32 %v2194, %v2464
        %v2483 = vmul.f32 %v2195, %v2468
        %v2484 = vmul.f32 %v2196, %v2472
        %v2485 = vmul.f32 %v2197, %v2460
        %v2486 = vmul.f32 %v2198, %v2464
        %v2487 = vmul.f32 %v2199, %v2468
        %v2488 = vmul.f32 %v2200, %v2472
        %v2489 = vmul.f32 %v2201, %v2460
        %v2490 = vmul.f32 %v2202, %v2464
        %v2491 = vmul.f32 %v2203, %v2468
        %v2492 = vmul.f32 %v2204, %v2472
        %v2493 = vmul.f32 %v2205, %v2460
        %v2494 = vmul.f32 %v2206, %v2464
        %v2495 = vmul.f32 %v2207, %v2468
        %v2496 = vmul.f32 %v2208, %v2472
        %v2497 = vmul.f32 %v2209, %v2460
        %v2498 = vmul.f32 %v2210, %v2464
        %v2499 = vmul.f32 %v2211, %v2468
        %v2500 = vmul.f32 %v2212, %v2472
        %v2501 = vmul.f32 %v2217, %v2460
        %v2502 = vmul.f32 %v2218, %v2464
        %v2503 = vmul.f32 %v2219, %v2468
        %v2504 = vmul.f32 %v2220, %v2472
        %v2505 = vmul.f32 %v2221, %v2460
        %v2506 = vmul.f32 %v2222, %v2464
        %v2507 = vmul.f32 %v2223, %v2468
        %v2508 = vmul.f32 %v2224, %v2472
        %v2509 = vmul.f32 %v2225, %v2460
        %v2510 = vmul.f32 %v2226, %v2464
        %v2511 = vmul.f32 %v2227, %v2468
        %v2512 = vmul.f32 %v2228, %v2472
        %v2513 = vmul.f32 %v2229, %v2460
        %v2514 = vmul.f32 %v2230, %v2464
        %v2515 = vmul.f32 %v2231, %v2468
        %v2516 = vmul.f32 %v2232, %v2472
        %v2517 = vmul.f32 %v2233, %v2460
        %v2518 = vmul.f32 %v2234, %v2464
        %v2519 = vmul.f32 %v2235, %v2468
        %v2520 = vmul.f32 %v2236, %v2472
        %v2521 = vmul.f32 %v2237, %v2460
        %v2522 = vmul.f32 %v2238, %v2464
        %v2523 = vmul.f32 %v2239, %v2468
        %v2524 = vmul.f32 %v2240, %v2472
        %v2525 = vmul.f32 %v2241, %v2460
        %v2526 = vmul.f32 %v2242, %v2464
        %v2527 = vmul.f32 %v2243, %v2468
        %v2528 = vmul.f32 %v2244, %v2472
        %v2529 = vadd.f32 %v2401, %v2473
        %v2530 = vadd.f32 %v2402, %v2474
        %v2531 = vadd.f32 %v2403, %v2475
        %v2532 = vadd.f32 %v2404, %v2476
        %v2533 = vadd.f32 %v2405, %v2477
        %v2534 = vadd.f32 %v2406, %v2478
        %v2535 = vadd.f32 %v2407, %v2479
        %v2536 = vadd.f32 %v2408, %v2480
        %v2537 = vadd.f32 %v2409, %v2481
        %v2538 = vadd.f32 %v2410, %v2482
        %v2539 = vadd.f32 %v2411, %v2483
        %v2540 = vadd.f32 %v2412, %v2484
        %v2541 = vadd.f32 %v2413, %v2485
        %v2542 = vadd.f32 %v2414, %v2486
        %v2543 = vadd.f32 %v2415, %v2487
        %v2544 = vadd.f32 %v2416, %v2488
        %v2545 = vadd.f32 %v2417, %v2489
        %v2546 = vadd.f32 %v2418, %v2490
        %v2547 = vadd.f32 %v2419, %v2491
        %v2548 = vadd.f32 %v2420, %v2492
        %v2549 = vadd.f32 %v2421, %v2493
        %v2550 = vadd.f32 %v2422, %v2494
        %v2551 = vadd.f32 %v2423, %v2495
        %v2552 = vadd.f32 %v2424, %v2496
        %v2553 = vadd.f32 %v2425, %v2497
        %v2554 = vadd.f32 %v2426, %v2498
        %v2555 = vadd.f32 %v2427, %v2499
        %v2556 = vadd.f32 %v2428, %v2500
        %v2557 = vadd.f32 %v2429, %v2501
        %v2558 = vadd.f32 %v2430, %v2502
        %v2559 = vadd.f32 %v2431, %v2503
        %v2560 = vadd.f32 %v2432, %v2504
        %v2561 = vadd.f32 %v2433, %v2505
        %v2562 = vadd.f32 %v2434, %v2506
        %v2563 = vadd.f32 %v2435, %v2507
        %v2564 = vadd.f32 %v2436, %v2508
        %v2565 = vadd.f32 %v2437, %v2509
        %v2566 = vadd.f32 %v2438, %v2510
        %v2567 = vadd.f32 %v2439, %v2511
        %v2568 = vadd.f32 %v2440, %v2512
        %v2569 = vadd.f32 %v2441, %v2513
        %v2570 = vadd.f32 %v2442, %v2514
        %v2571 = vadd.f32 %v2443, %v2515
        %v2572 = vadd.f32 %v2444, %v2516
        %v2573 = vadd.f32 %v2445, %v2517
        %v2574 = vadd.f32 %v2446, %v2518
        %v2575 = vadd.f32 %v2447, %v2519
        %v2576 = vadd.f32 %v2448, %v2520
        %v2577 = vadd.f32 %v2449, %v2521
        %v2578 = vadd.f32 %v2450, %v2522
        %v2579 = vadd.f32 %v2451, %v2523
        %v2580 = vadd.f32 %v2452, %v2524
        %v2581 = vadd.f32 %v2453, %v2525
        %v2582 = vadd.f32 %v2454, %v2526
        %v2583 = vadd.f32 %v2455, %v2527
        %v2584 = vadd.f32 %v2456, %v2528
        %v2585 = vlaneseq
        %v2586 = vshrl.u32 %v2585, 7
        %v2587 = vsub.s32 3, %v2586
        %v2588 = vrot.slane %v2249, %v2587
        %v2589 = vlaneseq
        %v2590 = vshrl.u32 %v2589, 7
        %v2591 = vsub.s32 3, %v2590
        %v2592 = vrot.slane %v2250, %v2591
        %v2593 = vlaneseq
        %v2594 = vshrl.u32 %v2593, 7
        %v2595 = vsub.s32 3, %v2594
        %v2596 = vrot.slane %v2251, %v2595
        %v2597 = vlaneseq
        %v2598 = vshrl.u32 %v2597, 7
        %v2599 = vsub.s32 3, %v2598
        %v2600 = vrot.slane %v2252, %v2599
        %v2601 = vmul.f32 %v1992, %v2588
        %v2602 = vmul.f32 %v1993, %v2592
        %v2603 = vmul.f32 %v1994, %v2596
        %v2604 = vmul.f32 %v1995, %v2600
        %v2605 = vmul.f32 %v1996, %v2588
        %v2606 = vmul.f32 %v1997, %v2592
        %v2607 = vmul.f32 %v1998, %v2596
        %v2608 = vmul.f32 %v1999, %v2600
        %v2609 = vmul.f32 %v2000, %v2588
        %v2610 = vmul.f32 %v2001, %v2592
        %v2611 = vmul.f32 %v2002, %v2596
        %v2612 = vmul.f32 %v2003, %v2600
        %v2613 = vmul.f32 %v2004, %v2588
        %v2614 = vmul.f32 %v2005, %v2592
        %v2615 = vmul.f32 %v2006, %v2596
        %v2616 = vmul.f32 %v2007, %v2600
        %v2617 = vmul.f32 %v2008, %v2588
        %v2618 = vmul.f32 %v2009, %v2592
        %v2619 = vmul.f32 %v2010, %v2596
        %v2620 = vmul.f32 %v2011, %v2600
        %v2621 = vmul.f32 %v2012, %v2588
        %v2622 = vmul.f32 %v2013, %v2592
        %v2623 = vmul.f32 %v2014, %v2596
        %v2624 = vmul.f32 %v2015, %v2600
        %v2625 = vmul.f32 %v2016, %v2588
        %v2626 = vmul.f32 %v2017, %v2592
        %v2627 = vmul.f32 %v2018, %v2596
        %v2628 = vmul.f32 %v2019, %v2600
        %v2629 = vmul.f32 %v2020, %v2588
        %v2630 = vmul.f32 %v2021, %v2592
        %v2631 = vmul.f32 %v2022, %v2596
        %v2632 = vmul.f32 %v2023, %v2600
        %v2633 = vmul.f32 %v2024, %v2588
        %v2634 = vmul.f32 %v2025, %v2592
        %v2635 = vmul.f32 %v2026, %v2596
        %v2636 = vmul.f32 %v2027, %v2600
        %v2637 = vmul.f32 %v2028, %v2588
        %v2638 = vmul.f32 %v2029, %v2592
        %v2639 = vmul.f32 %v2030, %v2596
        %v2640 = vmul.f32 %v2031, %v2600
        %v2641 = vmul.f32 %v2032, %v2588
        %v2642 = vmul.f32 %v2033, %v2592
        %v2643 = vmul.f32 %v2034, %v2596
        %v2644 = vmul.f32 %v2035, %v2600
        %v2645 = vmul.f32 %v2036, %v2588
        %v2646 = vmul.f32 %v2037, %v2592
        %v2647 = vmul.f32 %v2038, %v2596
        %v2648 = vmul.f32 %v2039, %v2600
        %v2649 = vmul.f32 %v2040, %v2588
        %v2650 = vmul.f32 %v2041, %v2592
        %v2651 = vmul.f32 %v2042, %v2596
        %v2652 = vmul.f32 %v2043, %v2600
        %v2653 = vmul.f32 %v2044, %v2588
        %v2654 = vmul.f32 %v2045, %v2592
        %v2655 = vmul.f32 %v2046, %v2596
        %v2656 = vmul.f32 %v2047, %v2600
        %v2657 = vmul.f32 %v2048, %v2588
        %v2658 = vmul.f32 %v2049, %v2592
        %v2659 = vmul.f32 %v2050, %v2596
        %v2660 = vmul.f32 %v2051, %v2600
        %v2661 = vmul.f32 %v2052, %v2588
        %v2662 = vmul.f32 %v2053, %v2592
        %v2663 = vmul.f32 %v2054, %v2596
        %v2664 = vmul.f32 %v2055, %v2600
        %v2665 = vlaneseq
        %v2666 = vshrl.u32 %v2665, 7
        %v2667 = vsub.s32 4, %v2666
        %v2668 = vrot.slane %v2249, %v2667
        %v2669 = vlaneseq
        %v2670 = vshrl.u32 %v2669, 7
        %v2671 = vsub.s32 4, %v2670
        %v2672 = vrot.slane %v2250, %v2671
        %v2673 = vlaneseq
        %v2674 = vshrl.u32 %v2673, 7
        %v2675 = vsub.s32 4, %v2674
        %v2676 = vrot.slane %v2251, %v2675
        %v2677 = vlaneseq
        %v2678 = vshrl.u32 %v2677, 7
        %v2679 = vsub.s32 4, %v2678
        %v2680 = vrot.slane %v2252, %v2679
        %v2681 = vmul.f32 %v1495, %v2668
        %v2682 = vmul.f32 %v1497, %v2672
        %v2683 = vmul.f32 %v1721, %v2676
        %v2684 = vmul.f32 %v1723, %v2680
        %v2685 = vmul.f32 %v1499, %v2668
        %v2686 = vmul.f32 %v1501, %v2672
        %v2687 = vmul.f32 %v1725, %v2676
        %v2688 = vmul.f32 %v1727, %v2680
        %v2689 = vmul.f32 %v1505, %v2668
        %v2690 = vmul.f32 %v1507, %v2672
        %v2691 = vmul.f32 %v1731, %v2676
        %v2692 = vmul.f32 %v1733, %v2680
        %v2693 = vmul.f32 %v1509, %v2668
        %v2694 = vmul.f32 %v1511, %v2672
        %v2695 = vmul.f32 %v1735, %v2676
        %v2696 = vmul.f32 %v1737, %v2680
        %v2697 = vmul.f32 %v1515, %v2668
        %v2698 = vmul.f32 %v1517, %v2672
        %v2699 = vmul.f32 %v1741, %v2676
        %v2700 = vmul.f32 %v1743, %v2680
        %v2701 = vmul.f32 %v1519, %v2668
        %v2702 = vmul.f32 %v1521, %v2672
        %v2703 = vmul.f32 %v1745, %v2676
        %v2704 = vmul.f32 %v1747, %v2680
        %v2705 = vmul.f32 %v1525, %v2668
        %v2706 = vmul.f32 %v1527, %v2672
        %v2707 = vmul.f32 %v1751, %v2676
        %v2708 = vmul.f32 %v1753, %v2680
        %v2709 = vmul.f32 %v1529, %v2668
        %v2710 = vmul.f32 %v1531, %v2672
        %v2711 = vmul.f32 %v1755, %v2676
        %v2712 = vmul.f32 %v1757, %v2680
        %v2713 = vmul.f32 %v1535, %v2668
        %v2714 = vmul.f32 %v1537, %v2672
        %v2715 = vmul.f32 %v1761, %v2676
        %v2716 = vmul.f32 %v1763, %v2680
        %v2717 = vmul.f32 %v1539, %v2668
        %v2718 = vmul.f32 %v1541, %v2672
        %v2719 = vmul.f32 %v1765, %v2676
        %v2720 = vmul.f32 %v1767, %v2680
        %v2721 = vmul.f32 %v1545, %v2668
        %v2722 = vmul.f32 %v1547, %v2672
        %v2723 = vmul.f32 %v1771, %v2676
        %v2724 = vmul.f32 %v1773, %v2680
        %v2725 = vmul.f32 %v1549, %v2668
        %v2726 = vmul.f32 %v1551, %v2672
        %v2727 = vmul.f32 %v1775, %v2676
        %v2728 = vmul.f32 %v1777, %v2680
        %v2729 = vmul.f32 %v1555, %v2668
        %v2730 = vmul.f32 %v1557, %v2672
        %v2731 = vmul.f32 %v1781, %v2676
        %v2732 = vmul.f32 %v1783, %v2680
        %v2733 = vmul.f32 %v1559, %v2668
        %v2734 = vmul.f32 %v1561, %v2672
        %v2735 = vmul.f32 %v1785, %v2676
        %v2736 = vmul.f32 %v1787, %v2680
        %v2737 = vmul.f32 %v1565, %v2668
        %v2738 = vmul.f32 %v1567, %v2672
        %v2739 = vmul.f32 %v1791, %v2676
        %v2740 = vmul.f32 %v1793, %v2680
        %v2741 = vmul.f32 %v1569, %v2668
        %v2742 = vmul.f32 %v1571, %v2672
        %v2743 = vmul.f32 %v1795, %v2676
        %v2744 = vmul.f32 %v1797, %v2680
        %v2745 = vadd.f32 %v2601, %v2681
        %v2746 = vadd.f32 %v2602, %v2682
        %v2747 = vadd.f32 %v2603, %v2683
        %v2748 = vadd.f32 %v2604, %v2684
        %v2749 = vadd.f32 %v2605, %v2685
        %v2750 = vadd.f32 %v2606, %v2686
        %v2751 = vadd.f32 %v2607, %v2687
        %v2752 = vadd.f32 %v2608, %v2688
        %v2753 = vadd.f32 %v2609, %v2689
        %v2754 = vadd.f32 %v2610, %v2690
        %v2755 = vadd.f32 %v2611, %v2691
        %v2756 = vadd.f32 %v2612, %v2692
        %v2757 = vadd.f32 %v2613, %v2693
        %v2758 = vadd.f32 %v2614, %v2694
        %v2759 = vadd.f32 %v2615, %v2695
        %v2760 = vadd.f32 %v2616, %v2696
        %v2761 = vadd.f32 %v2617, %v2697
        %v2762 = vadd.f32 %v2618, %v2698
        %v2763 = vadd.f32 %v2619, %v2699
        %v2764 = vadd.f32 %v2620, %v2700
        %v2765 = vadd.f32 %v2621, %v2701
        %v2766 = vadd.f32 %v2622, %v2702
        %v2767 = vadd.f32 %v2623, %v2703
        %v2768 = vadd.f32 %v2624, %v2704
        %v2769 = vadd.f32 %v2625, %v2705
        %v2770 = vadd.f32 %v2626, %v2706
        %v2771 = vadd.f32 %v2627, %v2707
        %v2772 = vadd.f32 %v2628, %v2708
        %v2773 = vadd.f32 %v2629, %v2709
        %v2774 = vadd.f32 %v2630, %v2710
        %v2775 = vadd.f32 %v2631, %v2711
        %v2776 = vadd.f32 %v2632, %v2712
        %v2777 = vadd.f32 %v2633, %v2713
        %v2778 = vadd.f32 %v2634, %v2714
        %v2779 = vadd.f32 %v2635, %v2715
        %v2780 = vadd.f32 %v2636, %v2716
        %v2781 = vadd.f32 %v2637, %v2717
        %v2782 = vadd.f32 %v2638, %v2718
        %v2783 = vadd.f32 %v2639, %v2719
        %v2784 = vadd.f32 %v2640, %v2720
        %v2785 = vadd.f32 %v2641, %v2721
        %v2786 = vadd.f32 %v2642, %v2722
        %v2787 = vadd.f32 %v2643, %v2723
        %v2788 = vadd.f32 %v2644, %v2724
        %v2789 = vadd.f32 %v2645, %v2725
        %v2790 = vadd.f32 %v2646, %v2726
        %v2791 = vadd.f32 %v2647, %v2727
        %v2792 = vadd.f32 %v2648, %v2728
        %v2793 = vadd.f32 %v2649, %v2729
        %v2794 = vadd.f32 %v2650, %v2730
        %v2795 = vadd.f32 %v2651, %v2731
        %v2796 = vadd.f32 %v2652, %v2732
        %v2797 = vadd.f32 %v2653, %v2733
        %v2798 = vadd.f32 %v2654, %v2734
        %v2799 = vadd.f32 %v2655, %v2735
        %v2800 = vadd.f32 %v2656, %v2736
        %v2801 = vadd.f32 %v2657, %v2737
        %v2802 = vadd.f32 %v2658, %v2738
        %v2803 = vadd.f32 %v2659, %v2739
        %v2804 = vadd.f32 %v2660, %v2740
        %v2805 = vadd.f32 %v2661, %v2741
        %v2806 = vadd.f32 %v2662, %v2742
        %v2807 = vadd.f32 %v2663, %v2743
        %v2808 = vadd.f32 %v2664, %v2744
        %v2809 = vlaneseq
        %v2810 = vshrl.u32 %v2809, 7
        %v2811 = vsub.s32 5, %v2810
        %v2812 = vrot.slane %v2249, %v2811
        %v2813 = vlaneseq
        %v2814 = vshrl.u32 %v2813, 7
        %v2815 = vsub.s32 5, %v2814
        %v2816 = vrot.slane %v2250, %v2815
        %v2817 = vlaneseq
        %v2818 = vshrl.u32 %v2817, 7
        %v2819 = vsub.s32 5, %v2818
        %v2820 = vrot.slane %v2251, %v2819
        %v2821 = vlaneseq
        %v2822 = vshrl.u32 %v2821, 7
        %v2823 = vsub.s32 5, %v2822
        %v2824 = vrot.slane %v2252, %v2823
        %v2825 = vmul.f32 %v2185, %v2812
        %v2826 = vmul.f32 %v2186, %v2816
        %v2827 = vmul.f32 %v2187, %v2820
        %v2828 = vmul.f32 %v2188, %v2824
        %v2829 = vmul.f32 %v2189, %v2812
        %v2830 = vmul.f32 %v2190, %v2816
        %v2831 = vmul.f32 %v2191, %v2820
        %v2832 = vmul.f32 %v2192, %v2824
        %v2833 = vmul.f32 %v2193, %v2812
        %v2834 = vmul.f32 %v2194, %v2816
        %v2835 = vmul.f32 %v2195, %v2820
        %v2836 = vmul.f32 %v2196, %v2824
        %v2837 = vmul.f32 %v2197, %v2812
        %v2838 = vmul.f32 %v2198, %v2816
        %v2839 = vmul.f32 %v2199, %v2820
        %v2840 = vmul.f32 %v2200, %v2824
        %v2841 = vmul.f32 %v2201, %v2812
        %v2842 = vmul.f32 %v2202, %v2816
        %v2843 = vmul.f32 %v2203, %v2820
        %v2844 = vmul.f32 %v2204, %v2824
        %v2845 = vmul.f32 %v2205, %v2812
        %v2846 = vmul.f32 %v2206, %v2816
        %v2847 = vmul.f32 %v2207, %v2820
        %v2848 = vmul.f32 %v2208, %v2824
        %v2849 = vmul.f32 %v2209, %v2812
        %v2850 = vmul.f32 %v2210, %v2816
        %v2851 = vmul.f32 %v2211, %v2820
        %v2852 = vmul.f32 %v2212, %v2824
        %v2853 = vmul.f32 %v2213, %v2812
        %v2854 = vmul.f32 %v2214, %v2816
        %v2855 = vmul.f32 %v2215, %v2820
        %v2856 = vmul.f32 %v2216, %v2824
        %v2857 = vmul.f32 %v2217, %v2812
        %v2858 = vmul.f32 %v2218, %v2816
        %v2859 = vmul.f32 %v2219, %v2820
        %v2860 = vmul.f32 %v2220, %v2824
        %v2861 = vmul.f32 %v2221, %v2812
        %v2862 = vmul.f32 %v2222, %v2816
        %v2863 = vmul.f32 %v2223, %v2820
        %v2864 = vmul.f32 %v2224, %v2824
        %v2865 = vmul.f32 %v2225, %v2812
        %v2866 = vmul.f32 %v2226, %v2816
        %v2867 = vmul.f32 %v2227, %v2820
        %v2868 = vmul.f32 %v2228, %v2824
        %v2869 = vmul.f32 %v2229, %v2812
        %v2870 = vmul.f32 %v2230, %v2816
        %v2871 = vmul.f32 %v2231, %v2820
        %v2872 = vmul.f32 %v2232, %v2824
        %v2873 = vmul.f32 %v2233, %v2812
        %v2874 = vmul.f32 %v2234, %v2816
        %v2875 = vmul.f32 %v2235, %v2820
        %v2876 = vmul.f32 %v2236, %v2824
        %v2877 = vmul.f32 %v2237, %v2812
        %v2878 = vmul.f32 %v2238, %v2816
        %v2879 = vmul.f32 %v2239, %v2820
        %v2880 = vmul.f32 %v2240, %v2824
        %v2881 = vmul.f32 %v2241, %v2812
        %v2882 = vmul.f32 %v2242, %v2816
        %v2883 = vmul.f32 %v2243, %v2820
        %v2884 = vmul.f32 %v2244, %v2824
        %v2885 = vmul.f32 %v2245, %v2812
        %v2886 = vmul.f32 %v2246, %v2816
        %v2887 = vmul.f32 %v2247, %v2820
        %v2888 = vmul.f32 %v2248, %v2824
        %v2889 = vadd.f32 %v2745, %v2825
        %v2890 = vadd.f32 %v2746, %v2826
        %v2891 = vadd.f32 %v2747, %v2827
        %v2892 = vadd.f32 %v2748, %v2828
        %v2893 = vadd.f32 %v2749, %v2829
        %v2894 = vadd.f32 %v2750, %v2830
        %v2895 = vadd.f32 %v2751, %v2831
        %v2896 = vadd.f32 %v2752, %v2832
        %v2897 = vadd.f32 %v2753, %v2833
        %v2898 = vadd.f32 %v2754, %v2834
        %v2899 = vadd.f32 %v2755, %v2835
        %v2900 = vadd.f32 %v2756, %v2836
        %v2901 = vadd.f32 %v2757, %v2837
        %v2902 = vadd.f32 %v2758, %v2838
        %v2903 = vadd.f32 %v2759, %v2839
        %v2904 = vadd.f32 %v2760, %v2840
        %v2905 = vadd.f32 %v2761, %v2841
        %v2906 = vadd.f32 %v2762, %v2842
        %v2907 = vadd.f32 %v2763, %v2843
        %v2908 = vadd.f32 %v2764, %v2844
        %v2909 = vadd.f32 %v2765, %v2845
        %v2910 = vadd.f32 %v2766, %v2846
        %v2911 = vadd.f32 %v2767, %v2847
        %v2912 = vadd.f32 %v2768, %v2848
        %v2913 = vadd.f32 %v2769, %v2849
        %v2914 = vadd.f32 %v2770, %v2850
        %v2915 = vadd.f32 %v2771, %v2851
        %v2916 = vadd.f32 %v2772, %v2852
        %v2917 = vadd.f32 %v2773, %v2853
        %v2918 = vadd.f32 %v2774, %v2854
        %v2919 = vadd.f32 %v2775, %v2855
        %v2920 = vadd.f32 %v2776, %v2856
        %v2921 = vadd.f32 %v2777, %v2857
        %v2922 = vadd.f32 %v2778, %v2858
        %v2923 = vadd.f32 %v2779, %v2859
        %v2924 = vadd.f32 %v2780, %v2860
        %v2925 = vadd.f32 %v2781, %v2861
        %v2926 = vadd.f32 %v2782, %v2862
        %v2927 = vadd.f32 %v2783, %v2863
        %v2928 = vadd.f32 %v2784, %v2864
        %v2929 = vadd.f32 %v2785, %v2865
        %v2930 = vadd.f32 %v2786, %v2866
        %v2931 = vadd.f32 %v2787, %v2867
        %v2932 = vadd.f32 %v2788, %v2868
        %v2933 = vadd.f32 %v2789, %v2869
        %v2934 = vadd.f32 %v2790, %v2870
        %v2935 = vadd.f32 %v2791, %v2871
        %v2936 = vadd.f32 %v2792, %v2872
        %v2937 = vadd.f32 %v2793, %v2873
        %v2938 = vadd.f32 %v2794, %v2874
        %v2939 = vadd.f32 %v2795, %v2875
        %v2940 = vadd.f32 %v2796, %v2876
        %v2941 = vadd.f32 %v2797, %v2877
        %v2942 = vadd.f32 %v2798, %v2878
        %v2943 = vadd.f32 %v2799, %v2879
        %v2944 = vadd.f32 %v2800, %v2880
        %v2945 = vadd.f32 %v2801, %v2881
        %v2946 = vadd.f32 %v2802, %v2882
        %v2947 = vadd.f32 %v2803, %v2883
        %v2948 = vadd.f32 %v2804, %v2884
        %v2949 = vadd.f32 %v2805, %v2885
        %v2950 = vadd.f32 %v2806, %v2886
        %v2951 = vadd.f32 %v2807, %v2887
        %v2952 = vadd.f32 %v2808, %v2888
        %v2953 = vadd.f32 %v2889, 0.0
        %v2954 = vadd.f32 %v2890, 0.0
        %v2955 = vadd.f32 %v2891, 0.0
        %v2956 = vadd.f32 %v2892, 0.0
        %v2957 = vadd.f32 %v2529, %v2893
        %v2958 = vadd.f32 %v2530, %v2894
        %v2959 = vadd.f32 %v2531, %v2895
        %v2960 = vadd.f32 %v2532, %v2896
        %v2961 = vadd.f32 %v2533, %v2897
        %v2962 = vadd.f32 %v2534, %v2898
        %v2963 = vadd.f32 %v2535, %v2899
        %v2964 = vadd.f32 %v2536, %v2900
        %v2965 = vadd.f32 %v2537, %v2901
        %v2966 = vadd.f32 %v2538, %v2902
        %v2967 = vadd.f32 %v2539, %v2903
        %v2968 = vadd.f32 %v2540, %v2904
        %v2969 = vadd.f32 %v2541, %v2905
        %v2970 = vadd.f32 %v2542, %v2906
        %v2971 = vadd.f32 %v2543, %v2907
        %v2972 = vadd.f32 %v2544, %v2908
        %v2973 = vadd.f32 %v2545, %v2909
        %v2974 = vadd.f32 %v2546, %v2910
        %v2975 = vadd.f32 %v2547, %v2911
        %v2976 = vadd.f32 %v2548, %v2912
        %v2977 = vadd.f32 %v2549, %v2913
        %v2978 = vadd.f32 %v2550, %v2914
        %v2979 = vadd.f32 %v2551, %v2915
        %v2980 = vadd.f32 %v2552, %v2916
        %v2981 = vadd.f32 %v2553, %v2917
        %v2982 = vadd.f32 %v2554, %v2918
        %v2983 = vadd.f32 %v2555, %v2919
        %v2984 = vadd.f32 %v2556, %v2920
        %v2985 = vadd.f32 %v2921, 0.0
        %v2986 = vadd.f32 %v2922, 0.0
        %v2987 = vadd.f32 %v2923, 0.0
        %v2988 = vadd.f32 %v2924, 0.0
        %v2989 = vadd.f32 %v2557, %v2925
        %v2990 = vadd.f32 %v2558, %v2926
        %v2991 = vadd.f32 %v2559, %v2927
        %v2992 = vadd.f32 %v2560, %v2928
        %v2993 = vadd.f32 %v2561, %v2929
        %v2994 = vadd.f32 %v2562, %v2930
        %v2995 = vadd.f32 %v2563, %v2931
        %v2996 = vadd.f32 %v2564, %v2932
        %v2997 = vadd.f32 %v2565, %v2933
        %v2998 = vadd.f32 %v2566, %v2934
        %v2999 = vadd.f32 %v2567, %v2935
        %v3000 = vadd.f32 %v2568, %v2936
        %v3001 = vadd.f32 %v2569, %v2937
        %v3002 = vadd.f32 %v2570, %v2938
        %v3003 = vadd.f32 %v2571, %v2939
        %v3004 = vadd.f32 %v2572, %v2940
        %v3005 = vadd.f32 %v2573, %v2941
        %v3006 = vadd.f32 %v2574, %v2942
        %v3007 = vadd.f32 %v2575, %v2943
        %v3008 = vadd.f32 %v2576, %v2944
        %v3009 = vadd.f32 %v2577, %v2945
        %v3010 = vadd.f32 %v2578, %v2946
        %v3011 = vadd.f32 %v2579, %v2947
        %v3012 = vadd.f32 %v2580, %v2948
        %v3013 = vadd.f32 %v2581, %v2949
        %v3014 = vadd.f32 %v2582, %v2950
        %v3015 = vadd.f32 %v2583, %v2951
        %v3016 = vadd.f32 %v2584, %v2952
        %v3017 = vlaneseq
        %v3018 = vshrl.u32 %v3017, 7
        %v3019 = vsub.s32 6, %v3018
        %v3020 = vrot.slane %v2249, %v3019
        %v3021 = vlaneseq
        %v3022 = vshrl.u32 %v3021, 7
        %v3023 = vsub.s32 6, %v3022
        %v3024 = vrot.slane %v2250, %v3023
        %v3025 = vlaneseq
        %v3026 = vshrl.u32 %v3025, 7
        %v3027 = vsub.s32 6, %v3026
        %v3028 = vrot.slane %v2251, %v3027
        %v3029 = vlaneseq
        %v3030 = vshrl.u32 %v3029, 7
        %v3031 = vsub.s32 6, %v3030
        %v3032 = vrot.slane %v2252, %v3031
        %v3033 = vmul.f32 %v1996, %v3020
        %v3034 = vmul.f32 %v1997, %v3024
        %v3035 = vmul.f32 %v1998, %v3028
        %v3036 = vmul.f32 %v1999, %v3032
        %v3037 = vmul.f32 %v2000, %v3020
        %v3038 = vmul.f32 %v2001, %v3024
        %v3039 = vmul.f32 %v2002, %v3028
        %v3040 = vmul.f32 %v2003, %v3032
        %v3041 = vmul.f32 %v2004, %v3020
        %v3042 = vmul.f32 %v2005, %v3024
        %v3043 = vmul.f32 %v2006, %v3028
        %v3044 = vmul.f32 %v2007, %v3032
        %v3045 = vmul.f32 %v2008, %v3020
        %v3046 = vmul.f32 %v2009, %v3024
        %v3047 = vmul.f32 %v2010, %v3028
        %v3048 = vmul.f32 %v2011, %v3032
        %v3049 = vmul.f32 %v2012, %v3020
        %v3050 = vmul.f32 %v2013, %v3024
        %v3051 = vmul.f32 %v2014, %v3028
        %v3052 = vmul.f32 %v2015, %v3032
        %v3053 = vmul.f32 %v2016, %v3020
        %v3054 = vmul.f32 %v2017, %v3024
        %v3055 = vmul.f32 %v2018, %v3028
        %v3056 = vmul.f32 %v2019, %v3032
        %v3057 = vmul.f32 %v2020, %v3020
        %v3058 = vmul.f32 %v2021, %v3024
        %v3059 = vmul.f32 %v2022, %v3028
        %v3060 = vmul.f32 %v2023, %v3032
        %v3061 = vmul.f32 %v2028, %v3020
        %v3062 = vmul.f32 %v2029, %v3024
        %v3063 = vmul.f32 %v2030, %v3028
        %v3064 = vmul.f32 %v2031, %v3032
        %v3065 = vmul.f32 %v2032, %v3020
        %v3066 = vmul.f32 %v2033, %v3024
        %v3067 = vmul.f32 %v2034, %v3028
        %v3068 = vmul.f32 %v2035, %v3032
        %v3069 = vmul.f32 %v2036, %v3020
        %v3070 = vmul.f32 %v2037, %v3024
        %v3071 = vmul.f32 %v2038, %v3028
        %v3072 = vmul.f32 %v2039, %v3032
        %v3073 = vmul.f32 %v2040, %v3020
        %v3074 = vmul.f32 %v2041, %v3024
        %v3075 = vmul.f32 %v2042, %v3028
        %v3076 = vmul.f32 %v2043, %v3032
        %v3077 = vmul.f32 %v2044, %v3020
        %v3078 = vmul.f32 %v2045, %v3024
        %v3079 = vmul.f32 %v2046, %v3028
        %v3080 = vmul.f32 %v2047, %v3032
        %v3081 = vmul.f32 %v2048, %v3020
        %v3082 = vmul.f32 %v2049, %v3024
        %v3083 = vmul.f32 %v2050, %v3028
        %v3084 = vmul.f32 %v2051, %v3032
        %v3085 = vmul.f32 %v2052, %v3020
        %v3086 = vmul.f32 %v2053, %v3024
        %v3087 = vmul.f32 %v2054, %v3028
        %v3088 = vmul.f32 %v2055, %v3032
        %v3089 = vlaneseq
        %v3090 = vshrl.u32 %v3089, 7
        %v3091 = vsub.s32 7, %v3090
        %v3092 = vrot.slane %v2249, %v3091
        %v3093 = vlaneseq
        %v3094 = vshrl.u32 %v3093, 7
        %v3095 = vsub.s32 7, %v3094
        %v3096 = vrot.slane %v2250, %v3095
        %v3097 = vlaneseq
        %v3098 = vshrl.u32 %v3097, 7
        %v3099 = vsub.s32 7, %v3098
        %v3100 = vrot.slane %v2251, %v3099
        %v3101 = vlaneseq
        %v3102 = vshrl.u32 %v3101, 7
        %v3103 = vsub.s32 7, %v3102
        %v3104 = vrot.slane %v2252, %v3103
        %v3105 = vmul.f32 %v1499, %v3092
        %v3106 = vmul.f32 %v1501, %v3096
        %v3107 = vmul.f32 %v1725, %v3100
        %v3108 = vmul.f32 %v1727, %v3104
        %v3109 = vmul.f32 %v1505, %v3092
        %v3110 = vmul.f32 %v1507, %v3096
        %v3111 = vmul.f32 %v1731, %v3100
        %v3112 = vmul.f32 %v1733, %v3104
        %v3113 = vmul.f32 %v1509, %v3092
        %v3114 = vmul.f32 %v1511, %v3096
        %v3115 = vmul.f32 %v1735, %v3100
        %v3116 = vmul.f32 %v1737, %v3104
        %v3117 = vmul.f32 %v1515, %v3092
        %v3118 = vmul.f32 %v1517, %v3096
        %v3119 = vmul.f32 %v1741, %v3100
        %v3120 = vmul.f32 %v1743, %v3104
        %v3121 = vmul.f32 %v1519, %v3092
        %v3122 = vmul.f32 %v1521, %v3096
        %v3123 = vmul.f32 %v1745, %v3100
        %v3124 = vmul.f32 %v1747, %v3104
        %v3125 = vmul.f32 %v1525, %v3092
        %v3126 = vmul.f32 %v1527, %v3096
        %v3127 = vmul.f32 %v1751, %v3100
        %v3128 = vmul.f32 %v1753, %v3104
        %v3129 = vmul.f32 %v1529, %v3092
        %v3130 = vmul.f32 %v1531, %v3096
        %v3131 = vmul.f32 %v1755, %v3100
        %v3132 = vmul.f32 %v1757, %v3104
        %v3133 = vmul.f32 %v1539, %v3092
        %v3134 = vmul.f32 %v1541, %v3096
        %v3135 = vmul.f32 %v1765, %v3100
        %v3136 = vmul.f32 %v1767, %v3104
        %v3137 = vmul.f32 %v1545, %v3092
        %v3138 = vmul.f32 %v1547, %v3096
        %v3139 = vmul.f32 %v1771, %v3100
        %v3140 = vmul.f32 %v1773, %v3104
        %v3141 = vmul.f32 %v1549, %v3092
        %v3142 = vmul.f32 %v1551, %v3096
        %v3143 = vmul.f32 %v1775, %v3100
        %v3144 = vmul.f32 %v1777, %v3104
        %v3145 = vmul.f32 %v1555, %v3092
        %v3146 = vmul.f32 %v1557, %v3096
        %v3147 = vmul.f32 %v1781, %v3100
        %v3148 = vmul.f32 %v1783, %v3104
        %v3149 = vmul.f32 %v1559, %v3092
        %v3150 = vmul.f32 %v1561, %v3096
        %v3151 = vmul.f32 %v1785, %v3100
        %v3152 = vmul.f32 %v1787, %v3104
        %v3153 = vmul.f32 %v1565, %v3092
        %v3154 = vmul.f32 %v1567, %v3096
        %v3155 = vmul.f32 %v1791, %v3100
        %v3156 = vmul.f32 %v1793, %v3104
        %v3157 = vmul.f32 %v1569, %v3092
        %v3158 = vmul.f32 %v1571, %v3096
        %v3159 = vmul.f32 %v1795, %v3100
        %v3160 = vmul.f32 %v1797, %v3104
        %v3161 = vadd.f32 %v3033, %v3105
        %v3162 = vadd.f32 %v3034, %v3106
        %v3163 = vadd.f32 %v3035, %v3107
        %v3164 = vadd.f32 %v3036, %v3108
        %v3165 = vadd.f32 %v3037, %v3109
        %v3166 = vadd.f32 %v3038, %v3110
        %v3167 = vadd.f32 %v3039, %v3111
        %v3168 = vadd.f32 %v3040, %v3112
        %v3169 = vadd.f32 %v3041, %v3113
        %v3170 = vadd.f32 %v3042, %v3114
        %v3171 = vadd.f32 %v3043, %v3115
        %v3172 = vadd.f32 %v3044, %v3116
        %v3173 = vadd.f32 %v3045, %v3117
        %v3174 = vadd.f32 %v3046, %v3118
        %v3175 = vadd.f32 %v3047, %v3119
        %v3176 = vadd.f32 %v3048, %v3120
        %v3177 = vadd.f32 %v3049, %v3121
        %v3178 = vadd.f32 %v3050, %v3122
        %v3179 = vadd.f32 %v3051, %v3123
        %v3180 = vadd.f32 %v3052, %v3124
        %v3181 = vadd.f32 %v3053, %v3125
        %v3182 = vadd.f32 %v3054, %v3126
        %v3183 = vadd.f32 %v3055, %v3127
        %v3184 = vadd.f32 %v3056, %v3128
        %v3185 = vadd.f32 %v3057, %v3129
        %v3186 = vadd.f32 %v3058, %v3130
        %v3187 = vadd.f32 %v3059, %v3131
        %v3188 = vadd.f32 %v3060, %v3132
        %v3189 = vadd.f32 %v3061, %v3133
        %v3190 = vadd.f32 %v3062, %v3134
        %v3191 = vadd.f32 %v3063, %v3135
        %v3192 = vadd.f32 %v3064, %v3136
        %v3193 = vadd.f32 %v3065, %v3137
        %v3194 = vadd.f32 %v3066, %v3138
        %v3195 = vadd.f32 %v3067, %v3139
        %v3196 = vadd.f32 %v3068, %v3140
        %v3197 = vadd.f32 %v3069, %v3141
        %v3198 = vadd.f32 %v3070, %v3142
        %v3199 = vadd.f32 %v3071, %v3143
        %v3200 = vadd.f32 %v3072, %v3144
        %v3201 = vadd.f32 %v3073, %v3145
        %v3202 = vadd.f32 %v3074, %v3146
        %v3203 = vadd.f32 %v3075, %v3147
        %v3204 = vadd.f32 %v3076, %v3148
        %v3205 = vadd.f32 %v3077, %v3149
        %v3206 = vadd.f32 %v3078, %v3150
        %v3207 = vadd.f32 %v3079, %v3151
        %v3208 = vadd.f32 %v3080, %v3152
        %v3209 = vadd.f32 %v3081, %v3153
        %v3210 = vadd.f32 %v3082, %v3154
        %v3211 = vadd.f32 %v3083, %v3155
        %v3212 = vadd.f32 %v3084, %v3156
        %v3213 = vadd.f32 %v3085, %v3157
        %v3214 = vadd.f32 %v3086, %v3158
        %v3215 = vadd.f32 %v3087, %v3159
        %v3216 = vadd.f32 %v3088, %v3160
        %v3217 = vlaneseq
        %v3218 = vshrl.u32 %v3217, 7
        %v3219 = vsub.s32 0, %v3218
        %v3220 = vrot.slane %v2253, %v3219
        %v3221 = vlaneseq
        %v3222 = vshrl.u32 %v3221, 7
        %v3223 = vsub.s32 0, %v3222
        %v3224 = vrot.slane %v2254, %v3223
        %v3225 = vlaneseq
        %v3226 = vshrl.u32 %v3225, 7
        %v3227 = vsub.s32 0, %v3226
        %v3228 = vrot.slane %v2255, %v3227
        %v3229 = vlaneseq
        %v3230 = vshrl.u32 %v3229, 7
        %v3231 = vsub.s32 0, %v3230
        %v3232 = vrot.slane %v2256, %v3231
        %v3233 = vmul.f32 %v2189, %v3220
        %v3234 = vmul.f32 %v2190, %v3224
        %v3235 = vmul.f32 %v2191, %v3228
        %v3236 = vmul.f32 %v2192, %v3232
        %v3237 = vmul.f32 %v2193, %v3220
        %v3238 = vmul.f32 %v2194, %v3224
        %v3239 = vmul.f32 %v2195, %v3228
        %v3240 = vmul.f32 %v2196, %v3232
        %v3241 = vmul.f32 %v2197, %v3220
        %v3242 = vmul.f32 %v2198, %v3224
        %v3243 = vmul.f32 %v2199, %v3228
        %v3244 = vmul.f32 %v2200, %v3232
        %v3245 = vmul.f32 %v2201, %v3220
        %v3246 = vmul.f32 %v2202, %v3224
        %v3247 = vmul.f32 %v2203, %v3228
        %v3248 = vmul.f32 %v2204, %v3232
        %v3249 = vmul.f32 %v2205, %v3220
        %v3250 = vmul.f32 %v2206, %v3224
        %v3251 = vmul.f32 %v2207, %v3228
        %v3252 = vmul.f32 %v2208, %v3232
        %v3253 = vmul.f32 %v2209, %v3220
        %v3254 = vmul.f32 %v2210, %v3224
        %v3255 = vmul.f32 %v2211, %v3228
        %v3256 = vmul.f32 %v2212, %v3232
        %v3257 = vmul.f32 %v2213, %v3220
        %v3258 = vmul.f32 %v2214, %v3224
        %v3259 = vmul.f32 %v2215, %v3228
        %v3260 = vmul.f32 %v2216, %v3232
        %v3261 = vmul.f32 %v2221, %v3220
        %v3262 = vmul.f32 %v2222, %v3224
        %v3263 = vmul.f32 %v2223, %v3228
        %v3264 = vmul.f32 %v2224, %v3232
        %v3265 = vmul.f32 %v2225, %v3220
        %v3266 = vmul.f32 %v2226, %v3224
        %v3267 = vmul.f32 %v2227, %v3228
        %v3268 = vmul.f32 %v2228, %v3232
        %v3269 = vmul.f32 %v2229, %v3220
        %v3270 = vmul.f32 %v2230, %v3224
        %v3271 = vmul.f32 %v2231, %v3228
        %v3272 = vmul.f32 %v2232, %v3232
        %v3273 = vmul.f32 %v2233, %v3220
        %v3274 = vmul.f32 %v2234, %v3224
        %v3275 = vmul.f32 %v2235, %v3228
        %v3276 = vmul.f32 %v2236, %v3232
        %v3277 = vmul.f32 %v2237, %v3220
        %v3278 = vmul.f32 %v2238, %v3224
        %v3279 = vmul.f32 %v2239, %v3228
        %v3280 = vmul.f32 %v2240, %v3232
        %v3281 = vmul.f32 %v2241, %v3220
        %v3282 = vmul.f32 %v2242, %v3224
        %v3283 = vmul.f32 %v2243, %v3228
        %v3284 = vmul.f32 %v2244, %v3232
        %v3285 = vmul.f32 %v2245, %v3220
        %v3286 = vmul.f32 %v2246, %v3224
        %v3287 = vmul.f32 %v2247, %v3228
        %v3288 = vmul.f32 %v2248, %v3232
        %v3289 = vadd.f32 %v3161, %v3233
        %v3290 = vadd.f32 %v3162, %v3234
        %v3291 = vadd.f32 %v3163, %v3235
        %v3292 = vadd.f32 %v3164, %v3236
        %v3293 = vadd.f32 %v3165, %v3237
        %v3294 = vadd.f32 %v3166, %v3238
        %v3295 = vadd.f32 %v3167, %v3239
        %v3296 = vadd.f32 %v3168, %v3240
        %v3297 = vadd.f32 %v3169, %v3241
        %v3298 = vadd.f32 %v3170, %v3242
        %v3299 = vadd.f32 %v3171, %v3243
        %v3300 = vadd.f32 %v3172, %v3244
        %v3301 = vadd.f32 %v3173, %v3245
        %v3302 = vadd.f32 %v3174, %v3246
        %v3303 = vadd.f32 %v3175, %v3247
        %v3304 = vadd.f32 %v3176, %v3248
        %v3305 = vadd.f32 %v3177, %v3249
        %v3306 = vadd.f32 %v3178, %v3250
        %v3307 = vadd.f32 %v3179, %v3251
        %v3308 = vadd.f32 %v3180, %v3252
        %v3309 = vadd.f32 %v3181, %v3253
        %v3310 = vadd.f32 %v3182, %v3254
        %v3311 = vadd.f32 %v3183, %v3255
        %v3312 = vadd.f32 %v3184, %v3256
        %v3313 = vadd.f32 %v3185, %v3257
        %v3314 = vadd.f32 %v3186, %v3258
        %v3315 = vadd.f32 %v3187, %v3259
        %v3316 = vadd.f32 %v3188, %v3260
        %v3317 = vadd.f32 %v3189, %v3261
        %v3318 = vadd.f32 %v3190, %v3262
        %v3319 = vadd.f32 %v3191, %v3263
        %v3320 = vadd.f32 %v3192, %v3264
        %v3321 = vadd.f32 %v3193, %v3265
        %v3322 = vadd.f32 %v3194, %v3266
        %v3323 = vadd.f32 %v3195, %v3267
        %v3324 = vadd.f32 %v3196, %v3268
        %v3325 = vadd.f32 %v3197, %v3269
        %v3326 = vadd.f32 %v3198, %v3270
        %v3327 = vadd.f32 %v3199, %v3271
        %v3328 = vadd.f32 %v3200, %v3272
        %v3329 = vadd.f32 %v3201, %v3273
        %v3330 = vadd.f32 %v3202, %v3274
        %v3331 = vadd.f32 %v3203, %v3275
        %v3332 = vadd.f32 %v3204, %v3276
        %v3333 = vadd.f32 %v3205, %v3277
        %v3334 = vadd.f32 %v3206, %v3278
        %v3335 = vadd.f32 %v3207, %v3279
        %v3336 = vadd.f32 %v3208, %v3280
        %v3337 = vadd.f32 %v3209, %v3281
        %v3338 = vadd.f32 %v3210, %v3282
        %v3339 = vadd.f32 %v3211, %v3283
        %v3340 = vadd.f32 %v3212, %v3284
        %v3341 = vadd.f32 %v3213, %v3285
        %v3342 = vadd.f32 %v3214, %v3286
        %v3343 = vadd.f32 %v3215, %v3287
        %v3344 = vadd.f32 %v3216, %v3288
        %v3345 = vadd.f32 %v2953, %v3289
        %v3346 = vadd.f32 %v2954, %v3290
        %v3347 = vadd.f32 %v2955, %v3291
        %v3348 = vadd.f32 %v2956, %v3292
        %v3349 = vadd.f32 %v2957, %v3293
        %v3350 = vadd.f32 %v2958, %v3294
        %v3351 = vadd.f32 %v2959, %v3295
        %v3352 = vadd.f32 %v2960, %v3296
        %v3353 = vadd.f32 %v2961, %v3297
        %v3354 = vadd.f32 %v2962, %v3298
        %v3355 = vadd.f32 %v2963, %v3299
        %v3356 = vadd.f32 %v2964, %v3300
        %v3357 = vadd.f32 %v2965, %v3301
        %v3358 = vadd.f32 %v2966, %v3302
        %v3359 = vadd.f32 %v2967, %v3303
        %v3360 = vadd.f32 %v2968, %v3304
        %v3361 = vadd.f32 %v2969, %v3305
        %v3362 = vadd.f32 %v2970, %v3306
        %v3363 = vadd.f32 %v2971, %v3307
        %v3364 = vadd.f32 %v2972, %v3308
        %v3365 = vadd.f32 %v2973, %v3309
        %v3366 = vadd.f32 %v2974, %v3310
        %v3367 = vadd.f32 %v2975, %v3311
        %v3368 = vadd.f32 %v2976, %v3312
        %v3369 = vadd.f32 %v2977, %v3313
        %v3370 = vadd.f32 %v2978, %v3314
        %v3371 = vadd.f32 %v2979, %v3315
        %v3372 = vadd.f32 %v2980, %v3316
        %v3373 = vadd.f32 %v2981, 0.0
        %v3374 = vadd.f32 %v2982, 0.0
        %v3375 = vadd.f32 %v2983, 0.0
        %v3376 = vadd.f32 %v2984, 0.0
        %v3377 = vadd.f32 %v2985, %v3317
        %v3378 = vadd.f32 %v2986, %v3318
        %v3379 = vadd.f32 %v2987, %v3319
        %v3380 = vadd.f32 %v2988, %v3320
        %v3381 = vadd.f32 %v2989, %v3321
        %v3382 = vadd.f32 %v2990, %v3322
        %v3383 = vadd.f32 %v2991, %v3323
        %v3384 = vadd.f32 %v2992, %v3324
        %v3385 = vadd.f32 %v2993, %v3325
        %v3386 = vadd.f32 %v2994, %v3326
        %v3387 = vadd.f32 %v2995, %v3327
        %v3388 = vadd.f32 %v2996, %v3328
        %v3389 = vadd.f32 %v2997, %v3329
        %v3390 = vadd.f32 %v2998, %v3330
        %v3391 = vadd.f32 %v2999, %v3331
        %v3392 = vadd.f32 %v3000, %v3332
        %v3393 = vadd.f32 %v3001, %v3333
        %v3394 = vadd.f32 %v3002, %v3334
        %v3395 = vadd.f32 %v3003, %v3335
        %v3396 = vadd.f32 %v3004, %v3336
        %v3397 = vadd.f32 %v3005, %v3337
        %v3398 = vadd.f32 %v3006, %v3338
        %v3399 = vadd.f32 %v3007, %v3339
        %v3400 = vadd.f32 %v3008, %v3340
        %v3401 = vadd.f32 %v3009, %v3341
        %v3402 = vadd.f32 %v3010, %v3342
        %v3403 = vadd.f32 %v3011, %v3343
        %v3404 = vadd.f32 %v3012, %v3344
        %v3405 = vadd.f32 %v3013, 0.0
        %v3406 = vadd.f32 %v3014, 0.0
        %v3407 = vadd.f32 %v3015, 0.0
        %v3408 = vadd.f32 %v3016, 0.0
        %v3409 = vld [vmem:[%s285] ss:$4 sm:$0xf]
        %v3411 = vlaneseq
        %v3412 = vshrl.u32 %v3411, 7
        %v3413 = vsub.s32 0, %v3412
        %v3414 = vrot.slane %v3409, %v3413
        %v3415 = vlaneseq
        %v3416 = vshrl.u32 %v3415, 7
        %v3417 = vsub.s32 1, %v3416
        %v3418 = vrot.slane %v3409, %v3417
        %v3419 = vlaneseq
        %v3420 = vshrl.u32 %v3419, 7
        %v3421 = vsub.s32 2, %v3420
        %v3422 = vrot.slane %v3409, %v3421
        %v3423 = vlaneseq
        %v3424 = vshrl.u32 %v3423, 7
        %v3425 = vsub.s32 3, %v3424
        %v3426 = vrot.slane %v3409, %v3425
        %v3431 = vadd.f32 %v3345, %v3414
        %v3432 = vadd.f32 %v3346, %v3418
        %v3433 = vadd.f32 %v3347, %v3422
        %v3434 = vadd.f32 %v3348, %v3426
        %v3435 = vadd.f32 %v3349, %v3414
        %v3436 = vadd.f32 %v3350, %v3418
        %v3437 = vadd.f32 %v3351, %v3422
        %v3438 = vadd.f32 %v3352, %v3426
        %v3439 = vadd.f32 %v3353, %v3414
        %v3440 = vadd.f32 %v3354, %v3418
        %v3441 = vadd.f32 %v3355, %v3422
        %v3442 = vadd.f32 %v3356, %v3426
        %v3443 = vadd.f32 %v3357, %v3414
        %v3444 = vadd.f32 %v3358, %v3418
        %v3445 = vadd.f32 %v3359, %v3422
        %v3446 = vadd.f32 %v3360, %v3426
        %v3447 = vadd.f32 %v3361, %v3414
        %v3448 = vadd.f32 %v3362, %v3418
        %v3449 = vadd.f32 %v3363, %v3422
        %v3450 = vadd.f32 %v3364, %v3426
        %v3451 = vadd.f32 %v3365, %v3414
        %v3452 = vadd.f32 %v3366, %v3418
        %v3453 = vadd.f32 %v3367, %v3422
        %v3454 = vadd.f32 %v3368, %v3426
        %v3455 = vadd.f32 %v3369, %v3414
        %v3456 = vadd.f32 %v3370, %v3418
        %v3457 = vadd.f32 %v3371, %v3422
        %v3458 = vadd.f32 %v3372, %v3426
        %v3459 = vadd.f32 %v3373, %v3414
        %v3460 = vadd.f32 %v3374, %v3418
        %v3461 = vadd.f32 %v3375, %v3422
        %v3462 = vadd.f32 %v3376, %v3426
        %v3463 = vadd.f32 %v3377, %v3414
        %v3464 = vadd.f32 %v3378, %v3418
        %v3465 = vadd.f32 %v3379, %v3422
        %v3466 = vadd.f32 %v3380, %v3426
        %v3467 = vadd.f32 %v3381, %v3414
        %v3468 = vadd.f32 %v3382, %v3418
        %v3469 = vadd.f32 %v3383, %v3422
        %v3470 = vadd.f32 %v3384, %v3426
        %v3471 = vadd.f32 %v3385, %v3414
        %v3472 = vadd.f32 %v3386, %v3418
        %v3473 = vadd.f32 %v3387, %v3422
        %v3474 = vadd.f32 %v3388, %v3426
        %v3475 = vadd.f32 %v3389, %v3414
        %v3476 = vadd.f32 %v3390, %v3418
        %v3477 = vadd.f32 %v3391, %v3422
        %v3478 = vadd.f32 %v3392, %v3426
        %v3479 = vadd.f32 %v3393, %v3414
        %v3480 = vadd.f32 %v3394, %v3418
        %v3481 = vadd.f32 %v3395, %v3422
        %v3482 = vadd.f32 %v3396, %v3426
        %v3483 = vadd.f32 %v3397, %v3414
        %v3484 = vadd.f32 %v3398, %v3418
        %v3485 = vadd.f32 %v3399, %v3422
        %v3486 = vadd.f32 %v3400, %v3426
        %v3487 = vadd.f32 %v3401, %v3414
        %v3488 = vadd.f32 %v3402, %v3418
        %v3489 = vadd.f32 %v3403, %v3422
        %v3490 = vadd.f32 %v3404, %v3426
        %v3491 = vadd.f32 %v3405, %v3414
        %v3492 = vadd.f32 %v3406, %v3418
        %v3493 = vadd.f32 %v3407, %v3422
        %v3494 = vadd.f32 %v3408, %v3426
        %v3495 = vmax.f32 %v3431, 0.0
        %v3496 = vmax.f32 %v3432, 0.0
        %v3497 = vmax.f32 %v3433, 0.0
        %v3498 = vmax.f32 %v3434, 0.0
        %v3499 = vmax.f32 %v3435, 0.0
        %v3500 = vmax.f32 %v3436, 0.0
        %v3501 = vmax.f32 %v3437, 0.0
        %v3502 = vmax.f32 %v3438, 0.0
        %v3503 = vmax.f32 %v3439, 0.0
        %v3504 = vmax.f32 %v3440, 0.0
        %v3505 = vmax.f32 %v3441, 0.0
        %v3506 = vmax.f32 %v3442, 0.0
        %v3507 = vmax.f32 %v3443, 0.0
        %v3508 = vmax.f32 %v3444, 0.0
        %v3509 = vmax.f32 %v3445, 0.0
        %v3510 = vmax.f32 %v3446, 0.0
        %v3511 = vmax.f32 %v3447, 0.0
        %v3512 = vmax.f32 %v3448, 0.0
        %v3513 = vmax.f32 %v3449, 0.0
        %v3514 = vmax.f32 %v3450, 0.0
        %v3515 = vmax.f32 %v3451, 0.0
        %v3516 = vmax.f32 %v3452, 0.0
        %v3517 = vmax.f32 %v3453, 0.0
        %v3518 = vmax.f32 %v3454, 0.0
        %v3519 = vmax.f32 %v3455, 0.0
        %v3520 = vmax.f32 %v3456, 0.0
        %v3521 = vmax.f32 %v3457, 0.0
        %v3522 = vmax.f32 %v3458, 0.0
        %v3523 = vmax.f32 %v3459, 0.0
        %v3524 = vmax.f32 %v3460, 0.0
        %v3525 = vmax.f32 %v3461, 0.0
        %v3526 = vmax.f32 %v3462, 0.0
        %v3527 = vmax.f32 %v3463, 0.0
        %v3528 = vmax.f32 %v3464, 0.0
        %v3529 = vmax.f32 %v3465, 0.0
        %v3530 = vmax.f32 %v3466, 0.0
        %v3531 = vmax.f32 %v3467, 0.0
        %v3532 = vmax.f32 %v3468, 0.0
        %v3533 = vmax.f32 %v3469, 0.0
        %v3534 = vmax.f32 %v3470, 0.0
        %v3535 = vmax.f32 %v3471, 0.0
        %v3536 = vmax.f32 %v3472, 0.0
        %v3537 = vmax.f32 %v3473, 0.0
        %v3538 = vmax.f32 %v3474, 0.0
        %v3539 = vmax.f32 %v3475, 0.0
        %v3540 = vmax.f32 %v3476, 0.0
        %v3541 = vmax.f32 %v3477, 0.0
        %v3542 = vmax.f32 %v3478, 0.0
        %v3543 = vmax.f32 %v3479, 0.0
        %v3544 = vmax.f32 %v3480, 0.0
        %v3545 = vmax.f32 %v3481, 0.0
        %v3546 = vmax.f32 %v3482, 0.0
        %v3547 = vmax.f32 %v3483, 0.0
        %v3548 = vmax.f32 %v3484, 0.0
        %v3549 = vmax.f32 %v3485, 0.0
        %v3550 = vmax.f32 %v3486, 0.0
        %v3551 = vmax.f32 %v3487, 0.0
        %v3552 = vmax.f32 %v3488, 0.0
        %v3553 = vmax.f32 %v3489, 0.0
        %v3554 = vmax.f32 %v3490, 0.0
        %v3555 = vmax.f32 %v3491, 0.0
        %v3556 = vmax.f32 %v3492, 0.0
        %v3557 = vmax.f32 %v3493, 0.0
        %v3558 = vmax.f32 %v3494, 0.0
        %v3559 = vpack.c.bf16 %v3499, %v3495
        %v3560 = vpack.c.bf16 %v3500, %v3496
        %v3561 = vpack.c.bf16 %v3501, %v3497
        %v3562 = vpack.c.bf16 %v3502, %v3498
        %v3563 = vpack.c.bf16 %v3507, %v3503
        %v3564 = vpack.c.bf16 %v3508, %v3504
        %v3565 = vpack.c.bf16 %v3509, %v3505
        %v3566 = vpack.c.bf16 %v3510, %v3506
        %v3567 = vpack.c.bf16 %v3515, %v3511
        %v3568 = vpack.c.bf16 %v3516, %v3512
        %v3569 = vpack.c.bf16 %v3517, %v3513
        %v3570 = vpack.c.bf16 %v3518, %v3514
        %v3571 = vpack.c.bf16 %v3523, %v3519
        %v3572 = vpack.c.bf16 %v3524, %v3520
        %v3573 = vpack.c.bf16 %v3525, %v3521
        %v3574 = vpack.c.bf16 %v3526, %v3522
        %v3575 = vpack.c.bf16 %v3531, %v3527
        %v3576 = vpack.c.bf16 %v3532, %v3528
        %v3577 = vpack.c.bf16 %v3533, %v3529
        %v3578 = vpack.c.bf16 %v3534, %v3530
        %v3579 = vpack.c.bf16 %v3539, %v3535
        %v3580 = vpack.c.bf16 %v3540, %v3536
        %v3581 = vpack.c.bf16 %v3541, %v3537
        %v3582 = vpack.c.bf16 %v3542, %v3538
        %v3583 = vpack.c.bf16 %v3547, %v3543
        %v3584 = vpack.c.bf16 %v3548, %v3544
        %v3585 = vpack.c.bf16 %v3549, %v3545
        %v3586 = vpack.c.bf16 %v3550, %v3546
        %v3587 = vpack.c.bf16 %v3555, %v3551
        %v3588 = vpack.c.bf16 %v3556, %v3552
        %v3589 = vpack.c.bf16 %v3557, %v3553
        %v3590 = vpack.c.bf16 %v3558, %v3554
        %s3591 = scalar_lea.vmem %s245, 1024 [#allocation5]
        %v3592 = vld [vmem:[%s3591] sm:$0xff]
        %v3593 = vld [vmem:[%s3591 + $0x8] sm:$0xff]
        %v3594 = vld [vmem:[%s3591 + $0x10] sm:$0xff]
        %v3595 = vld [vmem:[%s3591 + $0x18] sm:$0xff]
        %v3596 = vld [vmem:[%s3591 + $0x20] sm:$0xff]
        %v3597 = vld [vmem:[%s3591 + $0x28] sm:$0xff]
        %v3598 = vld [vmem:[%s3591 + $0x30] sm:$0xff]
        %v3599 = vld [vmem:[%s3591 + $0x38] sm:$0xff]
        %v3600 = vld [vmem:[%s3591 + $0x40] sm:$0xff]
        %v3601 = vld [vmem:[%s3591 + $0x48] sm:$0xff]
        %v3602 = vld [vmem:[%s3591 + $0x50] sm:$0xff]
        %v3603 = vld [vmem:[%s3591 + $0x58] sm:$0xff]
        %v3604 = vld [vmem:[%s3591 + $0x60] sm:$0xff]
        %v3605 = vld [vmem:[%s3591 + $0x68] sm:$0xff]
        %v3606 = vld [vmem:[%s3591 + $0x70] sm:$0xff]
        %v3607 = vld [vmem:[%s3591 + $0x78] sm:$0xff]
        %v3608 = vld [vmem:[%s3591 + $0x80] sm:$0xff]
        %v3609 = vld [vmem:[%s3591 + $0x88] sm:$0xff]
        %v3610 = vld [vmem:[%s3591 + $0x90] sm:$0xff]
        %v3611 = vld [vmem:[%s3591 + $0x98] sm:$0xff]
        %v3612 = vld [vmem:[%s3591 + $0xa0] sm:$0xff]
        %v3613 = vld [vmem:[%s3591 + $0xa8] sm:$0xff]
        %v3614 = vld [vmem:[%s3591 + $0xb0] sm:$0xff]
        %v3615 = vld [vmem:[%s3591 + $0xb8] sm:$0xff]
        %v3616 = vld [vmem:[%s3591 + $0xc0] sm:$0xff]
        %v3617 = vld [vmem:[%s3591 + $0xc8] sm:$0xff]
        %v3618 = vld [vmem:[%s3591 + $0xd0] sm:$0xff]
        %v3619 = vld [vmem:[%s3591 + $0xd8] sm:$0xff]
        %v3620 = vld [vmem:[%s3591 + $0xe0] sm:$0xff]
        %v3621 = vld [vmem:[%s3591 + $0xe8] sm:$0xff]
        %v3622 = vld [vmem:[%s3591 + $0xf0] sm:$0xff]
        %v3623 = vld [vmem:[%s3591 + $0xf8] sm:$0xff]
        %v3624 = vld [vmem:[%s3591 + $0x100] sm:$0xff]
        %v3625 = vld [vmem:[%s3591 + $0x108] sm:$0xff]
        %v3626 = vld [vmem:[%s3591 + $0x110] sm:$0xff]
        %v3627 = vld [vmem:[%s3591 + $0x118] sm:$0xff]
        %v3628 = vld [vmem:[%s3591 + $0x120] sm:$0xff]
        %v3629 = vld [vmem:[%s3591 + $0x128] sm:$0xff]
        %v3630 = vld [vmem:[%s3591 + $0x130] sm:$0xff]
        %v3631 = vld [vmem:[%s3591 + $0x138] sm:$0xff]
        %v3632 = vld [vmem:[%s3591 + $0x140] sm:$0xff]
        %v3633 = vld [vmem:[%s3591 + $0x148] sm:$0xff]
        %v3634 = vld [vmem:[%s3591 + $0x150] sm:$0xff]
        %v3635 = vld [vmem:[%s3591 + $0x158] sm:$0xff]
        %v3636 = vld [vmem:[%s3591 + $0x160] sm:$0xff]
        %v3637 = vld [vmem:[%s3591 + $0x168] sm:$0xff]
        %v3638 = vld [vmem:[%s3591 + $0x170] sm:$0xff]
        %v3639 = vld [vmem:[%s3591 + $0x178] sm:$0xff]
        %v3640 = vld [vmem:[%s3591 + $0x180] sm:$0xff]
        %v3641 = vld [vmem:[%s3591 + $0x188] sm:$0xff]
        %v3642 = vld [vmem:[%s3591 + $0x190] sm:$0xff]
        %v3643 = vld [vmem:[%s3591 + $0x198] sm:$0xff]
        %v3644 = vld [vmem:[%s3591 + $0x1a0] sm:$0xff]
        %v3645 = vld [vmem:[%s3591 + $0x1a8] sm:$0xff]
        %v3646 = vld [vmem:[%s3591 + $0x1b0] sm:$0xff]
        %v3647 = vld [vmem:[%s3591 + $0x1b8] sm:$0xff]
        %v3648 = vld [vmem:[%s3591 + $0x1c0] sm:$0xff]
        %v3649 = vld [vmem:[%s3591 + $0x1c8] sm:$0xff]
        %v3650 = vld [vmem:[%s3591 + $0x1d0] sm:$0xff]
        %v3651 = vld [vmem:[%s3591 + $0x1d8] sm:$0xff]
        %v3652 = vld [vmem:[%s3591 + $0x1e0] sm:$0xff]
        %v3653 = vld [vmem:[%s3591 + $0x1e8] sm:$0xff]
        %v3654 = vld [vmem:[%s3591 + $0x1f0] sm:$0xff]
        %v3655 = vld [vmem:[%s3591 + $0x1f8] sm:$0xff]
        %v3656 = vld [vmem:[%s3591 + $0x200] sm:$0xff]
        %v3657 = vld [vmem:[%s3591 + $0x208] sm:$0xff]
        %v3658 = vld [vmem:[%s3591 + $0x210] sm:$0xff]
        %v3659 = vld [vmem:[%s3591 + $0x218] sm:$0xff]
        %v3660 = vld [vmem:[%s3591 + $0x220] sm:$0xff]
        %v3661 = vld [vmem:[%s3591 + $0x228] sm:$0xff]
        %v3662 = vld [vmem:[%s3591 + $0x230] sm:$0xff]
        %v3663 = vld [vmem:[%s3591 + $0x238] sm:$0xff]
        %v3664 = vld [vmem:[%s3591 + $0x240] sm:$0xff]
        %v3665 = vld [vmem:[%s3591 + $0x248] sm:$0xff]
        %v3666 = vld [vmem:[%s3591 + $0x250] sm:$0xff]
        %v3667 = vld [vmem:[%s3591 + $0x258] sm:$0xff]
        %v3668 = vld [vmem:[%s3591 + $0x260] sm:$0xff]
        %v3669 = vld [vmem:[%s3591 + $0x268] sm:$0xff]
        %v3670 = vld [vmem:[%s3591 + $0x270] sm:$0xff]
        %v3671 = vld [vmem:[%s3591 + $0x278] sm:$0xff]
        %v3672 = vld [vmem:[%s3591 + $0x280] sm:$0xff]
        %v3673 = vld [vmem:[%s3591 + $0x288] sm:$0xff]
        %v3674 = vld [vmem:[%s3591 + $0x290] sm:$0xff]
        %v3675 = vld [vmem:[%s3591 + $0x298] sm:$0xff]
        %v3676 = vld [vmem:[%s3591 + $0x2a0] sm:$0xff]
        %v3677 = vld [vmem:[%s3591 + $0x2a8] sm:$0xff]
        %v3678 = vld [vmem:[%s3591 + $0x2b0] sm:$0xff]
        %v3679 = vld [vmem:[%s3591 + $0x2b8] sm:$0xff]
        %v3680 = vld [vmem:[%s3591 + $0x2c0] sm:$0xff]
        %v3681 = vld [vmem:[%s3591 + $0x2c8] sm:$0xff]
        %v3682 = vld [vmem:[%s3591 + $0x2d0] sm:$0xff]
        %v3683 = vld [vmem:[%s3591 + $0x2d8] sm:$0xff]
        %v3684 = vld [vmem:[%s3591 + $0x2e0] sm:$0xff]
        %v3685 = vld [vmem:[%s3591 + $0x2e8] sm:$0xff]
        %v3686 = vld [vmem:[%s3591 + $0x2f0] sm:$0xff]
        %v3687 = vld [vmem:[%s3591 + $0x2f8] sm:$0xff]
        %v3688 = vld [vmem:[%s3591 + $0x300] sm:$0xff]
        %v3689 = vld [vmem:[%s3591 + $0x308] sm:$0xff]
        %v3690 = vld [vmem:[%s3591 + $0x310] sm:$0xff]
        %v3691 = vld [vmem:[%s3591 + $0x318] sm:$0xff]
        %v3692 = vld [vmem:[%s3591 + $0x320] sm:$0xff]
        %v3693 = vld [vmem:[%s3591 + $0x328] sm:$0xff]
        %v3694 = vld [vmem:[%s3591 + $0x330] sm:$0xff]
        %v3695 = vld [vmem:[%s3591 + $0x338] sm:$0xff]
        %v3696 = vld [vmem:[%s3591 + $0x340] sm:$0xff]
        %v3697 = vld [vmem:[%s3591 + $0x348] sm:$0xff]
        %v3698 = vld [vmem:[%s3591 + $0x350] sm:$0xff]
        %v3699 = vld [vmem:[%s3591 + $0x358] sm:$0xff]
        %v3700 = vld [vmem:[%s3591 + $0x360] sm:$0xff]
        %v3701 = vld [vmem:[%s3591 + $0x368] sm:$0xff]
        %v3702 = vld [vmem:[%s3591 + $0x370] sm:$0xff]
        %v3703 = vld [vmem:[%s3591 + $0x378] sm:$0xff]
        %v3704 = vld [vmem:[%s3591 + $0x380] sm:$0xff]
        %v3705 = vld [vmem:[%s3591 + $0x388] sm:$0xff]
        %v3706 = vld [vmem:[%s3591 + $0x390] sm:$0xff]
        %v3707 = vld [vmem:[%s3591 + $0x398] sm:$0xff]
        %v3708 = vld [vmem:[%s3591 + $0x3a0] sm:$0xff]
        %v3709 = vld [vmem:[%s3591 + $0x3a8] sm:$0xff]
        %v3710 = vld [vmem:[%s3591 + $0x3b0] sm:$0xff]
        %v3711 = vld [vmem:[%s3591 + $0x3b8] sm:$0xff]
        %v3712 = vld [vmem:[%s3591 + $0x3c0] sm:$0xff]
        %v3713 = vld [vmem:[%s3591 + $0x3c8] sm:$0xff]
        %v3714 = vld [vmem:[%s3591 + $0x3d0] sm:$0xff]
        %v3715 = vld [vmem:[%s3591 + $0x3d8] sm:$0xff]
        %v3716 = vld [vmem:[%s3591 + $0x3e0] sm:$0xff]
        %v3717 = vld [vmem:[%s3591 + $0x3e8] sm:$0xff]
        %v3718 = vld [vmem:[%s3591 + $0x3f0] sm:$0xff]
        %v3719 = vld [vmem:[%s3591 + $0x3f8] sm:$0xff]
        %v3848 = vunpack.c.l.b16 %v3592
        %v3849 = vunpack.c.h.b16 %v3592
        %v3850 = vunpack.c.l.b16 %v3593
        %v3851 = vunpack.c.h.b16 %v3593
        %v3852 = vunpack.c.l.b16 %v3594
        %v3853 = vunpack.c.h.b16 %v3594
        %v3854 = vunpack.c.l.b16 %v3595
        %v3855 = vunpack.c.h.b16 %v3595
        %v3856 = vunpack.c.l.b16 %v3596
        %v3857 = vunpack.c.h.b16 %v3596
        %v3858 = vunpack.c.l.b16 %v3597
        %v3859 = vunpack.c.h.b16 %v3597
        %v3860 = vunpack.c.l.b16 %v3598
        %v3861 = vunpack.c.h.b16 %v3598
        %v3862 = vunpack.c.l.b16 %v3599
        %v3863 = vunpack.c.h.b16 %v3599
        %v3864 = vunpack.c.l.b16 %v3600
        %v3865 = vunpack.c.h.b16 %v3600
        %v3866 = vunpack.c.l.b16 %v3601
        %v3867 = vunpack.c.h.b16 %v3601
        %v3868 = vunpack.c.l.b16 %v3602
        %v3869 = vunpack.c.h.b16 %v3602
        %v3870 = vunpack.c.l.b16 %v3603
        %v3871 = vunpack.c.h.b16 %v3603
        %v3872 = vunpack.c.l.b16 %v3604
        %v3873 = vunpack.c.h.b16 %v3604
        %v3874 = vunpack.c.l.b16 %v3605
        %v3875 = vunpack.c.h.b16 %v3605
        %v3876 = vunpack.c.l.b16 %v3606
        %v3877 = vunpack.c.h.b16 %v3606
        %v3878 = vunpack.c.l.b16 %v3607
        %v3879 = vunpack.c.h.b16 %v3607
        %v3880 = vunpack.c.l.b16 %v3608
        %v3881 = vunpack.c.h.b16 %v3608
        %v3882 = vunpack.c.l.b16 %v3609
        %v3883 = vunpack.c.h.b16 %v3609
        %v3884 = vunpack.c.l.b16 %v3610
        %v3885 = vunpack.c.h.b16 %v3610
        %v3886 = vunpack.c.l.b16 %v3611
        %v3887 = vunpack.c.h.b16 %v3611
        %v3888 = vunpack.c.l.b16 %v3612
        %v3889 = vunpack.c.h.b16 %v3612
        %v3890 = vunpack.c.l.b16 %v3613
        %v3891 = vunpack.c.h.b16 %v3613
        %v3892 = vunpack.c.l.b16 %v3614
        %v3893 = vunpack.c.h.b16 %v3614
        %v3894 = vunpack.c.l.b16 %v3615
        %v3895 = vunpack.c.h.b16 %v3615
        %v3896 = vunpack.c.l.b16 %v3616
        %v3897 = vunpack.c.h.b16 %v3616
        %v3898 = vunpack.c.l.b16 %v3617
        %v3899 = vunpack.c.h.b16 %v3617
        %v3900 = vunpack.c.l.b16 %v3618
        %v3901 = vunpack.c.h.b16 %v3618
        %v3902 = vunpack.c.l.b16 %v3619
        %v3903 = vunpack.c.h.b16 %v3619
        %v3904 = vunpack.c.l.b16 %v3620
        %v3905 = vunpack.c.h.b16 %v3620
        %v3906 = vunpack.c.l.b16 %v3621
        %v3907 = vunpack.c.h.b16 %v3621
        %v3908 = vunpack.c.l.b16 %v3622
        %v3909 = vunpack.c.h.b16 %v3622
        %v3910 = vunpack.c.l.b16 %v3623
        %v3911 = vunpack.c.h.b16 %v3623
        %v3912 = vunpack.c.l.b16 %v3624
        %v3913 = vunpack.c.h.b16 %v3624
        %v3914 = vunpack.c.l.b16 %v3625
        %v3915 = vunpack.c.h.b16 %v3625
        %v3916 = vunpack.c.l.b16 %v3626
        %v3917 = vunpack.c.h.b16 %v3626
        %v3918 = vunpack.c.l.b16 %v3627
        %v3919 = vunpack.c.h.b16 %v3627
        %v3920 = vunpack.c.l.b16 %v3628
        %v3921 = vunpack.c.h.b16 %v3628
        %v3922 = vunpack.c.l.b16 %v3629
        %v3923 = vunpack.c.h.b16 %v3629
        %v3924 = vunpack.c.l.b16 %v3630
        %v3925 = vunpack.c.h.b16 %v3630
        %v3926 = vunpack.c.l.b16 %v3631
        %v3927 = vunpack.c.h.b16 %v3631
        %v3928 = vunpack.c.l.b16 %v3632
        %v3929 = vunpack.c.h.b16 %v3632
        %v3930 = vunpack.c.l.b16 %v3633
        %v3931 = vunpack.c.h.b16 %v3633
        %v3932 = vunpack.c.l.b16 %v3634
        %v3933 = vunpack.c.h.b16 %v3634
        %v3934 = vunpack.c.l.b16 %v3635
        %v3935 = vunpack.c.h.b16 %v3635
        %v3936 = vunpack.c.l.b16 %v3636
        %v3937 = vunpack.c.h.b16 %v3636
        %v3938 = vunpack.c.l.b16 %v3637
        %v3939 = vunpack.c.h.b16 %v3637
        %v3940 = vunpack.c.l.b16 %v3638
        %v3941 = vunpack.c.h.b16 %v3638
        %v3942 = vunpack.c.l.b16 %v3639
        %v3943 = vunpack.c.h.b16 %v3639
        %v3944 = vunpack.c.l.b16 %v3640
        %v3945 = vunpack.c.h.b16 %v3640
        %v3946 = vunpack.c.l.b16 %v3641
        %v3947 = vunpack.c.h.b16 %v3641
        %v3948 = vunpack.c.l.b16 %v3642
        %v3949 = vunpack.c.h.b16 %v3642
        %v3950 = vunpack.c.l.b16 %v3643
        %v3951 = vunpack.c.h.b16 %v3643
        %v3952 = vunpack.c.l.b16 %v3644
        %v3953 = vunpack.c.h.b16 %v3644
        %v3954 = vunpack.c.l.b16 %v3645
        %v3955 = vunpack.c.h.b16 %v3645
        %v3956 = vunpack.c.l.b16 %v3646
        %v3957 = vunpack.c.h.b16 %v3646
        %v3958 = vunpack.c.l.b16 %v3647
        %v3959 = vunpack.c.h.b16 %v3647
        %v3960 = vunpack.c.l.b16 %v3648
        %v3961 = vunpack.c.h.b16 %v3648
        %v3962 = vunpack.c.l.b16 %v3649
        %v3963 = vunpack.c.h.b16 %v3649
        %v3964 = vunpack.c.l.b16 %v3650
        %v3965 = vunpack.c.h.b16 %v3650
        %v3966 = vunpack.c.l.b16 %v3651
        %v3967 = vunpack.c.h.b16 %v3651
        %v3968 = vunpack.c.l.b16 %v3652
        %v3969 = vunpack.c.h.b16 %v3652
        %v3970 = vunpack.c.l.b16 %v3653
        %v3971 = vunpack.c.h.b16 %v3653
        %v3972 = vunpack.c.l.b16 %v3654
        %v3973 = vunpack.c.h.b16 %v3654
        %v3974 = vunpack.c.l.b16 %v3655
        %v3975 = vunpack.c.h.b16 %v3655
        %v3976 = vunpack.c.l.b16 %v3656
        %v3977 = vunpack.c.h.b16 %v3656
        %v3978 = vunpack.c.l.b16 %v3657
        %v3979 = vunpack.c.h.b16 %v3657
        %v3980 = vunpack.c.l.b16 %v3658
        %v3981 = vunpack.c.h.b16 %v3658
        %v3982 = vunpack.c.l.b16 %v3659
        %v3983 = vunpack.c.h.b16 %v3659
        %v3984 = vunpack.c.l.b16 %v3660
        %v3985 = vunpack.c.h.b16 %v3660
        %v3986 = vunpack.c.l.b16 %v3661
        %v3987 = vunpack.c.h.b16 %v3661
        %v3988 = vunpack.c.l.b16 %v3662
        %v3989 = vunpack.c.h.b16 %v3662
        %v3990 = vunpack.c.l.b16 %v3663
        %v3991 = vunpack.c.h.b16 %v3663
        %v3992 = vunpack.c.l.b16 %v3664
        %v3993 = vunpack.c.h.b16 %v3664
        %v3994 = vunpack.c.l.b16 %v3665
        %v3995 = vunpack.c.h.b16 %v3665
        %v3996 = vunpack.c.l.b16 %v3666
        %v3997 = vunpack.c.h.b16 %v3666
        %v3998 = vunpack.c.l.b16 %v3667
        %v3999 = vunpack.c.h.b16 %v3667
        %v4000 = vunpack.c.l.b16 %v3668
        %v4001 = vunpack.c.h.b16 %v3668
        %v4002 = vunpack.c.l.b16 %v3669
        %v4003 = vunpack.c.h.b16 %v3669
        %v4004 = vunpack.c.l.b16 %v3670
        %v4005 = vunpack.c.h.b16 %v3670
        %v4006 = vunpack.c.l.b16 %v3671
        %v4007 = vunpack.c.h.b16 %v3671
        %v4008 = vunpack.c.l.b16 %v3672
        %v4009 = vunpack.c.h.b16 %v3672
        %v4010 = vunpack.c.l.b16 %v3673
        %v4011 = vunpack.c.h.b16 %v3673
        %v4012 = vunpack.c.l.b16 %v3674
        %v4013 = vunpack.c.h.b16 %v3674
        %v4014 = vunpack.c.l.b16 %v3675
        %v4015 = vunpack.c.h.b16 %v3675
        %v4016 = vunpack.c.l.b16 %v3676
        %v4017 = vunpack.c.h.b16 %v3676
        %v4018 = vunpack.c.l.b16 %v3677
        %v4019 = vunpack.c.h.b16 %v3677
        %v4020 = vunpack.c.l.b16 %v3678
        %v4021 = vunpack.c.h.b16 %v3678
        %v4022 = vunpack.c.l.b16 %v3679
        %v4023 = vunpack.c.h.b16 %v3679
        %v4024 = vunpack.c.l.b16 %v3680
        %v4025 = vunpack.c.h.b16 %v3680
        %v4026 = vunpack.c.l.b16 %v3681
        %v4027 = vunpack.c.h.b16 %v3681
        %v4028 = vunpack.c.l.b16 %v3682
        %v4029 = vunpack.c.h.b16 %v3682
        %v4030 = vunpack.c.l.b16 %v3683
        %v4031 = vunpack.c.h.b16 %v3683
        %v4032 = vunpack.c.l.b16 %v3684
        %v4033 = vunpack.c.h.b16 %v3684
        %v4034 = vunpack.c.l.b16 %v3685
        %v4035 = vunpack.c.h.b16 %v3685
        %v4036 = vunpack.c.l.b16 %v3686
        %v4037 = vunpack.c.h.b16 %v3686
        %v4038 = vunpack.c.l.b16 %v3687
        %v4039 = vunpack.c.h.b16 %v3687
        %v4040 = vunpack.c.l.b16 %v3688
        %v4041 = vunpack.c.h.b16 %v3688
        %v4042 = vunpack.c.l.b16 %v3689
        %v4043 = vunpack.c.h.b16 %v3689
        %v4044 = vunpack.c.l.b16 %v3690
        %v4045 = vunpack.c.h.b16 %v3690
        %v4046 = vunpack.c.l.b16 %v3691
        %v4047 = vunpack.c.h.b16 %v3691
        %v4048 = vunpack.c.l.b16 %v3692
        %v4049 = vunpack.c.h.b16 %v3692
        %v4050 = vunpack.c.l.b16 %v3693
        %v4051 = vunpack.c.h.b16 %v3693
        %v4052 = vunpack.c.l.b16 %v3694
        %v4053 = vunpack.c.h.b16 %v3694
        %v4054 = vunpack.c.l.b16 %v3695
        %v4055 = vunpack.c.h.b16 %v3695
        %v4056 = vunpack.c.l.b16 %v3696
        %v4057 = vunpack.c.h.b16 %v3696
        %v4058 = vunpack.c.l.b16 %v3697
        %v4059 = vunpack.c.h.b16 %v3697
        %v4060 = vunpack.c.l.b16 %v3698
        %v4061 = vunpack.c.h.b16 %v3698
        %v4062 = vunpack.c.l.b16 %v3699
        %v4063 = vunpack.c.h.b16 %v3699
        %v4064 = vunpack.c.l.b16 %v3700
        %v4065 = vunpack.c.h.b16 %v3700
        %v4066 = vunpack.c.l.b16 %v3701
        %v4067 = vunpack.c.h.b16 %v3701
        %v4068 = vunpack.c.l.b16 %v3702
        %v4069 = vunpack.c.h.b16 %v3702
        %v4070 = vunpack.c.l.b16 %v3703
        %v4071 = vunpack.c.h.b16 %v3703
        %v4072 = vunpack.c.l.b16 %v3704
        %v4073 = vunpack.c.h.b16 %v3704
        %v4074 = vunpack.c.l.b16 %v3705
        %v4075 = vunpack.c.h.b16 %v3705
        %v4076 = vunpack.c.l.b16 %v3706
        %v4077 = vunpack.c.h.b16 %v3706
        %v4078 = vunpack.c.l.b16 %v3707
        %v4079 = vunpack.c.h.b16 %v3707
        %v4080 = vunpack.c.l.b16 %v3708
        %v4081 = vunpack.c.h.b16 %v3708
        %v4082 = vunpack.c.l.b16 %v3709
        %v4083 = vunpack.c.h.b16 %v3709
        %v4084 = vunpack.c.l.b16 %v3710
        %v4085 = vunpack.c.h.b16 %v3710
        %v4086 = vunpack.c.l.b16 %v3711
        %v4087 = vunpack.c.h.b16 %v3711
        %v4088 = vunpack.c.l.b16 %v3712
        %v4089 = vunpack.c.h.b16 %v3712
        %v4090 = vunpack.c.l.b16 %v3713
        %v4091 = vunpack.c.h.b16 %v3713
        %v4092 = vunpack.c.l.b16 %v3714
        %v4093 = vunpack.c.h.b16 %v3714
        %v4094 = vunpack.c.l.b16 %v3715
        %v4095 = vunpack.c.h.b16 %v3715
        %v4096 = vunpack.c.l.b16 %v3716
        %v4097 = vunpack.c.h.b16 %v3716
        %v4098 = vunpack.c.l.b16 %v3717
        %v4099 = vunpack.c.h.b16 %v3717
        %v4100 = vunpack.c.l.b16 %v3718
        %v4101 = vunpack.c.h.b16 %v3718
        %v4102 = vunpack.c.l.b16 %v3719
        %v4103 = vunpack.c.h.b16 %v3719
        %v4104 = vpack.c.b16 %v3852, %v3848
        %v4105 = vpack.c.b16 %v3853, %v3849
        %v4106 = vpack.c.b16 %v3854, %v3850
        %v4107 = vpack.c.b16 %v3855, %v3851
        %v4108 = vpack.c.b16 %v3860, %v3856
        %v4109 = vpack.c.b16 %v3861, %v3857
        %v4110 = vpack.c.b16 %v3862, %v3858
        %v4111 = vpack.c.b16 %v3863, %v3859
        %v4112 = vpack.c.b16 %v3868, %v3864
        %v4113 = vpack.c.b16 %v3869, %v3865
        %v4114 = vpack.c.b16 %v3870, %v3866
        %v4115 = vpack.c.b16 %v3871, %v3867
        %v4116 = vpack.c.b16 %v3876, %v3872
        %v4117 = vpack.c.b16 %v3877, %v3873
        %v4118 = vpack.c.b16 %v3878, %v3874
        %v4119 = vpack.c.b16 %v3879, %v3875
        %v4120 = vpack.c.b16 %v3884, %v3880
        %v4121 = vpack.c.b16 %v3885, %v3881
        %v4122 = vpack.c.b16 %v3886, %v3882
        %v4123 = vpack.c.b16 %v3887, %v3883
        %v4124 = vpack.c.b16 %v3892, %v3888
        %v4125 = vpack.c.b16 %v3893, %v3889
        %v4126 = vpack.c.b16 %v3894, %v3890
        %v4127 = vpack.c.b16 %v3895, %v3891
        %v4128 = vpack.c.b16 %v3900, %v3896
        %v4129 = vpack.c.b16 %v3901, %v3897
        %v4130 = vpack.c.b16 %v3902, %v3898
        %v4131 = vpack.c.b16 %v3903, %v3899
        %v4132 = vpack.c.b16 %v3908, %v3904
        %v4133 = vpack.c.b16 %v3909, %v3905
        %v4134 = vpack.c.b16 %v3910, %v3906
        %v4135 = vpack.c.b16 %v3911, %v3907
        %v4136 = vpack.c.b16 %v3916, %v3912
        %v4137 = vpack.c.b16 %v3917, %v3913
        %v4138 = vpack.c.b16 %v3918, %v3914
        %v4139 = vpack.c.b16 %v3919, %v3915
        %v4140 = vpack.c.b16 %v3924, %v3920
        %v4141 = vpack.c.b16 %v3925, %v3921
        %v4142 = vpack.c.b16 %v3926, %v3922
        %v4143 = vpack.c.b16 %v3927, %v3923
        %v4144 = vpack.c.b16 %v3932, %v3928
        %v4145 = vpack.c.b16 %v3933, %v3929
        %v4146 = vpack.c.b16 %v3934, %v3930
        %v4147 = vpack.c.b16 %v3935, %v3931
        %v4148 = vpack.c.b16 %v3940, %v3936
        %v4149 = vpack.c.b16 %v3941, %v3937
        %v4150 = vpack.c.b16 %v3942, %v3938
        %v4151 = vpack.c.b16 %v3943, %v3939
        %v4152 = vpack.c.b16 %v3948, %v3944
        %v4153 = vpack.c.b16 %v3949, %v3945
        %v4154 = vpack.c.b16 %v3950, %v3946
        %v4155 = vpack.c.b16 %v3951, %v3947
        %v4156 = vpack.c.b16 %v3956, %v3952
        %v4157 = vpack.c.b16 %v3957, %v3953
        %v4158 = vpack.c.b16 %v3958, %v3954
        %v4159 = vpack.c.b16 %v3959, %v3955
        %v4160 = vpack.c.b16 %v3964, %v3960
        %v4161 = vpack.c.b16 %v3965, %v3961
        %v4162 = vpack.c.b16 %v3966, %v3962
        %v4163 = vpack.c.b16 %v3967, %v3963
        %v4164 = vpack.c.b16 %v3972, %v3968
        %v4165 = vpack.c.b16 %v3973, %v3969
        %v4166 = vpack.c.b16 %v3974, %v3970
        %v4167 = vpack.c.b16 %v3975, %v3971
        %v4168 = vpack.c.b16 %v3980, %v3976
        %v4169 = vpack.c.b16 %v3981, %v3977
        %v4170 = vpack.c.b16 %v3982, %v3978
        %v4171 = vpack.c.b16 %v3983, %v3979
        %v4172 = vpack.c.b16 %v3988, %v3984
        %v4173 = vpack.c.b16 %v3989, %v3985
        %v4174 = vpack.c.b16 %v3990, %v3986
        %v4175 = vpack.c.b16 %v3991, %v3987
        %v4176 = vpack.c.b16 %v3996, %v3992
        %v4177 = vpack.c.b16 %v3997, %v3993
        %v4178 = vpack.c.b16 %v3998, %v3994
        %v4179 = vpack.c.b16 %v3999, %v3995
        %v4180 = vpack.c.b16 %v4004, %v4000
        %v4181 = vpack.c.b16 %v4005, %v4001
        %v4182 = vpack.c.b16 %v4006, %v4002
        %v4183 = vpack.c.b16 %v4007, %v4003
        %v4184 = vpack.c.b16 %v4012, %v4008
        %v4185 = vpack.c.b16 %v4013, %v4009
        %v4186 = vpack.c.b16 %v4014, %v4010
        %v4187 = vpack.c.b16 %v4015, %v4011
        %v4188 = vpack.c.b16 %v4020, %v4016
        %v4189 = vpack.c.b16 %v4021, %v4017
        %v4190 = vpack.c.b16 %v4022, %v4018
        %v4191 = vpack.c.b16 %v4023, %v4019
        %v4192 = vpack.c.b16 %v4028, %v4024
        %v4193 = vpack.c.b16 %v4029, %v4025
        %v4194 = vpack.c.b16 %v4030, %v4026
        %v4195 = vpack.c.b16 %v4031, %v4027
        %v4196 = vpack.c.b16 %v4036, %v4032
        %v4197 = vpack.c.b16 %v4037, %v4033
        %v4198 = vpack.c.b16 %v4038, %v4034
        %v4199 = vpack.c.b16 %v4039, %v4035
        %v4200 = vpack.c.b16 %v4044, %v4040
        %v4201 = vpack.c.b16 %v4045, %v4041
        %v4202 = vpack.c.b16 %v4046, %v4042
        %v4203 = vpack.c.b16 %v4047, %v4043
        %v4204 = vpack.c.b16 %v4052, %v4048
        %v4205 = vpack.c.b16 %v4053, %v4049
        %v4206 = vpack.c.b16 %v4054, %v4050
        %v4207 = vpack.c.b16 %v4055, %v4051
        %v4208 = vpack.c.b16 %v4060, %v4056
        %v4209 = vpack.c.b16 %v4061, %v4057
        %v4210 = vpack.c.b16 %v4062, %v4058
        %v4211 = vpack.c.b16 %v4063, %v4059
        %v4212 = vpack.c.b16 %v4068, %v4064
        %v4213 = vpack.c.b16 %v4069, %v4065
        %v4214 = vpack.c.b16 %v4070, %v4066
        %v4215 = vpack.c.b16 %v4071, %v4067
        %v4216 = vpack.c.b16 %v4076, %v4072
        %v4217 = vpack.c.b16 %v4077, %v4073
        %v4218 = vpack.c.b16 %v4078, %v4074
        %v4219 = vpack.c.b16 %v4079, %v4075
        %v4220 = vpack.c.b16 %v4084, %v4080
        %v4221 = vpack.c.b16 %v4085, %v4081
        %v4222 = vpack.c.b16 %v4086, %v4082
        %v4223 = vpack.c.b16 %v4087, %v4083
        %v4224 = vpack.c.b16 %v4092, %v4088
        %v4225 = vpack.c.b16 %v4093, %v4089
        %v4226 = vpack.c.b16 %v4094, %v4090
        %v4227 = vpack.c.b16 %v4095, %v4091
        %v4228 = vpack.c.b16 %v4100, %v4096
        %v4229 = vpack.c.b16 %v4101, %v4097
        %v4230 = vpack.c.b16 %v4102, %v4098
        %v4231 = vpack.c.b16 %v4103, %v4099
        %4360 = vmatprep.subr.bf16.mxu0 %v4133
        %4361 = vmatpush1.bf16.msra.mxu0 %v4132
        %4362 = vmatprep.subr.bf16.mxu0 %v4129
        %4363 = vmatpush1.bf16.msra.mxu0 %v4128
        %4364 = vmatprep.subr.bf16.mxu0 %v4125
        %4365 = vmatpush1.bf16.msra.mxu0 %v4124
        %4366 = vmatprep.subr.bf16.mxu0 %v4121
        %4367 = vmatpush1.bf16.msra.mxu0 %v4120
        %4368 = vmatprep.subr.bf16.mxu0 %v4117
        %4369 = vmatpush1.bf16.msra.mxu0 %v4116
        %4370 = vmatprep.subr.bf16.mxu0 %v4113
        %4371 = vmatpush1.bf16.msra.mxu0 %v4112
        %4372 = vmatprep.subr.bf16.mxu0 %v4109
        %4373 = vmatpush1.bf16.msra.mxu0 %v4108
        %4374 = vmatprep.subr.bf16.mxu0 %v4105
        %4375 = vmatpush1.bf16.msra.mxu0 %v4104
        %4376 = vmatprep.subr.bf16.mxu0 %v4165
        %4377 = vmatpush2.bf16.msra.mxu0 %v4164
        %4378 = vmatprep.subr.bf16.mxu0 %v4161
        %4379 = vmatpush2.bf16.msra.mxu0 %v4160
        %4380 = vmatprep.subr.bf16.mxu0 %v4157
        %4381 = vmatpush2.bf16.msra.mxu0 %v4156
        %4382 = vmatprep.subr.bf16.mxu0 %v4153
        %4383 = vmatpush2.bf16.msra.mxu0 %v4152
        %4384 = vmatprep.subr.bf16.mxu0 %v4149
        %4385 = vmatpush2.bf16.msra.mxu0 %v4148
        %4386 = vmatprep.subr.bf16.mxu0 %v4145
        %4387 = vmatpush2.bf16.msra.mxu0 %v4144
        %4388 = vmatprep.subr.bf16.mxu0 %v4141
        %4389 = vmatpush2.bf16.msra.mxu0 %v4140
        %4390 = vmatprep.subr.bf16.mxu0 %v4137
        %4391 = vmatpush2.bf16.msra.mxu0 %v4136
        %4392 = vmatprep.mubr.bf16.mxu0 %v3560
        %4393 = vmatmul.mubr.bf16.gmra.mxu0 %v3559
        %v4394 = vpop.f32.mrf.mxu0
        %v4395 = vadd.f32 0.0, %v4394
        %v4396 = vpop.f32.mrf.mxu0
        %v4397 = vadd.f32 0.0, %v4396
        %v4398 = vpop.f32.mrf.mxu0
        %v4399 = vadd.f32 0.0, %v4398
        %v4400 = vpop.f32.mrf.mxu0
        %v4401 = vadd.f32 0.0, %v4400
        %4402 = vmatprep.mubr.bf16.mxu0 %v3564
        %4403 = vmatmul.mubr.bf16.gmra.mxu0 %v3563
        %v4404 = vpop.f32.mrf.mxu0
        %v4405 = vadd.f32 0.0, %v4404
        %v4406 = vpop.f32.mrf.mxu0
        %v4407 = vadd.f32 0.0, %v4406
        %v4408 = vpop.f32.mrf.mxu0
        %v4409 = vadd.f32 0.0, %v4408
        %v4410 = vpop.f32.mrf.mxu0
        %v4411 = vadd.f32 0.0, %v4410
        %4412 = vmatprep.mubr.bf16.mxu0 %v3568
        %4413 = vmatmul.mubr.bf16.gmra.mxu0 %v3567
        %v4414 = vpop.f32.mrf.mxu0
        %v4415 = vadd.f32 0.0, %v4414
        %v4416 = vpop.f32.mrf.mxu0
        %v4417 = vadd.f32 0.0, %v4416
        %v4418 = vpop.f32.mrf.mxu0
        %v4419 = vadd.f32 0.0, %v4418
        %v4420 = vpop.f32.mrf.mxu0
        %v4421 = vadd.f32 0.0, %v4420
        %4422 = vmatprep.mubr.bf16.mxu0 %v3572
        %4423 = vmatmul.mubr.bf16.gmra.mxu0 %v3571
        %v4424 = vpop.f32.mrf.mxu0
        %v4425 = vadd.f32 0.0, %v4424
        %v4426 = vpop.f32.mrf.mxu0
        %v4427 = vadd.f32 0.0, %v4426
        %v4428 = vpop.f32.mrf.mxu0
        %v4429 = vadd.f32 0.0, %v4428
        %v4430 = vpop.f32.mrf.mxu0
        %v4431 = vadd.f32 0.0, %v4430
        %4432 = vmatprep.mubr.bf16.mxu0 %v3576
        %4433 = vmatmul.mubr.bf16.gmra.mxu0 %v3575
        %v4434 = vpop.f32.mrf.mxu0
        %v4435 = vadd.f32 0.0, %v4434
        %v4436 = vpop.f32.mrf.mxu0
        %v4437 = vadd.f32 0.0, %v4436
        %v4438 = vpop.f32.mrf.mxu0
        %v4439 = vadd.f32 0.0, %v4438
        %v4440 = vpop.f32.mrf.mxu0
        %v4441 = vadd.f32 0.0, %v4440
        %4442 = vmatprep.mubr.bf16.mxu0 %v3580
        %4443 = vmatmul.mubr.bf16.gmra.mxu0 %v3579
        %v4444 = vpop.f32.mrf.mxu0
        %v4445 = vadd.f32 0.0, %v4444
        %v4446 = vpop.f32.mrf.mxu0
        %v4447 = vadd.f32 0.0, %v4446
        %v4448 = vpop.f32.mrf.mxu0
        %v4449 = vadd.f32 0.0, %v4448
        %v4450 = vpop.f32.mrf.mxu0
        %v4451 = vadd.f32 0.0, %v4450
        %4452 = vmatprep.mubr.bf16.mxu0 %v3584
        %4453 = vmatmul.mubr.bf16.gmra.mxu0 %v3583
        %v4454 = vpop.f32.mrf.mxu0
        %v4455 = vadd.f32 0.0, %v4454
        %v4456 = vpop.f32.mrf.mxu0
        %v4457 = vadd.f32 0.0, %v4456
        %v4458 = vpop.f32.mrf.mxu0
        %v4459 = vadd.f32 0.0, %v4458
        %v4460 = vpop.f32.mrf.mxu0
        %v4461 = vadd.f32 0.0, %v4460
        %4462 = vmatprep.mubr.bf16.mxu0 %v3588
        %4463 = vmatmul.mubr.bf16.gmra.mxu0 %v3587
        %v4464 = vpop.f32.mrf.mxu0
        %v4465 = vadd.f32 0.0, %v4464
        %v4466 = vpop.f32.mrf.mxu0
        %v4467 = vadd.f32 0.0, %v4466
        %v4468 = vpop.f32.mrf.mxu0
        %v4469 = vadd.f32 0.0, %v4468
        %v4470 = vpop.f32.mrf.mxu0
        %v4471 = vadd.f32 0.0, %v4470
        %4472 = vdwg.mxu0
        %4473 = vmatprep.subr.bf16.mxu0 %v4197
        %4474 = vmatpush1.bf16.msra.mxu0 %v4196
        %4475 = vmatprep.subr.bf16.mxu0 %v4193
        %4476 = vmatpush1.bf16.msra.mxu0 %v4192
        %4477 = vmatprep.subr.bf16.mxu0 %v4189
        %4478 = vmatpush1.bf16.msra.mxu0 %v4188
        %4479 = vmatprep.subr.bf16.mxu0 %v4185
        %4480 = vmatpush1.bf16.msra.mxu0 %v4184
        %4481 = vmatprep.subr.bf16.mxu0 %v4181
        %4482 = vmatpush1.bf16.msra.mxu0 %v4180
        %4483 = vmatprep.subr.bf16.mxu0 %v4177
        %4484 = vmatpush1.bf16.msra.mxu0 %v4176
        %4485 = vmatprep.subr.bf16.mxu0 %v4173
        %4486 = vmatpush1.bf16.msra.mxu0 %v4172
        %4487 = vmatprep.subr.bf16.mxu0 %v4169
        %4488 = vmatpush1.bf16.msra.mxu0 %v4168
        %4489 = vmatprep.subr.bf16.mxu0 %v4229
        %4490 = vmatpush2.bf16.msra.mxu0 %v4228
        %4491 = vmatprep.subr.bf16.mxu0 %v4225
        %4492 = vmatpush2.bf16.msra.mxu0 %v4224
        %4493 = vmatprep.subr.bf16.mxu0 %v4221
        %4494 = vmatpush2.bf16.msra.mxu0 %v4220
        %4495 = vmatprep.subr.bf16.mxu0 %v4217
        %4496 = vmatpush2.bf16.msra.mxu0 %v4216
        %4497 = vmatprep.subr.bf16.mxu0 %v4213
        %4498 = vmatpush2.bf16.msra.mxu0 %v4212
        %4499 = vmatprep.subr.bf16.mxu0 %v4209
        %4500 = vmatpush2.bf16.msra.mxu0 %v4208
        %4501 = vmatprep.subr.bf16.mxu0 %v4205
        %4502 = vmatpush2.bf16.msra.mxu0 %v4204
        %4503 = vmatprep.subr.bf16.mxu0 %v4201
        %4504 = vmatpush2.bf16.msra.mxu0 %v4200
        %4505 = vmatprep.mubr.bf16.mxu0 %v3562
        %4506 = vmatmul.mubr.bf16.gmra.mxu0 %v3561
        %v4507 = vpop.f32.mrf.mxu0
        %v4508 = vadd.f32 %v4395, %v4507
        %v4509 = vpop.f32.mrf.mxu0
        %v4510 = vadd.f32 %v4397, %v4509
        %v4511 = vpop.f32.mrf.mxu0
        %v4512 = vadd.f32 %v4399, %v4511
        %v4513 = vpop.f32.mrf.mxu0
        %v4514 = vadd.f32 %v4401, %v4513
        %4515 = vmatprep.mubr.bf16.mxu0 %v3566
        %4516 = vmatmul.mubr.bf16.gmra.mxu0 %v3565
        %v4517 = vpop.f32.mrf.mxu0
        %v4518 = vadd.f32 %v4405, %v4517
        %v4519 = vpop.f32.mrf.mxu0
        %v4520 = vadd.f32 %v4407, %v4519
        %v4521 = vpop.f32.mrf.mxu0
        %v4522 = vadd.f32 %v4409, %v4521
        %v4523 = vpop.f32.mrf.mxu0
        %v4524 = vadd.f32 %v4411, %v4523
        %4525 = vmatprep.mubr.bf16.mxu0 %v3570
        %4526 = vmatmul.mubr.bf16.gmra.mxu0 %v3569
        %v4527 = vpop.f32.mrf.mxu0
        %v4528 = vadd.f32 %v4415, %v4527
        %v4529 = vpop.f32.mrf.mxu0
        %v4530 = vadd.f32 %v4417, %v4529
        %v4531 = vpop.f32.mrf.mxu0
        %v4532 = vadd.f32 %v4419, %v4531
        %v4533 = vpop.f32.mrf.mxu0
        %v4534 = vadd.f32 %v4421, %v4533
        %4535 = vmatprep.mubr.bf16.mxu0 %v3574
        %4536 = vmatmul.mubr.bf16.gmra.mxu0 %v3573
        %v4537 = vpop.f32.mrf.mxu0
        %v4538 = vadd.f32 %v4425, %v4537
        %v4539 = vpop.f32.mrf.mxu0
        %v4540 = vadd.f32 %v4427, %v4539
        %v4541 = vpop.f32.mrf.mxu0
        %v4542 = vadd.f32 %v4429, %v4541
        %v4543 = vpop.f32.mrf.mxu0
        %v4544 = vadd.f32 %v4431, %v4543
        %4545 = vmatprep.mubr.bf16.mxu0 %v3578
        %4546 = vmatmul.mubr.bf16.gmra.mxu0 %v3577
        %v4547 = vpop.f32.mrf.mxu0
        %v4548 = vadd.f32 %v4435, %v4547
        %v4549 = vpop.f32.mrf.mxu0
        %v4550 = vadd.f32 %v4437, %v4549
        %v4551 = vpop.f32.mrf.mxu0
        %v4552 = vadd.f32 %v4439, %v4551
        %v4553 = vpop.f32.mrf.mxu0
        %v4554 = vadd.f32 %v4441, %v4553
        %4555 = vmatprep.mubr.bf16.mxu0 %v3582
        %4556 = vmatmul.mubr.bf16.gmra.mxu0 %v3581
        %v4557 = vpop.f32.mrf.mxu0
        %v4558 = vadd.f32 %v4445, %v4557
        %v4559 = vpop.f32.mrf.mxu0
        %v4560 = vadd.f32 %v4447, %v4559
        %v4561 = vpop.f32.mrf.mxu0
        %v4562 = vadd.f32 %v4449, %v4561
        %v4563 = vpop.f32.mrf.mxu0
        %v4564 = vadd.f32 %v4451, %v4563
        %4565 = vmatprep.mubr.bf16.mxu0 %v3586
        %4566 = vmatmul.mubr.bf16.gmra.mxu0 %v3585
        %v4567 = vpop.f32.mrf.mxu0
        %v4568 = vadd.f32 %v4455, %v4567
        %v4569 = vpop.f32.mrf.mxu0
        %v4570 = vadd.f32 %v4457, %v4569
        %v4571 = vpop.f32.mrf.mxu0
        %v4572 = vadd.f32 %v4459, %v4571
        %v4573 = vpop.f32.mrf.mxu0
        %v4574 = vadd.f32 %v4461, %v4573
        %4575 = vmatprep.mubr.bf16.mxu0 %v3590
        %4576 = vmatmul.mubr.bf16.gmra.mxu0 %v3589
        %v4577 = vpop.f32.mrf.mxu0
        %v4578 = vadd.f32 %v4465, %v4577
        %v4579 = vpop.f32.mrf.mxu0
        %v4580 = vadd.f32 %v4467, %v4579
        %v4581 = vpop.f32.mrf.mxu0
        %v4582 = vadd.f32 %v4469, %v4581
        %v4583 = vpop.f32.mrf.mxu0
        %v4584 = vadd.f32 %v4471, %v4583
        %4585 = vdwg.mxu0
        %4586 = vmatprep.subr.bf16.mxu0 %v4135
        %4587 = vmatpush1.bf16.msra.mxu0 %v4134
        %4588 = vmatprep.subr.bf16.mxu0 %v4131
        %4589 = vmatpush1.bf16.msra.mxu0 %v4130
        %4590 = vmatprep.subr.bf16.mxu0 %v4127
        %4591 = vmatpush1.bf16.msra.mxu0 %v4126
        %4592 = vmatprep.subr.bf16.mxu0 %v4123
        %4593 = vmatpush1.bf16.msra.mxu0 %v4122
        %4594 = vmatprep.subr.bf16.mxu0 %v4119
        %4595 = vmatpush1.bf16.msra.mxu0 %v4118
        %4596 = vmatprep.subr.bf16.mxu0 %v4115
        %4597 = vmatpush1.bf16.msra.mxu0 %v4114
        %4598 = vmatprep.subr.bf16.mxu0 %v4111
        %4599 = vmatpush1.bf16.msra.mxu0 %v4110
        %4600 = vmatprep.subr.bf16.mxu0 %v4107
        %4601 = vmatpush1.bf16.msra.mxu0 %v4106
        %4602 = vmatprep.subr.bf16.mxu0 %v4167
        %4603 = vmatpush2.bf16.msra.mxu0 %v4166
        %4604 = vmatprep.subr.bf16.mxu0 %v4163
        %4605 = vmatpush2.bf16.msra.mxu0 %v4162
        %4606 = vmatprep.subr.bf16.mxu0 %v4159
        %4607 = vmatpush2.bf16.msra.mxu0 %v4158
        %4608 = vmatprep.subr.bf16.mxu0 %v4155
        %4609 = vmatpush2.bf16.msra.mxu0 %v4154
        %4610 = vmatprep.subr.bf16.mxu0 %v4151
        %4611 = vmatpush2.bf16.msra.mxu0 %v4150
        %4612 = vmatprep.subr.bf16.mxu0 %v4147
        %4613 = vmatpush2.bf16.msra.mxu0 %v4146
        %4614 = vmatprep.subr.bf16.mxu0 %v4143
        %4615 = vmatpush2.bf16.msra.mxu0 %v4142
        %4616 = vmatprep.subr.bf16.mxu0 %v4139
        %4617 = vmatpush2.bf16.msra.mxu0 %v4138
        %4618 = vmatprep.mubr.bf16.mxu0 %v3560
        %4619 = vmatmul.mubr.bf16.gmra.mxu0 %v3559
        %v4620 = vpop.f32.mrf.mxu0
        %v4621 = vadd.f32 0.0, %v4620
        %v4622 = vpop.f32.mrf.mxu0
        %v4623 = vadd.f32 0.0, %v4622
        %v4624 = vpop.f32.mrf.mxu0
        %v4625 = vadd.f32 0.0, %v4624
        %v4626 = vpop.f32.mrf.mxu0
        %v4627 = vadd.f32 0.0, %v4626
        %4628 = vmatprep.mubr.bf16.mxu0 %v3564
        %4629 = vmatmul.mubr.bf16.gmra.mxu0 %v3563
        %v4630 = vpop.f32.mrf.mxu0
        %v4631 = vadd.f32 0.0, %v4630
        %v4632 = vpop.f32.mrf.mxu0
        %v4633 = vadd.f32 0.0, %v4632
        %v4634 = vpop.f32.mrf.mxu0
        %v4635 = vadd.f32 0.0, %v4634
        %v4636 = vpop.f32.mrf.mxu0
        %v4637 = vadd.f32 0.0, %v4636
        %4638 = vmatprep.mubr.bf16.mxu0 %v3568
        %4639 = vmatmul.mubr.bf16.gmra.mxu0 %v3567
        %v4640 = vpop.f32.mrf.mxu0
        %v4641 = vadd.f32 0.0, %v4640
        %v4642 = vpop.f32.mrf.mxu0
        %v4643 = vadd.f32 0.0, %v4642
        %v4644 = vpop.f32.mrf.mxu0
        %v4645 = vadd.f32 0.0, %v4644
        %v4646 = vpop.f32.mrf.mxu0
        %v4647 = vadd.f32 0.0, %v4646
        %4648 = vmatprep.mubr.bf16.mxu0 %v3572
        %4649 = vmatmul.mubr.bf16.gmra.mxu0 %v3571
        %v4650 = vpop.f32.mrf.mxu0
        %v4651 = vadd.f32 0.0, %v4650
        %v4652 = vpop.f32.mrf.mxu0
        %v4653 = vadd.f32 0.0, %v4652
        %v4654 = vpop.f32.mrf.mxu0
        %v4655 = vadd.f32 0.0, %v4654
        %v4656 = vpop.f32.mrf.mxu0
        %v4657 = vadd.f32 0.0, %v4656
        %4658 = vmatprep.mubr.bf16.mxu0 %v3576
        %4659 = vmatmul.mubr.bf16.gmra.mxu0 %v3575
        %v4660 = vpop.f32.mrf.mxu0
        %v4661 = vadd.f32 0.0, %v4660
        %v4662 = vpop.f32.mrf.mxu0
        %v4663 = vadd.f32 0.0, %v4662
        %v4664 = vpop.f32.mrf.mxu0
        %v4665 = vadd.f32 0.0, %v4664
        %v4666 = vpop.f32.mrf.mxu0
        %v4667 = vadd.f32 0.0, %v4666
        %4668 = vmatprep.mubr.bf16.mxu0 %v3580
        %4669 = vmatmul.mubr.bf16.gmra.mxu0 %v3579
        %v4670 = vpop.f32.mrf.mxu0
        %v4671 = vadd.f32 0.0, %v4670
        %v4672 = vpop.f32.mrf.mxu0
        %v4673 = vadd.f32 0.0, %v4672
        %v4674 = vpop.f32.mrf.mxu0
        %v4675 = vadd.f32 0.0, %v4674
        %v4676 = vpop.f32.mrf.mxu0
        %v4677 = vadd.f32 0.0, %v4676
        %4678 = vmatprep.mubr.bf16.mxu0 %v3584
        %4679 = vmatmul.mubr.bf16.gmra.mxu0 %v3583
        %v4680 = vpop.f32.mrf.mxu0
        %v4681 = vadd.f32 0.0, %v4680
        %v4682 = vpop.f32.mrf.mxu0
        %v4683 = vadd.f32 0.0, %v4682
        %v4684 = vpop.f32.mrf.mxu0
        %v4685 = vadd.f32 0.0, %v4684
        %v4686 = vpop.f32.mrf.mxu0
        %v4687 = vadd.f32 0.0, %v4686
        %4688 = vmatprep.mubr.bf16.mxu0 %v3588
        %4689 = vmatmul.mubr.bf16.gmra.mxu0 %v3587
        %v4690 = vpop.f32.mrf.mxu0
        %v4691 = vadd.f32 0.0, %v4690
        %v4692 = vpop.f32.mrf.mxu0
        %v4693 = vadd.f32 0.0, %v4692
        %v4694 = vpop.f32.mrf.mxu0
        %v4695 = vadd.f32 0.0, %v4694
        %v4696 = vpop.f32.mrf.mxu0
        %v4697 = vadd.f32 0.0, %v4696
        %4698 = vdwg.mxu0
        %4699 = vmatprep.subr.bf16.mxu0 %v4199
        %4700 = vmatpush1.bf16.msra.mxu0 %v4198
        %4701 = vmatprep.subr.bf16.mxu0 %v4195
        %4702 = vmatpush1.bf16.msra.mxu0 %v4194
        %4703 = vmatprep.subr.bf16.mxu0 %v4191
        %4704 = vmatpush1.bf16.msra.mxu0 %v4190
        %4705 = vmatprep.subr.bf16.mxu0 %v4187
        %4706 = vmatpush1.bf16.msra.mxu0 %v4186
        %4707 = vmatprep.subr.bf16.mxu0 %v4183
        %4708 = vmatpush1.bf16.msra.mxu0 %v4182
        %4709 = vmatprep.subr.bf16.mxu0 %v4179
        %4710 = vmatpush1.bf16.msra.mxu0 %v4178
        %4711 = vmatprep.subr.bf16.mxu0 %v4175
        %4712 = vmatpush1.bf16.msra.mxu0 %v4174
        %4713 = vmatprep.subr.bf16.mxu0 %v4171
        %4714 = vmatpush1.bf16.msra.mxu0 %v4170
        %4715 = vmatprep.subr.bf16.mxu0 %v4231
        %4716 = vmatpush2.bf16.msra.mxu0 %v4230
        %4717 = vmatprep.subr.bf16.mxu0 %v4227
        %4718 = vmatpush2.bf16.msra.mxu0 %v4226
        %4719 = vmatprep.subr.bf16.mxu0 %v4223
        %4720 = vmatpush2.bf16.msra.mxu0 %v4222
        %4721 = vmatprep.subr.bf16.mxu0 %v4219
        %4722 = vmatpush2.bf16.msra.mxu0 %v4218
        %4723 = vmatprep.subr.bf16.mxu0 %v4215
        %4724 = vmatpush2.bf16.msra.mxu0 %v4214
        %4725 = vmatprep.subr.bf16.mxu0 %v4211
        %4726 = vmatpush2.bf16.msra.mxu0 %v4210
        %4727 = vmatprep.subr.bf16.mxu0 %v4207
        %4728 = vmatpush2.bf16.msra.mxu0 %v4206
        %4729 = vmatprep.subr.bf16.mxu0 %v4203
        %4730 = vmatpush2.bf16.msra.mxu0 %v4202
        %4731 = vmatprep.mubr.bf16.mxu0 %v3562
        %4732 = vmatmul.mubr.bf16.gmra.mxu0 %v3561
        %v4733 = vpop.f32.mrf.mxu0
        %v4734 = vadd.f32 %v4621, %v4733
        %v4735 = vpop.f32.mrf.mxu0
        %v4736 = vadd.f32 %v4623, %v4735
        %v4737 = vpop.f32.mrf.mxu0
        %v4738 = vadd.f32 %v4625, %v4737
        %v4739 = vpop.f32.mrf.mxu0
        %v4740 = vadd.f32 %v4627, %v4739
        %4741 = vmatprep.mubr.bf16.mxu0 %v3566
        %4742 = vmatmul.mubr.bf16.gmra.mxu0 %v3565
        %v4743 = vpop.f32.mrf.mxu0
        %v4744 = vadd.f32 %v4631, %v4743
        %v4745 = vpop.f32.mrf.mxu0
        %v4746 = vadd.f32 %v4633, %v4745
        %v4747 = vpop.f32.mrf.mxu0
        %v4748 = vadd.f32 %v4635, %v4747
        %v4749 = vpop.f32.mrf.mxu0
        %v4750 = vadd.f32 %v4637, %v4749
        %4751 = vmatprep.mubr.bf16.mxu0 %v3570
        %4752 = vmatmul.mubr.bf16.gmra.mxu0 %v3569
        %v4753 = vpop.f32.mrf.mxu0
        %v4754 = vadd.f32 %v4641, %v4753
        %v4755 = vpop.f32.mrf.mxu0
        %v4756 = vadd.f32 %v4643, %v4755
        %v4757 = vpop.f32.mrf.mxu0
        %v4758 = vadd.f32 %v4645, %v4757
        %v4759 = vpop.f32.mrf.mxu0
        %v4760 = vadd.f32 %v4647, %v4759
        %4761 = vmatprep.mubr.bf16.mxu0 %v3574
        %4762 = vmatmul.mubr.bf16.gmra.mxu0 %v3573
        %v4763 = vpop.f32.mrf.mxu0
        %v4764 = vadd.f32 %v4651, %v4763
        %v4765 = vpop.f32.mrf.mxu0
        %v4766 = vadd.f32 %v4653, %v4765
        %v4767 = vpop.f32.mrf.mxu0
        %v4768 = vadd.f32 %v4655, %v4767
        %v4769 = vpop.f32.mrf.mxu0
        %v4770 = vadd.f32 %v4657, %v4769
        %4771 = vmatprep.mubr.bf16.mxu0 %v3578
        %4772 = vmatmul.mubr.bf16.gmra.mxu0 %v3577
        %v4773 = vpop.f32.mrf.mxu0
        %v4774 = vadd.f32 %v4661, %v4773
        %v4775 = vpop.f32.mrf.mxu0
        %v4776 = vadd.f32 %v4663, %v4775
        %v4777 = vpop.f32.mrf.mxu0
        %v4778 = vadd.f32 %v4665, %v4777
        %v4779 = vpop.f32.mrf.mxu0
        %v4780 = vadd.f32 %v4667, %v4779
        %4781 = vmatprep.mubr.bf16.mxu0 %v3582
        %4782 = vmatmul.mubr.bf16.gmra.mxu0 %v3581
        %v4783 = vpop.f32.mrf.mxu0
        %v4784 = vadd.f32 %v4671, %v4783
        %v4785 = vpop.f32.mrf.mxu0
        %v4786 = vadd.f32 %v4673, %v4785
        %v4787 = vpop.f32.mrf.mxu0
        %v4788 = vadd.f32 %v4675, %v4787
        %v4789 = vpop.f32.mrf.mxu0
        %v4790 = vadd.f32 %v4677, %v4789
        %4791 = vmatprep.mubr.bf16.mxu0 %v3586
        %4792 = vmatmul.mubr.bf16.gmra.mxu0 %v3585
        %v4793 = vpop.f32.mrf.mxu0
        %v4794 = vadd.f32 %v4681, %v4793
        %v4795 = vpop.f32.mrf.mxu0
        %v4796 = vadd.f32 %v4683, %v4795
        %v4797 = vpop.f32.mrf.mxu0
        %v4798 = vadd.f32 %v4685, %v4797
        %v4799 = vpop.f32.mrf.mxu0
        %v4800 = vadd.f32 %v4687, %v4799
        %4801 = vmatprep.mubr.bf16.mxu0 %v3590
        %4802 = vmatmul.mubr.bf16.gmra.mxu0 %v3589
        %v4803 = vpop.f32.mrf.mxu0
        %v4804 = vadd.f32 %v4691, %v4803
        %v4805 = vpop.f32.mrf.mxu0
        %v4806 = vadd.f32 %v4693, %v4805
        %v4807 = vpop.f32.mrf.mxu0
        %v4808 = vadd.f32 %v4695, %v4807
        %v4809 = vpop.f32.mrf.mxu0
        %v4810 = vadd.f32 %v4697, %v4809
        %4811 = vdwg.mxu0
        %v4876 = vrot.slane %v4508, 7
        %v4877 = vrot.slane %v4510, 7
        %v4878 = vrot.slane %v4734, 7
        %v4879 = vrot.slane %v4736, 7
        %v4880 = vrot.slane %v4512, 7
        %v4881 = vrot.slane %v4514, 7
        %v4882 = vrot.slane %v4738, 7
        %v4883 = vrot.slane %v4740, 7
        %v4884 = vrot.slane %v4518, 7
        %v4885 = vrot.slane %v4520, 7
        %v4886 = vrot.slane %v4744, 7
        %v4887 = vrot.slane %v4746, 7
        %v4888 = vrot.slane %v4522, 7
        %v4889 = vrot.slane %v4524, 7
        %v4890 = vrot.slane %v4748, 7
        %v4891 = vrot.slane %v4750, 7
        %v4892 = vrot.slane %v4528, 7
        %v4893 = vrot.slane %v4530, 7
        %v4894 = vrot.slane %v4754, 7
        %v4895 = vrot.slane %v4756, 7
        %v4896 = vrot.slane %v4532, 7
        %v4897 = vrot.slane %v4534, 7
        %v4898 = vrot.slane %v4758, 7
        %v4899 = vrot.slane %v4760, 7
        %v4900 = vrot.slane %v4538, 7
        %v4901 = vrot.slane %v4540, 7
        %v4902 = vrot.slane %v4764, 7
        %v4903 = vrot.slane %v4766, 7
        %v4904 = vrot.slane %v4542, 7
        %v4905 = vrot.slane %v4544, 7
        %v4906 = vrot.slane %v4768, 7
        %v4907 = vrot.slane %v4770, 7
        %v4908 = vrot.slane %v4548, 7
        %v4909 = vrot.slane %v4550, 7
        %v4910 = vrot.slane %v4774, 7
        %v4911 = vrot.slane %v4776, 7
        %v4912 = vrot.slane %v4552, 7
        %v4913 = vrot.slane %v4554, 7
        %v4914 = vrot.slane %v4778, 7
        %v4915 = vrot.slane %v4780, 7
        %v4916 = vrot.slane %v4558, 7
        %v4917 = vrot.slane %v4560, 7
        %v4918 = vrot.slane %v4784, 7
        %v4919 = vrot.slane %v4786, 7
        %v4920 = vrot.slane %v4562, 7
        %v4921 = vrot.slane %v4564, 7
        %v4922 = vrot.slane %v4788, 7
        %v4923 = vrot.slane %v4790, 7
        %v4924 = vrot.slane %v4568, 7
        %v4925 = vrot.slane %v4570, 7
        %v4926 = vrot.slane %v4794, 7
        %v4927 = vrot.slane %v4796, 7
        %v4928 = vrot.slane %v4572, 7
        %v4929 = vrot.slane %v4574, 7
        %v4930 = vrot.slane %v4798, 7
        %v4931 = vrot.slane %v4800, 7
        %v4932 = vrot.slane %v4578, 7
        %v4933 = vrot.slane %v4580, 7
        %v4934 = vrot.slane %v4804, 7
        %v4935 = vrot.slane %v4806, 7
        %v4936 = vrot.slane %v4582, 7
        %v4937 = vrot.slane %v4584, 7
        %v4938 = vrot.slane %v4808, 7
        %v4939 = vrot.slane %v4810, 7
        %v5004 = vsel %vm1991, 0.0, %v4876
        %v5005 = vsel %vm1991, 0.0, %v4877
        %v5006 = vsel %vm1991, 0.0, %v4878
        %v5007 = vsel %vm1991, 0.0, %v4879
        %v5008 = vsel %vm1991, 0.0, %v4880
        %v5009 = vsel %vm1991, 0.0, %v4881
        %v5010 = vsel %vm1991, 0.0, %v4882
        %v5011 = vsel %vm1991, 0.0, %v4883
        %v5012 = vsel %vm1991, 0.0, %v4884
        %v5013 = vsel %vm1991, 0.0, %v4885
        %v5014 = vsel %vm1991, 0.0, %v4886
        %v5015 = vsel %vm1991, 0.0, %v4887
        %v5016 = vsel %vm1991, 0.0, %v4888
        %v5017 = vsel %vm1991, 0.0, %v4889
        %v5018 = vsel %vm1991, 0.0, %v4890
        %v5019 = vsel %vm1991, 0.0, %v4891
        %v5020 = vsel %vm1991, 0.0, %v4892
        %v5021 = vsel %vm1991, 0.0, %v4893
        %v5022 = vsel %vm1991, 0.0, %v4894
        %v5023 = vsel %vm1991, 0.0, %v4895
        %v5024 = vsel %vm1991, 0.0, %v4896
        %v5025 = vsel %vm1991, 0.0, %v4897
        %v5026 = vsel %vm1991, 0.0, %v4898
        %v5027 = vsel %vm1991, 0.0, %v4899
        %v5028 = vsel %vm1991, 0.0, %v4900
        %v5029 = vsel %vm1991, 0.0, %v4901
        %v5030 = vsel %vm1991, 0.0, %v4902
        %v5031 = vsel %vm1991, 0.0, %v4903
        %v5032 = vsel %vm1991, 0.0, %v4904
        %v5033 = vsel %vm1991, 0.0, %v4905
        %v5034 = vsel %vm1991, 0.0, %v4906
        %v5035 = vsel %vm1991, 0.0, %v4907
        %v5036 = vsel %vm1991, 0.0, %v4908
        %v5037 = vsel %vm1991, 0.0, %v4909
        %v5038 = vsel %vm1991, 0.0, %v4910
        %v5039 = vsel %vm1991, 0.0, %v4911
        %v5040 = vsel %vm1991, 0.0, %v4912
        %v5041 = vsel %vm1991, 0.0, %v4913
        %v5042 = vsel %vm1991, 0.0, %v4914
        %v5043 = vsel %vm1991, 0.0, %v4915
        %v5044 = vsel %vm1991, 0.0, %v4916
        %v5045 = vsel %vm1991, 0.0, %v4917
        %v5046 = vsel %vm1991, 0.0, %v4918
        %v5047 = vsel %vm1991, 0.0, %v4919
        %v5048 = vsel %vm1991, 0.0, %v4920
        %v5049 = vsel %vm1991, 0.0, %v4921
        %v5050 = vsel %vm1991, 0.0, %v4922
        %v5051 = vsel %vm1991, 0.0, %v4923
        %v5052 = vsel %vm1991, 0.0, %v4924
        %v5053 = vsel %vm1991, 0.0, %v4925
        %v5054 = vsel %vm1991, 0.0, %v4926
        %v5055 = vsel %vm1991, 0.0, %v4927
        %v5056 = vsel %vm1991, 0.0, %v4928
        %v5057 = vsel %vm1991, 0.0, %v4929
        %v5058 = vsel %vm1991, 0.0, %v4930
        %v5059 = vsel %vm1991, 0.0, %v4931
        %v5060 = vsel %vm1991, 0.0, %v4932
        %v5061 = vsel %vm1991, 0.0, %v4933
        %v5062 = vsel %vm1991, 0.0, %v4934
        %v5063 = vsel %vm1991, 0.0, %v4935
        %v5064 = vsel %vm1991, 0.0, %v4936
        %v5065 = vsel %vm1991, 0.0, %v4937
        %v5066 = vsel %vm1991, 0.0, %v4938
        %v5067 = vsel %vm1991, 0.0, %v4939
        %v5068 = vrot.slane %v4508, 1
        %v5069 = vrot.slane %v4510, 1
        %v5070 = vrot.slane %v4734, 1
        %v5071 = vrot.slane %v4736, 1
        %v5072 = vrot.slane %v4512, 1
        %v5073 = vrot.slane %v4514, 1
        %v5074 = vrot.slane %v4738, 1
        %v5075 = vrot.slane %v4740, 1
        %v5076 = vrot.slane %v4518, 1
        %v5077 = vrot.slane %v4520, 1
        %v5078 = vrot.slane %v4744, 1
        %v5079 = vrot.slane %v4746, 1
        %v5080 = vrot.slane %v4522, 1
        %v5081 = vrot.slane %v4524, 1
        %v5082 = vrot.slane %v4748, 1
        %v5083 = vrot.slane %v4750, 1
        %v5084 = vrot.slane %v4528, 1
        %v5085 = vrot.slane %v4530, 1
        %v5086 = vrot.slane %v4754, 1
        %v5087 = vrot.slane %v4756, 1
        %v5088 = vrot.slane %v4532, 1
        %v5089 = vrot.slane %v4534, 1
        %v5090 = vrot.slane %v4758, 1
        %v5091 = vrot.slane %v4760, 1
        %v5092 = vrot.slane %v4538, 1
        %v5093 = vrot.slane %v4540, 1
        %v5094 = vrot.slane %v4764, 1
        %v5095 = vrot.slane %v4766, 1
        %v5096 = vrot.slane %v4542, 1
        %v5097 = vrot.slane %v4544, 1
        %v5098 = vrot.slane %v4768, 1
        %v5099 = vrot.slane %v4770, 1
        %v5100 = vrot.slane %v4548, 1
        %v5101 = vrot.slane %v4550, 1
        %v5102 = vrot.slane %v4774, 1
        %v5103 = vrot.slane %v4776, 1
        %v5104 = vrot.slane %v4552, 1
        %v5105 = vrot.slane %v4554, 1
        %v5106 = vrot.slane %v4778, 1
        %v5107 = vrot.slane %v4780, 1
        %v5108 = vrot.slane %v4558, 1
        %v5109 = vrot.slane %v4560, 1
        %v5110 = vrot.slane %v4784, 1
        %v5111 = vrot.slane %v4786, 1
        %v5112 = vrot.slane %v4562, 1
        %v5113 = vrot.slane %v4564, 1
        %v5114 = vrot.slane %v4788, 1
        %v5115 = vrot.slane %v4790, 1
        %v5116 = vrot.slane %v4568, 1
        %v5117 = vrot.slane %v4570, 1
        %v5118 = vrot.slane %v4794, 1
        %v5119 = vrot.slane %v4796, 1
        %v5120 = vrot.slane %v4572, 1
        %v5121 = vrot.slane %v4574, 1
        %v5122 = vrot.slane %v4798, 1
        %v5123 = vrot.slane %v4800, 1
        %v5124 = vrot.slane %v4578, 1
        %v5125 = vrot.slane %v4580, 1
        %v5126 = vrot.slane %v4804, 1
        %v5127 = vrot.slane %v4806, 1
        %v5128 = vrot.slane %v4582, 1
        %v5129 = vrot.slane %v4584, 1
        %v5130 = vrot.slane %v4808, 1
        %v5131 = vrot.slane %v4810, 1
        %v5196 = vsel %vm2184, %v5068, 0.0
        %v5197 = vsel %vm2184, %v5069, 0.0
        %v5198 = vsel %vm2184, %v5070, 0.0
        %v5199 = vsel %vm2184, %v5071, 0.0
        %v5200 = vsel %vm2184, %v5072, 0.0
        %v5201 = vsel %vm2184, %v5073, 0.0
        %v5202 = vsel %vm2184, %v5074, 0.0
        %v5203 = vsel %vm2184, %v5075, 0.0
        %v5204 = vsel %vm2184, %v5076, 0.0
        %v5205 = vsel %vm2184, %v5077, 0.0
        %v5206 = vsel %vm2184, %v5078, 0.0
        %v5207 = vsel %vm2184, %v5079, 0.0
        %v5208 = vsel %vm2184, %v5080, 0.0
        %v5209 = vsel %vm2184, %v5081, 0.0
        %v5210 = vsel %vm2184, %v5082, 0.0
        %v5211 = vsel %vm2184, %v5083, 0.0
        %v5212 = vsel %vm2184, %v5084, 0.0
        %v5213 = vsel %vm2184, %v5085, 0.0
        %v5214 = vsel %vm2184, %v5086, 0.0
        %v5215 = vsel %vm2184, %v5087, 0.0
        %v5216 = vsel %vm2184, %v5088, 0.0
        %v5217 = vsel %vm2184, %v5089, 0.0
        %v5218 = vsel %vm2184, %v5090, 0.0
        %v5219 = vsel %vm2184, %v5091, 0.0
        %v5220 = vsel %vm2184, %v5092, 0.0
        %v5221 = vsel %vm2184, %v5093, 0.0
        %v5222 = vsel %vm2184, %v5094, 0.0
        %v5223 = vsel %vm2184, %v5095, 0.0
        %v5224 = vsel %vm2184, %v5096, 0.0
        %v5225 = vsel %vm2184, %v5097, 0.0
        %v5226 = vsel %vm2184, %v5098, 0.0
        %v5227 = vsel %vm2184, %v5099, 0.0
        %v5228 = vsel %vm2184, %v5100, 0.0
        %v5229 = vsel %vm2184, %v5101, 0.0
        %v5230 = vsel %vm2184, %v5102, 0.0
        %v5231 = vsel %vm2184, %v5103, 0.0
        %v5232 = vsel %vm2184, %v5104, 0.0
        %v5233 = vsel %vm2184, %v5105, 0.0
        %v5234 = vsel %vm2184, %v5106, 0.0
        %v5235 = vsel %vm2184, %v5107, 0.0
        %v5236 = vsel %vm2184, %v5108, 0.0
        %v5237 = vsel %vm2184, %v5109, 0.0
        %v5238 = vsel %vm2184, %v5110, 0.0
        %v5239 = vsel %vm2184, %v5111, 0.0
        %v5240 = vsel %vm2184, %v5112, 0.0
        %v5241 = vsel %vm2184, %v5113, 0.0
        %v5242 = vsel %vm2184, %v5114, 0.0
        %v5243 = vsel %vm2184, %v5115, 0.0
        %v5244 = vsel %vm2184, %v5116, 0.0
        %v5245 = vsel %vm2184, %v5117, 0.0
        %v5246 = vsel %vm2184, %v5118, 0.0
        %v5247 = vsel %vm2184, %v5119, 0.0
        %v5248 = vsel %vm2184, %v5120, 0.0
        %v5249 = vsel %vm2184, %v5121, 0.0
        %v5250 = vsel %vm2184, %v5122, 0.0
        %v5251 = vsel %vm2184, %v5123, 0.0
        %v5252 = vsel %vm2184, %v5124, 0.0
        %v5253 = vsel %vm2184, %v5125, 0.0
        %v5254 = vsel %vm2184, %v5126, 0.0
        %v5255 = vsel %vm2184, %v5127, 0.0
        %v5256 = vsel %vm2184, %v5128, 0.0
        %v5257 = vsel %vm2184, %v5129, 0.0
        %v5258 = vsel %vm2184, %v5130, 0.0
        %v5259 = vsel %vm2184, %v5131, 0.0
        %s5260 = scalar_lea.vmem %s280, 64
        %v5261 = vld [vmem:[%s5260] sm:$0xff]
        %v5262 = vld [vmem:[%s5260 + $0x8] sm:$0xff]
        %v5263 = vld [vmem:[%s5260 + $0x10] sm:$0xff]
        %v5264 = vld [vmem:[%s5260 + $0x18] sm:$0xff]
        %v5265 = vld [vmem:[%s5260 + $0x20] sm:$0x1]
        %v5266 = vld [vmem:[%s5260 + $0x28] sm:$0x1]
        %v5267 = vld [vmem:[%s5260 + $0x30] sm:$0x1]
        %v5268 = vld [vmem:[%s5260 + $0x38] sm:$0x1]
        %v5269 = vlaneseq
        %v5270 = vshrl.u32 %v5269, 7
        %v5271 = vsub.s32 0, %v5270
        %v5272 = vrot.slane %v5261, %v5271
        %v5273 = vlaneseq
        %v5274 = vshrl.u32 %v5273, 7
        %v5275 = vsub.s32 0, %v5274
        %v5276 = vrot.slane %v5262, %v5275
        %v5277 = vlaneseq
        %v5278 = vshrl.u32 %v5277, 7
        %v5279 = vsub.s32 0, %v5278
        %v5280 = vrot.slane %v5263, %v5279
        %v5281 = vlaneseq
        %v5282 = vshrl.u32 %v5281, 7
        %v5283 = vsub.s32 0, %v5282
        %v5284 = vrot.slane %v5264, %v5283
        %v5285 = vmul.f32 %v5004, %v5272
        %v5286 = vmul.f32 %v5005, %v5276
        %v5287 = vmul.f32 %v5006, %v5280
        %v5288 = vmul.f32 %v5007, %v5284
        %v5289 = vmul.f32 %v5008, %v5272
        %v5290 = vmul.f32 %v5009, %v5276
        %v5291 = vmul.f32 %v5010, %v5280
        %v5292 = vmul.f32 %v5011, %v5284
        %v5293 = vmul.f32 %v5012, %v5272
        %v5294 = vmul.f32 %v5013, %v5276
        %v5295 = vmul.f32 %v5014, %v5280
        %v5296 = vmul.f32 %v5015, %v5284
        %v5297 = vmul.f32 %v5016, %v5272
        %v5298 = vmul.f32 %v5017, %v5276
        %v5299 = vmul.f32 %v5018, %v5280
        %v5300 = vmul.f32 %v5019, %v5284
        %v5301 = vmul.f32 %v5020, %v5272
        %v5302 = vmul.f32 %v5021, %v5276
        %v5303 = vmul.f32 %v5022, %v5280
        %v5304 = vmul.f32 %v5023, %v5284
        %v5305 = vmul.f32 %v5024, %v5272
        %v5306 = vmul.f32 %v5025, %v5276
        %v5307 = vmul.f32 %v5026, %v5280
        %v5308 = vmul.f32 %v5027, %v5284
        %v5309 = vmul.f32 %v5028, %v5272
        %v5310 = vmul.f32 %v5029, %v5276
        %v5311 = vmul.f32 %v5030, %v5280
        %v5312 = vmul.f32 %v5031, %v5284
        %v5313 = vmul.f32 %v5036, %v5272
        %v5314 = vmul.f32 %v5037, %v5276
        %v5315 = vmul.f32 %v5038, %v5280
        %v5316 = vmul.f32 %v5039, %v5284
        %v5317 = vmul.f32 %v5040, %v5272
        %v5318 = vmul.f32 %v5041, %v5276
        %v5319 = vmul.f32 %v5042, %v5280
        %v5320 = vmul.f32 %v5043, %v5284
        %v5321 = vmul.f32 %v5044, %v5272
        %v5322 = vmul.f32 %v5045, %v5276
        %v5323 = vmul.f32 %v5046, %v5280
        %v5324 = vmul.f32 %v5047, %v5284
        %v5325 = vmul.f32 %v5048, %v5272
        %v5326 = vmul.f32 %v5049, %v5276
        %v5327 = vmul.f32 %v5050, %v5280
        %v5328 = vmul.f32 %v5051, %v5284
        %v5329 = vmul.f32 %v5052, %v5272
        %v5330 = vmul.f32 %v5053, %v5276
        %v5331 = vmul.f32 %v5054, %v5280
        %v5332 = vmul.f32 %v5055, %v5284
        %v5333 = vmul.f32 %v5056, %v5272
        %v5334 = vmul.f32 %v5057, %v5276
        %v5335 = vmul.f32 %v5058, %v5280
        %v5336 = vmul.f32 %v5059, %v5284
        %v5337 = vmul.f32 %v5060, %v5272
        %v5338 = vmul.f32 %v5061, %v5276
        %v5339 = vmul.f32 %v5062, %v5280
        %v5340 = vmul.f32 %v5063, %v5284
        %v5341 = vlaneseq
        %v5342 = vshrl.u32 %v5341, 7
        %v5343 = vsub.s32 1, %v5342
        %v5344 = vrot.slane %v5261, %v5343
        %v5345 = vlaneseq
        %v5346 = vshrl.u32 %v5345, 7
        %v5347 = vsub.s32 1, %v5346
        %v5348 = vrot.slane %v5262, %v5347
        %v5349 = vlaneseq
        %v5350 = vshrl.u32 %v5349, 7
        %v5351 = vsub.s32 1, %v5350
        %v5352 = vrot.slane %v5263, %v5351
        %v5353 = vlaneseq
        %v5354 = vshrl.u32 %v5353, 7
        %v5355 = vsub.s32 1, %v5354
        %v5356 = vrot.slane %v5264, %v5355
        %v5357 = vmul.f32 %v4508, %v5344
        %v5358 = vmul.f32 %v4510, %v5348
        %v5359 = vmul.f32 %v4734, %v5352
        %v5360 = vmul.f32 %v4736, %v5356
        %v5361 = vmul.f32 %v4512, %v5344
        %v5362 = vmul.f32 %v4514, %v5348
        %v5363 = vmul.f32 %v4738, %v5352
        %v5364 = vmul.f32 %v4740, %v5356
        %v5365 = vmul.f32 %v4518, %v5344
        %v5366 = vmul.f32 %v4520, %v5348
        %v5367 = vmul.f32 %v4744, %v5352
        %v5368 = vmul.f32 %v4746, %v5356
        %v5369 = vmul.f32 %v4522, %v5344
        %v5370 = vmul.f32 %v4524, %v5348
        %v5371 = vmul.f32 %v4748, %v5352
        %v5372 = vmul.f32 %v4750, %v5356
        %v5373 = vmul.f32 %v4528, %v5344
        %v5374 = vmul.f32 %v4530, %v5348
        %v5375 = vmul.f32 %v4754, %v5352
        %v5376 = vmul.f32 %v4756, %v5356
        %v5377 = vmul.f32 %v4532, %v5344
        %v5378 = vmul.f32 %v4534, %v5348
        %v5379 = vmul.f32 %v4758, %v5352
        %v5380 = vmul.f32 %v4760, %v5356
        %v5381 = vmul.f32 %v4538, %v5344
        %v5382 = vmul.f32 %v4540, %v5348
        %v5383 = vmul.f32 %v4764, %v5352
        %v5384 = vmul.f32 %v4766, %v5356
        %v5385 = vmul.f32 %v4548, %v5344
        %v5386 = vmul.f32 %v4550, %v5348
        %v5387 = vmul.f32 %v4774, %v5352
        %v5388 = vmul.f32 %v4776, %v5356
        %v5389 = vmul.f32 %v4552, %v5344
        %v5390 = vmul.f32 %v4554, %v5348
        %v5391 = vmul.f32 %v4778, %v5352
        %v5392 = vmul.f32 %v4780, %v5356
        %v5393 = vmul.f32 %v4558, %v5344
        %v5394 = vmul.f32 %v4560, %v5348
        %v5395 = vmul.f32 %v4784, %v5352
        %v5396 = vmul.f32 %v4786, %v5356
        %v5397 = vmul.f32 %v4562, %v5344
        %v5398 = vmul.f32 %v4564, %v5348
        %v5399 = vmul.f32 %v4788, %v5352
        %v5400 = vmul.f32 %v4790, %v5356
        %v5401 = vmul.f32 %v4568, %v5344
        %v5402 = vmul.f32 %v4570, %v5348
        %v5403 = vmul.f32 %v4794, %v5352
        %v5404 = vmul.f32 %v4796, %v5356
        %v5405 = vmul.f32 %v4572, %v5344
        %v5406 = vmul.f32 %v4574, %v5348
        %v5407 = vmul.f32 %v4798, %v5352
        %v5408 = vmul.f32 %v4800, %v5356
        %v5409 = vmul.f32 %v4578, %v5344
        %v5410 = vmul.f32 %v4580, %v5348
        %v5411 = vmul.f32 %v4804, %v5352
        %v5412 = vmul.f32 %v4806, %v5356
        %v5413 = vadd.f32 %v5285, %v5357
        %v5414 = vadd.f32 %v5286, %v5358
        %v5415 = vadd.f32 %v5287, %v5359
        %v5416 = vadd.f32 %v5288, %v5360
        %v5417 = vadd.f32 %v5289, %v5361
        %v5418 = vadd.f32 %v5290, %v5362
        %v5419 = vadd.f32 %v5291, %v5363
        %v5420 = vadd.f32 %v5292, %v5364
        %v5421 = vadd.f32 %v5293, %v5365
        %v5422 = vadd.f32 %v5294, %v5366
        %v5423 = vadd.f32 %v5295, %v5367
        %v5424 = vadd.f32 %v5296, %v5368
        %v5425 = vadd.f32 %v5297, %v5369
        %v5426 = vadd.f32 %v5298, %v5370
        %v5427 = vadd.f32 %v5299, %v5371
        %v5428 = vadd.f32 %v5300, %v5372
        %v5429 = vadd.f32 %v5301, %v5373
        %v5430 = vadd.f32 %v5302, %v5374
        %v5431 = vadd.f32 %v5303, %v5375
        %v5432 = vadd.f32 %v5304, %v5376
        %v5433 = vadd.f32 %v5305, %v5377
        %v5434 = vadd.f32 %v5306, %v5378
        %v5435 = vadd.f32 %v5307, %v5379
        %v5436 = vadd.f32 %v5308, %v5380
        %v5437 = vadd.f32 %v5309, %v5381
        %v5438 = vadd.f32 %v5310, %v5382
        %v5439 = vadd.f32 %v5311, %v5383
        %v5440 = vadd.f32 %v5312, %v5384
        %v5441 = vadd.f32 %v5313, %v5385
        %v5442 = vadd.f32 %v5314, %v5386
        %v5443 = vadd.f32 %v5315, %v5387
        %v5444 = vadd.f32 %v5316, %v5388
        %v5445 = vadd.f32 %v5317, %v5389
        %v5446 = vadd.f32 %v5318, %v5390
        %v5447 = vadd.f32 %v5319, %v5391
        %v5448 = vadd.f32 %v5320, %v5392
        %v5449 = vadd.f32 %v5321, %v5393
        %v5450 = vadd.f32 %v5322, %v5394
        %v5451 = vadd.f32 %v5323, %v5395
        %v5452 = vadd.f32 %v5324, %v5396
        %v5453 = vadd.f32 %v5325, %v5397
        %v5454 = vadd.f32 %v5326, %v5398
        %v5455 = vadd.f32 %v5327, %v5399
        %v5456 = vadd.f32 %v5328, %v5400
        %v5457 = vadd.f32 %v5329, %v5401
        %v5458 = vadd.f32 %v5330, %v5402
        %v5459 = vadd.f32 %v5331, %v5403
        %v5460 = vadd.f32 %v5332, %v5404
        %v5461 = vadd.f32 %v5333, %v5405
        %v5462 = vadd.f32 %v5334, %v5406
        %v5463 = vadd.f32 %v5335, %v5407
        %v5464 = vadd.f32 %v5336, %v5408
        %v5465 = vadd.f32 %v5337, %v5409
        %v5466 = vadd.f32 %v5338, %v5410
        %v5467 = vadd.f32 %v5339, %v5411
        %v5468 = vadd.f32 %v5340, %v5412
        %v5469 = vlaneseq
        %v5470 = vshrl.u32 %v5469, 7
        %v5471 = vsub.s32 2, %v5470
        %v5472 = vrot.slane %v5261, %v5471
        %v5473 = vlaneseq
        %v5474 = vshrl.u32 %v5473, 7
        %v5475 = vsub.s32 2, %v5474
        %v5476 = vrot.slane %v5262, %v5475
        %v5477 = vlaneseq
        %v5478 = vshrl.u32 %v5477, 7
        %v5479 = vsub.s32 2, %v5478
        %v5480 = vrot.slane %v5263, %v5479
        %v5481 = vlaneseq
        %v5482 = vshrl.u32 %v5481, 7
        %v5483 = vsub.s32 2, %v5482
        %v5484 = vrot.slane %v5264, %v5483
        %v5485 = vmul.f32 %v5196, %v5472
        %v5486 = vmul.f32 %v5197, %v5476
        %v5487 = vmul.f32 %v5198, %v5480
        %v5488 = vmul.f32 %v5199, %v5484
        %v5489 = vmul.f32 %v5200, %v5472
        %v5490 = vmul.f32 %v5201, %v5476
        %v5491 = vmul.f32 %v5202, %v5480
        %v5492 = vmul.f32 %v5203, %v5484
        %v5493 = vmul.f32 %v5204, %v5472
        %v5494 = vmul.f32 %v5205, %v5476
        %v5495 = vmul.f32 %v5206, %v5480
        %v5496 = vmul.f32 %v5207, %v5484
        %v5497 = vmul.f32 %v5208, %v5472
        %v5498 = vmul.f32 %v5209, %v5476
        %v5499 = vmul.f32 %v5210, %v5480
        %v5500 = vmul.f32 %v5211, %v5484
        %v5501 = vmul.f32 %v5212, %v5472
        %v5502 = vmul.f32 %v5213, %v5476
        %v5503 = vmul.f32 %v5214, %v5480
        %v5504 = vmul.f32 %v5215, %v5484
        %v5505 = vmul.f32 %v5216, %v5472
        %v5506 = vmul.f32 %v5217, %v5476
        %v5507 = vmul.f32 %v5218, %v5480
        %v5508 = vmul.f32 %v5219, %v5484
        %v5509 = vmul.f32 %v5220, %v5472
        %v5510 = vmul.f32 %v5221, %v5476
        %v5511 = vmul.f32 %v5222, %v5480
        %v5512 = vmul.f32 %v5223, %v5484
        %v5513 = vmul.f32 %v5228, %v5472
        %v5514 = vmul.f32 %v5229, %v5476
        %v5515 = vmul.f32 %v5230, %v5480
        %v5516 = vmul.f32 %v5231, %v5484
        %v5517 = vmul.f32 %v5232, %v5472
        %v5518 = vmul.f32 %v5233, %v5476
        %v5519 = vmul.f32 %v5234, %v5480
        %v5520 = vmul.f32 %v5235, %v5484
        %v5521 = vmul.f32 %v5236, %v5472
        %v5522 = vmul.f32 %v5237, %v5476
        %v5523 = vmul.f32 %v5238, %v5480
        %v5524 = vmul.f32 %v5239, %v5484
        %v5525 = vmul.f32 %v5240, %v5472
        %v5526 = vmul.f32 %v5241, %v5476
        %v5527 = vmul.f32 %v5242, %v5480
        %v5528 = vmul.f32 %v5243, %v5484
        %v5529 = vmul.f32 %v5244, %v5472
        %v5530 = vmul.f32 %v5245, %v5476
        %v5531 = vmul.f32 %v5246, %v5480
        %v5532 = vmul.f32 %v5247, %v5484
        %v5533 = vmul.f32 %v5248, %v5472
        %v5534 = vmul.f32 %v5249, %v5476
        %v5535 = vmul.f32 %v5250, %v5480
        %v5536 = vmul.f32 %v5251, %v5484
        %v5537 = vmul.f32 %v5252, %v5472
        %v5538 = vmul.f32 %v5253, %v5476
        %v5539 = vmul.f32 %v5254, %v5480
        %v5540 = vmul.f32 %v5255, %v5484
        %v5541 = vadd.f32 %v5413, %v5485
        %v5542 = vadd.f32 %v5414, %v5486
        %v5543 = vadd.f32 %v5415, %v5487
        %v5544 = vadd.f32 %v5416, %v5488
        %v5545 = vadd.f32 %v5417, %v5489
        %v5546 = vadd.f32 %v5418, %v5490
        %v5547 = vadd.f32 %v5419, %v5491
        %v5548 = vadd.f32 %v5420, %v5492
        %v5549 = vadd.f32 %v5421, %v5493
        %v5550 = vadd.f32 %v5422, %v5494
        %v5551 = vadd.f32 %v5423, %v5495
        %v5552 = vadd.f32 %v5424, %v5496
        %v5553 = vadd.f32 %v5425, %v5497
        %v5554 = vadd.f32 %v5426, %v5498
        %v5555 = vadd.f32 %v5427, %v5499
        %v5556 = vadd.f32 %v5428, %v5500
        %v5557 = vadd.f32 %v5429, %v5501
        %v5558 = vadd.f32 %v5430, %v5502
        %v5559 = vadd.f32 %v5431, %v5503
        %v5560 = vadd.f32 %v5432, %v5504
        %v5561 = vadd.f32 %v5433, %v5505
        %v5562 = vadd.f32 %v5434, %v5506
        %v5563 = vadd.f32 %v5435, %v5507
        %v5564 = vadd.f32 %v5436, %v5508
        %v5565 = vadd.f32 %v5437, %v5509
        %v5566 = vadd.f32 %v5438, %v5510
        %v5567 = vadd.f32 %v5439, %v5511
        %v5568 = vadd.f32 %v5440, %v5512
        %v5569 = vadd.f32 %v5441, %v5513
        %v5570 = vadd.f32 %v5442, %v5514
        %v5571 = vadd.f32 %v5443, %v5515
        %v5572 = vadd.f32 %v5444, %v5516
        %v5573 = vadd.f32 %v5445, %v5517
        %v5574 = vadd.f32 %v5446, %v5518
        %v5575 = vadd.f32 %v5447, %v5519
        %v5576 = vadd.f32 %v5448, %v5520
        %v5577 = vadd.f32 %v5449, %v5521
        %v5578 = vadd.f32 %v5450, %v5522
        %v5579 = vadd.f32 %v5451, %v5523
        %v5580 = vadd.f32 %v5452, %v5524
        %v5581 = vadd.f32 %v5453, %v5525
        %v5582 = vadd.f32 %v5454, %v5526
        %v5583 = vadd.f32 %v5455, %v5527
        %v5584 = vadd.f32 %v5456, %v5528
        %v5585 = vadd.f32 %v5457, %v5529
        %v5586 = vadd.f32 %v5458, %v5530
        %v5587 = vadd.f32 %v5459, %v5531
        %v5588 = vadd.f32 %v5460, %v5532
        %v5589 = vadd.f32 %v5461, %v5533
        %v5590 = vadd.f32 %v5462, %v5534
        %v5591 = vadd.f32 %v5463, %v5535
        %v5592 = vadd.f32 %v5464, %v5536
        %v5593 = vadd.f32 %v5465, %v5537
        %v5594 = vadd.f32 %v5466, %v5538
        %v5595 = vadd.f32 %v5467, %v5539
        %v5596 = vadd.f32 %v5468, %v5540
        %v5597 = vlaneseq
        %v5598 = vshrl.u32 %v5597, 7
        %v5599 = vsub.s32 3, %v5598
        %v5600 = vrot.slane %v5261, %v5599
        %v5601 = vlaneseq
        %v5602 = vshrl.u32 %v5601, 7
        %v5603 = vsub.s32 3, %v5602
        %v5604 = vrot.slane %v5262, %v5603
        %v5605 = vlaneseq
        %v5606 = vshrl.u32 %v5605, 7
        %v5607 = vsub.s32 3, %v5606
        %v5608 = vrot.slane %v5263, %v5607
        %v5609 = vlaneseq
        %v5610 = vshrl.u32 %v5609, 7
        %v5611 = vsub.s32 3, %v5610
        %v5612 = vrot.slane %v5264, %v5611
        %v5613 = vmul.f32 %v5004, %v5600
        %v5614 = vmul.f32 %v5005, %v5604
        %v5615 = vmul.f32 %v5006, %v5608
        %v5616 = vmul.f32 %v5007, %v5612
        %v5617 = vmul.f32 %v5008, %v5600
        %v5618 = vmul.f32 %v5009, %v5604
        %v5619 = vmul.f32 %v5010, %v5608
        %v5620 = vmul.f32 %v5011, %v5612
        %v5621 = vmul.f32 %v5012, %v5600
        %v5622 = vmul.f32 %v5013, %v5604
        %v5623 = vmul.f32 %v5014, %v5608
        %v5624 = vmul.f32 %v5015, %v5612
        %v5625 = vmul.f32 %v5016, %v5600
        %v5626 = vmul.f32 %v5017, %v5604
        %v5627 = vmul.f32 %v5018, %v5608
        %v5628 = vmul.f32 %v5019, %v5612
        %v5629 = vmul.f32 %v5020, %v5600
        %v5630 = vmul.f32 %v5021, %v5604
        %v5631 = vmul.f32 %v5022, %v5608
        %v5632 = vmul.f32 %v5023, %v5612
        %v5633 = vmul.f32 %v5024, %v5600
        %v5634 = vmul.f32 %v5025, %v5604
        %v5635 = vmul.f32 %v5026, %v5608
        %v5636 = vmul.f32 %v5027, %v5612
        %v5637 = vmul.f32 %v5028, %v5600
        %v5638 = vmul.f32 %v5029, %v5604
        %v5639 = vmul.f32 %v5030, %v5608
        %v5640 = vmul.f32 %v5031, %v5612
        %v5641 = vmul.f32 %v5032, %v5600
        %v5642 = vmul.f32 %v5033, %v5604
        %v5643 = vmul.f32 %v5034, %v5608
        %v5644 = vmul.f32 %v5035, %v5612
        %v5645 = vmul.f32 %v5036, %v5600
        %v5646 = vmul.f32 %v5037, %v5604
        %v5647 = vmul.f32 %v5038, %v5608
        %v5648 = vmul.f32 %v5039, %v5612
        %v5649 = vmul.f32 %v5040, %v5600
        %v5650 = vmul.f32 %v5041, %v5604
        %v5651 = vmul.f32 %v5042, %v5608
        %v5652 = vmul.f32 %v5043, %v5612
        %v5653 = vmul.f32 %v5044, %v5600
        %v5654 = vmul.f32 %v5045, %v5604
        %v5655 = vmul.f32 %v5046, %v5608
        %v5656 = vmul.f32 %v5047, %v5612
        %v5657 = vmul.f32 %v5048, %v5600
        %v5658 = vmul.f32 %v5049, %v5604
        %v5659 = vmul.f32 %v5050, %v5608
        %v5660 = vmul.f32 %v5051, %v5612
        %v5661 = vmul.f32 %v5052, %v5600
        %v5662 = vmul.f32 %v5053, %v5604
        %v5663 = vmul.f32 %v5054, %v5608
        %v5664 = vmul.f32 %v5055, %v5612
        %v5665 = vmul.f32 %v5056, %v5600
        %v5666 = vmul.f32 %v5057, %v5604
        %v5667 = vmul.f32 %v5058, %v5608
        %v5668 = vmul.f32 %v5059, %v5612
        %v5669 = vmul.f32 %v5060, %v5600
        %v5670 = vmul.f32 %v5061, %v5604
        %v5671 = vmul.f32 %v5062, %v5608
        %v5672 = vmul.f32 %v5063, %v5612
        %v5673 = vmul.f32 %v5064, %v5600
        %v5674 = vmul.f32 %v5065, %v5604
        %v5675 = vmul.f32 %v5066, %v5608
        %v5676 = vmul.f32 %v5067, %v5612
        %v5677 = vlaneseq
        %v5678 = vshrl.u32 %v5677, 7
        %v5679 = vsub.s32 4, %v5678
        %v5680 = vrot.slane %v5261, %v5679
        %v5681 = vlaneseq
        %v5682 = vshrl.u32 %v5681, 7
        %v5683 = vsub.s32 4, %v5682
        %v5684 = vrot.slane %v5262, %v5683
        %v5685 = vlaneseq
        %v5686 = vshrl.u32 %v5685, 7
        %v5687 = vsub.s32 4, %v5686
        %v5688 = vrot.slane %v5263, %v5687
        %v5689 = vlaneseq
        %v5690 = vshrl.u32 %v5689, 7
        %v5691 = vsub.s32 4, %v5690
        %v5692 = vrot.slane %v5264, %v5691
        %v5693 = vmul.f32 %v4508, %v5680
        %v5694 = vmul.f32 %v4510, %v5684
        %v5695 = vmul.f32 %v4734, %v5688
        %v5696 = vmul.f32 %v4736, %v5692
        %v5697 = vmul.f32 %v4512, %v5680
        %v5698 = vmul.f32 %v4514, %v5684
        %v5699 = vmul.f32 %v4738, %v5688
        %v5700 = vmul.f32 %v4740, %v5692
        %v5701 = vmul.f32 %v4518, %v5680
        %v5702 = vmul.f32 %v4520, %v5684
        %v5703 = vmul.f32 %v4744, %v5688
        %v5704 = vmul.f32 %v4746, %v5692
        %v5705 = vmul.f32 %v4522, %v5680
        %v5706 = vmul.f32 %v4524, %v5684
        %v5707 = vmul.f32 %v4748, %v5688
        %v5708 = vmul.f32 %v4750, %v5692
        %v5709 = vmul.f32 %v4528, %v5680
        %v5710 = vmul.f32 %v4530, %v5684
        %v5711 = vmul.f32 %v4754, %v5688
        %v5712 = vmul.f32 %v4756, %v5692
        %v5713 = vmul.f32 %v4532, %v5680
        %v5714 = vmul.f32 %v4534, %v5684
        %v5715 = vmul.f32 %v4758, %v5688
        %v5716 = vmul.f32 %v4760, %v5692
        %v5717 = vmul.f32 %v4538, %v5680
        %v5718 = vmul.f32 %v4540, %v5684
        %v5719 = vmul.f32 %v4764, %v5688
        %v5720 = vmul.f32 %v4766, %v5692
        %v5721 = vmul.f32 %v4542, %v5680
        %v5722 = vmul.f32 %v4544, %v5684
        %v5723 = vmul.f32 %v4768, %v5688
        %v5724 = vmul.f32 %v4770, %v5692
        %v5725 = vmul.f32 %v4548, %v5680
        %v5726 = vmul.f32 %v4550, %v5684
        %v5727 = vmul.f32 %v4774, %v5688
        %v5728 = vmul.f32 %v4776, %v5692
        %v5729 = vmul.f32 %v4552, %v5680
        %v5730 = vmul.f32 %v4554, %v5684
        %v5731 = vmul.f32 %v4778, %v5688
        %v5732 = vmul.f32 %v4780, %v5692
        %v5733 = vmul.f32 %v4558, %v5680
        %v5734 = vmul.f32 %v4560, %v5684
        %v5735 = vmul.f32 %v4784, %v5688
        %v5736 = vmul.f32 %v4786, %v5692
        %v5737 = vmul.f32 %v4562, %v5680
        %v5738 = vmul.f32 %v4564, %v5684
        %v5739 = vmul.f32 %v4788, %v5688
        %v5740 = vmul.f32 %v4790, %v5692
        %v5741 = vmul.f32 %v4568, %v5680
        %v5742 = vmul.f32 %v4570, %v5684
        %v5743 = vmul.f32 %v4794, %v5688
        %v5744 = vmul.f32 %v4796, %v5692
        %v5745 = vmul.f32 %v4572, %v5680
        %v5746 = vmul.f32 %v4574, %v5684
        %v5747 = vmul.f32 %v4798, %v5688
        %v5748 = vmul.f32 %v4800, %v5692
        %v5749 = vmul.f32 %v4578, %v5680
        %v5750 = vmul.f32 %v4580, %v5684
        %v5751 = vmul.f32 %v4804, %v5688
        %v5752 = vmul.f32 %v4806, %v5692
        %v5753 = vmul.f32 %v4582, %v5680
        %v5754 = vmul.f32 %v4584, %v5684
        %v5755 = vmul.f32 %v4808, %v5688
        %v5756 = vmul.f32 %v4810, %v5692
        %v5757 = vadd.f32 %v5613, %v5693
        %v5758 = vadd.f32 %v5614, %v5694
        %v5759 = vadd.f32 %v5615, %v5695
        %v5760 = vadd.f32 %v5616, %v5696
        %v5761 = vadd.f32 %v5617, %v5697
        %v5762 = vadd.f32 %v5618, %v5698
        %v5763 = vadd.f32 %v5619, %v5699
        %v5764 = vadd.f32 %v5620, %v5700
        %v5765 = vadd.f32 %v5621, %v5701
        %v5766 = vadd.f32 %v5622, %v5702
        %v5767 = vadd.f32 %v5623, %v5703
        %v5768 = vadd.f32 %v5624, %v5704
        %v5769 = vadd.f32 %v5625, %v5705
        %v5770 = vadd.f32 %v5626, %v5706
        %v5771 = vadd.f32 %v5627, %v5707
        %v5772 = vadd.f32 %v5628, %v5708
        %v5773 = vadd.f32 %v5629, %v5709
        %v5774 = vadd.f32 %v5630, %v5710
        %v5775 = vadd.f32 %v5631, %v5711
        %v5776 = vadd.f32 %v5632, %v5712
        %v5777 = vadd.f32 %v5633, %v5713
        %v5778 = vadd.f32 %v5634, %v5714
        %v5779 = vadd.f32 %v5635, %v5715
        %v5780 = vadd.f32 %v5636, %v5716
        %v5781 = vadd.f32 %v5637, %v5717
        %v5782 = vadd.f32 %v5638, %v5718
        %v5783 = vadd.f32 %v5639, %v5719
        %v5784 = vadd.f32 %v5640, %v5720
        %v5785 = vadd.f32 %v5641, %v5721
        %v5786 = vadd.f32 %v5642, %v5722
        %v5787 = vadd.f32 %v5643, %v5723
        %v5788 = vadd.f32 %v5644, %v5724
        %v5789 = vadd.f32 %v5645, %v5725
        %v5790 = vadd.f32 %v5646, %v5726
        %v5791 = vadd.f32 %v5647, %v5727
        %v5792 = vadd.f32 %v5648, %v5728
        %v5793 = vadd.f32 %v5649, %v5729
        %v5794 = vadd.f32 %v5650, %v5730
        %v5795 = vadd.f32 %v5651, %v5731
        %v5796 = vadd.f32 %v5652, %v5732
        %v5797 = vadd.f32 %v5653, %v5733
        %v5798 = vadd.f32 %v5654, %v5734
        %v5799 = vadd.f32 %v5655, %v5735
        %v5800 = vadd.f32 %v5656, %v5736
        %v5801 = vadd.f32 %v5657, %v5737
        %v5802 = vadd.f32 %v5658, %v5738
        %v5803 = vadd.f32 %v5659, %v5739
        %v5804 = vadd.f32 %v5660, %v5740
        %v5805 = vadd.f32 %v5661, %v5741
        %v5806 = vadd.f32 %v5662, %v5742
        %v5807 = vadd.f32 %v5663, %v5743
        %v5808 = vadd.f32 %v5664, %v5744
        %v5809 = vadd.f32 %v5665, %v5745
        %v5810 = vadd.f32 %v5666, %v5746
        %v5811 = vadd.f32 %v5667, %v5747
        %v5812 = vadd.f32 %v5668, %v5748
        %v5813 = vadd.f32 %v5669, %v5749
        %v5814 = vadd.f32 %v5670, %v5750
        %v5815 = vadd.f32 %v5671, %v5751
        %v5816 = vadd.f32 %v5672, %v5752
        %v5817 = vadd.f32 %v5673, %v5753
        %v5818 = vadd.f32 %v5674, %v5754
        %v5819 = vadd.f32 %v5675, %v5755
        %v5820 = vadd.f32 %v5676, %v5756
        %v5821 = vlaneseq
        %v5822 = vshrl.u32 %v5821, 7
        %v5823 = vsub.s32 5, %v5822
        %v5824 = vrot.slane %v5261, %v5823
        %v5825 = vlaneseq
        %v5826 = vshrl.u32 %v5825, 7
        %v5827 = vsub.s32 5, %v5826
        %v5828 = vrot.slane %v5262, %v5827
        %v5829 = vlaneseq
        %v5830 = vshrl.u32 %v5829, 7
        %v5831 = vsub.s32 5, %v5830
        %v5832 = vrot.slane %v5263, %v5831
        %v5833 = vlaneseq
        %v5834 = vshrl.u32 %v5833, 7
        %v5835 = vsub.s32 5, %v5834
        %v5836 = vrot.slane %v5264, %v5835
        %v5837 = vmul.f32 %v5196, %v5824
        %v5838 = vmul.f32 %v5197, %v5828
        %v5839 = vmul.f32 %v5198, %v5832
        %v5840 = vmul.f32 %v5199, %v5836
        %v5841 = vmul.f32 %v5200, %v5824
        %v5842 = vmul.f32 %v5201, %v5828
        %v5843 = vmul.f32 %v5202, %v5832
        %v5844 = vmul.f32 %v5203, %v5836
        %v5845 = vmul.f32 %v5204, %v5824
        %v5846 = vmul.f32 %v5205, %v5828
        %v5847 = vmul.f32 %v5206, %v5832
        %v5848 = vmul.f32 %v5207, %v5836
        %v5849 = vmul.f32 %v5208, %v5824
        %v5850 = vmul.f32 %v5209, %v5828
        %v5851 = vmul.f32 %v5210, %v5832
        %v5852 = vmul.f32 %v5211, %v5836
        %v5853 = vmul.f32 %v5212, %v5824
        %v5854 = vmul.f32 %v5213, %v5828
        %v5855 = vmul.f32 %v5214, %v5832
        %v5856 = vmul.f32 %v5215, %v5836
        %v5857 = vmul.f32 %v5216, %v5824
        %v5858 = vmul.f32 %v5217, %v5828
        %v5859 = vmul.f32 %v5218, %v5832
        %v5860 = vmul.f32 %v5219, %v5836
        %v5861 = vmul.f32 %v5220, %v5824
        %v5862 = vmul.f32 %v5221, %v5828
        %v5863 = vmul.f32 %v5222, %v5832
        %v5864 = vmul.f32 %v5223, %v5836
        %v5865 = vmul.f32 %v5224, %v5824
        %v5866 = vmul.f32 %v5225, %v5828
        %v5867 = vmul.f32 %v5226, %v5832
        %v5868 = vmul.f32 %v5227, %v5836
        %v5869 = vmul.f32 %v5228, %v5824
        %v5870 = vmul.f32 %v5229, %v5828
        %v5871 = vmul.f32 %v5230, %v5832
        %v5872 = vmul.f32 %v5231, %v5836
        %v5873 = vmul.f32 %v5232, %v5824
        %v5874 = vmul.f32 %v5233, %v5828
        %v5875 = vmul.f32 %v5234, %v5832
        %v5876 = vmul.f32 %v5235, %v5836
        %v5877 = vmul.f32 %v5236, %v5824
        %v5878 = vmul.f32 %v5237, %v5828
        %v5879 = vmul.f32 %v5238, %v5832
        %v5880 = vmul.f32 %v5239, %v5836
        %v5881 = vmul.f32 %v5240, %v5824
        %v5882 = vmul.f32 %v5241, %v5828
        %v5883 = vmul.f32 %v5242, %v5832
        %v5884 = vmul.f32 %v5243, %v5836
        %v5885 = vmul.f32 %v5244, %v5824
        %v5886 = vmul.f32 %v5245, %v5828
        %v5887 = vmul.f32 %v5246, %v5832
        %v5888 = vmul.f32 %v5247, %v5836
        %v5889 = vmul.f32 %v5248, %v5824
        %v5890 = vmul.f32 %v5249, %v5828
        %v5891 = vmul.f32 %v5250, %v5832
        %v5892 = vmul.f32 %v5251, %v5836
        %v5893 = vmul.f32 %v5252, %v5824
        %v5894 = vmul.f32 %v5253, %v5828
        %v5895 = vmul.f32 %v5254, %v5832
        %v5896 = vmul.f32 %v5255, %v5836
        %v5897 = vmul.f32 %v5256, %v5824
        %v5898 = vmul.f32 %v5257, %v5828
        %v5899 = vmul.f32 %v5258, %v5832
        %v5900 = vmul.f32 %v5259, %v5836
        %v5901 = vadd.f32 %v5757, %v5837
        %v5902 = vadd.f32 %v5758, %v5838
        %v5903 = vadd.f32 %v5759, %v5839
        %v5904 = vadd.f32 %v5760, %v5840
        %v5905 = vadd.f32 %v5761, %v5841
        %v5906 = vadd.f32 %v5762, %v5842
        %v5907 = vadd.f32 %v5763, %v5843
        %v5908 = vadd.f32 %v5764, %v5844
        %v5909 = vadd.f32 %v5765, %v5845
        %v5910 = vadd.f32 %v5766, %v5846
        %v5911 = vadd.f32 %v5767, %v5847
        %v5912 = vadd.f32 %v5768, %v5848
        %v5913 = vadd.f32 %v5769, %v5849
        %v5914 = vadd.f32 %v5770, %v5850
        %v5915 = vadd.f32 %v5771, %v5851
        %v5916 = vadd.f32 %v5772, %v5852
        %v5917 = vadd.f32 %v5773, %v5853
        %v5918 = vadd.f32 %v5774, %v5854
        %v5919 = vadd.f32 %v5775, %v5855
        %v5920 = vadd.f32 %v5776, %v5856
        %v5921 = vadd.f32 %v5777, %v5857
        %v5922 = vadd.f32 %v5778, %v5858
        %v5923 = vadd.f32 %v5779, %v5859
        %v5924 = vadd.f32 %v5780, %v5860
        %v5925 = vadd.f32 %v5781, %v5861
        %v5926 = vadd.f32 %v5782, %v5862
        %v5927 = vadd.f32 %v5783, %v5863
        %v5928 = vadd.f32 %v5784, %v5864
        %v5929 = vadd.f32 %v5785, %v5865
        %v5930 = vadd.f32 %v5786, %v5866
        %v5931 = vadd.f32 %v5787, %v5867
        %v5932 = vadd.f32 %v5788, %v5868
        %v5933 = vadd.f32 %v5789, %v5869
        %v5934 = vadd.f32 %v5790, %v5870
        %v5935 = vadd.f32 %v5791, %v5871
        %v5936 = vadd.f32 %v5792, %v5872
        %v5937 = vadd.f32 %v5793, %v5873
        %v5938 = vadd.f32 %v5794, %v5874
        %v5939 = vadd.f32 %v5795, %v5875
        %v5940 = vadd.f32 %v5796, %v5876
        %v5941 = vadd.f32 %v5797, %v5877
        %v5942 = vadd.f32 %v5798, %v5878
        %v5943 = vadd.f32 %v5799, %v5879
        %v5944 = vadd.f32 %v5800, %v5880
        %v5945 = vadd.f32 %v5801, %v5881
        %v5946 = vadd.f32 %v5802, %v5882
        %v5947 = vadd.f32 %v5803, %v5883
        %v5948 = vadd.f32 %v5804, %v5884
        %v5949 = vadd.f32 %v5805, %v5885
        %v5950 = vadd.f32 %v5806, %v5886
        %v5951 = vadd.f32 %v5807, %v5887
        %v5952 = vadd.f32 %v5808, %v5888
        %v5953 = vadd.f32 %v5809, %v5889
        %v5954 = vadd.f32 %v5810, %v5890
        %v5955 = vadd.f32 %v5811, %v5891
        %v5956 = vadd.f32 %v5812, %v5892
        %v5957 = vadd.f32 %v5813, %v5893
        %v5958 = vadd.f32 %v5814, %v5894
        %v5959 = vadd.f32 %v5815, %v5895
        %v5960 = vadd.f32 %v5816, %v5896
        %v5961 = vadd.f32 %v5817, %v5897
        %v5962 = vadd.f32 %v5818, %v5898
        %v5963 = vadd.f32 %v5819, %v5899
        %v5964 = vadd.f32 %v5820, %v5900
        %v5965 = vadd.f32 %v5901, 0.0
        %v5966 = vadd.f32 %v5902, 0.0
        %v5967 = vadd.f32 %v5903, 0.0
        %v5968 = vadd.f32 %v5904, 0.0
        %v5969 = vadd.f32 %v5541, %v5905
        %v5970 = vadd.f32 %v5542, %v5906
        %v5971 = vadd.f32 %v5543, %v5907
        %v5972 = vadd.f32 %v5544, %v5908
        %v5973 = vadd.f32 %v5545, %v5909
        %v5974 = vadd.f32 %v5546, %v5910
        %v5975 = vadd.f32 %v5547, %v5911
        %v5976 = vadd.f32 %v5548, %v5912
        %v5977 = vadd.f32 %v5549, %v5913
        %v5978 = vadd.f32 %v5550, %v5914
        %v5979 = vadd.f32 %v5551, %v5915
        %v5980 = vadd.f32 %v5552, %v5916
        %v5981 = vadd.f32 %v5553, %v5917
        %v5982 = vadd.f32 %v5554, %v5918
        %v5983 = vadd.f32 %v5555, %v5919
        %v5984 = vadd.f32 %v5556, %v5920
        %v5985 = vadd.f32 %v5557, %v5921
        %v5986 = vadd.f32 %v5558, %v5922
        %v5987 = vadd.f32 %v5559, %v5923
        %v5988 = vadd.f32 %v5560, %v5924
        %v5989 = vadd.f32 %v5561, %v5925
        %v5990 = vadd.f32 %v5562, %v5926
        %v5991 = vadd.f32 %v5563, %v5927
        %v5992 = vadd.f32 %v5564, %v5928
        %v5993 = vadd.f32 %v5565, %v5929
        %v5994 = vadd.f32 %v5566, %v5930
        %v5995 = vadd.f32 %v5567, %v5931
        %v5996 = vadd.f32 %v5568, %v5932
        %v5997 = vadd.f32 %v5933, 0.0
        %v5998 = vadd.f32 %v5934, 0.0
        %v5999 = vadd.f32 %v5935, 0.0
        %v6000 = vadd.f32 %v5936, 0.0
        %v6001 = vadd.f32 %v5569, %v5937
        %v6002 = vadd.f32 %v5570, %v5938
        %v6003 = vadd.f32 %v5571, %v5939
        %v6004 = vadd.f32 %v5572, %v5940
        %v6005 = vadd.f32 %v5573, %v5941
        %v6006 = vadd.f32 %v5574, %v5942
        %v6007 = vadd.f32 %v5575, %v5943
        %v6008 = vadd.f32 %v5576, %v5944
        %v6009 = vadd.f32 %v5577, %v5945
        %v6010 = vadd.f32 %v5578, %v5946
        %v6011 = vadd.f32 %v5579, %v5947
        %v6012 = vadd.f32 %v5580, %v5948
        %v6013 = vadd.f32 %v5581, %v5949
        %v6014 = vadd.f32 %v5582, %v5950
        %v6015 = vadd.f32 %v5583, %v5951
        %v6016 = vadd.f32 %v5584, %v5952
        %v6017 = vadd.f32 %v5585, %v5953
        %v6018 = vadd.f32 %v5586, %v5954
        %v6019 = vadd.f32 %v5587, %v5955
        %v6020 = vadd.f32 %v5588, %v5956
        %v6021 = vadd.f32 %v5589, %v5957
        %v6022 = vadd.f32 %v5590, %v5958
        %v6023 = vadd.f32 %v5591, %v5959
        %v6024 = vadd.f32 %v5592, %v5960
        %v6025 = vadd.f32 %v5593, %v5961
        %v6026 = vadd.f32 %v5594, %v5962
        %v6027 = vadd.f32 %v5595, %v5963
        %v6028 = vadd.f32 %v5596, %v5964
        %v6029 = vlaneseq
        %v6030 = vshrl.u32 %v6029, 7
        %v6031 = vsub.s32 6, %v6030
        %v6032 = vrot.slane %v5261, %v6031
        %v6033 = vlaneseq
        %v6034 = vshrl.u32 %v6033, 7
        %v6035 = vsub.s32 6, %v6034
        %v6036 = vrot.slane %v5262, %v6035
        %v6037 = vlaneseq
        %v6038 = vshrl.u32 %v6037, 7
        %v6039 = vsub.s32 6, %v6038
        %v6040 = vrot.slane %v5263, %v6039
        %v6041 = vlaneseq
        %v6042 = vshrl.u32 %v6041, 7
        %v6043 = vsub.s32 6, %v6042
        %v6044 = vrot.slane %v5264, %v6043
        %v6045 = vmul.f32 %v5008, %v6032
        %v6046 = vmul.f32 %v5009, %v6036
        %v6047 = vmul.f32 %v5010, %v6040
        %v6048 = vmul.f32 %v5011, %v6044
        %v6049 = vmul.f32 %v5012, %v6032
        %v6050 = vmul.f32 %v5013, %v6036
        %v6051 = vmul.f32 %v5014, %v6040
        %v6052 = vmul.f32 %v5015, %v6044
        %v6053 = vmul.f32 %v5016, %v6032
        %v6054 = vmul.f32 %v5017, %v6036
        %v6055 = vmul.f32 %v5018, %v6040
        %v6056 = vmul.f32 %v5019, %v6044
        %v6057 = vmul.f32 %v5020, %v6032
        %v6058 = vmul.f32 %v5021, %v6036
        %v6059 = vmul.f32 %v5022, %v6040
        %v6060 = vmul.f32 %v5023, %v6044
        %v6061 = vmul.f32 %v5024, %v6032
        %v6062 = vmul.f32 %v5025, %v6036
        %v6063 = vmul.f32 %v5026, %v6040
        %v6064 = vmul.f32 %v5027, %v6044
        %v6065 = vmul.f32 %v5028, %v6032
        %v6066 = vmul.f32 %v5029, %v6036
        %v6067 = vmul.f32 %v5030, %v6040
        %v6068 = vmul.f32 %v5031, %v6044
        %v6069 = vmul.f32 %v5032, %v6032
        %v6070 = vmul.f32 %v5033, %v6036
        %v6071 = vmul.f32 %v5034, %v6040
        %v6072 = vmul.f32 %v5035, %v6044
        %v6073 = vmul.f32 %v5040, %v6032
        %v6074 = vmul.f32 %v5041, %v6036
        %v6075 = vmul.f32 %v5042, %v6040
        %v6076 = vmul.f32 %v5043, %v6044
        %v6077 = vmul.f32 %v5044, %v6032
        %v6078 = vmul.f32 %v5045, %v6036
        %v6079 = vmul.f32 %v5046, %v6040
        %v6080 = vmul.f32 %v5047, %v6044
        %v6081 = vmul.f32 %v5048, %v6032
        %v6082 = vmul.f32 %v5049, %v6036
        %v6083 = vmul.f32 %v5050, %v6040
        %v6084 = vmul.f32 %v5051, %v6044
        %v6085 = vmul.f32 %v5052, %v6032
        %v6086 = vmul.f32 %v5053, %v6036
        %v6087 = vmul.f32 %v5054, %v6040
        %v6088 = vmul.f32 %v5055, %v6044
        %v6089 = vmul.f32 %v5056, %v6032
        %v6090 = vmul.f32 %v5057, %v6036
        %v6091 = vmul.f32 %v5058, %v6040
        %v6092 = vmul.f32 %v5059, %v6044
        %v6093 = vmul.f32 %v5060, %v6032
        %v6094 = vmul.f32 %v5061, %v6036
        %v6095 = vmul.f32 %v5062, %v6040
        %v6096 = vmul.f32 %v5063, %v6044
        %v6097 = vmul.f32 %v5064, %v6032
        %v6098 = vmul.f32 %v5065, %v6036
        %v6099 = vmul.f32 %v5066, %v6040
        %v6100 = vmul.f32 %v5067, %v6044
        %v6101 = vlaneseq
        %v6102 = vshrl.u32 %v6101, 7
        %v6103 = vsub.s32 7, %v6102
        %v6104 = vrot.slane %v5261, %v6103
        %v6105 = vlaneseq
        %v6106 = vshrl.u32 %v6105, 7
        %v6107 = vsub.s32 7, %v6106
        %v6108 = vrot.slane %v5262, %v6107
        %v6109 = vlaneseq
        %v6110 = vshrl.u32 %v6109, 7
        %v6111 = vsub.s32 7, %v6110
        %v6112 = vrot.slane %v5263, %v6111
        %v6113 = vlaneseq
        %v6114 = vshrl.u32 %v6113, 7
        %v6115 = vsub.s32 7, %v6114
        %v6116 = vrot.slane %v5264, %v6115
        %v6117 = vmul.f32 %v4512, %v6104
        %v6118 = vmul.f32 %v4514, %v6108
        %v6119 = vmul.f32 %v4738, %v6112
        %v6120 = vmul.f32 %v4740, %v6116
        %v6121 = vmul.f32 %v4518, %v6104
        %v6122 = vmul.f32 %v4520, %v6108
        %v6123 = vmul.f32 %v4744, %v6112
        %v6124 = vmul.f32 %v4746, %v6116
        %v6125 = vmul.f32 %v4522, %v6104
        %v6126 = vmul.f32 %v4524, %v6108
        %v6127 = vmul.f32 %v4748, %v6112
        %v6128 = vmul.f32 %v4750, %v6116
        %v6129 = vmul.f32 %v4528, %v6104
        %v6130 = vmul.f32 %v4530, %v6108
        %v6131 = vmul.f32 %v4754, %v6112
        %v6132 = vmul.f32 %v4756, %v6116
        %v6133 = vmul.f32 %v4532, %v6104
        %v6134 = vmul.f32 %v4534, %v6108
        %v6135 = vmul.f32 %v4758, %v6112
        %v6136 = vmul.f32 %v4760, %v6116
        %v6137 = vmul.f32 %v4538, %v6104
        %v6138 = vmul.f32 %v4540, %v6108
        %v6139 = vmul.f32 %v4764, %v6112
        %v6140 = vmul.f32 %v4766, %v6116
        %v6141 = vmul.f32 %v4542, %v6104
        %v6142 = vmul.f32 %v4544, %v6108
        %v6143 = vmul.f32 %v4768, %v6112
        %v6144 = vmul.f32 %v4770, %v6116
        %v6145 = vmul.f32 %v4552, %v6104
        %v6146 = vmul.f32 %v4554, %v6108
        %v6147 = vmul.f32 %v4778, %v6112
        %v6148 = vmul.f32 %v4780, %v6116
        %v6149 = vmul.f32 %v4558, %v6104
        %v6150 = vmul.f32 %v4560, %v6108
        %v6151 = vmul.f32 %v4784, %v6112
        %v6152 = vmul.f32 %v4786, %v6116
        %v6153 = vmul.f32 %v4562, %v6104
        %v6154 = vmul.f32 %v4564, %v6108
        %v6155 = vmul.f32 %v4788, %v6112
        %v6156 = vmul.f32 %v4790, %v6116
        %v6157 = vmul.f32 %v4568, %v6104
        %v6158 = vmul.f32 %v4570, %v6108
        %v6159 = vmul.f32 %v4794, %v6112
        %v6160 = vmul.f32 %v4796, %v6116
        %v6161 = vmul.f32 %v4572, %v6104
        %v6162 = vmul.f32 %v4574, %v6108
        %v6163 = vmul.f32 %v4798, %v6112
        %v6164 = vmul.f32 %v4800, %v6116
        %v6165 = vmul.f32 %v4578, %v6104
        %v6166 = vmul.f32 %v4580, %v6108
        %v6167 = vmul.f32 %v4804, %v6112
        %v6168 = vmul.f32 %v4806, %v6116
        %v6169 = vmul.f32 %v4582, %v6104
        %v6170 = vmul.f32 %v4584, %v6108
        %v6171 = vmul.f32 %v4808, %v6112
        %v6172 = vmul.f32 %v4810, %v6116
        %v6173 = vadd.f32 %v6045, %v6117
        %v6174 = vadd.f32 %v6046, %v6118
        %v6175 = vadd.f32 %v6047, %v6119
        %v6176 = vadd.f32 %v6048, %v6120
        %v6177 = vadd.f32 %v6049, %v6121
        %v6178 = vadd.f32 %v6050, %v6122
        %v6179 = vadd.f32 %v6051, %v6123
        %v6180 = vadd.f32 %v6052, %v6124
        %v6181 = vadd.f32 %v6053, %v6125
        %v6182 = vadd.f32 %v6054, %v6126
        %v6183 = vadd.f32 %v6055, %v6127
        %v6184 = vadd.f32 %v6056, %v6128
        %v6185 = vadd.f32 %v6057, %v6129
        %v6186 = vadd.f32 %v6058, %v6130
        %v6187 = vadd.f32 %v6059, %v6131
        %v6188 = vadd.f32 %v6060, %v6132
        %v6189 = vadd.f32 %v6061, %v6133
        %v6190 = vadd.f32 %v6062, %v6134
        %v6191 = vadd.f32 %v6063, %v6135
        %v6192 = vadd.f32 %v6064, %v6136
        %v6193 = vadd.f32 %v6065, %v6137
        %v6194 = vadd.f32 %v6066, %v6138
        %v6195 = vadd.f32 %v6067, %v6139
        %v6196 = vadd.f32 %v6068, %v6140
        %v6197 = vadd.f32 %v6069, %v6141
        %v6198 = vadd.f32 %v6070, %v6142
        %v6199 = vadd.f32 %v6071, %v6143
        %v6200 = vadd.f32 %v6072, %v6144
        %v6201 = vadd.f32 %v6073, %v6145
        %v6202 = vadd.f32 %v6074, %v6146
        %v6203 = vadd.f32 %v6075, %v6147
        %v6204 = vadd.f32 %v6076, %v6148
        %v6205 = vadd.f32 %v6077, %v6149
        %v6206 = vadd.f32 %v6078, %v6150
        %v6207 = vadd.f32 %v6079, %v6151
        %v6208 = vadd.f32 %v6080, %v6152
        %v6209 = vadd.f32 %v6081, %v6153
        %v6210 = vadd.f32 %v6082, %v6154
        %v6211 = vadd.f32 %v6083, %v6155
        %v6212 = vadd.f32 %v6084, %v6156
        %v6213 = vadd.f32 %v6085, %v6157
        %v6214 = vadd.f32 %v6086, %v6158
        %v6215 = vadd.f32 %v6087, %v6159
        %v6216 = vadd.f32 %v6088, %v6160
        %v6217 = vadd.f32 %v6089, %v6161
        %v6218 = vadd.f32 %v6090, %v6162
        %v6219 = vadd.f32 %v6091, %v6163
        %v6220 = vadd.f32 %v6092, %v6164
        %v6221 = vadd.f32 %v6093, %v6165
        %v6222 = vadd.f32 %v6094, %v6166
        %v6223 = vadd.f32 %v6095, %v6167
        %v6224 = vadd.f32 %v6096, %v6168
        %v6225 = vadd.f32 %v6097, %v6169
        %v6226 = vadd.f32 %v6098, %v6170
        %v6227 = vadd.f32 %v6099, %v6171
        %v6228 = vadd.f32 %v6100, %v6172
        %v6229 = vlaneseq
        %v6230 = vshrl.u32 %v6229, 7
        %v6231 = vsub.s32 0, %v6230
        %v6232 = vrot.slane %v5265, %v6231
        %v6233 = vlaneseq
        %v6234 = vshrl.u32 %v6233, 7
        %v6235 = vsub.s32 0, %v6234
        %v6236 = vrot.slane %v5266, %v6235
        %v6237 = vlaneseq
        %v6238 = vshrl.u32 %v6237, 7
        %v6239 = vsub.s32 0, %v6238
        %v6240 = vrot.slane %v5267, %v6239
        %v6241 = vlaneseq
        %v6242 = vshrl.u32 %v6241, 7
        %v6243 = vsub.s32 0, %v6242
        %v6244 = vrot.slane %v5268, %v6243
        %v6245 = vmul.f32 %v5200, %v6232
        %v6246 = vmul.f32 %v5201, %v6236
        %v6247 = vmul.f32 %v5202, %v6240
        %v6248 = vmul.f32 %v5203, %v6244
        %v6249 = vmul.f32 %v5204, %v6232
        %v6250 = vmul.f32 %v5205, %v6236
        %v6251 = vmul.f32 %v5206, %v6240
        %v6252 = vmul.f32 %v5207, %v6244
        %v6253 = vmul.f32 %v5208, %v6232
        %v6254 = vmul.f32 %v5209, %v6236
        %v6255 = vmul.f32 %v5210, %v6240
        %v6256 = vmul.f32 %v5211, %v6244
        %v6257 = vmul.f32 %v5212, %v6232
        %v6258 = vmul.f32 %v5213, %v6236
        %v6259 = vmul.f32 %v5214, %v6240
        %v6260 = vmul.f32 %v5215, %v6244
        %v6261 = vmul.f32 %v5216, %v6232
        %v6262 = vmul.f32 %v5217, %v6236
        %v6263 = vmul.f32 %v5218, %v6240
        %v6264 = vmul.f32 %v5219, %v6244
        %v6265 = vmul.f32 %v5220, %v6232
        %v6266 = vmul.f32 %v5221, %v6236
        %v6267 = vmul.f32 %v5222, %v6240
        %v6268 = vmul.f32 %v5223, %v6244
        %v6269 = vmul.f32 %v5224, %v6232
        %v6270 = vmul.f32 %v5225, %v6236
        %v6271 = vmul.f32 %v5226, %v6240
        %v6272 = vmul.f32 %v5227, %v6244
        %v6273 = vmul.f32 %v5232, %v6232
        %v6274 = vmul.f32 %v5233, %v6236
        %v6275 = vmul.f32 %v5234, %v6240
        %v6276 = vmul.f32 %v5235, %v6244
        %v6277 = vmul.f32 %v5236, %v6232
        %v6278 = vmul.f32 %v5237, %v6236
        %v6279 = vmul.f32 %v5238, %v6240
        %v6280 = vmul.f32 %v5239, %v6244
        %v6281 = vmul.f32 %v5240, %v6232
        %v6282 = vmul.f32 %v5241, %v6236
        %v6283 = vmul.f32 %v5242, %v6240
        %v6284 = vmul.f32 %v5243, %v6244
        %v6285 = vmul.f32 %v5244, %v6232
        %v6286 = vmul.f32 %v5245, %v6236
        %v6287 = vmul.f32 %v5246, %v6240
        %v6288 = vmul.f32 %v5247, %v6244
        %v6289 = vmul.f32 %v5248, %v6232
        %v6290 = vmul.f32 %v5249, %v6236
        %v6291 = vmul.f32 %v5250, %v6240
        %v6292 = vmul.f32 %v5251, %v6244
        %v6293 = vmul.f32 %v5252, %v6232
        %v6294 = vmul.f32 %v5253, %v6236
        %v6295 = vmul.f32 %v5254, %v6240
        %v6296 = vmul.f32 %v5255, %v6244
        %v6297 = vmul.f32 %v5256, %v6232
        %v6298 = vmul.f32 %v5257, %v6236
        %v6299 = vmul.f32 %v5258, %v6240
        %v6300 = vmul.f32 %v5259, %v6244
        %v6301 = vadd.f32 %v6173, %v6245
        %v6302 = vadd.f32 %v6174, %v6246
        %v6303 = vadd.f32 %v6175, %v6247
        %v6304 = vadd.f32 %v6176, %v6248
        %v6305 = vadd.f32 %v6177, %v6249
        %v6306 = vadd.f32 %v6178, %v6250
        %v6307 = vadd.f32 %v6179, %v6251
        %v6308 = vadd.f32 %v6180, %v6252
        %v6309 = vadd.f32 %v6181, %v6253
        %v6310 = vadd.f32 %v6182, %v6254
        %v6311 = vadd.f32 %v6183, %v6255
        %v6312 = vadd.f32 %v6184, %v6256
        %v6313 = vadd.f32 %v6185, %v6257
        %v6314 = vadd.f32 %v6186, %v6258
        %v6315 = vadd.f32 %v6187, %v6259
        %v6316 = vadd.f32 %v6188, %v6260
        %v6317 = vadd.f32 %v6189, %v6261
        %v6318 = vadd.f32 %v6190, %v6262
        %v6319 = vadd.f32 %v6191, %v6263
        %v6320 = vadd.f32 %v6192, %v6264
        %v6321 = vadd.f32 %v6193, %v6265
        %v6322 = vadd.f32 %v6194, %v6266
        %v6323 = vadd.f32 %v6195, %v6267
        %v6324 = vadd.f32 %v6196, %v6268
        %v6325 = vadd.f32 %v6197, %v6269
        %v6326 = vadd.f32 %v6198, %v6270
        %v6327 = vadd.f32 %v6199, %v6271
        %v6328 = vadd.f32 %v6200, %v6272
        %v6329 = vadd.f32 %v6201, %v6273
        %v6330 = vadd.f32 %v6202, %v6274
        %v6331 = vadd.f32 %v6203, %v6275
        %v6332 = vadd.f32 %v6204, %v6276
        %v6333 = vadd.f32 %v6205, %v6277
        %v6334 = vadd.f32 %v6206, %v6278
        %v6335 = vadd.f32 %v6207, %v6279
        %v6336 = vadd.f32 %v6208, %v6280
        %v6337 = vadd.f32 %v6209, %v6281
        %v6338 = vadd.f32 %v6210, %v6282
        %v6339 = vadd.f32 %v6211, %v6283
        %v6340 = vadd.f32 %v6212, %v6284
        %v6341 = vadd.f32 %v6213, %v6285
        %v6342 = vadd.f32 %v6214, %v6286
        %v6343 = vadd.f32 %v6215, %v6287
        %v6344 = vadd.f32 %v6216, %v6288
        %v6345 = vadd.f32 %v6217, %v6289
        %v6346 = vadd.f32 %v6218, %v6290
        %v6347 = vadd.f32 %v6219, %v6291
        %v6348 = vadd.f32 %v6220, %v6292
        %v6349 = vadd.f32 %v6221, %v6293
        %v6350 = vadd.f32 %v6222, %v6294
        %v6351 = vadd.f32 %v6223, %v6295
        %v6352 = vadd.f32 %v6224, %v6296
        %v6353 = vadd.f32 %v6225, %v6297
        %v6354 = vadd.f32 %v6226, %v6298
        %v6355 = vadd.f32 %v6227, %v6299
        %v6356 = vadd.f32 %v6228, %v6300
        %v6357 = vadd.f32 %v5965, %v6301
        %v6358 = vadd.f32 %v5966, %v6302
        %v6359 = vadd.f32 %v5967, %v6303
        %v6360 = vadd.f32 %v5968, %v6304
        %v6361 = vadd.f32 %v5969, %v6305
        %v6362 = vadd.f32 %v5970, %v6306
        %v6363 = vadd.f32 %v5971, %v6307
        %v6364 = vadd.f32 %v5972, %v6308
        %v6365 = vadd.f32 %v5973, %v6309
        %v6366 = vadd.f32 %v5974, %v6310
        %v6367 = vadd.f32 %v5975, %v6311
        %v6368 = vadd.f32 %v5976, %v6312
        %v6369 = vadd.f32 %v5977, %v6313
        %v6370 = vadd.f32 %v5978, %v6314
        %v6371 = vadd.f32 %v5979, %v6315
        %v6372 = vadd.f32 %v5980, %v6316
        %v6373 = vadd.f32 %v5981, %v6317
        %v6374 = vadd.f32 %v5982, %v6318
        %v6375 = vadd.f32 %v5983, %v6319
        %v6376 = vadd.f32 %v5984, %v6320
        %v6377 = vadd.f32 %v5985, %v6321
        %v6378 = vadd.f32 %v5986, %v6322
        %v6379 = vadd.f32 %v5987, %v6323
        %v6380 = vadd.f32 %v5988, %v6324
        %v6381 = vadd.f32 %v5989, %v6325
        %v6382 = vadd.f32 %v5990, %v6326
        %v6383 = vadd.f32 %v5991, %v6327
        %v6384 = vadd.f32 %v5992, %v6328
        %v6385 = vadd.f32 %v5993, 0.0
        %v6386 = vadd.f32 %v5994, 0.0
        %v6387 = vadd.f32 %v5995, 0.0
        %v6388 = vadd.f32 %v5996, 0.0
        %v6389 = vadd.f32 %v5997, %v6329
        %v6390 = vadd.f32 %v5998, %v6330
        %v6391 = vadd.f32 %v5999, %v6331
        %v6392 = vadd.f32 %v6000, %v6332
        %v6393 = vadd.f32 %v6001, %v6333
        %v6394 = vadd.f32 %v6002, %v6334
        %v6395 = vadd.f32 %v6003, %v6335
        %v6396 = vadd.f32 %v6004, %v6336
        %v6397 = vadd.f32 %v6005, %v6337
        %v6398 = vadd.f32 %v6006, %v6338
        %v6399 = vadd.f32 %v6007, %v6339
        %v6400 = vadd.f32 %v6008, %v6340
        %v6401 = vadd.f32 %v6009, %v6341
        %v6402 = vadd.f32 %v6010, %v6342
        %v6403 = vadd.f32 %v6011, %v6343
        %v6404 = vadd.f32 %v6012, %v6344
        %v6405 = vadd.f32 %v6013, %v6345
        %v6406 = vadd.f32 %v6014, %v6346
        %v6407 = vadd.f32 %v6015, %v6347
        %v6408 = vadd.f32 %v6016, %v6348
        %v6409 = vadd.f32 %v6017, %v6349
        %v6410 = vadd.f32 %v6018, %v6350
        %v6411 = vadd.f32 %v6019, %v6351
        %v6412 = vadd.f32 %v6020, %v6352
        %v6413 = vadd.f32 %v6021, %v6353
        %v6414 = vadd.f32 %v6022, %v6354
        %v6415 = vadd.f32 %v6023, %v6355
        %v6416 = vadd.f32 %v6024, %v6356
        %v6417 = vadd.f32 %v6025, 0.0
        %v6418 = vadd.f32 %v6026, 0.0
        %v6419 = vadd.f32 %v6027, 0.0
        %v6420 = vadd.f32 %v6028, 0.0
        %s6421 = scalar_lea.vmem %s285, 1
        %v6422 = vld [vmem:[%s6421] ss:$4 sm:$0xf]
        %v6424 = vlaneseq
        %v6425 = vshrl.u32 %v6424, 7
        %v6426 = vsub.s32 0, %v6425
        %v6427 = vrot.slane %v6422, %v6426
        %v6428 = vlaneseq
        %v6429 = vshrl.u32 %v6428, 7
        %v6430 = vsub.s32 1, %v6429
        %v6431 = vrot.slane %v6422, %v6430
        %v6432 = vlaneseq
        %v6433 = vshrl.u32 %v6432, 7
        %v6434 = vsub.s32 2, %v6433
        %v6435 = vrot.slane %v6422, %v6434
        %v6436 = vlaneseq
        %v6437 = vshrl.u32 %v6436, 7
        %v6438 = vsub.s32 3, %v6437
        %v6439 = vrot.slane %v6422, %v6438
        %v6444 = vadd.f32 %v6357, %v6427
        %v6445 = vadd.f32 %v6358, %v6431
        %v6446 = vadd.f32 %v6359, %v6435
        %v6447 = vadd.f32 %v6360, %v6439
        %v6448 = vadd.f32 %v6361, %v6427
        %v6449 = vadd.f32 %v6362, %v6431
        %v6450 = vadd.f32 %v6363, %v6435
        %v6451 = vadd.f32 %v6364, %v6439
        %v6452 = vadd.f32 %v6365, %v6427
        %v6453 = vadd.f32 %v6366, %v6431
        %v6454 = vadd.f32 %v6367, %v6435
        %v6455 = vadd.f32 %v6368, %v6439
        %v6456 = vadd.f32 %v6369, %v6427
        %v6457 = vadd.f32 %v6370, %v6431
        %v6458 = vadd.f32 %v6371, %v6435
        %v6459 = vadd.f32 %v6372, %v6439
        %v6460 = vadd.f32 %v6373, %v6427
        %v6461 = vadd.f32 %v6374, %v6431
        %v6462 = vadd.f32 %v6375, %v6435
        %v6463 = vadd.f32 %v6376, %v6439
        %v6464 = vadd.f32 %v6377, %v6427
        %v6465 = vadd.f32 %v6378, %v6431
        %v6466 = vadd.f32 %v6379, %v6435
        %v6467 = vadd.f32 %v6380, %v6439
        %v6468 = vadd.f32 %v6381, %v6427
        %v6469 = vadd.f32 %v6382, %v6431
        %v6470 = vadd.f32 %v6383, %v6435
        %v6471 = vadd.f32 %v6384, %v6439
        %v6472 = vadd.f32 %v6385, %v6427
        %v6473 = vadd.f32 %v6386, %v6431
        %v6474 = vadd.f32 %v6387, %v6435
        %v6475 = vadd.f32 %v6388, %v6439
        %v6476 = vadd.f32 %v6389, %v6427
        %v6477 = vadd.f32 %v6390, %v6431
        %v6478 = vadd.f32 %v6391, %v6435
        %v6479 = vadd.f32 %v6392, %v6439
        %v6480 = vadd.f32 %v6393, %v6427
        %v6481 = vadd.f32 %v6394, %v6431
        %v6482 = vadd.f32 %v6395, %v6435
        %v6483 = vadd.f32 %v6396, %v6439
        %v6484 = vadd.f32 %v6397, %v6427
        %v6485 = vadd.f32 %v6398, %v6431
        %v6486 = vadd.f32 %v6399, %v6435
        %v6487 = vadd.f32 %v6400, %v6439
        %v6488 = vadd.f32 %v6401, %v6427
        %v6489 = vadd.f32 %v6402, %v6431
        %v6490 = vadd.f32 %v6403, %v6435
        %v6491 = vadd.f32 %v6404, %v6439
        %v6492 = vadd.f32 %v6405, %v6427
        %v6493 = vadd.f32 %v6406, %v6431
        %v6494 = vadd.f32 %v6407, %v6435
        %v6495 = vadd.f32 %v6408, %v6439
        %v6496 = vadd.f32 %v6409, %v6427
        %v6497 = vadd.f32 %v6410, %v6431
        %v6498 = vadd.f32 %v6411, %v6435
        %v6499 = vadd.f32 %v6412, %v6439
        %v6500 = vadd.f32 %v6413, %v6427
        %v6501 = vadd.f32 %v6414, %v6431
        %v6502 = vadd.f32 %v6415, %v6435
        %v6503 = vadd.f32 %v6416, %v6439
        %v6504 = vadd.f32 %v6417, %v6427
        %v6505 = vadd.f32 %v6418, %v6431
        %v6506 = vadd.f32 %v6419, %v6435
        %v6507 = vadd.f32 %v6420, %v6439
        %v6508 = vmax.f32 %v6444, 0.0
        %v6509 = vmax.f32 %v6445, 0.0
        %v6510 = vmax.f32 %v6446, 0.0
        %v6511 = vmax.f32 %v6447, 0.0
        %v6512 = vmax.f32 %v6448, 0.0
        %v6513 = vmax.f32 %v6449, 0.0
        %v6514 = vmax.f32 %v6450, 0.0
        %v6515 = vmax.f32 %v6451, 0.0
        %v6516 = vmax.f32 %v6452, 0.0
        %v6517 = vmax.f32 %v6453, 0.0
        %v6518 = vmax.f32 %v6454, 0.0
        %v6519 = vmax.f32 %v6455, 0.0
        %v6520 = vmax.f32 %v6456, 0.0
        %v6521 = vmax.f32 %v6457, 0.0
        %v6522 = vmax.f32 %v6458, 0.0
        %v6523 = vmax.f32 %v6459, 0.0
        %v6524 = vmax.f32 %v6460, 0.0
        %v6525 = vmax.f32 %v6461, 0.0
        %v6526 = vmax.f32 %v6462, 0.0
        %v6527 = vmax.f32 %v6463, 0.0
        %v6528 = vmax.f32 %v6464, 0.0
        %v6529 = vmax.f32 %v6465, 0.0
        %v6530 = vmax.f32 %v6466, 0.0
        %v6531 = vmax.f32 %v6467, 0.0
        %v6532 = vmax.f32 %v6468, 0.0
        %v6533 = vmax.f32 %v6469, 0.0
        %v6534 = vmax.f32 %v6470, 0.0
        %v6535 = vmax.f32 %v6471, 0.0
        %v6536 = vmax.f32 %v6472, 0.0
        %v6537 = vmax.f32 %v6473, 0.0
        %v6538 = vmax.f32 %v6474, 0.0
        %v6539 = vmax.f32 %v6475, 0.0
        %v6540 = vmax.f32 %v6476, 0.0
        %v6541 = vmax.f32 %v6477, 0.0
        %v6542 = vmax.f32 %v6478, 0.0
        %v6543 = vmax.f32 %v6479, 0.0
        %v6544 = vmax.f32 %v6480, 0.0
        %v6545 = vmax.f32 %v6481, 0.0
        %v6546 = vmax.f32 %v6482, 0.0
        %v6547 = vmax.f32 %v6483, 0.0
        %v6548 = vmax.f32 %v6484, 0.0
        %v6549 = vmax.f32 %v6485, 0.0
        %v6550 = vmax.f32 %v6486, 0.0
        %v6551 = vmax.f32 %v6487, 0.0
        %v6552 = vmax.f32 %v6488, 0.0
        %v6553 = vmax.f32 %v6489, 0.0
        %v6554 = vmax.f32 %v6490, 0.0
        %v6555 = vmax.f32 %v6491, 0.0
        %v6556 = vmax.f32 %v6492, 0.0
        %v6557 = vmax.f32 %v6493, 0.0
        %v6558 = vmax.f32 %v6494, 0.0
        %v6559 = vmax.f32 %v6495, 0.0
        %v6560 = vmax.f32 %v6496, 0.0
        %v6561 = vmax.f32 %v6497, 0.0
        %v6562 = vmax.f32 %v6498, 0.0
        %v6563 = vmax.f32 %v6499, 0.0
        %v6564 = vmax.f32 %v6500, 0.0
        %v6565 = vmax.f32 %v6501, 0.0
        %v6566 = vmax.f32 %v6502, 0.0
        %v6567 = vmax.f32 %v6503, 0.0
        %v6568 = vmax.f32 %v6504, 0.0
        %v6569 = vmax.f32 %v6505, 0.0
        %v6570 = vmax.f32 %v6506, 0.0
        %v6571 = vmax.f32 %v6507, 0.0
        %v6572 = vpack.c.bf16 %v6512, %v6508
        %v6573 = vpack.c.bf16 %v6513, %v6509
        %v6574 = vpack.c.bf16 %v6514, %v6510
        %v6575 = vpack.c.bf16 %v6515, %v6511
        %v6576 = vpack.c.bf16 %v6520, %v6516
        %v6577 = vpack.c.bf16 %v6521, %v6517
        %v6578 = vpack.c.bf16 %v6522, %v6518
        %v6579 = vpack.c.bf16 %v6523, %v6519
        %v6580 = vpack.c.bf16 %v6528, %v6524
        %v6581 = vpack.c.bf16 %v6529, %v6525
        %v6582 = vpack.c.bf16 %v6530, %v6526
        %v6583 = vpack.c.bf16 %v6531, %v6527
        %v6584 = vpack.c.bf16 %v6536, %v6532
        %v6585 = vpack.c.bf16 %v6537, %v6533
        %v6586 = vpack.c.bf16 %v6538, %v6534
        %v6587 = vpack.c.bf16 %v6539, %v6535
        %v6588 = vpack.c.bf16 %v6544, %v6540
        %v6589 = vpack.c.bf16 %v6545, %v6541
        %v6590 = vpack.c.bf16 %v6546, %v6542
        %v6591 = vpack.c.bf16 %v6547, %v6543
        %v6592 = vpack.c.bf16 %v6552, %v6548
        %v6593 = vpack.c.bf16 %v6553, %v6549
        %v6594 = vpack.c.bf16 %v6554, %v6550
        %v6595 = vpack.c.bf16 %v6555, %v6551
        %v6596 = vpack.c.bf16 %v6560, %v6556
        %v6597 = vpack.c.bf16 %v6561, %v6557
        %v6598 = vpack.c.bf16 %v6562, %v6558
        %v6599 = vpack.c.bf16 %v6563, %v6559
        %v6600 = vpack.c.bf16 %v6568, %v6564
        %v6601 = vpack.c.bf16 %v6569, %v6565
        %v6602 = vpack.c.bf16 %v6570, %v6566
        %v6603 = vpack.c.bf16 %v6571, %v6567
        %s6604 = scalar_lea.vmem %s245, 2048 [#allocation5]
        %v6605 = vld [vmem:[%s6604] sm:$0xff]
        %v6606 = vld [vmem:[%s6604 + $0x8] sm:$0xff]
        %v6607 = vld [vmem:[%s6604 + $0x10] sm:$0xff]
        %v6608 = vld [vmem:[%s6604 + $0x18] sm:$0xff]
        %v6609 = vld [vmem:[%s6604 + $0x20] sm:$0xff]
        %v6610 = vld [vmem:[%s6604 + $0x28] sm:$0xff]
        %v6611 = vld [vmem:[%s6604 + $0x30] sm:$0xff]
        %v6612 = vld [vmem:[%s6604 + $0x38] sm:$0xff]
        %v6613 = vld [vmem:[%s6604 + $0x40] sm:$0xff]
        %v6614 = vld [vmem:[%s6604 + $0x48] sm:$0xff]
        %v6615 = vld [vmem:[%s6604 + $0x50] sm:$0xff]
        %v6616 = vld [vmem:[%s6604 + $0x58] sm:$0xff]
        %v6617 = vld [vmem:[%s6604 + $0x60] sm:$0xff]
        %v6618 = vld [vmem:[%s6604 + $0x68] sm:$0xff]
        %v6619 = vld [vmem:[%s6604 + $0x70] sm:$0xff]
        %v6620 = vld [vmem:[%s6604 + $0x78] sm:$0xff]
        %v6621 = vld [vmem:[%s6604 + $0x80] sm:$0xff]
        %v6622 = vld [vmem:[%s6604 + $0x88] sm:$0xff]
        %v6623 = vld [vmem:[%s6604 + $0x90] sm:$0xff]
        %v6624 = vld [vmem:[%s6604 + $0x98] sm:$0xff]
        %v6625 = vld [vmem:[%s6604 + $0xa0] sm:$0xff]
        %v6626 = vld [vmem:[%s6604 + $0xa8] sm:$0xff]
        %v6627 = vld [vmem:[%s6604 + $0xb0] sm:$0xff]
        %v6628 = vld [vmem:[%s6604 + $0xb8] sm:$0xff]
        %v6629 = vld [vmem:[%s6604 + $0xc0] sm:$0xff]
        %v6630 = vld [vmem:[%s6604 + $0xc8] sm:$0xff]
        %v6631 = vld [vmem:[%s6604 + $0xd0] sm:$0xff]
        %v6632 = vld [vmem:[%s6604 + $0xd8] sm:$0xff]
        %v6633 = vld [vmem:[%s6604 + $0xe0] sm:$0xff]
        %v6634 = vld [vmem:[%s6604 + $0xe8] sm:$0xff]
        %v6635 = vld [vmem:[%s6604 + $0xf0] sm:$0xff]
        %v6636 = vld [vmem:[%s6604 + $0xf8] sm:$0xff]
        %v6637 = vld [vmem:[%s6604 + $0x100] sm:$0xff]
        %v6638 = vld [vmem:[%s6604 + $0x108] sm:$0xff]
        %v6639 = vld [vmem:[%s6604 + $0x110] sm:$0xff]
        %v6640 = vld [vmem:[%s6604 + $0x118] sm:$0xff]
        %v6641 = vld [vmem:[%s6604 + $0x120] sm:$0xff]
        %v6642 = vld [vmem:[%s6604 + $0x128] sm:$0xff]
        %v6643 = vld [vmem:[%s6604 + $0x130] sm:$0xff]
        %v6644 = vld [vmem:[%s6604 + $0x138] sm:$0xff]
        %v6645 = vld [vmem:[%s6604 + $0x140] sm:$0xff]
        %v6646 = vld [vmem:[%s6604 + $0x148] sm:$0xff]
        %v6647 = vld [vmem:[%s6604 + $0x150] sm:$0xff]
        %v6648 = vld [vmem:[%s6604 + $0x158] sm:$0xff]
        %v6649 = vld [vmem:[%s6604 + $0x160] sm:$0xff]
        %v6650 = vld [vmem:[%s6604 + $0x168] sm:$0xff]
        %v6651 = vld [vmem:[%s6604 + $0x170] sm:$0xff]
        %v6652 = vld [vmem:[%s6604 + $0x178] sm:$0xff]
        %v6653 = vld [vmem:[%s6604 + $0x180] sm:$0xff]
        %v6654 = vld [vmem:[%s6604 + $0x188] sm:$0xff]
        %v6655 = vld [vmem:[%s6604 + $0x190] sm:$0xff]
        %v6656 = vld [vmem:[%s6604 + $0x198] sm:$0xff]
        %v6657 = vld [vmem:[%s6604 + $0x1a0] sm:$0xff]
        %v6658 = vld [vmem:[%s6604 + $0x1a8] sm:$0xff]
        %v6659 = vld [vmem:[%s6604 + $0x1b0] sm:$0xff]
        %v6660 = vld [vmem:[%s6604 + $0x1b8] sm:$0xff]
        %v6661 = vld [vmem:[%s6604 + $0x1c0] sm:$0xff]
        %v6662 = vld [vmem:[%s6604 + $0x1c8] sm:$0xff]
        %v6663 = vld [vmem:[%s6604 + $0x1d0] sm:$0xff]
        %v6664 = vld [vmem:[%s6604 + $0x1d8] sm:$0xff]
        %v6665 = vld [vmem:[%s6604 + $0x1e0] sm:$0xff]
        %v6666 = vld [vmem:[%s6604 + $0x1e8] sm:$0xff]
        %v6667 = vld [vmem:[%s6604 + $0x1f0] sm:$0xff]
        %v6668 = vld [vmem:[%s6604 + $0x1f8] sm:$0xff]
        %v6669 = vld [vmem:[%s6604 + $0x200] sm:$0xff]
        %v6670 = vld [vmem:[%s6604 + $0x208] sm:$0xff]
        %v6671 = vld [vmem:[%s6604 + $0x210] sm:$0xff]
        %v6672 = vld [vmem:[%s6604 + $0x218] sm:$0xff]
        %v6673 = vld [vmem:[%s6604 + $0x220] sm:$0xff]
        %v6674 = vld [vmem:[%s6604 + $0x228] sm:$0xff]
        %v6675 = vld [vmem:[%s6604 + $0x230] sm:$0xff]
        %v6676 = vld [vmem:[%s6604 + $0x238] sm:$0xff]
        %v6677 = vld [vmem:[%s6604 + $0x240] sm:$0xff]
        %v6678 = vld [vmem:[%s6604 + $0x248] sm:$0xff]
        %v6679 = vld [vmem:[%s6604 + $0x250] sm:$0xff]
        %v6680 = vld [vmem:[%s6604 + $0x258] sm:$0xff]
        %v6681 = vld [vmem:[%s6604 + $0x260] sm:$0xff]
        %v6682 = vld [vmem:[%s6604 + $0x268] sm:$0xff]
        %v6683 = vld [vmem:[%s6604 + $0x270] sm:$0xff]
        %v6684 = vld [vmem:[%s6604 + $0x278] sm:$0xff]
        %v6685 = vld [vmem:[%s6604 + $0x280] sm:$0xff]
        %v6686 = vld [vmem:[%s6604 + $0x288] sm:$0xff]
        %v6687 = vld [vmem:[%s6604 + $0x290] sm:$0xff]
        %v6688 = vld [vmem:[%s6604 + $0x298] sm:$0xff]
        %v6689 = vld [vmem:[%s6604 + $0x2a0] sm:$0xff]
        %v6690 = vld [vmem:[%s6604 + $0x2a8] sm:$0xff]
        %v6691 = vld [vmem:[%s6604 + $0x2b0] sm:$0xff]
        %v6692 = vld [vmem:[%s6604 + $0x2b8] sm:$0xff]
        %v6693 = vld [vmem:[%s6604 + $0x2c0] sm:$0xff]
        %v6694 = vld [vmem:[%s6604 + $0x2c8] sm:$0xff]
        %v6695 = vld [vmem:[%s6604 + $0x2d0] sm:$0xff]
        %v6696 = vld [vmem:[%s6604 + $0x2d8] sm:$0xff]
        %v6697 = vld [vmem:[%s6604 + $0x2e0] sm:$0xff]
        %v6698 = vld [vmem:[%s6604 + $0x2e8] sm:$0xff]
        %v6699 = vld [vmem:[%s6604 + $0x2f0] sm:$0xff]
        %v6700 = vld [vmem:[%s6604 + $0x2f8] sm:$0xff]
        %v6701 = vld [vmem:[%s6604 + $0x300] sm:$0xff]
        %v6702 = vld [vmem:[%s6604 + $0x308] sm:$0xff]
        %v6703 = vld [vmem:[%s6604 + $0x310] sm:$0xff]
        %v6704 = vld [vmem:[%s6604 + $0x318] sm:$0xff]
        %v6705 = vld [vmem:[%s6604 + $0x320] sm:$0xff]
        %v6706 = vld [vmem:[%s6604 + $0x328] sm:$0xff]
        %v6707 = vld [vmem:[%s6604 + $0x330] sm:$0xff]
        %v6708 = vld [vmem:[%s6604 + $0x338] sm:$0xff]
        %v6709 = vld [vmem:[%s6604 + $0x340] sm:$0xff]
        %v6710 = vld [vmem:[%s6604 + $0x348] sm:$0xff]
        %v6711 = vld [vmem:[%s6604 + $0x350] sm:$0xff]
        %v6712 = vld [vmem:[%s6604 + $0x358] sm:$0xff]
        %v6713 = vld [vmem:[%s6604 + $0x360] sm:$0xff]
        %v6714 = vld [vmem:[%s6604 + $0x368] sm:$0xff]
        %v6715 = vld [vmem:[%s6604 + $0x370] sm:$0xff]
        %v6716 = vld [vmem:[%s6604 + $0x378] sm:$0xff]
        %v6717 = vld [vmem:[%s6604 + $0x380] sm:$0xff]
        %v6718 = vld [vmem:[%s6604 + $0x388] sm:$0xff]
        %v6719 = vld [vmem:[%s6604 + $0x390] sm:$0xff]
        %v6720 = vld [vmem:[%s6604 + $0x398] sm:$0xff]
        %v6721 = vld [vmem:[%s6604 + $0x3a0] sm:$0xff]
        %v6722 = vld [vmem:[%s6604 + $0x3a8] sm:$0xff]
        %v6723 = vld [vmem:[%s6604 + $0x3b0] sm:$0xff]
        %v6724 = vld [vmem:[%s6604 + $0x3b8] sm:$0xff]
        %v6725 = vld [vmem:[%s6604 + $0x3c0] sm:$0xff]
        %v6726 = vld [vmem:[%s6604 + $0x3c8] sm:$0xff]
        %v6727 = vld [vmem:[%s6604 + $0x3d0] sm:$0xff]
        %v6728 = vld [vmem:[%s6604 + $0x3d8] sm:$0xff]
        %v6729 = vld [vmem:[%s6604 + $0x3e0] sm:$0xff]
        %v6730 = vld [vmem:[%s6604 + $0x3e8] sm:$0xff]
        %v6731 = vld [vmem:[%s6604 + $0x3f0] sm:$0xff]
        %v6732 = vld [vmem:[%s6604 + $0x3f8] sm:$0xff]
        %v6861 = vunpack.c.l.b16 %v6605
        %v6862 = vunpack.c.h.b16 %v6605
        %v6863 = vunpack.c.l.b16 %v6606
        %v6864 = vunpack.c.h.b16 %v6606
        %v6865 = vunpack.c.l.b16 %v6607
        %v6866 = vunpack.c.h.b16 %v6607
        %v6867 = vunpack.c.l.b16 %v6608
        %v6868 = vunpack.c.h.b16 %v6608
        %v6869 = vunpack.c.l.b16 %v6609
        %v6870 = vunpack.c.h.b16 %v6609
        %v6871 = vunpack.c.l.b16 %v6610
        %v6872 = vunpack.c.h.b16 %v6610
        %v6873 = vunpack.c.l.b16 %v6611
        %v6874 = vunpack.c.h.b16 %v6611
        %v6875 = vunpack.c.l.b16 %v6612
        %v6876 = vunpack.c.h.b16 %v6612
        %v6877 = vunpack.c.l.b16 %v6613
        %v6878 = vunpack.c.h.b16 %v6613
        %v6879 = vunpack.c.l.b16 %v6614
        %v6880 = vunpack.c.h.b16 %v6614
        %v6881 = vunpack.c.l.b16 %v6615
        %v6882 = vunpack.c.h.b16 %v6615
        %v6883 = vunpack.c.l.b16 %v6616
        %v6884 = vunpack.c.h.b16 %v6616
        %v6885 = vunpack.c.l.b16 %v6617
        %v6886 = vunpack.c.h.b16 %v6617
        %v6887 = vunpack.c.l.b16 %v6618
        %v6888 = vunpack.c.h.b16 %v6618
        %v6889 = vunpack.c.l.b16 %v6619
        %v6890 = vunpack.c.h.b16 %v6619
        %v6891 = vunpack.c.l.b16 %v6620
        %v6892 = vunpack.c.h.b16 %v6620
        %v6893 = vunpack.c.l.b16 %v6621
        %v6894 = vunpack.c.h.b16 %v6621
        %v6895 = vunpack.c.l.b16 %v6622
        %v6896 = vunpack.c.h.b16 %v6622
        %v6897 = vunpack.c.l.b16 %v6623
        %v6898 = vunpack.c.h.b16 %v6623
        %v6899 = vunpack.c.l.b16 %v6624
        %v6900 = vunpack.c.h.b16 %v6624
        %v6901 = vunpack.c.l.b16 %v6625
        %v6902 = vunpack.c.h.b16 %v6625
        %v6903 = vunpack.c.l.b16 %v6626
        %v6904 = vunpack.c.h.b16 %v6626
        %v6905 = vunpack.c.l.b16 %v6627
        %v6906 = vunpack.c.h.b16 %v6627
        %v6907 = vunpack.c.l.b16 %v6628
        %v6908 = vunpack.c.h.b16 %v6628
        %v6909 = vunpack.c.l.b16 %v6629
        %v6910 = vunpack.c.h.b16 %v6629
        %v6911 = vunpack.c.l.b16 %v6630
        %v6912 = vunpack.c.h.b16 %v6630
        %v6913 = vunpack.c.l.b16 %v6631
        %v6914 = vunpack.c.h.b16 %v6631
        %v6915 = vunpack.c.l.b16 %v6632
        %v6916 = vunpack.c.h.b16 %v6632
        %v6917 = vunpack.c.l.b16 %v6633
        %v6918 = vunpack.c.h.b16 %v6633
        %v6919 = vunpack.c.l.b16 %v6634
        %v6920 = vunpack.c.h.b16 %v6634
        %v6921 = vunpack.c.l.b16 %v6635
        %v6922 = vunpack.c.h.b16 %v6635
        %v6923 = vunpack.c.l.b16 %v6636
        %v6924 = vunpack.c.h.b16 %v6636
        %v6925 = vunpack.c.l.b16 %v6637
        %v6926 = vunpack.c.h.b16 %v6637
        %v6927 = vunpack.c.l.b16 %v6638
        %v6928 = vunpack.c.h.b16 %v6638
        %v6929 = vunpack.c.l.b16 %v6639
        %v6930 = vunpack.c.h.b16 %v6639
        %v6931 = vunpack.c.l.b16 %v6640
        %v6932 = vunpack.c.h.b16 %v6640
        %v6933 = vunpack.c.l.b16 %v6641
        %v6934 = vunpack.c.h.b16 %v6641
        %v6935 = vunpack.c.l.b16 %v6642
        %v6936 = vunpack.c.h.b16 %v6642
        %v6937 = vunpack.c.l.b16 %v6643
        %v6938 = vunpack.c.h.b16 %v6643
        %v6939 = vunpack.c.l.b16 %v6644
        %v6940 = vunpack.c.h.b16 %v6644
        %v6941 = vunpack.c.l.b16 %v6645
        %v6942 = vunpack.c.h.b16 %v6645
        %v6943 = vunpack.c.l.b16 %v6646
        %v6944 = vunpack.c.h.b16 %v6646
        %v6945 = vunpack.c.l.b16 %v6647
        %v6946 = vunpack.c.h.b16 %v6647
        %v6947 = vunpack.c.l.b16 %v6648
        %v6948 = vunpack.c.h.b16 %v6648
        %v6949 = vunpack.c.l.b16 %v6649
        %v6950 = vunpack.c.h.b16 %v6649
        %v6951 = vunpack.c.l.b16 %v6650
        %v6952 = vunpack.c.h.b16 %v6650
        %v6953 = vunpack.c.l.b16 %v6651
        %v6954 = vunpack.c.h.b16 %v6651
        %v6955 = vunpack.c.l.b16 %v6652
        %v6956 = vunpack.c.h.b16 %v6652
        %v6957 = vunpack.c.l.b16 %v6653
        %v6958 = vunpack.c.h.b16 %v6653
        %v6959 = vunpack.c.l.b16 %v6654
        %v6960 = vunpack.c.h.b16 %v6654
        %v6961 = vunpack.c.l.b16 %v6655
        %v6962 = vunpack.c.h.b16 %v6655
        %v6963 = vunpack.c.l.b16 %v6656
        %v6964 = vunpack.c.h.b16 %v6656
        %v6965 = vunpack.c.l.b16 %v6657
        %v6966 = vunpack.c.h.b16 %v6657
        %v6967 = vunpack.c.l.b16 %v6658
        %v6968 = vunpack.c.h.b16 %v6658
        %v6969 = vunpack.c.l.b16 %v6659
        %v6970 = vunpack.c.h.b16 %v6659
        %v6971 = vunpack.c.l.b16 %v6660
        %v6972 = vunpack.c.h.b16 %v6660
        %v6973 = vunpack.c.l.b16 %v6661
        %v6974 = vunpack.c.h.b16 %v6661
        %v6975 = vunpack.c.l.b16 %v6662
        %v6976 = vunpack.c.h.b16 %v6662
        %v6977 = vunpack.c.l.b16 %v6663
        %v6978 = vunpack.c.h.b16 %v6663
        %v6979 = vunpack.c.l.b16 %v6664
        %v6980 = vunpack.c.h.b16 %v6664
        %v6981 = vunpack.c.l.b16 %v6665
        %v6982 = vunpack.c.h.b16 %v6665
        %v6983 = vunpack.c.l.b16 %v6666
        %v6984 = vunpack.c.h.b16 %v6666
        %v6985 = vunpack.c.l.b16 %v6667
        %v6986 = vunpack.c.h.b16 %v6667
        %v6987 = vunpack.c.l.b16 %v6668
        %v6988 = vunpack.c.h.b16 %v6668
        %v6989 = vunpack.c.l.b16 %v6669
        %v6990 = vunpack.c.h.b16 %v6669
        %v6991 = vunpack.c.l.b16 %v6670
        %v6992 = vunpack.c.h.b16 %v6670
        %v6993 = vunpack.c.l.b16 %v6671
        %v6994 = vunpack.c.h.b16 %v6671
        %v6995 = vunpack.c.l.b16 %v6672
        %v6996 = vunpack.c.h.b16 %v6672
        %v6997 = vunpack.c.l.b16 %v6673
        %v6998 = vunpack.c.h.b16 %v6673
        %v6999 = vunpack.c.l.b16 %v6674
        %v7000 = vunpack.c.h.b16 %v6674
        %v7001 = vunpack.c.l.b16 %v6675
        %v7002 = vunpack.c.h.b16 %v6675
        %v7003 = vunpack.c.l.b16 %v6676
        %v7004 = vunpack.c.h.b16 %v6676
        %v7005 = vunpack.c.l.b16 %v6677
        %v7006 = vunpack.c.h.b16 %v6677
        %v7007 = vunpack.c.l.b16 %v6678
        %v7008 = vunpack.c.h.b16 %v6678
        %v7009 = vunpack.c.l.b16 %v6679
        %v7010 = vunpack.c.h.b16 %v6679
        %v7011 = vunpack.c.l.b16 %v6680
        %v7012 = vunpack.c.h.b16 %v6680
        %v7013 = vunpack.c.l.b16 %v6681
        %v7014 = vunpack.c.h.b16 %v6681
        %v7015 = vunpack.c.l.b16 %v6682
        %v7016 = vunpack.c.h.b16 %v6682
        %v7017 = vunpack.c.l.b16 %v6683
        %v7018 = vunpack.c.h.b16 %v6683
        %v7019 = vunpack.c.l.b16 %v6684
        %v7020 = vunpack.c.h.b16 %v6684
        %v7021 = vunpack.c.l.b16 %v6685
        %v7022 = vunpack.c.h.b16 %v6685
        %v7023 = vunpack.c.l.b16 %v6686
        %v7024 = vunpack.c.h.b16 %v6686
        %v7025 = vunpack.c.l.b16 %v6687
        %v7026 = vunpack.c.h.b16 %v6687
        %v7027 = vunpack.c.l.b16 %v6688
        %v7028 = vunpack.c.h.b16 %v6688
        %v7029 = vunpack.c.l.b16 %v6689
        %v7030 = vunpack.c.h.b16 %v6689
        %v7031 = vunpack.c.l.b16 %v6690
        %v7032 = vunpack.c.h.b16 %v6690
        %v7033 = vunpack.c.l.b16 %v6691
        %v7034 = vunpack.c.h.b16 %v6691
        %v7035 = vunpack.c.l.b16 %v6692
        %v7036 = vunpack.c.h.b16 %v6692
        %v7037 = vunpack.c.l.b16 %v6693
        %v7038 = vunpack.c.h.b16 %v6693
        %v7039 = vunpack.c.l.b16 %v6694
        %v7040 = vunpack.c.h.b16 %v6694
        %v7041 = vunpack.c.l.b16 %v6695
        %v7042 = vunpack.c.h.b16 %v6695
        %v7043 = vunpack.c.l.b16 %v6696
        %v7044 = vunpack.c.h.b16 %v6696
        %v7045 = vunpack.c.l.b16 %v6697
        %v7046 = vunpack.c.h.b16 %v6697
        %v7047 = vunpack.c.l.b16 %v6698
        %v7048 = vunpack.c.h.b16 %v6698
        %v7049 = vunpack.c.l.b16 %v6699
        %v7050 = vunpack.c.h.b16 %v6699
        %v7051 = vunpack.c.l.b16 %v6700
        %v7052 = vunpack.c.h.b16 %v6700
        %v7053 = vunpack.c.l.b16 %v6701
        %v7054 = vunpack.c.h.b16 %v6701
        %v7055 = vunpack.c.l.b16 %v6702
        %v7056 = vunpack.c.h.b16 %v6702
        %v7057 = vunpack.c.l.b16 %v6703
        %v7058 = vunpack.c.h.b16 %v6703
        %v7059 = vunpack.c.l.b16 %v6704
        %v7060 = vunpack.c.h.b16 %v6704
        %v7061 = vunpack.c.l.b16 %v6705
        %v7062 = vunpack.c.h.b16 %v6705
        %v7063 = vunpack.c.l.b16 %v6706
        %v7064 = vunpack.c.h.b16 %v6706
        %v7065 = vunpack.c.l.b16 %v6707
        %v7066 = vunpack.c.h.b16 %v6707
        %v7067 = vunpack.c.l.b16 %v6708
        %v7068 = vunpack.c.h.b16 %v6708
        %v7069 = vunpack.c.l.b16 %v6709
        %v7070 = vunpack.c.h.b16 %v6709
        %v7071 = vunpack.c.l.b16 %v6710
        %v7072 = vunpack.c.h.b16 %v6710
        %v7073 = vunpack.c.l.b16 %v6711
        %v7074 = vunpack.c.h.b16 %v6711
        %v7075 = vunpack.c.l.b16 %v6712
        %v7076 = vunpack.c.h.b16 %v6712
        %v7077 = vunpack.c.l.b16 %v6713
        %v7078 = vunpack.c.h.b16 %v6713
        %v7079 = vunpack.c.l.b16 %v6714
        %v7080 = vunpack.c.h.b16 %v6714
        %v7081 = vunpack.c.l.b16 %v6715
        %v7082 = vunpack.c.h.b16 %v6715
        %v7083 = vunpack.c.l.b16 %v6716
        %v7084 = vunpack.c.h.b16 %v6716
        %v7085 = vunpack.c.l.b16 %v6717
        %v7086 = vunpack.c.h.b16 %v6717
        %v7087 = vunpack.c.l.b16 %v6718
        %v7088 = vunpack.c.h.b16 %v6718
        %v7089 = vunpack.c.l.b16 %v6719
        %v7090 = vunpack.c.h.b16 %v6719
        %v7091 = vunpack.c.l.b16 %v6720
        %v7092 = vunpack.c.h.b16 %v6720
        %v7093 = vunpack.c.l.b16 %v6721
        %v7094 = vunpack.c.h.b16 %v6721
        %v7095 = vunpack.c.l.b16 %v6722
        %v7096 = vunpack.c.h.b16 %v6722
        %v7097 = vunpack.c.l.b16 %v6723
        %v7098 = vunpack.c.h.b16 %v6723
        %v7099 = vunpack.c.l.b16 %v6724
        %v7100 = vunpack.c.h.b16 %v6724
        %v7101 = vunpack.c.l.b16 %v6725
        %v7102 = vunpack.c.h.b16 %v6725
        %v7103 = vunpack.c.l.b16 %v6726
        %v7104 = vunpack.c.h.b16 %v6726
        %v7105 = vunpack.c.l.b16 %v6727
        %v7106 = vunpack.c.h.b16 %v6727
        %v7107 = vunpack.c.l.b16 %v6728
        %v7108 = vunpack.c.h.b16 %v6728
        %v7109 = vunpack.c.l.b16 %v6729
        %v7110 = vunpack.c.h.b16 %v6729
        %v7111 = vunpack.c.l.b16 %v6730
        %v7112 = vunpack.c.h.b16 %v6730
        %v7113 = vunpack.c.l.b16 %v6731
        %v7114 = vunpack.c.h.b16 %v6731
        %v7115 = vunpack.c.l.b16 %v6732
        %v7116 = vunpack.c.h.b16 %v6732
        %v7117 = vpack.c.b16 %v6865, %v6861
        %v7118 = vpack.c.b16 %v6866, %v6862
        %v7119 = vpack.c.b16 %v6867, %v6863
        %v7120 = vpack.c.b16 %v6868, %v6864
        %v7121 = vpack.c.b16 %v6873, %v6869
        %v7122 = vpack.c.b16 %v6874, %v6870
        %v7123 = vpack.c.b16 %v6875, %v6871
        %v7124 = vpack.c.b16 %v6876, %v6872
        %v7125 = vpack.c.b16 %v6881, %v6877
        %v7126 = vpack.c.b16 %v6882, %v6878
        %v7127 = vpack.c.b16 %v6883, %v6879
        %v7128 = vpack.c.b16 %v6884, %v6880
        %v7129 = vpack.c.b16 %v6889, %v6885
        %v7130 = vpack.c.b16 %v6890, %v6886
        %v7131 = vpack.c.b16 %v6891, %v6887
        %v7132 = vpack.c.b16 %v6892, %v6888
        %v7133 = vpack.c.b16 %v6897, %v6893
        %v7134 = vpack.c.b16 %v6898, %v6894
        %v7135 = vpack.c.b16 %v6899, %v6895
        %v7136 = vpack.c.b16 %v6900, %v6896
        %v7137 = vpack.c.b16 %v6905, %v6901
        %v7138 = vpack.c.b16 %v6906, %v6902
        %v7139 = vpack.c.b16 %v6907, %v6903
        %v7140 = vpack.c.b16 %v6908, %v6904
        %v7141 = vpack.c.b16 %v6913, %v6909
        %v7142 = vpack.c.b16 %v6914, %v6910
        %v7143 = vpack.c.b16 %v6915, %v6911
        %v7144 = vpack.c.b16 %v6916, %v6912
        %v7145 = vpack.c.b16 %v6921, %v6917
        %v7146 = vpack.c.b16 %v6922, %v6918
        %v7147 = vpack.c.b16 %v6923, %v6919
        %v7148 = vpack.c.b16 %v6924, %v6920
        %v7149 = vpack.c.b16 %v6929, %v6925
        %v7150 = vpack.c.b16 %v6930, %v6926
        %v7151 = vpack.c.b16 %v6931, %v6927
        %v7152 = vpack.c.b16 %v6932, %v6928
        %v7153 = vpack.c.b16 %v6937, %v6933
        %v7154 = vpack.c.b16 %v6938, %v6934
        %v7155 = vpack.c.b16 %v6939, %v6935
        %v7156 = vpack.c.b16 %v6940, %v6936
        %v7157 = vpack.c.b16 %v6945, %v6941
        %v7158 = vpack.c.b16 %v6946, %v6942
        %v7159 = vpack.c.b16 %v6947, %v6943
        %v7160 = vpack.c.b16 %v6948, %v6944
        %v7161 = vpack.c.b16 %v6953, %v6949
        %v7162 = vpack.c.b16 %v6954, %v6950
        %v7163 = vpack.c.b16 %v6955, %v6951
        %v7164 = vpack.c.b16 %v6956, %v6952
        %v7165 = vpack.c.b16 %v6961, %v6957
        %v7166 = vpack.c.b16 %v6962, %v6958
        %v7167 = vpack.c.b16 %v6963, %v6959
        %v7168 = vpack.c.b16 %v6964, %v6960
        %v7169 = vpack.c.b16 %v6969, %v6965
        %v7170 = vpack.c.b16 %v6970, %v6966
        %v7171 = vpack.c.b16 %v6971, %v6967
        %v7172 = vpack.c.b16 %v6972, %v6968
        %v7173 = vpack.c.b16 %v6977, %v6973
        %v7174 = vpack.c.b16 %v6978, %v6974
        %v7175 = vpack.c.b16 %v6979, %v6975
        %v7176 = vpack.c.b16 %v6980, %v6976
        %v7177 = vpack.c.b16 %v6985, %v6981
        %v7178 = vpack.c.b16 %v6986, %v6982
        %v7179 = vpack.c.b16 %v6987, %v6983
        %v7180 = vpack.c.b16 %v6988, %v6984
        %v7181 = vpack.c.b16 %v6993, %v6989
        %v7182 = vpack.c.b16 %v6994, %v6990
        %v7183 = vpack.c.b16 %v6995, %v6991
        %v7184 = vpack.c.b16 %v6996, %v6992
        %v7185 = vpack.c.b16 %v7001, %v6997
        %v7186 = vpack.c.b16 %v7002, %v6998
        %v7187 = vpack.c.b16 %v7003, %v6999
        %v7188 = vpack.c.b16 %v7004, %v7000
        %v7189 = vpack.c.b16 %v7009, %v7005
        %v7190 = vpack.c.b16 %v7010, %v7006
        %v7191 = vpack.c.b16 %v7011, %v7007
        %v7192 = vpack.c.b16 %v7012, %v7008
        %v7193 = vpack.c.b16 %v7017, %v7013
        %v7194 = vpack.c.b16 %v7018, %v7014
        %v7195 = vpack.c.b16 %v7019, %v7015
        %v7196 = vpack.c.b16 %v7020, %v7016
        %v7197 = vpack.c.b16 %v7025, %v7021
        %v7198 = vpack.c.b16 %v7026, %v7022
        %v7199 = vpack.c.b16 %v7027, %v7023
        %v7200 = vpack.c.b16 %v7028, %v7024
        %v7201 = vpack.c.b16 %v7033, %v7029
        %v7202 = vpack.c.b16 %v7034, %v7030
        %v7203 = vpack.c.b16 %v7035, %v7031
        %v7204 = vpack.c.b16 %v7036, %v7032
        %v7205 = vpack.c.b16 %v7041, %v7037
        %v7206 = vpack.c.b16 %v7042, %v7038
        %v7207 = vpack.c.b16 %v7043, %v7039
        %v7208 = vpack.c.b16 %v7044, %v7040
        %v7209 = vpack.c.b16 %v7049, %v7045
        %v7210 = vpack.c.b16 %v7050, %v7046
        %v7211 = vpack.c.b16 %v7051, %v7047
        %v7212 = vpack.c.b16 %v7052, %v7048
        %v7213 = vpack.c.b16 %v7057, %v7053
        %v7214 = vpack.c.b16 %v7058, %v7054
        %v7215 = vpack.c.b16 %v7059, %v7055
        %v7216 = vpack.c.b16 %v7060, %v7056
        %v7217 = vpack.c.b16 %v7065, %v7061
        %v7218 = vpack.c.b16 %v7066, %v7062
        %v7219 = vpack.c.b16 %v7067, %v7063
        %v7220 = vpack.c.b16 %v7068, %v7064
        %v7221 = vpack.c.b16 %v7073, %v7069
        %v7222 = vpack.c.b16 %v7074, %v7070
        %v7223 = vpack.c.b16 %v7075, %v7071
        %v7224 = vpack.c.b16 %v7076, %v7072
        %v7225 = vpack.c.b16 %v7081, %v7077
        %v7226 = vpack.c.b16 %v7082, %v7078
        %v7227 = vpack.c.b16 %v7083, %v7079
        %v7228 = vpack.c.b16 %v7084, %v7080
        %v7229 = vpack.c.b16 %v7089, %v7085
        %v7230 = vpack.c.b16 %v7090, %v7086
        %v7231 = vpack.c.b16 %v7091, %v7087
        %v7232 = vpack.c.b16 %v7092, %v7088
        %v7233 = vpack.c.b16 %v7097, %v7093
        %v7234 = vpack.c.b16 %v7098, %v7094
        %v7235 = vpack.c.b16 %v7099, %v7095
        %v7236 = vpack.c.b16 %v7100, %v7096
        %v7237 = vpack.c.b16 %v7105, %v7101
        %v7238 = vpack.c.b16 %v7106, %v7102
        %v7239 = vpack.c.b16 %v7107, %v7103
        %v7240 = vpack.c.b16 %v7108, %v7104
        %v7241 = vpack.c.b16 %v7113, %v7109
        %v7242 = vpack.c.b16 %v7114, %v7110
        %v7243 = vpack.c.b16 %v7115, %v7111
        %v7244 = vpack.c.b16 %v7116, %v7112
        %7373 = vmatprep.subr.bf16.mxu0 %v7146
        %7374 = vmatpush1.bf16.msra.mxu0 %v7145
        %7375 = vmatprep.subr.bf16.mxu0 %v7142
        %7376 = vmatpush1.bf16.msra.mxu0 %v7141
        %7377 = vmatprep.subr.bf16.mxu0 %v7138
        %7378 = vmatpush1.bf16.msra.mxu0 %v7137
        %7379 = vmatprep.subr.bf16.mxu0 %v7134
        %7380 = vmatpush1.bf16.msra.mxu0 %v7133
        %7381 = vmatprep.subr.bf16.mxu0 %v7130
        %7382 = vmatpush1.bf16.msra.mxu0 %v7129
        %7383 = vmatprep.subr.bf16.mxu0 %v7126
        %7384 = vmatpush1.bf16.msra.mxu0 %v7125
        %7385 = vmatprep.subr.bf16.mxu0 %v7122
        %7386 = vmatpush1.bf16.msra.mxu0 %v7121
        %7387 = vmatprep.subr.bf16.mxu0 %v7118
        %7388 = vmatpush1.bf16.msra.mxu0 %v7117
        %7389 = vmatprep.subr.bf16.mxu0 %v7178
        %7390 = vmatpush2.bf16.msra.mxu0 %v7177
        %7391 = vmatprep.subr.bf16.mxu0 %v7174
        %7392 = vmatpush2.bf16.msra.mxu0 %v7173
        %7393 = vmatprep.subr.bf16.mxu0 %v7170
        %7394 = vmatpush2.bf16.msra.mxu0 %v7169
        %7395 = vmatprep.subr.bf16.mxu0 %v7166
        %7396 = vmatpush2.bf16.msra.mxu0 %v7165
        %7397 = vmatprep.subr.bf16.mxu0 %v7162
        %7398 = vmatpush2.bf16.msra.mxu0 %v7161
        %7399 = vmatprep.subr.bf16.mxu0 %v7158
        %7400 = vmatpush2.bf16.msra.mxu0 %v7157
        %7401 = vmatprep.subr.bf16.mxu0 %v7154
        %7402 = vmatpush2.bf16.msra.mxu0 %v7153
        %7403 = vmatprep.subr.bf16.mxu0 %v7150
        %7404 = vmatpush2.bf16.msra.mxu0 %v7149
        %7405 = vmatprep.mubr.bf16.mxu0 %v6573
        %7406 = vmatmul.mubr.bf16.gmra.mxu0 %v6572
        %v7407 = vpop.f32.mrf.mxu0
        %v7408 = vadd.f32 0.0, %v7407
        %v7409 = vpop.f32.mrf.mxu0
        %v7410 = vadd.f32 0.0, %v7409
        %v7411 = vpop.f32.mrf.mxu0
        %v7412 = vadd.f32 0.0, %v7411
        %v7413 = vpop.f32.mrf.mxu0
        %v7414 = vadd.f32 0.0, %v7413
        %7415 = vmatprep.mubr.bf16.mxu0 %v6577
        %7416 = vmatmul.mubr.bf16.gmra.mxu0 %v6576
        %v7417 = vpop.f32.mrf.mxu0
        %v7418 = vadd.f32 0.0, %v7417
        %v7419 = vpop.f32.mrf.mxu0
        %v7420 = vadd.f32 0.0, %v7419
        %v7421 = vpop.f32.mrf.mxu0
        %v7422 = vadd.f32 0.0, %v7421
        %v7423 = vpop.f32.mrf.mxu0
        %v7424 = vadd.f32 0.0, %v7423
        %7425 = vmatprep.mubr.bf16.mxu0 %v6581
        %7426 = vmatmul.mubr.bf16.gmra.mxu0 %v6580
        %v7427 = vpop.f32.mrf.mxu0
        %v7428 = vadd.f32 0.0, %v7427
        %v7429 = vpop.f32.mrf.mxu0
        %v7430 = vadd.f32 0.0, %v7429
        %v7431 = vpop.f32.mrf.mxu0
        %v7432 = vadd.f32 0.0, %v7431
        %v7433 = vpop.f32.mrf.mxu0
        %v7434 = vadd.f32 0.0, %v7433
        %7435 = vmatprep.mubr.bf16.mxu0 %v6585
        %7436 = vmatmul.mubr.bf16.gmra.mxu0 %v6584
        %v7437 = vpop.f32.mrf.mxu0
        %v7438 = vadd.f32 0.0, %v7437
        %v7439 = vpop.f32.mrf.mxu0
        %v7440 = vadd.f32 0.0, %v7439
        %v7441 = vpop.f32.mrf.mxu0
        %v7442 = vadd.f32 0.0, %v7441
        %v7443 = vpop.f32.mrf.mxu0
        %v7444 = vadd.f32 0.0, %v7443
        %7445 = vmatprep.mubr.bf16.mxu0 %v6589
        %7446 = vmatmul.mubr.bf16.gmra.mxu0 %v6588
        %v7447 = vpop.f32.mrf.mxu0
        %v7448 = vadd.f32 0.0, %v7447
        %v7449 = vpop.f32.mrf.mxu0
        %v7450 = vadd.f32 0.0, %v7449
        %v7451 = vpop.f32.mrf.mxu0
        %v7452 = vadd.f32 0.0, %v7451
        %v7453 = vpop.f32.mrf.mxu0
        %v7454 = vadd.f32 0.0, %v7453
        %7455 = vmatprep.mubr.bf16.mxu0 %v6593
        %7456 = vmatmul.mubr.bf16.gmra.mxu0 %v6592
        %v7457 = vpop.f32.mrf.mxu0
        %v7458 = vadd.f32 0.0, %v7457
        %v7459 = vpop.f32.mrf.mxu0
        %v7460 = vadd.f32 0.0, %v7459
        %v7461 = vpop.f32.mrf.mxu0
        %v7462 = vadd.f32 0.0, %v7461
        %v7463 = vpop.f32.mrf.mxu0
        %v7464 = vadd.f32 0.0, %v7463
        %7465 = vmatprep.mubr.bf16.mxu0 %v6597
        %7466 = vmatmul.mubr.bf16.gmra.mxu0 %v6596
        %v7467 = vpop.f32.mrf.mxu0
        %v7468 = vadd.f32 0.0, %v7467
        %v7469 = vpop.f32.mrf.mxu0
        %v7470 = vadd.f32 0.0, %v7469
        %v7471 = vpop.f32.mrf.mxu0
        %v7472 = vadd.f32 0.0, %v7471
        %v7473 = vpop.f32.mrf.mxu0
        %v7474 = vadd.f32 0.0, %v7473
        %7475 = vmatprep.mubr.bf16.mxu0 %v6601
        %7476 = vmatmul.mubr.bf16.gmra.mxu0 %v6600
        %v7477 = vpop.f32.mrf.mxu0
        %v7478 = vadd.f32 0.0, %v7477
        %v7479 = vpop.f32.mrf.mxu0
        %v7480 = vadd.f32 0.0, %v7479
        %v7481 = vpop.f32.mrf.mxu0
        %v7482 = vadd.f32 0.0, %v7481
        %v7483 = vpop.f32.mrf.mxu0
        %v7484 = vadd.f32 0.0, %v7483
        %7485 = vdwg.mxu0
        %7486 = vmatprep.subr.bf16.mxu0 %v7210
        %7487 = vmatpush1.bf16.msra.mxu0 %v7209
        %7488 = vmatprep.subr.bf16.mxu0 %v7206
        %7489 = vmatpush1.bf16.msra.mxu0 %v7205
        %7490 = vmatprep.subr.bf16.mxu0 %v7202
        %7491 = vmatpush1.bf16.msra.mxu0 %v7201
        %7492 = vmatprep.subr.bf16.mxu0 %v7198
        %7493 = vmatpush1.bf16.msra.mxu0 %v7197
        %7494 = vmatprep.subr.bf16.mxu0 %v7194
        %7495 = vmatpush1.bf16.msra.mxu0 %v7193
        %7496 = vmatprep.subr.bf16.mxu0 %v7190
        %7497 = vmatpush1.bf16.msra.mxu0 %v7189
        %7498 = vmatprep.subr.bf16.mxu0 %v7186
        %7499 = vmatpush1.bf16.msra.mxu0 %v7185
        %7500 = vmatprep.subr.bf16.mxu0 %v7182
        %7501 = vmatpush1.bf16.msra.mxu0 %v7181
        %7502 = vmatprep.subr.bf16.mxu0 %v7242
        %7503 = vmatpush2.bf16.msra.mxu0 %v7241
        %7504 = vmatprep.subr.bf16.mxu0 %v7238
        %7505 = vmatpush2.bf16.msra.mxu0 %v7237
        %7506 = vmatprep.subr.bf16.mxu0 %v7234
        %7507 = vmatpush2.bf16.msra.mxu0 %v7233
        %7508 = vmatprep.subr.bf16.mxu0 %v7230
        %7509 = vmatpush2.bf16.msra.mxu0 %v7229
        %7510 = vmatprep.subr.bf16.mxu0 %v7226
        %7511 = vmatpush2.bf16.msra.mxu0 %v7225
        %7512 = vmatprep.subr.bf16.mxu0 %v7222
        %7513 = vmatpush2.bf16.msra.mxu0 %v7221
        %7514 = vmatprep.subr.bf16.mxu0 %v7218
        %7515 = vmatpush2.bf16.msra.mxu0 %v7217
        %7516 = vmatprep.subr.bf16.mxu0 %v7214
        %7517 = vmatpush2.bf16.msra.mxu0 %v7213
        %7518 = vmatprep.mubr.bf16.mxu0 %v6575
        %7519 = vmatmul.mubr.bf16.gmra.mxu0 %v6574
        %v7520 = vpop.f32.mrf.mxu0
        %v7521 = vadd.f32 %v7408, %v7520
        %v7522 = vpop.f32.mrf.mxu0
        %v7523 = vadd.f32 %v7410, %v7522
        %v7524 = vpop.f32.mrf.mxu0
        %v7525 = vadd.f32 %v7412, %v7524
        %v7526 = vpop.f32.mrf.mxu0
        %v7527 = vadd.f32 %v7414, %v7526
        %7528 = vmatprep.mubr.bf16.mxu0 %v6579
        %7529 = vmatmul.mubr.bf16.gmra.mxu0 %v6578
        %v7530 = vpop.f32.mrf.mxu0
        %v7531 = vadd.f32 %v7418, %v7530
        %v7532 = vpop.f32.mrf.mxu0
        %v7533 = vadd.f32 %v7420, %v7532
        %v7534 = vpop.f32.mrf.mxu0
        %v7535 = vadd.f32 %v7422, %v7534
        %v7536 = vpop.f32.mrf.mxu0
        %v7537 = vadd.f32 %v7424, %v7536
        %7538 = vmatprep.mubr.bf16.mxu0 %v6583
        %7539 = vmatmul.mubr.bf16.gmra.mxu0 %v6582
        %v7540 = vpop.f32.mrf.mxu0
        %v7541 = vadd.f32 %v7428, %v7540
        %v7542 = vpop.f32.mrf.mxu0
        %v7543 = vadd.f32 %v7430, %v7542
        %v7544 = vpop.f32.mrf.mxu0
        %v7545 = vadd.f32 %v7432, %v7544
        %v7546 = vpop.f32.mrf.mxu0
        %v7547 = vadd.f32 %v7434, %v7546
        %7548 = vmatprep.mubr.bf16.mxu0 %v6587
        %7549 = vmatmul.mubr.bf16.gmra.mxu0 %v6586
        %v7550 = vpop.f32.mrf.mxu0
        %v7551 = vadd.f32 %v7438, %v7550
        %v7552 = vpop.f32.mrf.mxu0
        %v7553 = vadd.f32 %v7440, %v7552
        %v7554 = vpop.f32.mrf.mxu0
        %v7555 = vadd.f32 %v7442, %v7554
        %v7556 = vpop.f32.mrf.mxu0
        %v7557 = vadd.f32 %v7444, %v7556
        %7558 = vmatprep.mubr.bf16.mxu0 %v6591
        %7559 = vmatmul.mubr.bf16.gmra.mxu0 %v6590
        %v7560 = vpop.f32.mrf.mxu0
        %v7561 = vadd.f32 %v7448, %v7560
        %v7562 = vpop.f32.mrf.mxu0
        %v7563 = vadd.f32 %v7450, %v7562
        %v7564 = vpop.f32.mrf.mxu0
        %v7565 = vadd.f32 %v7452, %v7564
        %v7566 = vpop.f32.mrf.mxu0
        %v7567 = vadd.f32 %v7454, %v7566
        %7568 = vmatprep.mubr.bf16.mxu0 %v6595
        %7569 = vmatmul.mubr.bf16.gmra.mxu0 %v6594
        %v7570 = vpop.f32.mrf.mxu0
        %v7571 = vadd.f32 %v7458, %v7570
        %v7572 = vpop.f32.mrf.mxu0
        %v7573 = vadd.f32 %v7460, %v7572
        %v7574 = vpop.f32.mrf.mxu0
        %v7575 = vadd.f32 %v7462, %v7574
        %v7576 = vpop.f32.mrf.mxu0
        %v7577 = vadd.f32 %v7464, %v7576
        %7578 = vmatprep.mubr.bf16.mxu0 %v6599
        %7579 = vmatmul.mubr.bf16.gmra.mxu0 %v6598
        %v7580 = vpop.f32.mrf.mxu0
        %v7581 = vadd.f32 %v7468, %v7580
        %v7582 = vpop.f32.mrf.mxu0
        %v7583 = vadd.f32 %v7470, %v7582
        %v7584 = vpop.f32.mrf.mxu0
        %v7585 = vadd.f32 %v7472, %v7584
        %v7586 = vpop.f32.mrf.mxu0
        %v7587 = vadd.f32 %v7474, %v7586
        %7588 = vmatprep.mubr.bf16.mxu0 %v6603
        %7589 = vmatmul.mubr.bf16.gmra.mxu0 %v6602
        %v7590 = vpop.f32.mrf.mxu0
        %v7591 = vadd.f32 %v7478, %v7590
        %v7592 = vpop.f32.mrf.mxu0
        %v7593 = vadd.f32 %v7480, %v7592
        %v7594 = vpop.f32.mrf.mxu0
        %v7595 = vadd.f32 %v7482, %v7594
        %v7596 = vpop.f32.mrf.mxu0
        %v7597 = vadd.f32 %v7484, %v7596
        %7598 = vdwg.mxu0
        %7599 = vmatprep.subr.bf16.mxu0 %v7148
        %7600 = vmatpush1.bf16.msra.mxu0 %v7147
        %7601 = vmatprep.subr.bf16.mxu0 %v7144
        %7602 = vmatpush1.bf16.msra.mxu0 %v7143
        %7603 = vmatprep.subr.bf16.mxu0 %v7140
        %7604 = vmatpush1.bf16.msra.mxu0 %v7139
        %7605 = vmatprep.subr.bf16.mxu0 %v7136
        %7606 = vmatpush1.bf16.msra.mxu0 %v7135
        %7607 = vmatprep.subr.bf16.mxu0 %v7132
        %7608 = vmatpush1.bf16.msra.mxu0 %v7131
        %7609 = vmatprep.subr.bf16.mxu0 %v7128
        %7610 = vmatpush1.bf16.msra.mxu0 %v7127
        %7611 = vmatprep.subr.bf16.mxu0 %v7124
        %7612 = vmatpush1.bf16.msra.mxu0 %v7123
        %7613 = vmatprep.subr.bf16.mxu0 %v7120
        %7614 = vmatpush1.bf16.msra.mxu0 %v7119
        %7615 = vmatprep.subr.bf16.mxu0 %v7180
        %7616 = vmatpush2.bf16.msra.mxu0 %v7179
        %7617 = vmatprep.subr.bf16.mxu0 %v7176
        %7618 = vmatpush2.bf16.msra.mxu0 %v7175
        %7619 = vmatprep.subr.bf16.mxu0 %v7172
        %7620 = vmatpush2.bf16.msra.mxu0 %v7171
        %7621 = vmatprep.subr.bf16.mxu0 %v7168
        %7622 = vmatpush2.bf16.msra.mxu0 %v7167
        %7623 = vmatprep.subr.bf16.mxu0 %v7164
        %7624 = vmatpush2.bf16.msra.mxu0 %v7163
        %7625 = vmatprep.subr.bf16.mxu0 %v7160
        %7626 = vmatpush2.bf16.msra.mxu0 %v7159
        %7627 = vmatprep.subr.bf16.mxu0 %v7156
        %7628 = vmatpush2.bf16.msra.mxu0 %v7155
        %7629 = vmatprep.subr.bf16.mxu0 %v7152
        %7630 = vmatpush2.bf16.msra.mxu0 %v7151
        %7631 = vmatprep.mubr.bf16.mxu0 %v6573
        %7632 = vmatmul.mubr.bf16.gmra.mxu0 %v6572
        %v7633 = vpop.f32.mrf.mxu0
        %v7634 = vadd.f32 0.0, %v7633
        %v7635 = vpop.f32.mrf.mxu0
        %v7636 = vadd.f32 0.0, %v7635
        %v7637 = vpop.f32.mrf.mxu0
        %v7638 = vadd.f32 0.0, %v7637
        %v7639 = vpop.f32.mrf.mxu0
        %v7640 = vadd.f32 0.0, %v7639
        %7641 = vmatprep.mubr.bf16.mxu0 %v6577
        %7642 = vmatmul.mubr.bf16.gmra.mxu0 %v6576
        %v7643 = vpop.f32.mrf.mxu0
        %v7644 = vadd.f32 0.0, %v7643
        %v7645 = vpop.f32.mrf.mxu0
        %v7646 = vadd.f32 0.0, %v7645
        %v7647 = vpop.f32.mrf.mxu0
        %v7648 = vadd.f32 0.0, %v7647
        %v7649 = vpop.f32.mrf.mxu0
        %v7650 = vadd.f32 0.0, %v7649
        %7651 = vmatprep.mubr.bf16.mxu0 %v6581
        %7652 = vmatmul.mubr.bf16.gmra.mxu0 %v6580
        %v7653 = vpop.f32.mrf.mxu0
        %v7654 = vadd.f32 0.0, %v7653
        %v7655 = vpop.f32.mrf.mxu0
        %v7656 = vadd.f32 0.0, %v7655
        %v7657 = vpop.f32.mrf.mxu0
        %v7658 = vadd.f32 0.0, %v7657
        %v7659 = vpop.f32.mrf.mxu0
        %v7660 = vadd.f32 0.0, %v7659
        %7661 = vmatprep.mubr.bf16.mxu0 %v6585
        %7662 = vmatmul.mubr.bf16.gmra.mxu0 %v6584
        %v7663 = vpop.f32.mrf.mxu0
        %v7664 = vadd.f32 0.0, %v7663
        %v7665 = vpop.f32.mrf.mxu0
        %v7666 = vadd.f32 0.0, %v7665
        %v7667 = vpop.f32.mrf.mxu0
        %v7668 = vadd.f32 0.0, %v7667
        %v7669 = vpop.f32.mrf.mxu0
        %v7670 = vadd.f32 0.0, %v7669
        %7671 = vmatprep.mubr.bf16.mxu0 %v6589
        %7672 = vmatmul.mubr.bf16.gmra.mxu0 %v6588
        %v7673 = vpop.f32.mrf.mxu0
        %v7674 = vadd.f32 0.0, %v7673
        %v7675 = vpop.f32.mrf.mxu0
        %v7676 = vadd.f32 0.0, %v7675
        %v7677 = vpop.f32.mrf.mxu0
        %v7678 = vadd.f32 0.0, %v7677
        %v7679 = vpop.f32.mrf.mxu0
        %v7680 = vadd.f32 0.0, %v7679
        %7681 = vmatprep.mubr.bf16.mxu0 %v6593
        %7682 = vmatmul.mubr.bf16.gmra.mxu0 %v6592
        %v7683 = vpop.f32.mrf.mxu0
        %v7684 = vadd.f32 0.0, %v7683
        %v7685 = vpop.f32.mrf.mxu0
        %v7686 = vadd.f32 0.0, %v7685
        %v7687 = vpop.f32.mrf.mxu0
        %v7688 = vadd.f32 0.0, %v7687
        %v7689 = vpop.f32.mrf.mxu0
        %v7690 = vadd.f32 0.0, %v7689
        %7691 = vmatprep.mubr.bf16.mxu0 %v6597
        %7692 = vmatmul.mubr.bf16.gmra.mxu0 %v6596
        %v7693 = vpop.f32.mrf.mxu0
        %v7694 = vadd.f32 0.0, %v7693
        %v7695 = vpop.f32.mrf.mxu0
        %v7696 = vadd.f32 0.0, %v7695
        %v7697 = vpop.f32.mrf.mxu0
        %v7698 = vadd.f32 0.0, %v7697
        %v7699 = vpop.f32.mrf.mxu0
        %v7700 = vadd.f32 0.0, %v7699
        %7701 = vmatprep.mubr.bf16.mxu0 %v6601
        %7702 = vmatmul.mubr.bf16.gmra.mxu0 %v6600
        %v7703 = vpop.f32.mrf.mxu0
        %v7704 = vadd.f32 0.0, %v7703
        %v7705 = vpop.f32.mrf.mxu0
        %v7706 = vadd.f32 0.0, %v7705
        %v7707 = vpop.f32.mrf.mxu0
        %v7708 = vadd.f32 0.0, %v7707
        %v7709 = vpop.f32.mrf.mxu0
        %v7710 = vadd.f32 0.0, %v7709
        %7711 = vdwg.mxu0
        %7712 = vmatprep.subr.bf16.mxu0 %v7212
        %7713 = vmatpush1.bf16.msra.mxu0 %v7211
        %7714 = vmatprep.subr.bf16.mxu0 %v7208
        %7715 = vmatpush1.bf16.msra.mxu0 %v7207
        %7716 = vmatprep.subr.bf16.mxu0 %v7204
        %7717 = vmatpush1.bf16.msra.mxu0 %v7203
        %7718 = vmatprep.subr.bf16.mxu0 %v7200
        %7719 = vmatpush1.bf16.msra.mxu0 %v7199
        %7720 = vmatprep.subr.bf16.mxu0 %v7196
        %7721 = vmatpush1.bf16.msra.mxu0 %v7195
        %7722 = vmatprep.subr.bf16.mxu0 %v7192
        %7723 = vmatpush1.bf16.msra.mxu0 %v7191
        %7724 = vmatprep.subr.bf16.mxu0 %v7188
        %7725 = vmatpush1.bf16.msra.mxu0 %v7187
        %7726 = vmatprep.subr.bf16.mxu0 %v7184
        %7727 = vmatpush1.bf16.msra.mxu0 %v7183
        %7728 = vmatprep.subr.bf16.mxu0 %v7244
        %7729 = vmatpush2.bf16.msra.mxu0 %v7243
        %7730 = vmatprep.subr.bf16.mxu0 %v7240
        %7731 = vmatpush2.bf16.msra.mxu0 %v7239
        %7732 = vmatprep.subr.bf16.mxu0 %v7236
        %7733 = vmatpush2.bf16.msra.mxu0 %v7235
        %7734 = vmatprep.subr.bf16.mxu0 %v7232
        %7735 = vmatpush2.bf16.msra.mxu0 %v7231
        %7736 = vmatprep.subr.bf16.mxu0 %v7228
        %7737 = vmatpush2.bf16.msra.mxu0 %v7227
        %7738 = vmatprep.subr.bf16.mxu0 %v7224
        %7739 = vmatpush2.bf16.msra.mxu0 %v7223
        %7740 = vmatprep.subr.bf16.mxu0 %v7220
        %7741 = vmatpush2.bf16.msra.mxu0 %v7219
        %7742 = vmatprep.subr.bf16.mxu0 %v7216
        %7743 = vmatpush2.bf16.msra.mxu0 %v7215
        %7744 = vmatprep.mubr.bf16.mxu0 %v6575
        %7745 = vmatmul.mubr.bf16.gmra.mxu0 %v6574
        %v7746 = vpop.f32.mrf.mxu0
        %v7747 = vadd.f32 %v7634, %v7746
        %v7748 = vpop.f32.mrf.mxu0
        %v7749 = vadd.f32 %v7636, %v7748
        %v7750 = vpop.f32.mrf.mxu0
        %v7751 = vadd.f32 %v7638, %v7750
        %v7752 = vpop.f32.mrf.mxu0
        %v7753 = vadd.f32 %v7640, %v7752
        %7754 = vmatprep.mubr.bf16.mxu0 %v6579
        %7755 = vmatmul.mubr.bf16.gmra.mxu0 %v6578
        %v7756 = vpop.f32.mrf.mxu0
        %v7757 = vadd.f32 %v7644, %v7756
        %v7758 = vpop.f32.mrf.mxu0
        %v7759 = vadd.f32 %v7646, %v7758
        %v7760 = vpop.f32.mrf.mxu0
        %v7761 = vadd.f32 %v7648, %v7760
        %v7762 = vpop.f32.mrf.mxu0
        %v7763 = vadd.f32 %v7650, %v7762
        %7764 = vmatprep.mubr.bf16.mxu0 %v6583
        %7765 = vmatmul.mubr.bf16.gmra.mxu0 %v6582
        %v7766 = vpop.f32.mrf.mxu0
        %v7767 = vadd.f32 %v7654, %v7766
        %v7768 = vpop.f32.mrf.mxu0
        %v7769 = vadd.f32 %v7656, %v7768
        %v7770 = vpop.f32.mrf.mxu0
        %v7771 = vadd.f32 %v7658, %v7770
        %v7772 = vpop.f32.mrf.mxu0
        %v7773 = vadd.f32 %v7660, %v7772
        %7774 = vmatprep.mubr.bf16.mxu0 %v6587
        %7775 = vmatmul.mubr.bf16.gmra.mxu0 %v6586
        %v7776 = vpop.f32.mrf.mxu0
        %v7777 = vadd.f32 %v7664, %v7776
        %v7778 = vpop.f32.mrf.mxu0
        %v7779 = vadd.f32 %v7666, %v7778
        %v7780 = vpop.f32.mrf.mxu0
        %v7781 = vadd.f32 %v7668, %v7780
        %v7782 = vpop.f32.mrf.mxu0
        %v7783 = vadd.f32 %v7670, %v7782
        %7784 = vmatprep.mubr.bf16.mxu0 %v6591
        %7785 = vmatmul.mubr.bf16.gmra.mxu0 %v6590
        %v7786 = vpop.f32.mrf.mxu0
        %v7787 = vadd.f32 %v7674, %v7786
        %v7788 = vpop.f32.mrf.mxu0
        %v7789 = vadd.f32 %v7676, %v7788
        %v7790 = vpop.f32.mrf.mxu0
        %v7791 = vadd.f32 %v7678, %v7790
        %v7792 = vpop.f32.mrf.mxu0
        %v7793 = vadd.f32 %v7680, %v7792
        %7794 = vmatprep.mubr.bf16.mxu0 %v6595
        %7795 = vmatmul.mubr.bf16.gmra.mxu0 %v6594
        %v7796 = vpop.f32.mrf.mxu0
        %v7797 = vadd.f32 %v7684, %v7796
        %v7798 = vpop.f32.mrf.mxu0
        %v7799 = vadd.f32 %v7686, %v7798
        %v7800 = vpop.f32.mrf.mxu0
        %v7801 = vadd.f32 %v7688, %v7800
        %v7802 = vpop.f32.mrf.mxu0
        %v7803 = vadd.f32 %v7690, %v7802
        %7804 = vmatprep.mubr.bf16.mxu0 %v6599
        %7805 = vmatmul.mubr.bf16.gmra.mxu0 %v6598
        %v7806 = vpop.f32.mrf.mxu0
        %v7807 = vadd.f32 %v7694, %v7806
        %v7808 = vpop.f32.mrf.mxu0
        %v7809 = vadd.f32 %v7696, %v7808
        %v7810 = vpop.f32.mrf.mxu0
        %v7811 = vadd.f32 %v7698, %v7810
        %v7812 = vpop.f32.mrf.mxu0
        %v7813 = vadd.f32 %v7700, %v7812
        %7814 = vmatprep.mubr.bf16.mxu0 %v6603
        %7815 = vmatmul.mubr.bf16.gmra.mxu0 %v6602
        %v7816 = vpop.f32.mrf.mxu0
        %v7817 = vadd.f32 %v7704, %v7816
        %v7818 = vpop.f32.mrf.mxu0
        %v7819 = vadd.f32 %v7706, %v7818
        %v7820 = vpop.f32.mrf.mxu0
        %v7821 = vadd.f32 %v7708, %v7820
        %v7822 = vpop.f32.mrf.mxu0
        %v7823 = vadd.f32 %v7710, %v7822
        %7824 = vdwg.mxu0
        %v7889 = vrot.slane %v7521, 7
        %v7890 = vrot.slane %v7523, 7
        %v7891 = vrot.slane %v7747, 7
        %v7892 = vrot.slane %v7749, 7
        %v7893 = vrot.slane %v7525, 7
        %v7894 = vrot.slane %v7527, 7
        %v7895 = vrot.slane %v7751, 7
        %v7896 = vrot.slane %v7753, 7
        %v7897 = vrot.slane %v7531, 7
        %v7898 = vrot.slane %v7533, 7
        %v7899 = vrot.slane %v7757, 7
        %v7900 = vrot.slane %v7759, 7
        %v7901 = vrot.slane %v7535, 7
        %v7902 = vrot.slane %v7537, 7
        %v7903 = vrot.slane %v7761, 7
        %v7904 = vrot.slane %v7763, 7
        %v7905 = vrot.slane %v7541, 7
        %v7906 = vrot.slane %v7543, 7
        %v7907 = vrot.slane %v7767, 7
        %v7908 = vrot.slane %v7769, 7
        %v7909 = vrot.slane %v7545, 7
        %v7910 = vrot.slane %v7547, 7
        %v7911 = vrot.slane %v7771, 7
        %v7912 = vrot.slane %v7773, 7
        %v7913 = vrot.slane %v7551, 7
        %v7914 = vrot.slane %v7553, 7
        %v7915 = vrot.slane %v7777, 7
        %v7916 = vrot.slane %v7779, 7
        %v7917 = vrot.slane %v7555, 7
        %v7918 = vrot.slane %v7557, 7
        %v7919 = vrot.slane %v7781, 7
        %v7920 = vrot.slane %v7783, 7
        %v7921 = vrot.slane %v7561, 7
        %v7922 = vrot.slane %v7563, 7
        %v7923 = vrot.slane %v7787, 7
        %v7924 = vrot.slane %v7789, 7
        %v7925 = vrot.slane %v7565, 7
        %v7926 = vrot.slane %v7567, 7
        %v7927 = vrot.slane %v7791, 7
        %v7928 = vrot.slane %v7793, 7
        %v7929 = vrot.slane %v7571, 7
        %v7930 = vrot.slane %v7573, 7
        %v7931 = vrot.slane %v7797, 7
        %v7932 = vrot.slane %v7799, 7
        %v7933 = vrot.slane %v7575, 7
        %v7934 = vrot.slane %v7577, 7
        %v7935 = vrot.slane %v7801, 7
        %v7936 = vrot.slane %v7803, 7
        %v7937 = vrot.slane %v7581, 7
        %v7938 = vrot.slane %v7583, 7
        %v7939 = vrot.slane %v7807, 7
        %v7940 = vrot.slane %v7809, 7
        %v7941 = vrot.slane %v7585, 7
        %v7942 = vrot.slane %v7587, 7
        %v7943 = vrot.slane %v7811, 7
        %v7944 = vrot.slane %v7813, 7
        %v7945 = vrot.slane %v7591, 7
        %v7946 = vrot.slane %v7593, 7
        %v7947 = vrot.slane %v7817, 7
        %v7948 = vrot.slane %v7819, 7
        %v7949 = vrot.slane %v7595, 7
        %v7950 = vrot.slane %v7597, 7
        %v7951 = vrot.slane %v7821, 7
        %v7952 = vrot.slane %v7823, 7
        %v8017 = vsel %vm1991, 0.0, %v7889
        %v8018 = vsel %vm1991, 0.0, %v7890
        %v8019 = vsel %vm1991, 0.0, %v7891
        %v8020 = vsel %vm1991, 0.0, %v7892
        %v8021 = vsel %vm1991, 0.0, %v7893
        %v8022 = vsel %vm1991, 0.0, %v7894
        %v8023 = vsel %vm1991, 0.0, %v7895
        %v8024 = vsel %vm1991, 0.0, %v7896
        %v8025 = vsel %vm1991, 0.0, %v7897
        %v8026 = vsel %vm1991, 0.0, %v7898
        %v8027 = vsel %vm1991, 0.0, %v7899
        %v8028 = vsel %vm1991, 0.0, %v7900
        %v8029 = vsel %vm1991, 0.0, %v7901
        %v8030 = vsel %vm1991, 0.0, %v7902
        %v8031 = vsel %vm1991, 0.0, %v7903
        %v8032 = vsel %vm1991, 0.0, %v7904
        %v8033 = vsel %vm1991, 0.0, %v7905
        %v8034 = vsel %vm1991, 0.0, %v7906
        %v8035 = vsel %vm1991, 0.0, %v7907
        %v8036 = vsel %vm1991, 0.0, %v7908
        %v8037 = vsel %vm1991, 0.0, %v7909
        %v8038 = vsel %vm1991, 0.0, %v7910
        %v8039 = vsel %vm1991, 0.0, %v7911
        %v8040 = vsel %vm1991, 0.0, %v7912
        %v8041 = vsel %vm1991, 0.0, %v7913
        %v8042 = vsel %vm1991, 0.0, %v7914
        %v8043 = vsel %vm1991, 0.0, %v7915
        %v8044 = vsel %vm1991, 0.0, %v7916
        %v8045 = vsel %vm1991, 0.0, %v7917
        %v8046 = vsel %vm1991, 0.0, %v7918
        %v8047 = vsel %vm1991, 0.0, %v7919
        %v8048 = vsel %vm1991, 0.0, %v7920
        %v8049 = vsel %vm1991, 0.0, %v7921
        %v8050 = vsel %vm1991, 0.0, %v7922
        %v8051 = vsel %vm1991, 0.0, %v7923
        %v8052 = vsel %vm1991, 0.0, %v7924
        %v8053 = vsel %vm1991, 0.0, %v7925
        %v8054 = vsel %vm1991, 0.0, %v7926
        %v8055 = vsel %vm1991, 0.0, %v7927
        %v8056 = vsel %vm1991, 0.0, %v7928
        %v8057 = vsel %vm1991, 0.0, %v7929
        %v8058 = vsel %vm1991, 0.0, %v7930
        %v8059 = vsel %vm1991, 0.0, %v7931
        %v8060 = vsel %vm1991, 0.0, %v7932
        %v8061 = vsel %vm1991, 0.0, %v7933
        %v8062 = vsel %vm1991, 0.0, %v7934
        %v8063 = vsel %vm1991, 0.0, %v7935
        %v8064 = vsel %vm1991, 0.0, %v7936
        %v8065 = vsel %vm1991, 0.0, %v7937
        %v8066 = vsel %vm1991, 0.0, %v7938
        %v8067 = vsel %vm1991, 0.0, %v7939
        %v8068 = vsel %vm1991, 0.0, %v7940
        %v8069 = vsel %vm1991, 0.0, %v7941
        %v8070 = vsel %vm1991, 0.0, %v7942
        %v8071 = vsel %vm1991, 0.0, %v7943
        %v8072 = vsel %vm1991, 0.0, %v7944
        %v8073 = vsel %vm1991, 0.0, %v7945
        %v8074 = vsel %vm1991, 0.0, %v7946
        %v8075 = vsel %vm1991, 0.0, %v7947
        %v8076 = vsel %vm1991, 0.0, %v7948
        %v8077 = vsel %vm1991, 0.0, %v7949
        %v8078 = vsel %vm1991, 0.0, %v7950
        %v8079 = vsel %vm1991, 0.0, %v7951
        %v8080 = vsel %vm1991, 0.0, %v7952
        %v8081 = vrot.slane %v7521, 1
        %v8082 = vrot.slane %v7523, 1
        %v8083 = vrot.slane %v7747, 1
        %v8084 = vrot.slane %v7749, 1
        %v8085 = vrot.slane %v7525, 1
        %v8086 = vrot.slane %v7527, 1
        %v8087 = vrot.slane %v7751, 1
        %v8088 = vrot.slane %v7753, 1
        %v8089 = vrot.slane %v7531, 1
        %v8090 = vrot.slane %v7533, 1
        %v8091 = vrot.slane %v7757, 1
        %v8092 = vrot.slane %v7759, 1
        %v8093 = vrot.slane %v7535, 1
        %v8094 = vrot.slane %v7537, 1
        %v8095 = vrot.slane %v7761, 1
        %v8096 = vrot.slane %v7763, 1
        %v8097 = vrot.slane %v7541, 1
        %v8098 = vrot.slane %v7543, 1
        %v8099 = vrot.slane %v7767, 1
        %v8100 = vrot.slane %v7769, 1
        %v8101 = vrot.slane %v7545, 1
        %v8102 = vrot.slane %v7547, 1
        %v8103 = vrot.slane %v7771, 1
        %v8104 = vrot.slane %v7773, 1
        %v8105 = vrot.slane %v7551, 1
        %v8106 = vrot.slane %v7553, 1
        %v8107 = vrot.slane %v7777, 1
        %v8108 = vrot.slane %v7779, 1
        %v8109 = vrot.slane %v7555, 1
        %v8110 = vrot.slane %v7557, 1
        %v8111 = vrot.slane %v7781, 1
        %v8112 = vrot.slane %v7783, 1
        %v8113 = vrot.slane %v7561, 1
        %v8114 = vrot.slane %v7563, 1
        %v8115 = vrot.slane %v7787, 1
        %v8116 = vrot.slane %v7789, 1
        %v8117 = vrot.slane %v7565, 1
        %v8118 = vrot.slane %v7567, 1
        %v8119 = vrot.slane %v7791, 1
        %v8120 = vrot.slane %v7793, 1
        %v8121 = vrot.slane %v7571, 1
        %v8122 = vrot.slane %v7573, 1
        %v8123 = vrot.slane %v7797, 1
        %v8124 = vrot.slane %v7799, 1
        %v8125 = vrot.slane %v7575, 1
        %v8126 = vrot.slane %v7577, 1
        %v8127 = vrot.slane %v7801, 1
        %v8128 = vrot.slane %v7803, 1
        %v8129 = vrot.slane %v7581, 1
        %v8130 = vrot.slane %v7583, 1
        %v8131 = vrot.slane %v7807, 1
        %v8132 = vrot.slane %v7809, 1
        %v8133 = vrot.slane %v7585, 1
        %v8134 = vrot.slane %v7587, 1
        %v8135 = vrot.slane %v7811, 1
        %v8136 = vrot.slane %v7813, 1
        %v8137 = vrot.slane %v7591, 1
        %v8138 = vrot.slane %v7593, 1
        %v8139 = vrot.slane %v7817, 1
        %v8140 = vrot.slane %v7819, 1
        %v8141 = vrot.slane %v7595, 1
        %v8142 = vrot.slane %v7597, 1
        %v8143 = vrot.slane %v7821, 1
        %v8144 = vrot.slane %v7823, 1
        %v8209 = vsel %vm2184, %v8081, 0.0
        %v8210 = vsel %vm2184, %v8082, 0.0
        %v8211 = vsel %vm2184, %v8083, 0.0
        %v8212 = vsel %vm2184, %v8084, 0.0
        %v8213 = vsel %vm2184, %v8085, 0.0
        %v8214 = vsel %vm2184, %v8086, 0.0
        %v8215 = vsel %vm2184, %v8087, 0.0
        %v8216 = vsel %vm2184, %v8088, 0.0
        %v8217 = vsel %vm2184, %v8089, 0.0
        %v8218 = vsel %vm2184, %v8090, 0.0
        %v8219 = vsel %vm2184, %v8091, 0.0
        %v8220 = vsel %vm2184, %v8092, 0.0
        %v8221 = vsel %vm2184, %v8093, 0.0
        %v8222 = vsel %vm2184, %v8094, 0.0
        %v8223 = vsel %vm2184, %v8095, 0.0
        %v8224 = vsel %vm2184, %v8096, 0.0
        %v8225 = vsel %vm2184, %v8097, 0.0
        %v8226 = vsel %vm2184, %v8098, 0.0
        %v8227 = vsel %vm2184, %v8099, 0.0
        %v8228 = vsel %vm2184, %v8100, 0.0
        %v8229 = vsel %vm2184, %v8101, 0.0
        %v8230 = vsel %vm2184, %v8102, 0.0
        %v8231 = vsel %vm2184, %v8103, 0.0
        %v8232 = vsel %vm2184, %v8104, 0.0
        %v8233 = vsel %vm2184, %v8105, 0.0
        %v8234 = vsel %vm2184, %v8106, 0.0
        %v8235 = vsel %vm2184, %v8107, 0.0
        %v8236 = vsel %vm2184, %v8108, 0.0
        %v8237 = vsel %vm2184, %v8109, 0.0
        %v8238 = vsel %vm2184, %v8110, 0.0
        %v8239 = vsel %vm2184, %v8111, 0.0
        %v8240 = vsel %vm2184, %v8112, 0.0
        %v8241 = vsel %vm2184, %v8113, 0.0
        %v8242 = vsel %vm2184, %v8114, 0.0
        %v8243 = vsel %vm2184, %v8115, 0.0
        %v8244 = vsel %vm2184, %v8116, 0.0
        %v8245 = vsel %vm2184, %v8117, 0.0
        %v8246 = vsel %vm2184, %v8118, 0.0
        %v8247 = vsel %vm2184, %v8119, 0.0
        %v8248 = vsel %vm2184, %v8120, 0.0
        %v8249 = vsel %vm2184, %v8121, 0.0
        %v8250 = vsel %vm2184, %v8122, 0.0
        %v8251 = vsel %vm2184, %v8123, 0.0
        %v8252 = vsel %vm2184, %v8124, 0.0
        %v8253 = vsel %vm2184, %v8125, 0.0
        %v8254 = vsel %vm2184, %v8126, 0.0
        %v8255 = vsel %vm2184, %v8127, 0.0
        %v8256 = vsel %vm2184, %v8128, 0.0
        %v8257 = vsel %vm2184, %v8129, 0.0
        %v8258 = vsel %vm2184, %v8130, 0.0
        %v8259 = vsel %vm2184, %v8131, 0.0
        %v8260 = vsel %vm2184, %v8132, 0.0
        %v8261 = vsel %vm2184, %v8133, 0.0
        %v8262 = vsel %vm2184, %v8134, 0.0
        %v8263 = vsel %vm2184, %v8135, 0.0
        %v8264 = vsel %vm2184, %v8136, 0.0
        %v8265 = vsel %vm2184, %v8137, 0.0
        %v8266 = vsel %vm2184, %v8138, 0.0
        %v8267 = vsel %vm2184, %v8139, 0.0
        %v8268 = vsel %vm2184, %v8140, 0.0
        %v8269 = vsel %vm2184, %v8141, 0.0
        %v8270 = vsel %vm2184, %v8142, 0.0
        %v8271 = vsel %vm2184, %v8143, 0.0
        %v8272 = vsel %vm2184, %v8144, 0.0
        %s8273 = scalar_lea.vmem %s280, 128
        %v8274 = vld [vmem:[%s8273] sm:$0xff]
        %v8275 = vld [vmem:[%s8273 + $0x8] sm:$0xff]
        %v8276 = vld [vmem:[%s8273 + $0x10] sm:$0xff]
        %v8277 = vld [vmem:[%s8273 + $0x18] sm:$0xff]
        %v8278 = vld [vmem:[%s8273 + $0x20] sm:$0x1]
        %v8279 = vld [vmem:[%s8273 + $0x28] sm:$0x1]
        %v8280 = vld [vmem:[%s8273 + $0x30] sm:$0x1]
        %v8281 = vld [vmem:[%s8273 + $0x38] sm:$0x1]
        %v8282 = vlaneseq
        %v8283 = vshrl.u32 %v8282, 7
        %v8284 = vsub.s32 0, %v8283
        %v8285 = vrot.slane %v8274, %v8284
        %v8286 = vlaneseq
        %v8287 = vshrl.u32 %v8286, 7
        %v8288 = vsub.s32 0, %v8287
        %v8289 = vrot.slane %v8275, %v8288
        %v8290 = vlaneseq
        %v8291 = vshrl.u32 %v8290, 7
        %v8292 = vsub.s32 0, %v8291
        %v8293 = vrot.slane %v8276, %v8292
        %v8294 = vlaneseq
        %v8295 = vshrl.u32 %v8294, 7
        %v8296 = vsub.s32 0, %v8295
        %v8297 = vrot.slane %v8277, %v8296
        %v8298 = vmul.f32 %v8017, %v8285
        %v8299 = vmul.f32 %v8018, %v8289
        %v8300 = vmul.f32 %v8019, %v8293
        %v8301 = vmul.f32 %v8020, %v8297
        %v8302 = vmul.f32 %v8021, %v8285
        %v8303 = vmul.f32 %v8022, %v8289
        %v8304 = vmul.f32 %v8023, %v8293
        %v8305 = vmul.f32 %v8024, %v8297
        %v8306 = vmul.f32 %v8025, %v8285
        %v8307 = vmul.f32 %v8026, %v8289
        %v8308 = vmul.f32 %v8027, %v8293
        %v8309 = vmul.f32 %v8028, %v8297
        %v8310 = vmul.f32 %v8029, %v8285
        %v8311 = vmul.f32 %v8030, %v8289
        %v8312 = vmul.f32 %v8031, %v8293
        %v8313 = vmul.f32 %v8032, %v8297
        %v8314 = vmul.f32 %v8033, %v8285
        %v8315 = vmul.f32 %v8034, %v8289
        %v8316 = vmul.f32 %v8035, %v8293
        %v8317 = vmul.f32 %v8036, %v8297
        %v8318 = vmul.f32 %v8037, %v8285
        %v8319 = vmul.f32 %v8038, %v8289
        %v8320 = vmul.f32 %v8039, %v8293
        %v8321 = vmul.f32 %v8040, %v8297
        %v8322 = vmul.f32 %v8041, %v8285
        %v8323 = vmul.f32 %v8042, %v8289
        %v8324 = vmul.f32 %v8043, %v8293
        %v8325 = vmul.f32 %v8044, %v8297
        %v8326 = vmul.f32 %v8049, %v8285
        %v8327 = vmul.f32 %v8050, %v8289
        %v8328 = vmul.f32 %v8051, %v8293
        %v8329 = vmul.f32 %v8052, %v8297
        %v8330 = vmul.f32 %v8053, %v8285
        %v8331 = vmul.f32 %v8054, %v8289
        %v8332 = vmul.f32 %v8055, %v8293
        %v8333 = vmul.f32 %v8056, %v8297
        %v8334 = vmul.f32 %v8057, %v8285
        %v8335 = vmul.f32 %v8058, %v8289
        %v8336 = vmul.f32 %v8059, %v8293
        %v8337 = vmul.f32 %v8060, %v8297
        %v8338 = vmul.f32 %v8061, %v8285
        %v8339 = vmul.f32 %v8062, %v8289
        %v8340 = vmul.f32 %v8063, %v8293
        %v8341 = vmul.f32 %v8064, %v8297
        %v8342 = vmul.f32 %v8065, %v8285
        %v8343 = vmul.f32 %v8066, %v8289
        %v8344 = vmul.f32 %v8067, %v8293
        %v8345 = vmul.f32 %v8068, %v8297
        %v8346 = vmul.f32 %v8069, %v8285
        %v8347 = vmul.f32 %v8070, %v8289
        %v8348 = vmul.f32 %v8071, %v8293
        %v8349 = vmul.f32 %v8072, %v8297
        %v8350 = vmul.f32 %v8073, %v8285
        %v8351 = vmul.f32 %v8074, %v8289
        %v8352 = vmul.f32 %v8075, %v8293
        %v8353 = vmul.f32 %v8076, %v8297
        %v8354 = vlaneseq
        %v8355 = vshrl.u32 %v8354, 7
        %v8356 = vsub.s32 1, %v8355
        %v8357 = vrot.slane %v8274, %v8356
        %v8358 = vlaneseq
        %v8359 = vshrl.u32 %v8358, 7
        %v8360 = vsub.s32 1, %v8359
        %v8361 = vrot.slane %v8275, %v8360
        %v8362 = vlaneseq
        %v8363 = vshrl.u32 %v8362, 7
        %v8364 = vsub.s32 1, %v8363
        %v8365 = vrot.slane %v8276, %v8364
        %v8366 = vlaneseq
        %v8367 = vshrl.u32 %v8366, 7
        %v8368 = vsub.s32 1, %v8367
        %v8369 = vrot.slane %v8277, %v8368
        %v8370 = vmul.f32 %v7521, %v8357
        %v8371 = vmul.f32 %v7523, %v8361
        %v8372 = vmul.f32 %v7747, %v8365
        %v8373 = vmul.f32 %v7749, %v8369
        %v8374 = vmul.f32 %v7525, %v8357
        %v8375 = vmul.f32 %v7527, %v8361
        %v8376 = vmul.f32 %v7751, %v8365
        %v8377 = vmul.f32 %v7753, %v8369
        %v8378 = vmul.f32 %v7531, %v8357
        %v8379 = vmul.f32 %v7533, %v8361
        %v8380 = vmul.f32 %v7757, %v8365
        %v8381 = vmul.f32 %v7759, %v8369
        %v8382 = vmul.f32 %v7535, %v8357
        %v8383 = vmul.f32 %v7537, %v8361
        %v8384 = vmul.f32 %v7761, %v8365
        %v8385 = vmul.f32 %v7763, %v8369
        %v8386 = vmul.f32 %v7541, %v8357
        %v8387 = vmul.f32 %v7543, %v8361
        %v8388 = vmul.f32 %v7767, %v8365
        %v8389 = vmul.f32 %v7769, %v8369
        %v8390 = vmul.f32 %v7545, %v8357
        %v8391 = vmul.f32 %v7547, %v8361
        %v8392 = vmul.f32 %v7771, %v8365
        %v8393 = vmul.f32 %v7773, %v8369
        %v8394 = vmul.f32 %v7551, %v8357
        %v8395 = vmul.f32 %v7553, %v8361
        %v8396 = vmul.f32 %v7777, %v8365
        %v8397 = vmul.f32 %v7779, %v8369
        %v8398 = vmul.f32 %v7561, %v8357
        %v8399 = vmul.f32 %v7563, %v8361
        %v8400 = vmul.f32 %v7787, %v8365
        %v8401 = vmul.f32 %v7789, %v8369
        %v8402 = vmul.f32 %v7565, %v8357
        %v8403 = vmul.f32 %v7567, %v8361
        %v8404 = vmul.f32 %v7791, %v8365
        %v8405 = vmul.f32 %v7793, %v8369
        %v8406 = vmul.f32 %v7571, %v8357
        %v8407 = vmul.f32 %v7573, %v8361
        %v8408 = vmul.f32 %v7797, %v8365
        %v8409 = vmul.f32 %v7799, %v8369
        %v8410 = vmul.f32 %v7575, %v8357
        %v8411 = vmul.f32 %v7577, %v8361
        %v8412 = vmul.f32 %v7801, %v8365
        %v8413 = vmul.f32 %v7803, %v8369
        %v8414 = vmul.f32 %v7581, %v8357
        %v8415 = vmul.f32 %v7583, %v8361
        %v8416 = vmul.f32 %v7807, %v8365
        %v8417 = vmul.f32 %v7809, %v8369
        %v8418 = vmul.f32 %v7585, %v8357
        %v8419 = vmul.f32 %v7587, %v8361
        %v8420 = vmul.f32 %v7811, %v8365
        %v8421 = vmul.f32 %v7813, %v8369
        %v8422 = vmul.f32 %v7591, %v8357
        %v8423 = vmul.f32 %v7593, %v8361
        %v8424 = vmul.f32 %v7817, %v8365
        %v8425 = vmul.f32 %v7819, %v8369
        %v8426 = vadd.f32 %v8298, %v8370
        %v8427 = vadd.f32 %v8299, %v8371
        %v8428 = vadd.f32 %v8300, %v8372
        %v8429 = vadd.f32 %v8301, %v8373
        %v8430 = vadd.f32 %v8302, %v8374
        %v8431 = vadd.f32 %v8303, %v8375
        %v8432 = vadd.f32 %v8304, %v8376
        %v8433 = vadd.f32 %v8305, %v8377
        %v8434 = vadd.f32 %v8306, %v8378
        %v8435 = vadd.f32 %v8307, %v8379
        %v8436 = vadd.f32 %v8308, %v8380
        %v8437 = vadd.f32 %v8309, %v8381
        %v8438 = vadd.f32 %v8310, %v8382
        %v8439 = vadd.f32 %v8311, %v8383
        %v8440 = vadd.f32 %v8312, %v8384
        %v8441 = vadd.f32 %v8313, %v8385
        %v8442 = vadd.f32 %v8314, %v8386
        %v8443 = vadd.f32 %v8315, %v8387
        %v8444 = vadd.f32 %v8316, %v8388
        %v8445 = vadd.f32 %v8317, %v8389
        %v8446 = vadd.f32 %v8318, %v8390
        %v8447 = vadd.f32 %v8319, %v8391
        %v8448 = vadd.f32 %v8320, %v8392
        %v8449 = vadd.f32 %v8321, %v8393
        %v8450 = vadd.f32 %v8322, %v8394
        %v8451 = vadd.f32 %v8323, %v8395
        %v8452 = vadd.f32 %v8324, %v8396
        %v8453 = vadd.f32 %v8325, %v8397
        %v8454 = vadd.f32 %v8326, %v8398
        %v8455 = vadd.f32 %v8327, %v8399
        %v8456 = vadd.f32 %v8328, %v8400
        %v8457 = vadd.f32 %v8329, %v8401
        %v8458 = vadd.f32 %v8330, %v8402
        %v8459 = vadd.f32 %v8331, %v8403
        %v8460 = vadd.f32 %v8332, %v8404
        %v8461 = vadd.f32 %v8333, %v8405
        %v8462 = vadd.f32 %v8334, %v8406
        %v8463 = vadd.f32 %v8335, %v8407
        %v8464 = vadd.f32 %v8336, %v8408
        %v8465 = vadd.f32 %v8337, %v8409
        %v8466 = vadd.f32 %v8338, %v8410
        %v8467 = vadd.f32 %v8339, %v8411
        %v8468 = vadd.f32 %v8340, %v8412
        %v8469 = vadd.f32 %v8341, %v8413
        %v8470 = vadd.f32 %v8342, %v8414
        %v8471 = vadd.f32 %v8343, %v8415
        %v8472 = vadd.f32 %v8344, %v8416
        %v8473 = vadd.f32 %v8345, %v8417
        %v8474 = vadd.f32 %v8346, %v8418
        %v8475 = vadd.f32 %v8347, %v8419
        %v8476 = vadd.f32 %v8348, %v8420
        %v8477 = vadd.f32 %v8349, %v8421
        %v8478 = vadd.f32 %v8350, %v8422
        %v8479 = vadd.f32 %v8351, %v8423
        %v8480 = vadd.f32 %v8352, %v8424
        %v8481 = vadd.f32 %v8353, %v8425
        %v8482 = vlaneseq
        %v8483 = vshrl.u32 %v8482, 7
        %v8484 = vsub.s32 2, %v8483
        %v8485 = vrot.slane %v8274, %v8484
        %v8486 = vlaneseq
        %v8487 = vshrl.u32 %v8486, 7
        %v8488 = vsub.s32 2, %v8487
        %v8489 = vrot.slane %v8275, %v8488
        %v8490 = vlaneseq
        %v8491 = vshrl.u32 %v8490, 7
        %v8492 = vsub.s32 2, %v8491
        %v8493 = vrot.slane %v8276, %v8492
        %v8494 = vlaneseq
        %v8495 = vshrl.u32 %v8494, 7
        %v8496 = vsub.s32 2, %v8495
        %v8497 = vrot.slane %v8277, %v8496
        %v8498 = vmul.f32 %v8209, %v8485
        %v8499 = vmul.f32 %v8210, %v8489
        %v8500 = vmul.f32 %v8211, %v8493
        %v8501 = vmul.f32 %v8212, %v8497
        %v8502 = vmul.f32 %v8213, %v8485
        %v8503 = vmul.f32 %v8214, %v8489
        %v8504 = vmul.f32 %v8215, %v8493
        %v8505 = vmul.f32 %v8216, %v8497
        %v8506 = vmul.f32 %v8217, %v8485
        %v8507 = vmul.f32 %v8218, %v8489
        %v8508 = vmul.f32 %v8219, %v8493
        %v8509 = vmul.f32 %v8220, %v8497
        %v8510 = vmul.f32 %v8221, %v8485
        %v8511 = vmul.f32 %v8222, %v8489
        %v8512 = vmul.f32 %v8223, %v8493
        %v8513 = vmul.f32 %v8224, %v8497
        %v8514 = vmul.f32 %v8225, %v8485
        %v8515 = vmul.f32 %v8226, %v8489
        %v8516 = vmul.f32 %v8227, %v8493
        %v8517 = vmul.f32 %v8228, %v8497
        %v8518 = vmul.f32 %v8229, %v8485
        %v8519 = vmul.f32 %v8230, %v8489
        %v8520 = vmul.f32 %v8231, %v8493
        %v8521 = vmul.f32 %v8232, %v8497
        %v8522 = vmul.f32 %v8233, %v8485
        %v8523 = vmul.f32 %v8234, %v8489
        %v8524 = vmul.f32 %v8235, %v8493
        %v8525 = vmul.f32 %v8236, %v8497
        %v8526 = vmul.f32 %v8241, %v8485
        %v8527 = vmul.f32 %v8242, %v8489
        %v8528 = vmul.f32 %v8243, %v8493
        %v8529 = vmul.f32 %v8244, %v8497
        %v8530 = vmul.f32 %v8245, %v8485
        %v8531 = vmul.f32 %v8246, %v8489
        %v8532 = vmul.f32 %v8247, %v8493
        %v8533 = vmul.f32 %v8248, %v8497
        %v8534 = vmul.f32 %v8249, %v8485
        %v8535 = vmul.f32 %v8250, %v8489
        %v8536 = vmul.f32 %v8251, %v8493
        %v8537 = vmul.f32 %v8252, %v8497
        %v8538 = vmul.f32 %v8253, %v8485
        %v8539 = vmul.f32 %v8254, %v8489
        %v8540 = vmul.f32 %v8255, %v8493
        %v8541 = vmul.f32 %v8256, %v8497
        %v8542 = vmul.f32 %v8257, %v8485
        %v8543 = vmul.f32 %v8258, %v8489
        %v8544 = vmul.f32 %v8259, %v8493
        %v8545 = vmul.f32 %v8260, %v8497
        %v8546 = vmul.f32 %v8261, %v8485
        %v8547 = vmul.f32 %v8262, %v8489
        %v8548 = vmul.f32 %v8263, %v8493
        %v8549 = vmul.f32 %v8264, %v8497
        %v8550 = vmul.f32 %v8265, %v8485
        %v8551 = vmul.f32 %v8266, %v8489
        %v8552 = vmul.f32 %v8267, %v8493
        %v8553 = vmul.f32 %v8268, %v8497
        %v8554 = vadd.f32 %v8426, %v8498
        %v8555 = vadd.f32 %v8427, %v8499
        %v8556 = vadd.f32 %v8428, %v8500
        %v8557 = vadd.f32 %v8429, %v8501
        %v8558 = vadd.f32 %v8430, %v8502
        %v8559 = vadd.f32 %v8431, %v8503
        %v8560 = vadd.f32 %v8432, %v8504
        %v8561 = vadd.f32 %v8433, %v8505
        %v8562 = vadd.f32 %v8434, %v8506
        %v8563 = vadd.f32 %v8435, %v8507
        %v8564 = vadd.f32 %v8436, %v8508
        %v8565 = vadd.f32 %v8437, %v8509
        %v8566 = vadd.f32 %v8438, %v8510
        %v8567 = vadd.f32 %v8439, %v8511
        %v8568 = vadd.f32 %v8440, %v8512
        %v8569 = vadd.f32 %v8441, %v8513
        %v8570 = vadd.f32 %v8442, %v8514
        %v8571 = vadd.f32 %v8443, %v8515
        %v8572 = vadd.f32 %v8444, %v8516
        %v8573 = vadd.f32 %v8445, %v8517
        %v8574 = vadd.f32 %v8446, %v8518
        %v8575 = vadd.f32 %v8447, %v8519
        %v8576 = vadd.f32 %v8448, %v8520
        %v8577 = vadd.f32 %v8449, %v8521
        %v8578 = vadd.f32 %v8450, %v8522
        %v8579 = vadd.f32 %v8451, %v8523
        %v8580 = vadd.f32 %v8452, %v8524
        %v8581 = vadd.f32 %v8453, %v8525
        %v8582 = vadd.f32 %v8454, %v8526
        %v8583 = vadd.f32 %v8455, %v8527
        %v8584 = vadd.f32 %v8456, %v8528
        %v8585 = vadd.f32 %v8457, %v8529
        %v8586 = vadd.f32 %v8458, %v8530
        %v8587 = vadd.f32 %v8459, %v8531
        %v8588 = vadd.f32 %v8460, %v8532
        %v8589 = vadd.f32 %v8461, %v8533
        %v8590 = vadd.f32 %v8462, %v8534
        %v8591 = vadd.f32 %v8463, %v8535
        %v8592 = vadd.f32 %v8464, %v8536
        %v8593 = vadd.f32 %v8465, %v8537
        %v8594 = vadd.f32 %v8466, %v8538
        %v8595 = vadd.f32 %v8467, %v8539
        %v8596 = vadd.f32 %v8468, %v8540
        %v8597 = vadd.f32 %v8469, %v8541
        %v8598 = vadd.f32 %v8470, %v8542
        %v8599 = vadd.f32 %v8471, %v8543
        %v8600 = vadd.f32 %v8472, %v8544
        %v8601 = vadd.f32 %v8473, %v8545
        %v8602 = vadd.f32 %v8474, %v8546
        %v8603 = vadd.f32 %v8475, %v8547
        %v8604 = vadd.f32 %v8476, %v8548
        %v8605 = vadd.f32 %v8477, %v8549
        %v8606 = vadd.f32 %v8478, %v8550
        %v8607 = vadd.f32 %v8479, %v8551
        %v8608 = vadd.f32 %v8480, %v8552
        %v8609 = vadd.f32 %v8481, %v8553
        %v8610 = vlaneseq
        %v8611 = vshrl.u32 %v8610, 7
        %v8612 = vsub.s32 3, %v8611
        %v8613 = vrot.slane %v8274, %v8612
        %v8614 = vlaneseq
        %v8615 = vshrl.u32 %v8614, 7
        %v8616 = vsub.s32 3, %v8615
        %v8617 = vrot.slane %v8275, %v8616
        %v8618 = vlaneseq
        %v8619 = vshrl.u32 %v8618, 7
        %v8620 = vsub.s32 3, %v8619
        %v8621 = vrot.slane %v8276, %v8620
        %v8622 = vlaneseq
        %v8623 = vshrl.u32 %v8622, 7
        %v8624 = vsub.s32 3, %v8623
        %v8625 = vrot.slane %v8277, %v8624
        %v8626 = vmul.f32 %v8017, %v8613
        %v8627 = vmul.f32 %v8018, %v8617
        %v8628 = vmul.f32 %v8019, %v8621
        %v8629 = vmul.f32 %v8020, %v8625
        %v8630 = vmul.f32 %v8021, %v8613
        %v8631 = vmul.f32 %v8022, %v8617
        %v8632 = vmul.f32 %v8023, %v8621
        %v8633 = vmul.f32 %v8024, %v8625
        %v8634 = vmul.f32 %v8025, %v8613
        %v8635 = vmul.f32 %v8026, %v8617
        %v8636 = vmul.f32 %v8027, %v8621
        %v8637 = vmul.f32 %v8028, %v8625
        %v8638 = vmul.f32 %v8029, %v8613
        %v8639 = vmul.f32 %v8030, %v8617
        %v8640 = vmul.f32 %v8031, %v8621
        %v8641 = vmul.f32 %v8032, %v8625
        %v8642 = vmul.f32 %v8033, %v8613
        %v8643 = vmul.f32 %v8034, %v8617
        %v8644 = vmul.f32 %v8035, %v8621
        %v8645 = vmul.f32 %v8036, %v8625
        %v8646 = vmul.f32 %v8037, %v8613
        %v8647 = vmul.f32 %v8038, %v8617
        %v8648 = vmul.f32 %v8039, %v8621
        %v8649 = vmul.f32 %v8040, %v8625
        %v8650 = vmul.f32 %v8041, %v8613
        %v8651 = vmul.f32 %v8042, %v8617
        %v8652 = vmul.f32 %v8043, %v8621
        %v8653 = vmul.f32 %v8044, %v8625
        %v8654 = vmul.f32 %v8045, %v8613
        %v8655 = vmul.f32 %v8046, %v8617
        %v8656 = vmul.f32 %v8047, %v8621
        %v8657 = vmul.f32 %v8048, %v8625
        %v8658 = vmul.f32 %v8049, %v8613
        %v8659 = vmul.f32 %v8050, %v8617
        %v8660 = vmul.f32 %v8051, %v8621
        %v8661 = vmul.f32 %v8052, %v8625
        %v8662 = vmul.f32 %v8053, %v8613
        %v8663 = vmul.f32 %v8054, %v8617
        %v8664 = vmul.f32 %v8055, %v8621
        %v8665 = vmul.f32 %v8056, %v8625
        %v8666 = vmul.f32 %v8057, %v8613
        %v8667 = vmul.f32 %v8058, %v8617
        %v8668 = vmul.f32 %v8059, %v8621
        %v8669 = vmul.f32 %v8060, %v8625
        %v8670 = vmul.f32 %v8061, %v8613
        %v8671 = vmul.f32 %v8062, %v8617
        %v8672 = vmul.f32 %v8063, %v8621
        %v8673 = vmul.f32 %v8064, %v8625
        %v8674 = vmul.f32 %v8065, %v8613
        %v8675 = vmul.f32 %v8066, %v8617
        %v8676 = vmul.f32 %v8067, %v8621
        %v8677 = vmul.f32 %v8068, %v8625
        %v8678 = vmul.f32 %v8069, %v8613
        %v8679 = vmul.f32 %v8070, %v8617
        %v8680 = vmul.f32 %v8071, %v8621
        %v8681 = vmul.f32 %v8072, %v8625
        %v8682 = vmul.f32 %v8073, %v8613
        %v8683 = vmul.f32 %v8074, %v8617
        %v8684 = vmul.f32 %v8075, %v8621
        %v8685 = vmul.f32 %v8076, %v8625
        %v8686 = vmul.f32 %v8077, %v8613
        %v8687 = vmul.f32 %v8078, %v8617
        %v8688 = vmul.f32 %v8079, %v8621
        %v8689 = vmul.f32 %v8080, %v8625
        %v8690 = vlaneseq
        %v8691 = vshrl.u32 %v8690, 7
        %v8692 = vsub.s32 4, %v8691
        %v8693 = vrot.slane %v8274, %v8692
        %v8694 = vlaneseq
        %v8695 = vshrl.u32 %v8694, 7
        %v8696 = vsub.s32 4, %v8695
        %v8697 = vrot.slane %v8275, %v8696
        %v8698 = vlaneseq
        %v8699 = vshrl.u32 %v8698, 7
        %v8700 = vsub.s32 4, %v8699
        %v8701 = vrot.slane %v8276, %v8700
        %v8702 = vlaneseq
        %v8703 = vshrl.u32 %v8702, 7
        %v8704 = vsub.s32 4, %v8703
        %v8705 = vrot.slane %v8277, %v8704
        %v8706 = vmul.f32 %v7521, %v8693
        %v8707 = vmul.f32 %v7523, %v8697
        %v8708 = vmul.f32 %v7747, %v8701
        %v8709 = vmul.f32 %v7749, %v8705
        %v8710 = vmul.f32 %v7525, %v8693
        %v8711 = vmul.f32 %v7527, %v8697
        %v8712 = vmul.f32 %v7751, %v8701
        %v8713 = vmul.f32 %v7753, %v8705
        %v8714 = vmul.f32 %v7531, %v8693
        %v8715 = vmul.f32 %v7533, %v8697
        %v8716 = vmul.f32 %v7757, %v8701
        %v8717 = vmul.f32 %v7759, %v8705
        %v8718 = vmul.f32 %v7535, %v8693
        %v8719 = vmul.f32 %v7537, %v8697
        %v8720 = vmul.f32 %v7761, %v8701
        %v8721 = vmul.f32 %v7763, %v8705
        %v8722 = vmul.f32 %v7541, %v8693
        %v8723 = vmul.f32 %v7543, %v8697
        %v8724 = vmul.f32 %v7767, %v8701
        %v8725 = vmul.f32 %v7769, %v8705
        %v8726 = vmul.f32 %v7545, %v8693
        %v8727 = vmul.f32 %v7547, %v8697
        %v8728 = vmul.f32 %v7771, %v8701
        %v8729 = vmul.f32 %v7773, %v8705
        %v8730 = vmul.f32 %v7551, %v8693
        %v8731 = vmul.f32 %v7553, %v8697
        %v8732 = vmul.f32 %v7777, %v8701
        %v8733 = vmul.f32 %v7779, %v8705
        %v8734 = vmul.f32 %v7555, %v8693
        %v8735 = vmul.f32 %v7557, %v8697
        %v8736 = vmul.f32 %v7781, %v8701
        %v8737 = vmul.f32 %v7783, %v8705
        %v8738 = vmul.f32 %v7561, %v8693
        %v8739 = vmul.f32 %v7563, %v8697
        %v8740 = vmul.f32 %v7787, %v8701
        %v8741 = vmul.f32 %v7789, %v8705
        %v8742 = vmul.f32 %v7565, %v8693
        %v8743 = vmul.f32 %v7567, %v8697
        %v8744 = vmul.f32 %v7791, %v8701
        %v8745 = vmul.f32 %v7793, %v8705
        %v8746 = vmul.f32 %v7571, %v8693
        %v8747 = vmul.f32 %v7573, %v8697
        %v8748 = vmul.f32 %v7797, %v8701
        %v8749 = vmul.f32 %v7799, %v8705
        %v8750 = vmul.f32 %v7575, %v8693
        %v8751 = vmul.f32 %v7577, %v8697
        %v8752 = vmul.f32 %v7801, %v8701
        %v8753 = vmul.f32 %v7803, %v8705
        %v8754 = vmul.f32 %v7581, %v8693
        %v8755 = vmul.f32 %v7583, %v8697
        %v8756 = vmul.f32 %v7807, %v8701
        %v8757 = vmul.f32 %v7809, %v8705
        %v8758 = vmul.f32 %v7585, %v8693
        %v8759 = vmul.f32 %v7587, %v8697
        %v8760 = vmul.f32 %v7811, %v8701
        %v8761 = vmul.f32 %v7813, %v8705
        %v8762 = vmul.f32 %v7591, %v8693
        %v8763 = vmul.f32 %v7593, %v8697
        %v8764 = vmul.f32 %v7817, %v8701
        %v8765 = vmul.f32 %v7819, %v8705
        %v8766 = vmul.f32 %v7595, %v8693
        %v8767 = vmul.f32 %v7597, %v8697
        %v8768 = vmul.f32 %v7821, %v8701
        %v8769 = vmul.f32 %v7823, %v8705
        %v8770 = vadd.f32 %v8626, %v8706
        %v8771 = vadd.f32 %v8627, %v8707
        %v8772 = vadd.f32 %v8628, %v8708
        %v8773 = vadd.f32 %v8629, %v8709
        %v8774 = vadd.f32 %v8630, %v8710
        %v8775 = vadd.f32 %v8631, %v8711
        %v8776 = vadd.f32 %v8632, %v8712
        %v8777 = vadd.f32 %v8633, %v8713
        %v8778 = vadd.f32 %v8634, %v8714
        %v8779 = vadd.f32 %v8635, %v8715
        %v8780 = vadd.f32 %v8636, %v8716
        %v8781 = vadd.f32 %v8637, %v8717
        %v8782 = vadd.f32 %v8638, %v8718
        %v8783 = vadd.f32 %v8639, %v8719
        %v8784 = vadd.f32 %v8640, %v8720
        %v8785 = vadd.f32 %v8641, %v8721
        %v8786 = vadd.f32 %v8642, %v8722
        %v8787 = vadd.f32 %v8643, %v8723
        %v8788 = vadd.f32 %v8644, %v8724
        %v8789 = vadd.f32 %v8645, %v8725
        %v8790 = vadd.f32 %v8646, %v8726
        %v8791 = vadd.f32 %v8647, %v8727
        %v8792 = vadd.f32 %v8648, %v8728
        %v8793 = vadd.f32 %v8649, %v8729
        %v8794 = vadd.f32 %v8650, %v8730
        %v8795 = vadd.f32 %v8651, %v8731
        %v8796 = vadd.f32 %v8652, %v8732
        %v8797 = vadd.f32 %v8653, %v8733
        %v8798 = vadd.f32 %v8654, %v8734
        %v8799 = vadd.f32 %v8655, %v8735
        %v8800 = vadd.f32 %v8656, %v8736
        %v8801 = vadd.f32 %v8657, %v8737
        %v8802 = vadd.f32 %v8658, %v8738
        %v8803 = vadd.f32 %v8659, %v8739
        %v8804 = vadd.f32 %v8660, %v8740
        %v8805 = vadd.f32 %v8661, %v8741
        %v8806 = vadd.f32 %v8662, %v8742
        %v8807 = vadd.f32 %v8663, %v8743
        %v8808 = vadd.f32 %v8664, %v8744
        %v8809 = vadd.f32 %v8665, %v8745
        %v8810 = vadd.f32 %v8666, %v8746
        %v8811 = vadd.f32 %v8667, %v8747
        %v8812 = vadd.f32 %v8668, %v8748
        %v8813 = vadd.f32 %v8669, %v8749
        %v8814 = vadd.f32 %v8670, %v8750
        %v8815 = vadd.f32 %v8671, %v8751
        %v8816 = vadd.f32 %v8672, %v8752
        %v8817 = vadd.f32 %v8673, %v8753
        %v8818 = vadd.f32 %v8674, %v8754
        %v8819 = vadd.f32 %v8675, %v8755
        %v8820 = vadd.f32 %v8676, %v8756
        %v8821 = vadd.f32 %v8677, %v8757
        %v8822 = vadd.f32 %v8678, %v8758
        %v8823 = vadd.f32 %v8679, %v8759
        %v8824 = vadd.f32 %v8680, %v8760
        %v8825 = vadd.f32 %v8681, %v8761
        %v8826 = vadd.f32 %v8682, %v8762
        %v8827 = vadd.f32 %v8683, %v8763
        %v8828 = vadd.f32 %v8684, %v8764
        %v8829 = vadd.f32 %v8685, %v8765
        %v8830 = vadd.f32 %v8686, %v8766
        %v8831 = vadd.f32 %v8687, %v8767
        %v8832 = vadd.f32 %v8688, %v8768
        %v8833 = vadd.f32 %v8689, %v8769
        %v8834 = vlaneseq
        %v8835 = vshrl.u32 %v8834, 7
        %v8836 = vsub.s32 5, %v8835
        %v8837 = vrot.slane %v8274, %v8836
        %v8838 = vlaneseq
        %v8839 = vshrl.u32 %v8838, 7
        %v8840 = vsub.s32 5, %v8839
        %v8841 = vrot.slane %v8275, %v8840
        %v8842 = vlaneseq
        %v8843 = vshrl.u32 %v8842, 7
        %v8844 = vsub.s32 5, %v8843
        %v8845 = vrot.slane %v8276, %v8844
        %v8846 = vlaneseq
        %v8847 = vshrl.u32 %v8846, 7
        %v8848 = vsub.s32 5, %v8847
        %v8849 = vrot.slane %v8277, %v8848
        %v8850 = vmul.f32 %v8209, %v8837
        %v8851 = vmul.f32 %v8210, %v8841
        %v8852 = vmul.f32 %v8211, %v8845
        %v8853 = vmul.f32 %v8212, %v8849
        %v8854 = vmul.f32 %v8213, %v8837
        %v8855 = vmul.f32 %v8214, %v8841
        %v8856 = vmul.f32 %v8215, %v8845
        %v8857 = vmul.f32 %v8216, %v8849
        %v8858 = vmul.f32 %v8217, %v8837
        %v8859 = vmul.f32 %v8218, %v8841
        %v8860 = vmul.f32 %v8219, %v8845
        %v8861 = vmul.f32 %v8220, %v8849
        %v8862 = vmul.f32 %v8221, %v8837
        %v8863 = vmul.f32 %v8222, %v8841
        %v8864 = vmul.f32 %v8223, %v8845
        %v8865 = vmul.f32 %v8224, %v8849
        %v8866 = vmul.f32 %v8225, %v8837
        %v8867 = vmul.f32 %v8226, %v8841
        %v8868 = vmul.f32 %v8227, %v8845
        %v8869 = vmul.f32 %v8228, %v8849
        %v8870 = vmul.f32 %v8229, %v8837
        %v8871 = vmul.f32 %v8230, %v8841
        %v8872 = vmul.f32 %v8231, %v8845
        %v8873 = vmul.f32 %v8232, %v8849
        %v8874 = vmul.f32 %v8233, %v8837
        %v8875 = vmul.f32 %v8234, %v8841
        %v8876 = vmul.f32 %v8235, %v8845
        %v8877 = vmul.f32 %v8236, %v8849
        %v8878 = vmul.f32 %v8237, %v8837
        %v8879 = vmul.f32 %v8238, %v8841
        %v8880 = vmul.f32 %v8239, %v8845
        %v8881 = vmul.f32 %v8240, %v8849
        %v8882 = vmul.f32 %v8241, %v8837
        %v8883 = vmul.f32 %v8242, %v8841
        %v8884 = vmul.f32 %v8243, %v8845
        %v8885 = vmul.f32 %v8244, %v8849
        %v8886 = vmul.f32 %v8245, %v8837
        %v8887 = vmul.f32 %v8246, %v8841
        %v8888 = vmul.f32 %v8247, %v8845
        %v8889 = vmul.f32 %v8248, %v8849
        %v8890 = vmul.f32 %v8249, %v8837
        %v8891 = vmul.f32 %v8250, %v8841
        %v8892 = vmul.f32 %v8251, %v8845
        %v8893 = vmul.f32 %v8252, %v8849
        %v8894 = vmul.f32 %v8253, %v8837
        %v8895 = vmul.f32 %v8254, %v8841
        %v8896 = vmul.f32 %v8255, %v8845
        %v8897 = vmul.f32 %v8256, %v8849
        %v8898 = vmul.f32 %v8257, %v8837
        %v8899 = vmul.f32 %v8258, %v8841
        %v8900 = vmul.f32 %v8259, %v8845
        %v8901 = vmul.f32 %v8260, %v8849
        %v8902 = vmul.f32 %v8261, %v8837
        %v8903 = vmul.f32 %v8262, %v8841
        %v8904 = vmul.f32 %v8263, %v8845
        %v8905 = vmul.f32 %v8264, %v8849
        %v8906 = vmul.f32 %v8265, %v8837
        %v8907 = vmul.f32 %v8266, %v8841
        %v8908 = vmul.f32 %v8267, %v8845
        %v8909 = vmul.f32 %v8268, %v8849
        %v8910 = vmul.f32 %v8269, %v8837
        %v8911 = vmul.f32 %v8270, %v8841
        %v8912 = vmul.f32 %v8271, %v8845
        %v8913 = vmul.f32 %v8272, %v8849
        %v8914 = vadd.f32 %v8770, %v8850
        %v8915 = vadd.f32 %v8771, %v8851
        %v8916 = vadd.f32 %v8772, %v8852
        %v8917 = vadd.f32 %v8773, %v8853
        %v8918 = vadd.f32 %v8774, %v8854
        %v8919 = vadd.f32 %v8775, %v8855
        %v8920 = vadd.f32 %v8776, %v8856
        %v8921 = vadd.f32 %v8777, %v8857
        %v8922 = vadd.f32 %v8778, %v8858
        %v8923 = vadd.f32 %v8779, %v8859
        %v8924 = vadd.f32 %v8780, %v8860
        %v8925 = vadd.f32 %v8781, %v8861
        %v8926 = vadd.f32 %v8782, %v8862
        %v8927 = vadd.f32 %v8783, %v8863
        %v8928 = vadd.f32 %v8784, %v8864
        %v8929 = vadd.f32 %v8785, %v8865
        %v8930 = vadd.f32 %v8786, %v8866
        %v8931 = vadd.f32 %v8787, %v8867
        %v8932 = vadd.f32 %v8788, %v8868
        %v8933 = vadd.f32 %v8789, %v8869
        %v8934 = vadd.f32 %v8790, %v8870
        %v8935 = vadd.f32 %v8791, %v8871
        %v8936 = vadd.f32 %v8792, %v8872
        %v8937 = vadd.f32 %v8793, %v8873
        %v8938 = vadd.f32 %v8794, %v8874
        %v8939 = vadd.f32 %v8795, %v8875
        %v8940 = vadd.f32 %v8796, %v8876
        %v8941 = vadd.f32 %v8797, %v8877
        %v8942 = vadd.f32 %v8798, %v8878
        %v8943 = vadd.f32 %v8799, %v8879
        %v8944 = vadd.f32 %v8800, %v8880
        %v8945 = vadd.f32 %v8801, %v8881
        %v8946 = vadd.f32 %v8802, %v8882
        %v8947 = vadd.f32 %v8803, %v8883
        %v8948 = vadd.f32 %v8804, %v8884
        %v8949 = vadd.f32 %v8805, %v8885
        %v8950 = vadd.f32 %v8806, %v8886
        %v8951 = vadd.f32 %v8807, %v8887
        %v8952 = vadd.f32 %v8808, %v8888
        %v8953 = vadd.f32 %v8809, %v8889
        %v8954 = vadd.f32 %v8810, %v8890
        %v8955 = vadd.f32 %v8811, %v8891
        %v8956 = vadd.f32 %v8812, %v8892
        %v8957 = vadd.f32 %v8813, %v8893
        %v8958 = vadd.f32 %v8814, %v8894
        %v8959 = vadd.f32 %v8815, %v8895
        %v8960 = vadd.f32 %v8816, %v8896
        %v8961 = vadd.f32 %v8817, %v8897
        %v8962 = vadd.f32 %v8818, %v8898
        %v8963 = vadd.f32 %v8819, %v8899
        %v8964 = vadd.f32 %v8820, %v8900
        %v8965 = vadd.f32 %v8821, %v8901
        %v8966 = vadd.f32 %v8822, %v8902
        %v8967 = vadd.f32 %v8823, %v8903
        %v8968 = vadd.f32 %v8824, %v8904
        %v8969 = vadd.f32 %v8825, %v8905
        %v8970 = vadd.f32 %v8826, %v8906
        %v8971 = vadd.f32 %v8827, %v8907
        %v8972 = vadd.f32 %v8828, %v8908
        %v8973 = vadd.f32 %v8829, %v8909
        %v8974 = vadd.f32 %v8830, %v8910
        %v8975 = vadd.f32 %v8831, %v8911
        %v8976 = vadd.f32 %v8832, %v8912
        %v8977 = vadd.f32 %v8833, %v8913
        %v8978 = vadd.f32 %v8914, 0.0
        %v8979 = vadd.f32 %v8915, 0.0
        %v8980 = vadd.f32 %v8916, 0.0
        %v8981 = vadd.f32 %v8917, 0.0
        %v8982 = vadd.f32 %v8554, %v8918
        %v8983 = vadd.f32 %v8555, %v8919
        %v8984 = vadd.f32 %v8556, %v8920
        %v8985 = vadd.f32 %v8557, %v8921
        %v8986 = vadd.f32 %v8558, %v8922
        %v8987 = vadd.f32 %v8559, %v8923
        %v8988 = vadd.f32 %v8560, %v8924
        %v8989 = vadd.f32 %v8561, %v8925
        %v8990 = vadd.f32 %v8562, %v8926
        %v8991 = vadd.f32 %v8563, %v8927
        %v8992 = vadd.f32 %v8564, %v8928
        %v8993 = vadd.f32 %v8565, %v8929
        %v8994 = vadd.f32 %v8566, %v8930
        %v8995 = vadd.f32 %v8567, %v8931
        %v8996 = vadd.f32 %v8568, %v8932
        %v8997 = vadd.f32 %v8569, %v8933
        %v8998 = vadd.f32 %v8570, %v8934
        %v8999 = vadd.f32 %v8571, %v8935
        %v9000 = vadd.f32 %v8572, %v8936
        %v9001 = vadd.f32 %v8573, %v8937
        %v9002 = vadd.f32 %v8574, %v8938
        %v9003 = vadd.f32 %v8575, %v8939
        %v9004 = vadd.f32 %v8576, %v8940
        %v9005 = vadd.f32 %v8577, %v8941
        %v9006 = vadd.f32 %v8578, %v8942
        %v9007 = vadd.f32 %v8579, %v8943
        %v9008 = vadd.f32 %v8580, %v8944
        %v9009 = vadd.f32 %v8581, %v8945
        %v9010 = vadd.f32 %v8946, 0.0
        %v9011 = vadd.f32 %v8947, 0.0
        %v9012 = vadd.f32 %v8948, 0.0
        %v9013 = vadd.f32 %v8949, 0.0
        %v9014 = vadd.f32 %v8582, %v8950
        %v9015 = vadd.f32 %v8583, %v8951
        %v9016 = vadd.f32 %v8584, %v8952
        %v9017 = vadd.f32 %v8585, %v8953
        %v9018 = vadd.f32 %v8586, %v8954
        %v9019 = vadd.f32 %v8587, %v8955
        %v9020 = vadd.f32 %v8588, %v8956
        %v9021 = vadd.f32 %v8589, %v8957
        %v9022 = vadd.f32 %v8590, %v8958
        %v9023 = vadd.f32 %v8591, %v8959
        %v9024 = vadd.f32 %v8592, %v8960
        %v9025 = vadd.f32 %v8593, %v8961
        %v9026 = vadd.f32 %v8594, %v8962
        %v9027 = vadd.f32 %v8595, %v8963
        %v9028 = vadd.f32 %v8596, %v8964
        %v9029 = vadd.f32 %v8597, %v8965
        %v9030 = vadd.f32 %v8598, %v8966
        %v9031 = vadd.f32 %v8599, %v8967
        %v9032 = vadd.f32 %v8600, %v8968
        %v9033 = vadd.f32 %v8601, %v8969
        %v9034 = vadd.f32 %v8602, %v8970
        %v9035 = vadd.f32 %v8603, %v8971
        %v9036 = vadd.f32 %v8604, %v8972
        %v9037 = vadd.f32 %v8605, %v8973
        %v9038 = vadd.f32 %v8606, %v8974
        %v9039 = vadd.f32 %v8607, %v8975
        %v9040 = vadd.f32 %v8608, %v8976
        %v9041 = vadd.f32 %v8609, %v8977
        %v9042 = vlaneseq
        %v9043 = vshrl.u32 %v9042, 7
        %v9044 = vsub.s32 6, %v9043
        %v9045 = vrot.slane %v8274, %v9044
        %v9046 = vlaneseq
        %v9047 = vshrl.u32 %v9046, 7
        %v9048 = vsub.s32 6, %v9047
        %v9049 = vrot.slane %v8275, %v9048
        %v9050 = vlaneseq
        %v9051 = vshrl.u32 %v9050, 7
        %v9052 = vsub.s32 6, %v9051
        %v9053 = vrot.slane %v8276, %v9052
        %v9054 = vlaneseq
        %v9055 = vshrl.u32 %v9054, 7
        %v9056 = vsub.s32 6, %v9055
        %v9057 = vrot.slane %v8277, %v9056
        %v9058 = vmul.f32 %v8021, %v9045
        %v9059 = vmul.f32 %v8022, %v9049
        %v9060 = vmul.f32 %v8023, %v9053
        %v9061 = vmul.f32 %v8024, %v9057
        %v9062 = vmul.f32 %v8025, %v9045
        %v9063 = vmul.f32 %v8026, %v9049
        %v9064 = vmul.f32 %v8027, %v9053
        %v9065 = vmul.f32 %v8028, %v9057
        %v9066 = vmul.f32 %v8029, %v9045
        %v9067 = vmul.f32 %v8030, %v9049
        %v9068 = vmul.f32 %v8031, %v9053
        %v9069 = vmul.f32 %v8032, %v9057
        %v9070 = vmul.f32 %v8033, %v9045
        %v9071 = vmul.f32 %v8034, %v9049
        %v9072 = vmul.f32 %v8035, %v9053
        %v9073 = vmul.f32 %v8036, %v9057
        %v9074 = vmul.f32 %v8037, %v9045
        %v9075 = vmul.f32 %v8038, %v9049
        %v9076 = vmul.f32 %v8039, %v9053
        %v9077 = vmul.f32 %v8040, %v9057
        %v9078 = vmul.f32 %v8041, %v9045
        %v9079 = vmul.f32 %v8042, %v9049
        %v9080 = vmul.f32 %v8043, %v9053
        %v9081 = vmul.f32 %v8044, %v9057
        %v9082 = vmul.f32 %v8045, %v9045
        %v9083 = vmul.f32 %v8046, %v9049
        %v9084 = vmul.f32 %v8047, %v9053
        %v9085 = vmul.f32 %v8048, %v9057
        %v9086 = vmul.f32 %v8053, %v9045
        %v9087 = vmul.f32 %v8054, %v9049
        %v9088 = vmul.f32 %v8055, %v9053
        %v9089 = vmul.f32 %v8056, %v9057
        %v9090 = vmul.f32 %v8057, %v9045
        %v9091 = vmul.f32 %v8058, %v9049
        %v9092 = vmul.f32 %v8059, %v9053
        %v9093 = vmul.f32 %v8060, %v9057
        %v9094 = vmul.f32 %v8061, %v9045
        %v9095 = vmul.f32 %v8062, %v9049
        %v9096 = vmul.f32 %v8063, %v9053
        %v9097 = vmul.f32 %v8064, %v9057
        %v9098 = vmul.f32 %v8065, %v9045
        %v9099 = vmul.f32 %v8066, %v9049
        %v9100 = vmul.f32 %v8067, %v9053
        %v9101 = vmul.f32 %v8068, %v9057
        %v9102 = vmul.f32 %v8069, %v9045
        %v9103 = vmul.f32 %v8070, %v9049
        %v9104 = vmul.f32 %v8071, %v9053
        %v9105 = vmul.f32 %v8072, %v9057
        %v9106 = vmul.f32 %v8073, %v9045
        %v9107 = vmul.f32 %v8074, %v9049
        %v9108 = vmul.f32 %v8075, %v9053
        %v9109 = vmul.f32 %v8076, %v9057
        %v9110 = vmul.f32 %v8077, %v9045
        %v9111 = vmul.f32 %v8078, %v9049
        %v9112 = vmul.f32 %v8079, %v9053
        %v9113 = vmul.f32 %v8080, %v9057
        %v9114 = vlaneseq
        %v9115 = vshrl.u32 %v9114, 7
        %v9116 = vsub.s32 7, %v9115
        %v9117 = vrot.slane %v8274, %v9116
        %v9118 = vlaneseq
        %v9119 = vshrl.u32 %v9118, 7
        %v9120 = vsub.s32 7, %v9119
        %v9121 = vrot.slane %v8275, %v9120
        %v9122 = vlaneseq
        %v9123 = vshrl.u32 %v9122, 7
        %v9124 = vsub.s32 7, %v9123
        %v9125 = vrot.slane %v8276, %v9124
        %v9126 = vlaneseq
        %v9127 = vshrl.u32 %v9126, 7
        %v9128 = vsub.s32 7, %v9127
        %v9129 = vrot.slane %v8277, %v9128
        %v9130 = vmul.f32 %v7525, %v9117
        %v9131 = vmul.f32 %v7527, %v9121
        %v9132 = vmul.f32 %v7751, %v9125
        %v9133 = vmul.f32 %v7753, %v9129
        %v9134 = vmul.f32 %v7531, %v9117
        %v9135 = vmul.f32 %v7533, %v9121
        %v9136 = vmul.f32 %v7757, %v9125
        %v9137 = vmul.f32 %v7759, %v9129
        %v9138 = vmul.f32 %v7535, %v9117
        %v9139 = vmul.f32 %v7537, %v9121
        %v9140 = vmul.f32 %v7761, %v9125
        %v9141 = vmul.f32 %v7763, %v9129
        %v9142 = vmul.f32 %v7541, %v9117
        %v9143 = vmul.f32 %v7543, %v9121
        %v9144 = vmul.f32 %v7767, %v9125
        %v9145 = vmul.f32 %v7769, %v9129
        %v9146 = vmul.f32 %v7545, %v9117
        %v9147 = vmul.f32 %v7547, %v9121
        %v9148 = vmul.f32 %v7771, %v9125
        %v9149 = vmul.f32 %v7773, %v9129
        %v9150 = vmul.f32 %v7551, %v9117
        %v9151 = vmul.f32 %v7553, %v9121
        %v9152 = vmul.f32 %v7777, %v9125
        %v9153 = vmul.f32 %v7779, %v9129
        %v9154 = vmul.f32 %v7555, %v9117
        %v9155 = vmul.f32 %v7557, %v9121
        %v9156 = vmul.f32 %v7781, %v9125
        %v9157 = vmul.f32 %v7783, %v9129
        %v9158 = vmul.f32 %v7565, %v9117
        %v9159 = vmul.f32 %v7567, %v9121
        %v9160 = vmul.f32 %v7791, %v9125
        %v9161 = vmul.f32 %v7793, %v9129
        %v9162 = vmul.f32 %v7571, %v9117
        %v9163 = vmul.f32 %v7573, %v9121
        %v9164 = vmul.f32 %v7797, %v9125
        %v9165 = vmul.f32 %v7799, %v9129
        %v9166 = vmul.f32 %v7575, %v9117
        %v9167 = vmul.f32 %v7577, %v9121
        %v9168 = vmul.f32 %v7801, %v9125
        %v9169 = vmul.f32 %v7803, %v9129
        %v9170 = vmul.f32 %v7581, %v9117
        %v9171 = vmul.f32 %v7583, %v9121
        %v9172 = vmul.f32 %v7807, %v9125
        %v9173 = vmul.f32 %v7809, %v9129
        %v9174 = vmul.f32 %v7585, %v9117
        %v9175 = vmul.f32 %v7587, %v9121
        %v9176 = vmul.f32 %v7811, %v9125
        %v9177 = vmul.f32 %v7813, %v9129
        %v9178 = vmul.f32 %v7591, %v9117
        %v9179 = vmul.f32 %v7593, %v9121
        %v9180 = vmul.f32 %v7817, %v9125
        %v9181 = vmul.f32 %v7819, %v9129
        %v9182 = vmul.f32 %v7595, %v9117
        %v9183 = vmul.f32 %v7597, %v9121
        %v9184 = vmul.f32 %v7821, %v9125
        %v9185 = vmul.f32 %v7823, %v9129
        %v9186 = vadd.f32 %v9058, %v9130
        %v9187 = vadd.f32 %v9059, %v9131
        %v9188 = vadd.f32 %v9060, %v9132
        %v9189 = vadd.f32 %v9061, %v9133
        %v9190 = vadd.f32 %v9062, %v9134
        %v9191 = vadd.f32 %v9063, %v9135
        %v9192 = vadd.f32 %v9064, %v9136
        %v9193 = vadd.f32 %v9065, %v9137
        %v9194 = vadd.f32 %v9066, %v9138
        %v9195 = vadd.f32 %v9067, %v9139
        %v9196 = vadd.f32 %v9068, %v9140
        %v9197 = vadd.f32 %v9069, %v9141
        %v9198 = vadd.f32 %v9070, %v9142
        %v9199 = vadd.f32 %v9071, %v9143
        %v9200 = vadd.f32 %v9072, %v9144
        %v9201 = vadd.f32 %v9073, %v9145
        %v9202 = vadd.f32 %v9074, %v9146
        %v9203 = vadd.f32 %v9075, %v9147
        %v9204 = vadd.f32 %v9076, %v9148
        %v9205 = vadd.f32 %v9077, %v9149
        %v9206 = vadd.f32 %v9078, %v9150
        %v9207 = vadd.f32 %v9079, %v9151
        %v9208 = vadd.f32 %v9080, %v9152
        %v9209 = vadd.f32 %v9081, %v9153
        %v9210 = vadd.f32 %v9082, %v9154
        %v9211 = vadd.f32 %v9083, %v9155
        %v9212 = vadd.f32 %v9084, %v9156
        %v9213 = vadd.f32 %v9085, %v9157
        %v9214 = vadd.f32 %v9086, %v9158
        %v9215 = vadd.f32 %v9087, %v9159
        %v9216 = vadd.f32 %v9088, %v9160
        %v9217 = vadd.f32 %v9089, %v9161
        %v9218 = vadd.f32 %v9090, %v9162
        %v9219 = vadd.f32 %v9091, %v9163
        %v9220 = vadd.f32 %v9092, %v9164
        %v9221 = vadd.f32 %v9093, %v9165
        %v9222 = vadd.f32 %v9094, %v9166
        %v9223 = vadd.f32 %v9095, %v9167
        %v9224 = vadd.f32 %v9096, %v9168
        %v9225 = vadd.f32 %v9097, %v9169
        %v9226 = vadd.f32 %v9098, %v9170
        %v9227 = vadd.f32 %v9099, %v9171
        %v9228 = vadd.f32 %v9100, %v9172
        %v9229 = vadd.f32 %v9101, %v9173
        %v9230 = vadd.f32 %v9102, %v9174
        %v9231 = vadd.f32 %v9103, %v9175
        %v9232 = vadd.f32 %v9104, %v9176
        %v9233 = vadd.f32 %v9105, %v9177
        %v9234 = vadd.f32 %v9106, %v9178
        %v9235 = vadd.f32 %v9107, %v9179
        %v9236 = vadd.f32 %v9108, %v9180
        %v9237 = vadd.f32 %v9109, %v9181
        %v9238 = vadd.f32 %v9110, %v9182
        %v9239 = vadd.f32 %v9111, %v9183
        %v9240 = vadd.f32 %v9112, %v9184
        %v9241 = vadd.f32 %v9113, %v9185
        %v9242 = vlaneseq
        %v9243 = vshrl.u32 %v9242, 7
        %v9244 = vsub.s32 0, %v9243
        %v9245 = vrot.slane %v8278, %v9244
        %v9246 = vlaneseq
        %v9247 = vshrl.u32 %v9246, 7
        %v9248 = vsub.s32 0, %v9247
        %v9249 = vrot.slane %v8279, %v9248
        %v9250 = vlaneseq
        %v9251 = vshrl.u32 %v9250, 7
        %v9252 = vsub.s32 0, %v9251
        %v9253 = vrot.slane %v8280, %v9252
        %v9254 = vlaneseq
        %v9255 = vshrl.u32 %v9254, 7
        %v9256 = vsub.s32 0, %v9255
        %v9257 = vrot.slane %v8281, %v9256
        %v9258 = vmul.f32 %v8213, %v9245
        %v9259 = vmul.f32 %v8214, %v9249
        %v9260 = vmul.f32 %v8215, %v9253
        %v9261 = vmul.f32 %v8216, %v9257
        %v9262 = vmul.f32 %v8217, %v9245
        %v9263 = vmul.f32 %v8218, %v9249
        %v9264 = vmul.f32 %v8219, %v9253
        %v9265 = vmul.f32 %v8220, %v9257
        %v9266 = vmul.f32 %v8221, %v9245
        %v9267 = vmul.f32 %v8222, %v9249
        %v9268 = vmul.f32 %v8223, %v9253
        %v9269 = vmul.f32 %v8224, %v9257
        %v9270 = vmul.f32 %v8225, %v9245
        %v9271 = vmul.f32 %v8226, %v9249
        %v9272 = vmul.f32 %v8227, %v9253
        %v9273 = vmul.f32 %v8228, %v9257
        %v9274 = vmul.f32 %v8229, %v9245
        %v9275 = vmul.f32 %v8230, %v9249
        %v9276 = vmul.f32 %v8231, %v9253
        %v9277 = vmul.f32 %v8232, %v9257
        %v9278 = vmul.f32 %v8233, %v9245
        %v9279 = vmul.f32 %v8234, %v9249
        %v9280 = vmul.f32 %v8235, %v9253
        %v9281 = vmul.f32 %v8236, %v9257
        %v9282 = vmul.f32 %v8237, %v9245
        %v9283 = vmul.f32 %v8238, %v9249
        %v9284 = vmul.f32 %v8239, %v9253
        %v9285 = vmul.f32 %v8240, %v9257
        %v9286 = vmul.f32 %v8245, %v9245
        %v9287 = vmul.f32 %v8246, %v9249
        %v9288 = vmul.f32 %v8247, %v9253
        %v9289 = vmul.f32 %v8248, %v9257
        %v9290 = vmul.f32 %v8249, %v9245
        %v9291 = vmul.f32 %v8250, %v9249
        %v9292 = vmul.f32 %v8251, %v9253
        %v9293 = vmul.f32 %v8252, %v9257
        %v9294 = vmul.f32 %v8253, %v9245
        %v9295 = vmul.f32 %v8254, %v9249
        %v9296 = vmul.f32 %v8255, %v9253
        %v9297 = vmul.f32 %v8256, %v9257
        %v9298 = vmul.f32 %v8257, %v9245
        %v9299 = vmul.f32 %v8258, %v9249
        %v9300 = vmul.f32 %v8259, %v9253
        %v9301 = vmul.f32 %v8260, %v9257
        %v9302 = vmul.f32 %v8261, %v9245
        %v9303 = vmul.f32 %v8262, %v9249
        %v9304 = vmul.f32 %v8263, %v9253
        %v9305 = vmul.f32 %v8264, %v9257
        %v9306 = vmul.f32 %v8265, %v9245
        %v9307 = vmul.f32 %v8266, %v9249
        %v9308 = vmul.f32 %v8267, %v9253
        %v9309 = vmul.f32 %v8268, %v9257
        %v9310 = vmul.f32 %v8269, %v9245
        %v9311 = vmul.f32 %v8270, %v9249
        %v9312 = vmul.f32 %v8271, %v9253
        %v9313 = vmul.f32 %v8272, %v9257
        %v9314 = vadd.f32 %v9186, %v9258
        %v9315 = vadd.f32 %v9187, %v9259
        %v9316 = vadd.f32 %v9188, %v9260
        %v9317 = vadd.f32 %v9189, %v9261
        %v9318 = vadd.f32 %v9190, %v9262
        %v9319 = vadd.f32 %v9191, %v9263
        %v9320 = vadd.f32 %v9192, %v9264
        %v9321 = vadd.f32 %v9193, %v9265
        %v9322 = vadd.f32 %v9194, %v9266
        %v9323 = vadd.f32 %v9195, %v9267
        %v9324 = vadd.f32 %v9196, %v9268
        %v9325 = vadd.f32 %v9197, %v9269
        %v9326 = vadd.f32 %v9198, %v9270
        %v9327 = vadd.f32 %v9199, %v9271
        %v9328 = vadd.f32 %v9200, %v9272
        %v9329 = vadd.f32 %v9201, %v9273
        %v9330 = vadd.f32 %v9202, %v9274
        %v9331 = vadd.f32 %v9203, %v9275
        %v9332 = vadd.f32 %v9204, %v9276
        %v9333 = vadd.f32 %v9205, %v9277
        %v9334 = vadd.f32 %v9206, %v9278
        %v9335 = vadd.f32 %v9207, %v9279
        %v9336 = vadd.f32 %v9208, %v9280
        %v9337 = vadd.f32 %v9209, %v9281
        %v9338 = vadd.f32 %v9210, %v9282
        %v9339 = vadd.f32 %v9211, %v9283
        %v9340 = vadd.f32 %v9212, %v9284
        %v9341 = vadd.f32 %v9213, %v9285
        %v9342 = vadd.f32 %v9214, %v9286
        %v9343 = vadd.f32 %v9215, %v9287
        %v9344 = vadd.f32 %v9216, %v9288
        %v9345 = vadd.f32 %v9217, %v9289
        %v9346 = vadd.f32 %v9218, %v9290
        %v9347 = vadd.f32 %v9219, %v9291
        %v9348 = vadd.f32 %v9220, %v9292
        %v9349 = vadd.f32 %v9221, %v9293
        %v9350 = vadd.f32 %v9222, %v9294
        %v9351 = vadd.f32 %v9223, %v9295
        %v9352 = vadd.f32 %v9224, %v9296
        %v9353 = vadd.f32 %v9225, %v9297
        %v9354 = vadd.f32 %v9226, %v9298
        %v9355 = vadd.f32 %v9227, %v9299
        %v9356 = vadd.f32 %v9228, %v9300
        %v9357 = vadd.f32 %v9229, %v9301
        %v9358 = vadd.f32 %v9230, %v9302
        %v9359 = vadd.f32 %v9231, %v9303
        %v9360 = vadd.f32 %v9232, %v9304
        %v9361 = vadd.f32 %v9233, %v9305
        %v9362 = vadd.f32 %v9234, %v9306
        %v9363 = vadd.f32 %v9235, %v9307
        %v9364 = vadd.f32 %v9236, %v9308
        %v9365 = vadd.f32 %v9237, %v9309
        %v9366 = vadd.f32 %v9238, %v9310
        %v9367 = vadd.f32 %v9239, %v9311
        %v9368 = vadd.f32 %v9240, %v9312
        %v9369 = vadd.f32 %v9241, %v9313
        %v9370 = vadd.f32 %v8978, %v9314
        %v9371 = vadd.f32 %v8979, %v9315
        %v9372 = vadd.f32 %v8980, %v9316
        %v9373 = vadd.f32 %v8981, %v9317
        %v9374 = vadd.f32 %v8982, %v9318
        %v9375 = vadd.f32 %v8983, %v9319
        %v9376 = vadd.f32 %v8984, %v9320
        %v9377 = vadd.f32 %v8985, %v9321
        %v9378 = vadd.f32 %v8986, %v9322
        %v9379 = vadd.f32 %v8987, %v9323
        %v9380 = vadd.f32 %v8988, %v9324
        %v9381 = vadd.f32 %v8989, %v9325
        %v9382 = vadd.f32 %v8990, %v9326
        %v9383 = vadd.f32 %v8991, %v9327
        %v9384 = vadd.f32 %v8992, %v9328
        %v9385 = vadd.f32 %v8993, %v9329
        %v9386 = vadd.f32 %v8994, %v9330
        %v9387 = vadd.f32 %v8995, %v9331
        %v9388 = vadd.f32 %v8996, %v9332
        %v9389 = vadd.f32 %v8997, %v9333
        %v9390 = vadd.f32 %v8998, %v9334
        %v9391 = vadd.f32 %v8999, %v9335
        %v9392 = vadd.f32 %v9000, %v9336
        %v9393 = vadd.f32 %v9001, %v9337
        %v9394 = vadd.f32 %v9002, %v9338
        %v9395 = vadd.f32 %v9003, %v9339
        %v9396 = vadd.f32 %v9004, %v9340
        %v9397 = vadd.f32 %v9005, %v9341
        %v9398 = vadd.f32 %v9006, 0.0
        %v9399 = vadd.f32 %v9007, 0.0
        %v9400 = vadd.f32 %v9008, 0.0
        %v9401 = vadd.f32 %v9009, 0.0
        %v9402 = vadd.f32 %v9010, %v9342
        %v9403 = vadd.f32 %v9011, %v9343
        %v9404 = vadd.f32 %v9012, %v9344
        %v9405 = vadd.f32 %v9013, %v9345
        %v9406 = vadd.f32 %v9014, %v9346
        %v9407 = vadd.f32 %v9015, %v9347
        %v9408 = vadd.f32 %v9016, %v9348
        %v9409 = vadd.f32 %v9017, %v9349
        %v9410 = vadd.f32 %v9018, %v9350
        %v9411 = vadd.f32 %v9019, %v9351
        %v9412 = vadd.f32 %v9020, %v9352
        %v9413 = vadd.f32 %v9021, %v9353
        %v9414 = vadd.f32 %v9022, %v9354
        %v9415 = vadd.f32 %v9023, %v9355
        %v9416 = vadd.f32 %v9024, %v9356
        %v9417 = vadd.f32 %v9025, %v9357
        %v9418 = vadd.f32 %v9026, %v9358
        %v9419 = vadd.f32 %v9027, %v9359
        %v9420 = vadd.f32 %v9028, %v9360
        %v9421 = vadd.f32 %v9029, %v9361
        %v9422 = vadd.f32 %v9030, %v9362
        %v9423 = vadd.f32 %v9031, %v9363
        %v9424 = vadd.f32 %v9032, %v9364
        %v9425 = vadd.f32 %v9033, %v9365
        %v9426 = vadd.f32 %v9034, %v9366
        %v9427 = vadd.f32 %v9035, %v9367
        %v9428 = vadd.f32 %v9036, %v9368
        %v9429 = vadd.f32 %v9037, %v9369
        %v9430 = vadd.f32 %v9038, 0.0
        %v9431 = vadd.f32 %v9039, 0.0
        %v9432 = vadd.f32 %v9040, 0.0
        %v9433 = vadd.f32 %v9041, 0.0
        %s9434 = scalar_lea.vmem %s285, 2
        %v9435 = vld [vmem:[%s9434] ss:$4 sm:$0xf]
        %v9437 = vlaneseq
        %v9438 = vshrl.u32 %v9437, 7
        %v9439 = vsub.s32 0, %v9438
        %v9440 = vrot.slane %v9435, %v9439
        %v9441 = vlaneseq
        %v9442 = vshrl.u32 %v9441, 7
        %v9443 = vsub.s32 1, %v9442
        %v9444 = vrot.slane %v9435, %v9443
        %v9445 = vlaneseq
        %v9446 = vshrl.u32 %v9445, 7
        %v9447 = vsub.s32 2, %v9446
        %v9448 = vrot.slane %v9435, %v9447
        %v9449 = vlaneseq
        %v9450 = vshrl.u32 %v9449, 7
        %v9451 = vsub.s32 3, %v9450
        %v9452 = vrot.slane %v9435, %v9451
        %v9457 = vadd.f32 %v9370, %v9440
        %v9458 = vadd.f32 %v9371, %v9444
        %v9459 = vadd.f32 %v9372, %v9448
        %v9460 = vadd.f32 %v9373, %v9452
        %v9461 = vadd.f32 %v9374, %v9440
        %v9462 = vadd.f32 %v9375, %v9444
        %v9463 = vadd.f32 %v9376, %v9448
        %v9464 = vadd.f32 %v9377, %v9452
        %v9465 = vadd.f32 %v9378, %v9440
        %v9466 = vadd.f32 %v9379, %v9444
        %v9467 = vadd.f32 %v9380, %v9448
        %v9468 = vadd.f32 %v9381, %v9452
        %v9469 = vadd.f32 %v9382, %v9440
        %v9470 = vadd.f32 %v9383, %v9444
        %v9471 = vadd.f32 %v9384, %v9448
        %v9472 = vadd.f32 %v9385, %v9452
        %v9473 = vadd.f32 %v9386, %v9440
        %v9474 = vadd.f32 %v9387, %v9444
        %v9475 = vadd.f32 %v9388, %v9448
        %v9476 = vadd.f32 %v9389, %v9452
        %v9477 = vadd.f32 %v9390, %v9440
        %v9478 = vadd.f32 %v9391, %v9444
        %v9479 = vadd.f32 %v9392, %v9448
        %v9480 = vadd.f32 %v9393, %v9452
        %v9481 = vadd.f32 %v9394, %v9440
        %v9482 = vadd.f32 %v9395, %v9444
        %v9483 = vadd.f32 %v9396, %v9448
        %v9484 = vadd.f32 %v9397, %v9452
        %v9485 = vadd.f32 %v9398, %v9440
        %v9486 = vadd.f32 %v9399, %v9444
        %v9487 = vadd.f32 %v9400, %v9448
        %v9488 = vadd.f32 %v9401, %v9452
        %v9489 = vadd.f32 %v9402, %v9440
        %v9490 = vadd.f32 %v9403, %v9444
        %v9491 = vadd.f32 %v9404, %v9448
        %v9492 = vadd.f32 %v9405, %v9452
        %v9493 = vadd.f32 %v9406, %v9440
        %v9494 = vadd.f32 %v9407, %v9444
        %v9495 = vadd.f32 %v9408, %v9448
        %v9496 = vadd.f32 %v9409, %v9452
        %v9497 = vadd.f32 %v9410, %v9440
        %v9498 = vadd.f32 %v9411, %v9444
        %v9499 = vadd.f32 %v9412, %v9448
        %v9500 = vadd.f32 %v9413, %v9452
        %v9501 = vadd.f32 %v9414, %v9440
        %v9502 = vadd.f32 %v9415, %v9444
        %v9503 = vadd.f32 %v9416, %v9448
        %v9504 = vadd.f32 %v9417, %v9452
        %v9505 = vadd.f32 %v9418, %v9440
        %v9506 = vadd.f32 %v9419, %v9444
        %v9507 = vadd.f32 %v9420, %v9448
        %v9508 = vadd.f32 %v9421, %v9452
        %v9509 = vadd.f32 %v9422, %v9440
        %v9510 = vadd.f32 %v9423, %v9444
        %v9511 = vadd.f32 %v9424, %v9448
        %v9512 = vadd.f32 %v9425, %v9452
        %v9513 = vadd.f32 %v9426, %v9440
        %v9514 = vadd.f32 %v9427, %v9444
        %v9515 = vadd.f32 %v9428, %v9448
        %v9516 = vadd.f32 %v9429, %v9452
        %v9517 = vadd.f32 %v9430, %v9440
        %v9518 = vadd.f32 %v9431, %v9444
        %v9519 = vadd.f32 %v9432, %v9448
        %v9520 = vadd.f32 %v9433, %v9452
        %v9521 = vadd.f32 %v9457, %v419
        %v9522 = vadd.f32 %v9458, %v420
        %v9523 = vadd.f32 %v9459, %v421
        %v9524 = vadd.f32 %v9460, %v422
        %v9525 = vadd.f32 %v9461, %v423
        %v9526 = vadd.f32 %v9462, %v424
        %v9527 = vadd.f32 %v9463, %v425
        %v9528 = vadd.f32 %v9464, %v426
        %v9529 = vadd.f32 %v9465, %v427
        %v9530 = vadd.f32 %v9466, %v428
        %v9531 = vadd.f32 %v9467, %v429
        %v9532 = vadd.f32 %v9468, %v430
        %v9533 = vadd.f32 %v9469, %v431
        %v9534 = vadd.f32 %v9470, %v432
        %v9535 = vadd.f32 %v9471, %v433
        %v9536 = vadd.f32 %v9472, %v434
        %v9537 = vadd.f32 %v9473, %v435
        %v9538 = vadd.f32 %v9474, %v436
        %v9539 = vadd.f32 %v9475, %v437
        %v9540 = vadd.f32 %v9476, %v438
        %v9541 = vadd.f32 %v9477, %v439
        %v9542 = vadd.f32 %v9478, %v440
        %v9543 = vadd.f32 %v9479, %v441
        %v9544 = vadd.f32 %v9480, %v442
        %v9545 = vadd.f32 %v9481, %v443
        %v9546 = vadd.f32 %v9482, %v444
        %v9547 = vadd.f32 %v9483, %v445
        %v9548 = vadd.f32 %v9484, %v446
        %v9549 = vadd.f32 %v9485, %v447
        %v9550 = vadd.f32 %v9486, %v448
        %v9551 = vadd.f32 %v9487, %v449
        %v9552 = vadd.f32 %v9488, %v450
        %v9553 = vadd.f32 %v9489, %v451
        %v9554 = vadd.f32 %v9490, %v452
        %v9555 = vadd.f32 %v9491, %v453
        %v9556 = vadd.f32 %v9492, %v454
        %v9557 = vadd.f32 %v9493, %v455
        %v9558 = vadd.f32 %v9494, %v456
        %v9559 = vadd.f32 %v9495, %v457
        %v9560 = vadd.f32 %v9496, %v458
        %v9561 = vadd.f32 %v9497, %v459
        %v9562 = vadd.f32 %v9498, %v460
        %v9563 = vadd.f32 %v9499, %v461
        %v9564 = vadd.f32 %v9500, %v462
        %v9565 = vadd.f32 %v9501, %v463
        %v9566 = vadd.f32 %v9502, %v464
        %v9567 = vadd.f32 %v9503, %v465
        %v9568 = vadd.f32 %v9504, %v466
        %v9569 = vadd.f32 %v9505, %v467
        %v9570 = vadd.f32 %v9506, %v468
        %v9571 = vadd.f32 %v9507, %v469
        %v9572 = vadd.f32 %v9508, %v470
        %v9573 = vadd.f32 %v9509, %v471
        %v9574 = vadd.f32 %v9510, %v472
        %v9575 = vadd.f32 %v9511, %v473
        %v9576 = vadd.f32 %v9512, %v474
        %v9577 = vadd.f32 %v9513, %v475
        %v9578 = vadd.f32 %v9514, %v476
        %v9579 = vadd.f32 %v9515, %v477
        %v9580 = vadd.f32 %v9516, %v478
        %v9581 = vadd.f32 %v9517, %v479
        %v9582 = vadd.f32 %v9518, %v480
        %v9583 = vadd.f32 %v9519, %v481
        %v9584 = vadd.f32 %v9520, %v482
        %9585 = vst [vmem:[#allocation7] sm:$0xff] %v9521
        %9586 = vst [vmem:[#allocation7 + $0x8] sm:$0xff] %v9522
        %9587 = vst [vmem:[#allocation7 + $0x10] sm:$0xff] %v9523
        %9588 = vst [vmem:[#allocation7 + $0x18] sm:$0xff] %v9524
        %9589 = vst [vmem:[#allocation7 + $0x20] sm:$0xff] %v9525
        %9590 = vst [vmem:[#allocation7 + $0x28] sm:$0xff] %v9526
        %9591 = vst [vmem:[#allocation7 + $0x30] sm:$0xff] %v9527
        %9592 = vst [vmem:[#allocation7 + $0x38] sm:$0xff] %v9528
        %9593 = vst [vmem:[#allocation7 + $0x40] sm:$0xff] %v9529
        %9594 = vst [vmem:[#allocation7 + $0x48] sm:$0xff] %v9530
        %9595 = vst [vmem:[#allocation7 + $0x50] sm:$0xff] %v9531
        %9596 = vst [vmem:[#allocation7 + $0x58] sm:$0xff] %v9532
        %9597 = vst [vmem:[#allocation7 + $0x60] sm:$0xff] %v9533
        %9598 = vst [vmem:[#allocation7 + $0x68] sm:$0xff] %v9534
        %9599 = vst [vmem:[#allocation7 + $0x70] sm:$0xff] %v9535
        %9600 = vst [vmem:[#allocation7 + $0x78] sm:$0xff] %v9536
        %9601 = vst [vmem:[#allocation7 + $0x80] sm:$0xff] %v9537
        %9602 = vst [vmem:[#allocation7 + $0x88] sm:$0xff] %v9538
        %9603 = vst [vmem:[#allocation7 + $0x90] sm:$0xff] %v9539
        %9604 = vst [vmem:[#allocation7 + $0x98] sm:$0xff] %v9540
        %9605 = vst [vmem:[#allocation7 + $0xa0] sm:$0xff] %v9541
        %9606 = vst [vmem:[#allocation7 + $0xa8] sm:$0xff] %v9542
        %9607 = vst [vmem:[#allocation7 + $0xb0] sm:$0xff] %v9543
        %9608 = vst [vmem:[#allocation7 + $0xb8] sm:$0xff] %v9544
        %9609 = vst [vmem:[#allocation7 + $0xc0] sm:$0xff] %v9545
        %9610 = vst [vmem:[#allocation7 + $0xc8] sm:$0xff] %v9546
        %9611 = vst [vmem:[#allocation7 + $0xd0] sm:$0xff] %v9547
        %9612 = vst [vmem:[#allocation7 + $0xd8] sm:$0xff] %v9548
        %9613 = vst [vmem:[#allocation7 + $0xe0] sm:$0xff] %v9549
        %9614 = vst [vmem:[#allocation7 + $0xe8] sm:$0xff] %v9550
        %9615 = vst [vmem:[#allocation7 + $0xf0] sm:$0xff] %v9551
        %9616 = vst [vmem:[#allocation7 + $0xf8] sm:$0xff] %v9552
        %9617 = vst [vmem:[#allocation7 + $0x100] sm:$0xff] %v9553
        %9618 = vst [vmem:[#allocation7 + $0x108] sm:$0xff] %v9554
        %9619 = vst [vmem:[#allocation7 + $0x110] sm:$0xff] %v9555
        %9620 = vst [vmem:[#allocation7 + $0x118] sm:$0xff] %v9556
        %9621 = vst [vmem:[#allocation7 + $0x120] sm:$0xff] %v9557
        %9622 = vst [vmem:[#allocation7 + $0x128] sm:$0xff] %v9558
        %9623 = vst [vmem:[#allocation7 + $0x130] sm:$0xff] %v9559
        %9624 = vst [vmem:[#allocation7 + $0x138] sm:$0xff] %v9560
        %9625 = vst [vmem:[#allocation7 + $0x140] sm:$0xff] %v9561
        %9626 = vst [vmem:[#allocation7 + $0x148] sm:$0xff] %v9562
        %9627 = vst [vmem:[#allocation7 + $0x150] sm:$0xff] %v9563
        %9628 = vst [vmem:[#allocation7 + $0x158] sm:$0xff] %v9564
        %9629 = vst [vmem:[#allocation7 + $0x160] sm:$0xff] %v9565
        %9630 = vst [vmem:[#allocation7 + $0x168] sm:$0xff] %v9566
        %9631 = vst [vmem:[#allocation7 + $0x170] sm:$0xff] %v9567
        %9632 = vst [vmem:[#allocation7 + $0x178] sm:$0xff] %v9568
        %9633 = vst [vmem:[#allocation7 + $0x180] sm:$0xff] %v9569
        %9634 = vst [vmem:[#allocation7 + $0x188] sm:$0xff] %v9570
        %9635 = vst [vmem:[#allocation7 + $0x190] sm:$0xff] %v9571
        %9636 = vst [vmem:[#allocation7 + $0x198] sm:$0xff] %v9572
        %9637 = vst [vmem:[#allocation7 + $0x1a0] sm:$0xff] %v9573
        %9638 = vst [vmem:[#allocation7 + $0x1a8] sm:$0xff] %v9574
        %9639 = vst [vmem:[#allocation7 + $0x1b0] sm:$0xff] %v9575
        %9640 = vst [vmem:[#allocation7 + $0x1b8] sm:$0xff] %v9576
        %9641 = vst [vmem:[#allocation7 + $0x1c0] sm:$0xff] %v9577
        %9642 = vst [vmem:[#allocation7 + $0x1c8] sm:$0xff] %v9578
        %9643 = vst [vmem:[#allocation7 + $0x1d0] sm:$0xff] %v9579
        %9644 = vst [vmem:[#allocation7 + $0x1d8] sm:$0xff] %v9580
        %9645 = vst [vmem:[#allocation7 + $0x1e0] sm:$0xff] %v9581
        %9646 = vst [vmem:[#allocation7 + $0x1e8] sm:$0xff] %v9582
        %9647 = vst [vmem:[#allocation7 + $0x1f0] sm:$0xff] %v9583
        %9648 = vst [vmem:[#allocation7 + $0x1f8] sm:$0xff] %v9584
        // Predicated region
        $region49: #{tpu_custom_call.1} parent=35 // pred_check
          %p9649 = pneg %p154
        $region50: #{tpu_custom_call.1} parent=35 // pred_check_branch
          %9651 = sbr.rel (%p9649) target = $region52
        $region51: #{tpu_custom_call.1} parent=35 // pred_region
          %s9652 = smul.u32 2, %s24
          %s9654 = ssub.s32 8192, 8192
          %9655 = vsyncadd [#allocation4], %s9654
          %s9656 = smul.addr %s9652, 32
          %s9657 = smul.addr %s9656, 128
          %s9658 = scalar_lea.hbm %s4, %s9657
          %s9659 = sshll.u32 [#allocation7], 4
          %s9660 = int_to_ptr.vmem [resolvable:$true] %s9659
          %9665 = dma.vmem_to_hbm [thread:$0]  %s9660, 8192, %s9658, [#allocation4], 512, 512, 32
        $region52: #{tpu_custom_call.1} parent=35 // pred_fallthru
          _
        // Predicated region
        $region53: #{tpu_custom_call.1} parent=35 // pred_check
          %p9666 = pneg %p154
        $region54: #{tpu_custom_call.1} parent=35 // pred_check_branch
          %9668 = sbr.rel (%p9666) target = $region56
        $region55: #{tpu_custom_call.1} parent=35 // pred_region
          %9669 = dma.done [#allocation4], 8192
        $region56: #{tpu_custom_call.1} parent=35 // pred_fallthru
          _
      $region36: #{tpu_custom_call.1} parent=5 // pred_fallthru
        _
      %p9670 = scmp.le.s32.totalorder 2, %s15
      // Predicated region
      $region57: #{tpu_custom_call.1} parent=5 // pred_check
        %p9671 = pneg %p9670
      $region58: #{tpu_custom_call.1} parent=5 // pred_check_branch
        %9673 = sbr.rel (%p9671) target = $region60
      $region59: #{tpu_custom_call.1} parent=5 // pred_region
        %s9674 = ssub.s32 %s15, 2
      $region60: #{tpu_custom_call.1} parent=5 // pred_fallthru
        _
    $region6: #{tpu_custom_call.1} parent=1 // loop_footer
      %s19 = sadd.s32 1, %s15
    $region7: #{tpu_custom_call.1} parent=1 // loop_footer_branch
      %14 = sbr.rel target = $region3
    $region8: #{tpu_custom_call.1} parent=1 // loop_exit
      _
    %9675 = vsyncpa [#allocation3], 1
    %s9676 = scalar_lea.sflag [#allocation3], 1
    %9677 = vsyncpa %s9676, 1
    %9678 = vsyncpa [#allocation6], 1
    %s9679 = scalar_lea.sflag [#allocation6], 1
    %9680 = vsyncpa %s9679, 1
    %9681 = vsyncpa [#allocation4], 1
    %s9682 = scalar_lea.sflag [#allocation4], 1
    %9683 = vsyncpa %s9682, 1

</llo_original>
